<compile_context>
chip_gen: v5e
topology: v5e:2x2
jax: 0.10.0
libtpu: 0.0.40
codegen_flags: <defaults>
</compile_context>

<pallas_src>
import jax
import jax.numpy as jnp
from jax.experimental import pallas as pl
from jax.experimental.pallas import tpu as pltpu

NUM_GROUPS = 32                        # GroupNorm(32, out_channels)
EPS = 1e-5                             # PyTorch GroupNorm default eps
VMEM_LIMIT_BYTES = 32 * 1024 * 1024    # safe on v5e/v6e (128 MiB) and v7x (64 MiB)


# --------------------------------------------------------------------------
# Fused layer kernel: conv3x3 + bias + ReLU + GroupNorm (stats + affine)
# --------------------------------------------------------------------------
def _make_layer_kernel(stride, H, W, Cin, Cout, Ho, Wo, Wpx, M, cpg):
    def kernel(x_ref, w_ref, b_ref, g_ref, be_ref, p_ref, mask_ref, o_ref, xf_ref):
        # ---- 1. zero-padded, row-flattened input in VMEM (no HBM pad pass) ----
        xf_ref[...] = jnp.zeros_like(xf_ref)
        if stride == 1:
            # flat row index = (input_row + 1) * Wpx + (input_col + 1)
            for h in range(H):
                xf_ref[pl.ds((h + 1) * Wpx + 1, W), :] = x_ref[0, h]
        else:
            # double parity fold: padded (pr, pc) -> flat row (pr//2)*Wpx + pc//2,
            # lane block (pr%2)*2 + (pc%2).  Input arrives column-folded (Wf, 2*Cin).
            Wf = W // 2
            for h in range(H):
                hq, rp = (h + 1) // 2, (h + 1) % 2
                row = x_ref[0, h]                               # (Wf, 2*Cin)
                # even input cols -> padded col parity 1, same folded column
                xf_ref[pl.ds(hq * Wpx, Wf),
                       (2 * rp + 1) * Cin:(2 * rp + 2) * Cin] = row[:, :Cin]
                # odd input cols -> padded col parity 0, next folded column
                xf_ref[pl.ds(hq * Wpx + 1, Wf),
                       (2 * rp) * Cin:(2 * rp + 1) * Cin] = row[:, Cin:]

        # ---- 2. im2col via contiguous flat-offset slices + ONE fused MXU matmul ----
        pieces = []
        for ky in range(3):
            for kx in range(3):
                if stride == 1:
                    off, c0 = ky * Wpx + kx, 0
                else:
                    off = (Wpx if ky == 2 else 0) + (1 if kx == 2 else 0)
                    c0 = ((ky % 2) * 2 + (kx % 2)) * Cin
                pieces.append(xf_ref[pl.ds(off, M), pl.ds(c0, Cin)])
        lhs = jnp.concatenate(pieces, axis=-1).astype(jnp.bfloat16)     # (M, 9*Cin)
        y = jnp.dot(lhs, w_ref[...], preferred_element_type=jnp.float32)
        y = jnp.maximum(y + b_ref[...], 0.0)                            # bias + ReLU

        # ---- 3. GroupNorm statistics over valid positions only (on the MXU) ----
        maskf = mask_ref[...]                                           # (1, M) 0/1
        cnt = float(Ho * Wo * cpg)
        s = jnp.dot(maskf, y, preferred_element_type=jnp.float32)       # (1, Cout)
        ss = jnp.dot(maskf, y * y, preferred_element_type=jnp.float32)  # (1, Cout)
        mean_c = jnp.dot(s, p_ref[...], preferred_element_type=jnp.float32) * (1.0 / cnt)
        ey2_c = jnp.dot(ss, p_ref[...], preferred_element_type=jnp.float32) * (1.0 / cnt)
        # TODO(synk): single-pass E[y^2]-E[y]^2 in f32; use a compensated /
        # two-pass reduction if H*W per group becomes very large.
        var_c = jnp.maximum(ey2_c - mean_c * mean_c, 0.0)
        inv = jax.lax.rsqrt(var_c + EPS)                                # EUP
        scale = g_ref[...] * inv
        shift = be_ref[...] - mean_c * scale
        y = y * scale + shift

        # ---- 4. store valid rows (skip the padded-width garbage columns) ----
        for r in range(Ho):
            o_ref[0, r] = y[r * Wpx:r * Wpx + Wo, :]

    return kernel


def conv_relu_gn_layer(x, w, bias, gamma, beta, *, stride):
    """One fused Conv3x3(pad=1)+ReLU+GroupNorm(32) layer.  x is NHWC."""
    N, H, W, Cin = x.shape
    Cout = w.shape[-1]
    assert Cout % NUM_GROUPS == 0
    cpg = Cout // NUM_GROUPS

    if stride == 1:
        Ho, Wo = H, W
        Wpx = W + 2                         # padded width (1 garbage col pair / row)
        flat_len = (H + 3) * Wpx            # padded rows + spare zero row
        Cx = Cin
        x_in = x
        in_block = (1, H, W, Cin)
    else:
        # TODO(synk): stride-2 path assumes even H, W (true for this module chain).
        assert H % 2 == 0 and W % 2 == 0, "stride-2 path assumes even H, W"
        Ho, Wo = H // 2, W // 2
        Wpx = Wo + 1                        # folded padded width
        flat_len = (Ho + 2) * Wpx           # folded padded rows + spare zero row
        Cx = 4 * Cin                        # (row parity, col parity, ci)
        x_in = x.reshape(N, H, W // 2, 2 * Cin)   # metadata-only column-parity fold
        in_block = (1, H, W // 2, 2 * Cin)
    M = Ho * Wpx

    # trace-time constants
    w9 = w.reshape(9 * Cin, Cout).astype(jnp.bfloat16)       # tap-major (ky, kx, ci)
    b2 = bias.reshape(1, Cout).astype(jnp.float32)
    g2 = gamma.reshape(1, Cout).astype(jnp.float32)
    be2 = beta.reshape(1, Cout).astype(jnp.float32)
    proj = jnp.kron(jnp.eye(NUM_GROUPS, dtype=jnp.float32),
                    jnp.ones((cpg, cpg), jnp.float32))        # (Cout, Cout) group proj
    col = jnp.arange(M, dtype=jnp.int32) % Wpx
    mask = (col < Wo).astype(jnp.float32).reshape(1, M)       # valid-position mask

    kernel = _make_layer_kernel(stride, H, W, Cin, Cout, Ho, Wo, Wpx, M, cpg)

    out = pl.pallas_call(
        kernel,
        grid=(N,),
        in_specs=[
            pl.BlockSpec(in_block, lambda n: (n, 0, 0, 0)),
            pl.BlockSpec((9 * Cin, Cout), lambda n: (0, 0)),
            pl.BlockSpec((1, Cout), lambda n: (0, 0)),
            pl.BlockSpec((1, Cout), lambda n: (0, 0)),
            pl.BlockSpec((1, Cout), lambda n: (0, 0)),
            pl.BlockSpec((Cout, Cout), lambda n: (0, 0)),
            pl.BlockSpec((1, M), lambda n: (0, 0)),
        ],
        out_specs=pl.BlockSpec((1, Ho, Wo, Cout), lambda n: (n, 0, 0, 0)),
        out_shape=jax.ShapeDtypeStruct((N, Ho, Wo, Cout), jnp.float32),
        scratch_shapes=[pltpu.VMEM((flat_len, Cx), jnp.float32)],
        compiler_params=pltpu.CompilerParams(
            dimension_semantics=("parallel",),
            vmem_limit_bytes=VMEM_LIMIT_BYTES),
    )(x_in, w9, b2, g2, be2, proj, mask)
    return out


# --------------------------------------------------------------------------
# Module forward
# --------------------------------------------------------------------------
def init_params(key, in_channels, out_channels):
    """Deterministic synthetic params (shapes match the PyTorch module, HWIO)."""
    params = []
    cin = in_channels
    for _ in range(5):
        key, k1, k2, k3, k4 = jax.random.split(key, 5)
        fan_in = cin * 9
        bound = 1.0 / (fan_in ** 0.5)
        w = jax.random.uniform(k1, (3, 3, cin, out_channels), jnp.float32, -bound, bound)
        b = jax.random.uniform(k2, (out_channels,), jnp.float32, -bound, bound)
        gamma = 1.0 + 0.1 * jax.random.normal(k3, (out_channels,), jnp.float32)
        beta = 0.1 * jax.random.normal(k4, (out_channels,), jnp.float32)
        params.append((w, b, gamma, beta))
        cin = out_channels
    return params


def multi_scale_downsampling(x, params):
    """Forward pass of MultiScaleDownsamplingModule (x in NHWC)."""
    outputs = {}
    strides = [1, 2, 2, 2]
    names = ["res2", "res3", "res4", "res5"]
    for (w, b, g, be), s_, name in zip(params[:4], strides, names):
        x = conv_relu_gn_layer(x, w, b, g, be, stride=s_)
        outputs[name] = x
    # down5's output is never returned by the PyTorch module -> dead compute &
    # HBM writeback skipped (returned dict is identical).
    return outputs


# --------------------------------------------------------------------------
# Pure-JAX per-layer reference (conv operands quantized to bf16, like the kernel)
# --------------------------------------------------------------------------
def _ref_block(x, w, b, g, be, stride):
    y = jax.lax.conv_general_dilated(
        x.astype(jnp.bfloat16), w.astype(jnp.bfloat16),
        window_strides=(stride, stride), padding=((1, 1), (1, 1)),
        dimension_numbers=("NHWC", "HWIO", "NHWC"),
        preferred_element_type=jnp.float32)
    y = y + b.reshape(1, 1, 1, -1)
    y = jnp.maximum(y, 0.0)
    N, H, W, C = y.shape
    yg = y.reshape(N, H * W, NUM_GROUPS, C // NUM_GROUPS)
    mean = yg.mean(axis=(1, 3), keepdims=True)
    var = ((yg - mean) ** 2).mean(axis=(1, 3), keepdims=True)
    yn = ((yg - mean) / jnp.sqrt(var + EPS)).reshape(N, H, W, C)
    return yn * g.reshape(1, 1, 1, -1) + be.reshape(1, 1, 1, -1)


if __name__ == "__main__":
    key = jax.random.PRNGKey(0)
    key, kx = jax.random.split(key)

    N, Cin, Cout, H, W = 2, 4, 32, 16, 16      # Cout must be divisible by 32 (GroupNorm)
    x_nhwc = jax.random.normal(kx, (N, H, W, Cin), jnp.float32)
    params = init_params(key, Cin, Cout)

    fwd = jax.jit(multi_scale_downsampling)
    outs = fwd(x_nhwc, params)
    outs = jax.tree_util.tree_map(jax.block_until_ready, outs)

    # Per-layer check: compare each returned scale against the reference block
    # applied to the *same* input that scale's kernel saw (both paths quantize
    # identical conv operands to bf16, so tolerance is tight).
    strides = [1, 2, 2, 2]
    names = ["res2", "res3", "res4", "res5"]
    prev = x_nhwc
    for (w, b, g, be), s_, name in zip(params[:4], strides, names):
        ref = _ref_block(prev, w, b, g, be, s_)
        got = outs[name]
        assert got.shape == ref.shape, (name, got.shape, ref.shape)
        err = float(jnp.max(jnp.abs(got - ref)))
        assert jnp.allclose(got, ref, atol=2e-3, rtol=2e-3), (name, err)
        prev = got

    print("KERNEL_OK")
</pallas_src>

<mosaic_0001>
module attributes {stable_mosaic.version = 11 : i64} {
  func.func @kernel(%arg0: i32, %arg1: memref<1x16x16x4xf32, #tpu.memory_space<vmem>>, %arg2: memref<36x32xbf16, #tpu.memory_space<vmem>>, %arg3: memref<1x32xf32, #tpu.memory_space<vmem>>, %arg4: memref<1x32xf32, #tpu.memory_space<vmem>>, %arg5: memref<1x32xf32, #tpu.memory_space<vmem>>, %arg6: memref<32x32xf32, #tpu.memory_space<vmem>>, %arg7: memref<1x288xf32, #tpu.memory_space<vmem>>, %arg8: memref<1x16x16x32xf32, #tpu.memory_space<vmem>>, %arg9: memref<342x4xf32, #tpu.memory_space<vmem>>) attributes {dimension_semantics = [#tpu.dimension_semantics<parallel>], iteration_bounds = array<i64: 2>, scalar_prefetch = 0 : i64, scratch_operands = 1 : i64, tpu.core_type = #tpu.core_type<tc>, window_params = [{transform_indices = @transform_0, window_bounds = array<i64: 1, 16, 16, 4>}, {pipeline_mode = #tpu.pipeline_mode<synchronous>, transform_indices = @transform_1, window_bounds = array<i64: 36, 32>}, {pipeline_mode = #tpu.pipeline_mode<synchronous>, transform_indices = @transform_2, window_bounds = array<i64: 1, 32>}, {pipeline_mode = #tpu.pipeline_mode<synchronous>, transform_indices = @transform_3, window_bounds = array<i64: 1, 32>}, {pipeline_mode = #tpu.pipeline_mode<synchronous>, transform_indices = @transform_4, window_bounds = array<i64: 1, 32>}, {pipeline_mode = #tpu.pipeline_mode<synchronous>, transform_indices = @transform_5, window_bounds = array<i64: 32, 32>}, {pipeline_mode = #tpu.pipeline_mode<synchronous>, transform_indices = @transform_6, window_bounds = array<i64: 1, 288>}, {transform_indices = @transform_7, window_bounds = array<i64: 1, 16, 16, 32>}]} {
    %cst = arith.constant 0.000000e+00 : f32
    %0 = vector.broadcast %cst : f32 to vector<342x4xf32>
    %c0 = arith.constant 0 : index
    %c0_0 = arith.constant 0 : index
    %1 = vector.load %arg9[%c0, %c0_0] : memref<342x4xf32, #tpu.memory_space<vmem>>, vector<342x4xf32>
    tpu.vector_store %arg9[%c0, %c0_0], %0 {strides = array<i32>} : memref<342x4xf32, #tpu.memory_space<vmem>>, vector<342x4xf32>,
    %c0_1 = arith.constant 0 : index
    %c0_2 = arith.constant 0 : index
    %c0_3 = arith.constant 0 : index
    %c0_4 = arith.constant 0 : index
    %2 = vector.load %arg1[%c0_1, %c0_2, %c0_3, %c0_4] : memref<1x16x16x4xf32, #tpu.memory_space<vmem>>, vector<1x1x16x4xf32>
    %3 = vector.shape_cast %2 : vector<1x1x16x4xf32> to vector<16x4xf32>
    %c19 = arith.constant 19 : index
    %c0_5 = arith.constant 0 : index
    %4 = vector.load %arg9[%c19, %c0_5] : memref<342x4xf32, #tpu.memory_space<vmem>>, vector<16x4xf32>
    tpu.vector_store %arg9[%c19, %c0_5], %3 {strides = array<i32>} : memref<342x4xf32, #tpu.memory_space<vmem>>, vector<16x4xf32>,
    %c0_6 = arith.constant 0 : index
    %c1 = arith.constant 1 : index
    %c0_7 = arith.constant 0 : index
    %c0_8 = arith.constant 0 : index
    %5 = vector.load %arg1[%c0_6, %c1, %c0_7, %c0_8] : memref<1x16x16x4xf32, #tpu.memory_space<vmem>>, vector<1x1x16x4xf32>
    %6 = vector.shape_cast %5 : vector<1x1x16x4xf32> to vector<16x4xf32>
    %c37 = arith.constant 37 : index
    %c0_9 = arith.constant 0 : index
    %7 = vector.load %arg9[%c37, %c0_9] : memref<342x4xf32, #tpu.memory_space<vmem>>, vector<16x4xf32>
    tpu.vector_store %arg9[%c37, %c0_9], %6 {strides = array<i32>} : memref<342x4xf32, #tpu.memory_space<vmem>>, vector<16x4xf32>,
    %c0_10 = arith.constant 0 : index
    %c2 = arith.constant 2 : index
    %c0_11 = arith.constant 0 : index
    %c0_12 = arith.constant 0 : index
    %8 = vector.load %arg1[%c0_10, %c2, %c0_11, %c0_12] : memref<1x16x16x4xf32, #tpu.memory_space<vmem>>, vector<1x1x16x4xf32>
    %9 = vector.shape_cast %8 : vector<1x1x16x4xf32> to vector<16x4xf32>
    %c55 = arith.constant 55 : index
    %c0_13 = arith.constant 0 : index
    %10 = vector.load %arg9[%c55, %c0_13] : memref<342x4xf32, #tpu.memory_space<vmem>>, vector<16x4xf32>
    tpu.vector_store %arg9[%c55, %c0_13], %9 {strides = array<i32>} : memref<342x4xf32, #tpu.memory_space<vmem>>, vector<16x4xf32>,
    %c0_14 = arith.constant 0 : index
    %c3 = arith.constant 3 : index
    %c0_15 = arith.constant 0 : index
    %c0_16 = arith.constant 0 : index
    %11 = vector.load %arg1[%c0_14, %c3, %c0_15, %c0_16] : memref<1x16x16x4xf32, #tpu.memory_space<vmem>>, vector<1x1x16x4xf32>
    %12 = vector.shape_cast %11 : vector<1x1x16x4xf32> to vector<16x4xf32>
    %c73 = arith.constant 73 : index
    %c0_17 = arith.constant 0 : index
    %13 = vector.load %arg9[%c73, %c0_17] : memref<342x4xf32, #tpu.memory_space<vmem>>, vector<16x4xf32>
    tpu.vector_store %arg9[%c73, %c0_17], %12 {strides = array<i32>} : memref<342x4xf32, #tpu.memory_space<vmem>>, vector<16x4xf32>,
    %c0_18 = arith.constant 0 : index
    %c4 = arith.constant 4 : index
    %c0_19 = arith.constant 0 : index
    %c0_20 = arith.constant 0 : index
    %14 = vector.load %arg1[%c0_18, %c4, %c0_19, %c0_20] : memref<1x16x16x4xf32, #tpu.memory_space<vmem>>, vector<1x1x16x4xf32>
    %15 = vector.shape_cast %14 : vector<1x1x16x4xf32> to vector<16x4xf32>
    %c91 = arith.constant 91 : index
    %c0_21 = arith.constant 0 : index
    %16 = vector.load %arg9[%c91, %c0_21] : memref<342x4xf32, #tpu.memory_space<vmem>>, vector<16x4xf32>
    tpu.vector_store %arg9[%c91, %c0_21], %15 {strides = array<i32>} : memref<342x4xf32, #tpu.memory_space<vmem>>, vector<16x4xf32>,
    %c0_22 = arith.constant 0 : index
    %c5 = arith.constant 5 : index
    %c0_23 = arith.constant 0 : index
    %c0_24 = arith.constant 0 : index
    %17 = vector.load %arg1[%c0_22, %c5, %c0_23, %c0_24] : memref<1x16x16x4xf32, #tpu.memory_space<vmem>>, vector<1x1x16x4xf32>
    %18 = vector.shape_cast %17 : vector<1x1x16x4xf32> to vector<16x4xf32>
    %c109 = arith.constant 109 : index
    %c0_25 = arith.constant 0 : index
    %19 = vector.load %arg9[%c109, %c0_25] : memref<342x4xf32, #tpu.memory_space<vmem>>, vector<16x4xf32>
    tpu.vector_store %arg9[%c109, %c0_25], %18 {strides = array<i32>} : memref<342x4xf32, #tpu.memory_space<vmem>>, vector<16x4xf32>,
    %c0_26 = arith.constant 0 : index
    %c6 = arith.constant 6 : index
    %c0_27 = arith.constant 0 : index
    %c0_28 = arith.constant 0 : index
    %20 = vector.load %arg1[%c0_26, %c6, %c0_27, %c0_28] : memref<1x16x16x4xf32, #tpu.memory_space<vmem>>, vector<1x1x16x4xf32>
    %21 = vector.shape_cast %20 : vector<1x1x16x4xf32> to vector<16x4xf32>
    %c127 = arith.constant 127 : index
    %c0_29 = arith.constant 0 : index
    %22 = vector.load %arg9[%c127, %c0_29] : memref<342x4xf32, #tpu.memory_space<vmem>>, vector<16x4xf32>
    tpu.vector_store %arg9[%c127, %c0_29], %21 {strides = array<i32>} : memref<342x4xf32, #tpu.memory_space<vmem>>, vector<16x4xf32>,
    %c0_30 = arith.constant 0 : index
    %c7 = arith.constant 7 : index
    %c0_31 = arith.constant 0 : index
    %c0_32 = arith.constant 0 : index
    %23 = vector.load %arg1[%c0_30, %c7, %c0_31, %c0_32] : memref<1x16x16x4xf32, #tpu.memory_space<vmem>>, vector<1x1x16x4xf32>
    %24 = vector.shape_cast %23 : vector<1x1x16x4xf32> to vector<16x4xf32>
    %c145 = arith.constant 145 : index
    %c0_33 = arith.constant 0 : index
    %25 = vector.load %arg9[%c145, %c0_33] : memref<342x4xf32, #tpu.memory_space<vmem>>, vector<16x4xf32>
    tpu.vector_store %arg9[%c145, %c0_33], %24 {strides = array<i32>} : memref<342x4xf32, #tpu.memory_space<vmem>>, vector<16x4xf32>,
    %c0_34 = arith.constant 0 : index
    %c8 = arith.constant 8 : index
    %c0_35 = arith.constant 0 : index
    %c0_36 = arith.constant 0 : index
    %26 = vector.load %arg1[%c0_34, %c8, %c0_35, %c0_36] : memref<1x16x16x4xf32, #tpu.memory_space<vmem>>, vector<1x1x16x4xf32>
    %27 = vector.shape_cast %26 : vector<1x1x16x4xf32> to vector<16x4xf32>
    %c163 = arith.constant 163 : index
    %c0_37 = arith.constant 0 : index
    %28 = vector.load %arg9[%c163, %c0_37] : memref<342x4xf32, #tpu.memory_space<vmem>>, vector<16x4xf32>
    tpu.vector_store %arg9[%c163, %c0_37], %27 {strides = array<i32>} : memref<342x4xf32, #tpu.memory_space<vmem>>, vector<16x4xf32>,
    %c0_38 = arith.constant 0 : index
    %c9 = arith.constant 9 : index
    %c0_39 = arith.constant 0 : index
    %c0_40 = arith.constant 0 : index
    %29 = vector.load %arg1[%c0_38, %c9, %c0_39, %c0_40] : memref<1x16x16x4xf32, #tpu.memory_space<vmem>>, vector<1x1x16x4xf32>
    %30 = vector.shape_cast %29 : vector<1x1x16x4xf32> to vector<16x4xf32>
    %c181 = arith.constant 181 : index
    %c0_41 = arith.constant 0 : index
    %31 = vector.load %arg9[%c181, %c0_41] : memref<342x4xf32, #tpu.memory_space<vmem>>, vector<16x4xf32>
    tpu.vector_store %arg9[%c181, %c0_41], %30 {strides = array<i32>} : memref<342x4xf32, #tpu.memory_space<vmem>>, vector<16x4xf32>,
    %c0_42 = arith.constant 0 : index
    %c10 = arith.constant 10 : index
    %c0_43 = arith.constant 0 : index
    %c0_44 = arith.constant 0 : index
    %32 = vector.load %arg1[%c0_42, %c10, %c0_43, %c0_44] : memref<1x16x16x4xf32, #tpu.memory_space<vmem>>, vector<1x1x16x4xf32>
    %33 = vector.shape_cast %32 : vector<1x1x16x4xf32> to vector<16x4xf32>
    %c199 = arith.constant 199 : index
    %c0_45 = arith.constant 0 : index
    %34 = vector.load %arg9[%c199, %c0_45] : memref<342x4xf32, #tpu.memory_space<vmem>>, vector<16x4xf32>
    tpu.vector_store %arg9[%c199, %c0_45], %33 {strides = array<i32>} : memref<342x4xf32, #tpu.memory_space<vmem>>, vector<16x4xf32>,
    %c0_46 = arith.constant 0 : index
    %c11 = arith.constant 11 : index
    %c0_47 = arith.constant 0 : index
    %c0_48 = arith.constant 0 : index
    %35 = vector.load %arg1[%c0_46, %c11, %c0_47, %c0_48] : memref<1x16x16x4xf32, #tpu.memory_space<vmem>>, vector<1x1x16x4xf32>
    %36 = vector.shape_cast %35 : vector<1x1x16x4xf32> to vector<16x4xf32>
    %c217 = arith.constant 217 : index
    %c0_49 = arith.constant 0 : index
    %37 = vector.load %arg9[%c217, %c0_49] : memref<342x4xf32, #tpu.memory_space<vmem>>, vector<16x4xf32>
    tpu.vector_store %arg9[%c217, %c0_49], %36 {strides = array<i32>} : memref<342x4xf32, #tpu.memory_space<vmem>>, vector<16x4xf32>,
    %c0_50 = arith.constant 0 : index
    %c12 = arith.constant 12 : index
    %c0_51 = arith.constant 0 : index
    %c0_52 = arith.constant 0 : index
    %38 = vector.load %arg1[%c0_50, %c12, %c0_51, %c0_52] : memref<1x16x16x4xf32, #tpu.memory_space<vmem>>, vector<1x1x16x4xf32>
    %39 = vector.shape_cast %38 : vector<1x1x16x4xf32> to vector<16x4xf32>
    %c235 = arith.constant 235 : index
    %c0_53 = arith.constant 0 : index
    %40 = vector.load %arg9[%c235, %c0_53] : memref<342x4xf32, #tpu.memory_space<vmem>>, vector<16x4xf32>
    tpu.vector_store %arg9[%c235, %c0_53], %39 {strides = array<i32>} : memref<342x4xf32, #tpu.memory_space<vmem>>, vector<16x4xf32>,
    %c0_54 = arith.constant 0 : index
    %c13 = arith.constant 13 : index
    %c0_55 = arith.constant 0 : index
    %c0_56 = arith.constant 0 : index
    %41 = vector.load %arg1[%c0_54, %c13, %c0_55, %c0_56] : memref<1x16x16x4xf32, #tpu.memory_space<vmem>>, vector<1x1x16x4xf32>
    %42 = vector.shape_cast %41 : vector<1x1x16x4xf32> to vector<16x4xf32>
    %c253 = arith.constant 253 : index
    %c0_57 = arith.constant 0 : index
    %43 = vector.load %arg9[%c253, %c0_57] : memref<342x4xf32, #tpu.memory_space<vmem>>, vector<16x4xf32>
    tpu.vector_store %arg9[%c253, %c0_57], %42 {strides = array<i32>} : memref<342x4xf32, #tpu.memory_space<vmem>>, vector<16x4xf32>,
    %c0_58 = arith.constant 0 : index
    %c14 = arith.constant 14 : index
    %c0_59 = arith.constant 0 : index
    %c0_60 = arith.constant 0 : index
    %44 = vector.load %arg1[%c0_58, %c14, %c0_59, %c0_60] : memref<1x16x16x4xf32, #tpu.memory_space<vmem>>, vector<1x1x16x4xf32>
    %45 = vector.shape_cast %44 : vector<1x1x16x4xf32> to vector<16x4xf32>
    %c271 = arith.constant 271 : index
    %c0_61 = arith.constant 0 : index
    %46 = vector.load %arg9[%c271, %c0_61] : memref<342x4xf32, #tpu.memory_space<vmem>>, vector<16x4xf32>
    tpu.vector_store %arg9[%c271, %c0_61], %45 {strides = array<i32>} : memref<342x4xf32, #tpu.memory_space<vmem>>, vector<16x4xf32>,
    %c0_62 = arith.constant 0 : index
    %c15 = arith.constant 15 : index
    %c0_63 = arith.constant 0 : index
    %c0_64 = arith.constant 0 : index
    %47 = vector.load %arg1[%c0_62, %c15, %c0_63, %c0_64] : memref<1x16x16x4xf32, #tpu.memory_space<vmem>>, vector<1x1x16x4xf32>
    %48 = vector.shape_cast %47 : vector<1x1x16x4xf32> to vector<16x4xf32>
    %c289 = arith.constant 289 : index
    %c0_65 = arith.constant 0 : index
    %49 = vector.load %arg9[%c289, %c0_65] : memref<342x4xf32, #tpu.memory_space<vmem>>, vector<16x4xf32>
    tpu.vector_store %arg9[%c289, %c0_65], %48 {strides = array<i32>} : memref<342x4xf32, #tpu.memory_space<vmem>>, vector<16x4xf32>,
    %c0_66 = arith.constant 0 : index
    %c0_67 = arith.constant 0 : index
    %50 = vector.load %arg9[%c0_66, %c0_67] : memref<342x4xf32, #tpu.memory_space<vmem>>, vector<288x4xf32>
    %c1_68 = arith.constant 1 : index
    %c0_69 = arith.constant 0 : index
    %51 = vector.load %arg9[%c1_68, %c0_69] : memref<342x4xf32, #tpu.memory_space<vmem>>, vector<288x4xf32>
    %c2_70 = arith.constant 2 : index
    %c0_71 = arith.constant 0 : index
    %52 = vector.load %arg9[%c2_70, %c0_71] : memref<342x4xf32, #tpu.memory_space<vmem>>, vector<288x4xf32>
    %c18 = arith.constant 18 : index
    %c0_72 = arith.constant 0 : index
    %53 = vector.load %arg9[%c18, %c0_72] : memref<342x4xf32, #tpu.memory_space<vmem>>, vector<288x4xf32>
    %c19_73 = arith.constant 19 : index
    %c0_74 = arith.constant 0 : index
    %54 = vector.load %arg9[%c19_73, %c0_74] : memref<342x4xf32, #tpu.memory_space<vmem>>, vector<288x4xf32>
    %c20 = arith.constant 20 : index
    %c0_75 = arith.constant 0 : index
    %55 = vector.load %arg9[%c20, %c0_75] : memref<342x4xf32, #tpu.memory_space<vmem>>, vector<288x4xf32>
    %c36 = arith.constant 36 : index
    %c0_76 = arith.constant 0 : index
    %56 = vector.load %arg9[%c36, %c0_76] : memref<342x4xf32, #tpu.memory_space<vmem>>, vector<288x4xf32>
    %c37_77 = arith.constant 37 : index
    %c0_78 = arith.constant 0 : index
    %57 = vector.load %arg9[%c37_77, %c0_78] : memref<342x4xf32, #tpu.memory_space<vmem>>, vector<288x4xf32>
    %c38 = arith.constant 38 : index
    %c0_79 = arith.constant 0 : index
    %58 = vector.load %arg9[%c38, %c0_79] : memref<342x4xf32, #tpu.memory_space<vmem>>, vector<288x4xf32>
    %59 = tpu.concatenate %50, %51, %52, %53, %54, %55, %56, %57, %58 in 1 : vector<288x4xf32>, vector<288x4xf32>, vector<288x4xf32>, vector<288x4xf32>, vector<288x4xf32>, vector<288x4xf32>, vector<288x4xf32>, vector<288x4xf32>, vector<288x4xf32> -> vector<288x36xf32>
    %60 = arith.truncf %59 : vector<288x36xf32> to vector<288x36xbf16>
    %c0_80 = arith.constant 0 : index
    %c0_81 = arith.constant 0 : index
    %61 = vector.load %arg2[%c0_80, %c0_81] : memref<36x32xbf16, #tpu.memory_space<vmem>>, vector<36x32xbf16>
    %cst_82 = arith.constant dense<0.000000e+00> : vector<288x32xf32>
    %62 = tpu.matmul %60, %61, %cst_82 {dimension_numbers = #tpu.dot_dimension_numbers<[1], [0], [0], [1], [0, 0, 1, 1], [], []>} : vector<288x36xbf16>, vector<36x32xbf16>, vector<288x32xf32> -> vector<288x32xf32>
    %c0_83 = arith.constant 0 : index
    %c0_84 = arith.constant 0 : index
    %63 = vector.load %arg3[%c0_83, %c0_84] : memref<1x32xf32, #tpu.memory_space<vmem>>, vector<1x32xf32>
    %64 = vector.broadcast %63 : vector<1x32xf32> to vector<288x32xf32>
    %65 = arith.addf %62, %64 : vector<288x32xf32>
    %cst_85 = arith.constant 0.000000e+00 : f32
    %66 = vector.broadcast %cst_85 : f32 to vector<288x32xf32>
    %67 = arith.maximumf %65, %66 : vector<288x32xf32>
    %c0_86 = arith.constant 0 : index
    %c0_87 = arith.constant 0 : index
    %68 = vector.load %arg7[%c0_86, %c0_87] : memref<1x288xf32, #tpu.memory_space<vmem>>, vector<1x288xf32>
    %cst_88 = arith.constant dense<0.000000e+00> : vector<1x32xf32>
    %69 = tpu.matmul %68, %67, %cst_88 {dimension_numbers = #tpu.dot_dimension_numbers<[1], [0], [0], [1], [0, 0, 1, 1], [], []>} : vector<1x288xf32>, vector<288x32xf32>, vector<1x32xf32> -> vector<1x32xf32>
    %70 = arith.mulf %67, %67 : vector<288x32xf32>
    %cst_89 = arith.constant dense<0.000000e+00> : vector<1x32xf32>
    %71 = tpu.matmul %68, %70, %cst_89 {dimension_numbers = #tpu.dot_dimension_numbers<[1], [0], [0], [1], [0, 0, 1, 1], [], []>} : vector<1x288xf32>, vector<288x32xf32>, vector<1x32xf32> -> vector<1x32xf32>
    %c0_90 = arith.constant 0 : index
    %c0_91 = arith.constant 0 : index
    %72 = vector.load %arg6[%c0_90, %c0_91] : memref<32x32xf32, #tpu.memory_space<vmem>>, vector<32x32xf32>
    %cst_92 = arith.constant dense<0.000000e+00> : vector<1x32xf32>
    %73 = tpu.matmul %69, %72, %cst_92 {dimension_numbers = #tpu.dot_dimension_numbers<[1], [0], [0], [1], [0, 0, 1, 1], [], []>} : vector<1x32xf32>, vector<32x32xf32>, vector<1x32xf32> -> vector<1x32xf32>
    %cst_93 = arith.constant 3.906250e-03 : f32
    %74 = vector.broadcast %cst_93 : f32 to vector<1x32xf32>
    %75 = arith.mulf %73, %74 : vector<1x32xf32>
    %c0_94 = arith.constant 0 : index
    %c0_95 = arith.constant 0 : index
    %76 = vector.load %arg6[%c0_94, %c0_95] : memref<32x32xf32, #tpu.memory_space<vmem>>, vector<32x32xf32>
    %cst_96 = arith.constant dense<0.000000e+00> : vector<1x32xf32>
    %77 = tpu.matmul %71, %76, %cst_96 {dimension_numbers = #tpu.dot_dimension_numbers<[1], [0], [0], [1], [0, 0, 1, 1], [], []>} : vector<1x32xf32>, vector<32x32xf32>, vector<1x32xf32> -> vector<1x32xf32>
    %cst_97 = arith.constant 3.906250e-03 : f32
    %78 = vector.broadcast %cst_97 : f32 to vector<1x32xf32>
    %79 = arith.mulf %77, %78 : vector<1x32xf32>
    %80 = arith.mulf %75, %75 : vector<1x32xf32>
    %81 = arith.subf %79, %80 : vector<1x32xf32>
    %cst_98 = arith.constant 0.000000e+00 : f32
    %82 = vector.broadcast %cst_98 : f32 to vector<1x32xf32>
    %83 = arith.maximumf %81, %82 : vector<1x32xf32>
    %cst_99 = arith.constant 9.99999974E-6 : f32
    %84 = vector.broadcast %cst_99 : f32 to vector<1x32xf32>
    %85 = arith.addf %83, %84 : vector<1x32xf32>
    %86 = math.rsqrt %85 : vector<1x32xf32>
    %c0_100 = arith.constant 0 : index
    %c0_101 = arith.constant 0 : index
    %87 = vector.load %arg4[%c0_100, %c0_101] : memref<1x32xf32, #tpu.memory_space<vmem>>, vector<1x32xf32>
    %88 = arith.mulf %87, %86 : vector<1x32xf32>
    %c0_102 = arith.constant 0 : index
    %c0_103 = arith.constant 0 : index
    %89 = vector.load %arg5[%c0_102, %c0_103] : memref<1x32xf32, #tpu.memory_space<vmem>>, vector<1x32xf32>
    %90 = arith.mulf %75, %88 : vector<1x32xf32>
    %91 = arith.subf %89, %90 : vector<1x32xf32>
    %92 = vector.broadcast %88 : vector<1x32xf32> to vector<288x32xf32>
    %93 = arith.mulf %67, %92 : vector<288x32xf32>
    %94 = vector.broadcast %91 : vector<1x32xf32> to vector<288x32xf32>
    %95 = arith.addf %93, %94 : vector<288x32xf32>
    %96 = vector.extract_strided_slice %95 {offsets = [0, 0], sizes = [16, 32], strides = [1, 1]} : vector<288x32xf32> to vector<16x32xf32>
    %c0_104 = arith.constant 0 : index
    %c0_105 = arith.constant 0 : index
    %c0_106 = arith.constant 0 : index
    %c0_107 = arith.constant 0 : index
    %97 = vector.load %arg8[%c0_104, %c0_105, %c0_106, %c0_107] : memref<1x16x16x32xf32, #tpu.memory_space<vmem>>, vector<1x1x16x32xf32>
    %98 = vector.shape_cast %97 : vector<1x1x16x32xf32> to vector<16x32xf32>
    %99 = vector.shape_cast %96 : vector<16x32xf32> to vector<1x1x16x32xf32>
    tpu.vector_store %arg8[%c0_104, %c0_105, %c0_106, %c0_107], %99 {strides = array<i32>} : memref<1x16x16x32xf32, #tpu.memory_space<vmem>>, vector<1x1x16x32xf32>,
    %100 = vector.extract_strided_slice %95 {offsets = [18, 0], sizes = [16, 32], strides = [1, 1]} : vector<288x32xf32> to vector<16x32xf32>
    %c0_108 = arith.constant 0 : index
    %c1_109 = arith.constant 1 : index
    %c0_110 = arith.constant 0 : index
    %c0_111 = arith.constant 0 : index
    %101 = vector.load %arg8[%c0_108, %c1_109, %c0_110, %c0_111] : memref<1x16x16x32xf32, #tpu.memory_space<vmem>>, vector<1x1x16x32xf32>
    %102 = vector.shape_cast %101 : vector<1x1x16x32xf32> to vector<16x32xf32>
    %103 = vector.shape_cast %100 : vector<16x32xf32> to vector<1x1x16x32xf32>
    tpu.vector_store %arg8[%c0_108, %c1_109, %c0_110, %c0_111], %103 {strides = array<i32>} : memref<1x16x16x32xf32, #tpu.memory_space<vmem>>, vector<1x1x16x32xf32>,
    %104 = vector.extract_strided_slice %95 {offsets = [36, 0], sizes = [16, 32], strides = [1, 1]} : vector<288x32xf32> to vector<16x32xf32>
    %c0_112 = arith.constant 0 : index
    %c2_113 = arith.constant 2 : index
    %c0_114 = arith.constant 0 : index
    %c0_115 = arith.constant 0 : index
    %105 = vector.load %arg8[%c0_112, %c2_113, %c0_114, %c0_115] : memref<1x16x16x32xf32, #tpu.memory_space<vmem>>, vector<1x1x16x32xf32>
    %106 = vector.shape_cast %105 : vector<1x1x16x32xf32> to vector<16x32xf32>
    %107 = vector.shape_cast %104 : vector<16x32xf32> to vector<1x1x16x32xf32>
    tpu.vector_store %arg8[%c0_112, %c2_113, %c0_114, %c0_115], %107 {strides = array<i32>} : memref<1x16x16x32xf32, #tpu.memory_space<vmem>>, vector<1x1x16x32xf32>,
    %108 = vector.extract_strided_slice %95 {offsets = [54, 0], sizes = [16, 32], strides = [1, 1]} : vector<288x32xf32> to vector<16x32xf32>
    %c0_116 = arith.constant 0 : index
    %c3_117 = arith.constant 3 : index
    %c0_118 = arith.constant 0 : index
    %c0_119 = arith.constant 0 : index
    %109 = vector.load %arg8[%c0_116, %c3_117, %c0_118, %c0_119] : memref<1x16x16x32xf32, #tpu.memory_space<vmem>>, vector<1x1x16x32xf32>
    %110 = vector.shape_cast %109 : vector<1x1x16x32xf32> to vector<16x32xf32>
    %111 = vector.shape_cast %108 : vector<16x32xf32> to vector<1x1x16x32xf32>
    tpu.vector_store %arg8[%c0_116, %c3_117, %c0_118, %c0_119], %111 {strides = array<i32>} : memref<1x16x16x32xf32, #tpu.memory_space<vmem>>, vector<1x1x16x32xf32>,
    %112 = vector.extract_strided_slice %95 {offsets = [72, 0], sizes = [16, 32], strides = [1, 1]} : vector<288x32xf32> to vector<16x32xf32>
    %c0_120 = arith.constant 0 : index
    %c4_121 = arith.constant 4 : index
    %c0_122 = arith.constant 0 : index
    %c0_123 = arith.constant 0 : index
    %113 = vector.load %arg8[%c0_120, %c4_121, %c0_122, %c0_123] : memref<1x16x16x32xf32, #tpu.memory_space<vmem>>, vector<1x1x16x32xf32>
    %114 = vector.shape_cast %113 : vector<1x1x16x32xf32> to vector<16x32xf32>
    %115 = vector.shape_cast %112 : vector<16x32xf32> to vector<1x1x16x32xf32>
    tpu.vector_store %arg8[%c0_120, %c4_121, %c0_122, %c0_123], %115 {strides = array<i32>} : memref<1x16x16x32xf32, #tpu.memory_space<vmem>>, vector<1x1x16x32xf32>,
    %116 = vector.extract_strided_slice %95 {offsets = [90, 0], sizes = [16, 32], strides = [1, 1]} : vector<288x32xf32> to vector<16x32xf32>
    %c0_124 = arith.constant 0 : index
    %c5_125 = arith.constant 5 : index
    %c0_126 = arith.constant 0 : index
    %c0_127 = arith.constant 0 : index
    %117 = vector.load %arg8[%c0_124, %c5_125, %c0_126, %c0_127] : memref<1x16x16x32xf32, #tpu.memory_space<vmem>>, vector<1x1x16x32xf32>
    %118 = vector.shape_cast %117 : vector<1x1x16x32xf32> to vector<16x32xf32>
    %119 = vector.shape_cast %116 : vector<16x32xf32> to vector<1x1x16x32xf32>
    tpu.vector_store %arg8[%c0_124, %c5_125, %c0_126, %c0_127], %119 {strides = array<i32>} : memref<1x16x16x32xf32, #tpu.memory_space<vmem>>, vector<1x1x16x32xf32>,
    %120 = vector.extract_strided_slice %95 {offsets = [108, 0], sizes = [16, 32], strides = [1, 1]} : vector<288x32xf32> to vector<16x32xf32>
    %c0_128 = arith.constant 0 : index
    %c6_129 = arith.constant 6 : index
    %c0_130 = arith.constant 0 : index
    %c0_131 = arith.constant 0 : index
    %121 = vector.load %arg8[%c0_128, %c6_129, %c0_130, %c0_131] : memref<1x16x16x32xf32, #tpu.memory_space<vmem>>, vector<1x1x16x32xf32>
    %122 = vector.shape_cast %121 : vector<1x1x16x32xf32> to vector<16x32xf32>
    %123 = vector.shape_cast %120 : vector<16x32xf32> to vector<1x1x16x32xf32>
    tpu.vector_store %arg8[%c0_128, %c6_129, %c0_130, %c0_131], %123 {strides = array<i32>} : memref<1x16x16x32xf32, #tpu.memory_space<vmem>>, vector<1x1x16x32xf32>,
    %124 = vector.extract_strided_slice %95 {offsets = [126, 0], sizes = [16, 32], strides = [1, 1]} : vector<288x32xf32> to vector<16x32xf32>
    %c0_132 = arith.constant 0 : index
    %c7_133 = arith.constant 7 : index
    %c0_134 = arith.constant 0 : index
    %c0_135 = arith.constant 0 : index
    %125 = vector.load %arg8[%c0_132, %c7_133, %c0_134, %c0_135] : memref<1x16x16x32xf32, #tpu.memory_space<vmem>>, vector<1x1x16x32xf32>
    %126 = vector.shape_cast %125 : vector<1x1x16x32xf32> to vector<16x32xf32>
    %127 = vector.shape_cast %124 : vector<16x32xf32> to vector<1x1x16x32xf32>
    tpu.vector_store %arg8[%c0_132, %c7_133, %c0_134, %c0_135], %127 {strides = array<i32>} : memref<1x16x16x32xf32, #tpu.memory_space<vmem>>, vector<1x1x16x32xf32>,
    %128 = vector.extract_strided_slice %95 {offsets = [144, 0], sizes = [16, 32], strides = [1, 1]} : vector<288x32xf32> to vector<16x32xf32>
    %c0_136 = arith.constant 0 : index
    %c8_137 = arith.constant 8 : index
    %c0_138 = arith.constant 0 : index
    %c0_139 = arith.constant 0 : index
    %129 = vector.load %arg8[%c0_136, %c8_137, %c0_138, %c0_139] : memref<1x16x16x32xf32, #tpu.memory_space<vmem>>, vector<1x1x16x32xf32>
    %130 = vector.shape_cast %129 : vector<1x1x16x32xf32> to vector<16x32xf32>
    %131 = vector.shape_cast %128 : vector<16x32xf32> to vector<1x1x16x32xf32>
    tpu.vector_store %arg8[%c0_136, %c8_137, %c0_138, %c0_139], %131 {strides = array<i32>} : memref<1x16x16x32xf32, #tpu.memory_space<vmem>>, vector<1x1x16x32xf32>,
    %132 = vector.extract_strided_slice %95 {offsets = [162, 0], sizes = [16, 32], strides = [1, 1]} : vector<288x32xf32> to vector<16x32xf32>
    %c0_140 = arith.constant 0 : index
    %c9_141 = arith.constant 9 : index
    %c0_142 = arith.constant 0 : index
    %c0_143 = arith.constant 0 : index
    %133 = vector.load %arg8[%c0_140, %c9_141, %c0_142, %c0_143] : memref<1x16x16x32xf32, #tpu.memory_space<vmem>>, vector<1x1x16x32xf32>
    %134 = vector.shape_cast %133 : vector<1x1x16x32xf32> to vector<16x32xf32>
    %135 = vector.shape_cast %132 : vector<16x32xf32> to vector<1x1x16x32xf32>
    tpu.vector_store %arg8[%c0_140, %c9_141, %c0_142, %c0_143], %135 {strides = array<i32>} : memref<1x16x16x32xf32, #tpu.memory_space<vmem>>, vector<1x1x16x32xf32>,
    %136 = vector.extract_strided_slice %95 {offsets = [180, 0], sizes = [16, 32], strides = [1, 1]} : vector<288x32xf32> to vector<16x32xf32>
    %c0_144 = arith.constant 0 : index
    %c10_145 = arith.constant 10 : index
    %c0_146 = arith.constant 0 : index
    %c0_147 = arith.constant 0 : index
    %137 = vector.load %arg8[%c0_144, %c10_145, %c0_146, %c0_147] : memref<1x16x16x32xf32, #tpu.memory_space<vmem>>, vector<1x1x16x32xf32>
    %138 = vector.shape_cast %137 : vector<1x1x16x32xf32> to vector<16x32xf32>
    %139 = vector.shape_cast %136 : vector<16x32xf32> to vector<1x1x16x32xf32>
    tpu.vector_store %arg8[%c0_144, %c10_145, %c0_146, %c0_147], %139 {strides = array<i32>} : memref<1x16x16x32xf32, #tpu.memory_space<vmem>>, vector<1x1x16x32xf32>,
    %140 = vector.extract_strided_slice %95 {offsets = [198, 0], sizes = [16, 32], strides = [1, 1]} : vector<288x32xf32> to vector<16x32xf32>
    %c0_148 = arith.constant 0 : index
    %c11_149 = arith.constant 11 : index
    %c0_150 = arith.constant 0 : index
    %c0_151 = arith.constant 0 : index
    %141 = vector.load %arg8[%c0_148, %c11_149, %c0_150, %c0_151] : memref<1x16x16x32xf32, #tpu.memory_space<vmem>>, vector<1x1x16x32xf32>
    %142 = vector.shape_cast %141 : vector<1x1x16x32xf32> to vector<16x32xf32>
    %143 = vector.shape_cast %140 : vector<16x32xf32> to vector<1x1x16x32xf32>
    tpu.vector_store %arg8[%c0_148, %c11_149, %c0_150, %c0_151], %143 {strides = array<i32>} : memref<1x16x16x32xf32, #tpu.memory_space<vmem>>, vector<1x1x16x32xf32>,
    %144 = vector.extract_strided_slice %95 {offsets = [216, 0], sizes = [16, 32], strides = [1, 1]} : vector<288x32xf32> to vector<16x32xf32>
    %c0_152 = arith.constant 0 : index
    %c12_153 = arith.constant 12 : index
    %c0_154 = arith.constant 0 : index
    %c0_155 = arith.constant 0 : index
    %145 = vector.load %arg8[%c0_152, %c12_153, %c0_154, %c0_155] : memref<1x16x16x32xf32, #tpu.memory_space<vmem>>, vector<1x1x16x32xf32>
    %146 = vector.shape_cast %145 : vector<1x1x16x32xf32> to vector<16x32xf32>
    %147 = vector.shape_cast %144 : vector<16x32xf32> to vector<1x1x16x32xf32>
    tpu.vector_store %arg8[%c0_152, %c12_153, %c0_154, %c0_155], %147 {strides = array<i32>} : memref<1x16x16x32xf32, #tpu.memory_space<vmem>>, vector<1x1x16x32xf32>,
    %148 = vector.extract_strided_slice %95 {offsets = [234, 0], sizes = [16, 32], strides = [1, 1]} : vector<288x32xf32> to vector<16x32xf32>
    %c0_156 = arith.constant 0 : index
    %c13_157 = arith.constant 13 : index
    %c0_158 = arith.constant 0 : index
    %c0_159 = arith.constant 0 : index
    %149 = vector.load %arg8[%c0_156, %c13_157, %c0_158, %c0_159] : memref<1x16x16x32xf32, #tpu.memory_space<vmem>>, vector<1x1x16x32xf32>
    %150 = vector.shape_cast %149 : vector<1x1x16x32xf32> to vector<16x32xf32>
    %151 = vector.shape_cast %148 : vector<16x32xf32> to vector<1x1x16x32xf32>
    tpu.vector_store %arg8[%c0_156, %c13_157, %c0_158, %c0_159], %151 {strides = array<i32>} : memref<1x16x16x32xf32, #tpu.memory_space<vmem>>, vector<1x1x16x32xf32>,
    %152 = vector.extract_strided_slice %95 {offsets = [252, 0], sizes = [16, 32], strides = [1, 1]} : vector<288x32xf32> to vector<16x32xf32>
    %c0_160 = arith.constant 0 : index
    %c14_161 = arith.constant 14 : index
    %c0_162 = arith.constant 0 : index
    %c0_163 = arith.constant 0 : index
    %153 = vector.load %arg8[%c0_160, %c14_161, %c0_162, %c0_163] : memref<1x16x16x32xf32, #tpu.memory_space<vmem>>, vector<1x1x16x32xf32>
    %154 = vector.shape_cast %153 : vector<1x1x16x32xf32> to vector<16x32xf32>
    %155 = vector.shape_cast %152 : vector<16x32xf32> to vector<1x1x16x32xf32>
    tpu.vector_store %arg8[%c0_160, %c14_161, %c0_162, %c0_163], %155 {strides = array<i32>} : memref<1x16x16x32xf32, #tpu.memory_space<vmem>>, vector<1x1x16x32xf32>,
    %156 = vector.extract_strided_slice %95 {offsets = [270, 0], sizes = [16, 32], strides = [1, 1]} : vector<288x32xf32> to vector<16x32xf32>
    %c0_164 = arith.constant 0 : index
    %c15_165 = arith.constant 15 : index
    %c0_166 = arith.constant 0 : index
    %c0_167 = arith.constant 0 : index
    %157 = vector.load %arg8[%c0_164, %c15_165, %c0_166, %c0_167] : memref<1x16x16x32xf32, #tpu.memory_space<vmem>>, vector<1x1x16x32xf32>
    %158 = vector.shape_cast %157 : vector<1x1x16x32xf32> to vector<16x32xf32>
    %159 = vector.shape_cast %156 : vector<16x32xf32> to vector<1x1x16x32xf32>
    tpu.vector_store %arg8[%c0_164, %c15_165, %c0_166, %c0_167], %159 {strides = array<i32>} : memref<1x16x16x32xf32, #tpu.memory_space<vmem>>, vector<1x1x16x32xf32>,
    return
  }
  func.func @transform_0(%arg0: i32) -> (i32, i32, i32, i32) {
    %c0_i32 = arith.constant 0 : i32
    %c0_i32_0 = arith.constant 0 : i32
    %c0_i32_1 = arith.constant 0 : i32
    %c0_i32_2 = arith.constant 0 : i32
    return %arg0, %c0_i32, %c0_i32_0, %c0_i32_1 : i32, i32, i32, i32
  }
  func.func @transform_1(%arg0: i32) -> (i32, i32) {
    %c0_i32 = arith.constant 0 : i32
    %c0_i32_0 = arith.constant 0 : i32
    %c0_i32_1 = arith.constant 0 : i32
    return %c0_i32, %c0_i32_0 : i32, i32
  }
  func.func @transform_2(%arg0: i32) -> (i32, i32) {
    %c0_i32 = arith.constant 0 : i32
    %c0_i32_0 = arith.constant 0 : i32
    %c0_i32_1 = arith.constant 0 : i32
    return %c0_i32, %c0_i32_0 : i32, i32
  }
  func.func @transform_3(%arg0: i32) -> (i32, i32) {
    %c0_i32 = arith.constant 0 : i32
    %c0_i32_0 = arith.constant 0 : i32
    %c0_i32_1 = arith.constant 0 : i32
    return %c0_i32, %c0_i32_0 : i32, i32
  }
  func.func @transform_4(%arg0: i32) -> (i32, i32) {
    %c0_i32 = arith.constant 0 : i32
    %c0_i32_0 = arith.constant 0 : i32
    %c0_i32_1 = arith.constant 0 : i32
    return %c0_i32, %c0_i32_0 : i32, i32
  }
  func.func @transform_5(%arg0: i32) -> (i32, i32) {
    %c0_i32 = arith.constant 0 : i32
    %c0_i32_0 = arith.constant 0 : i32
    %c0_i32_1 = arith.constant 0 : i32
    return %c0_i32, %c0_i32_0 : i32, i32
  }
  func.func @transform_6(%arg0: i32) -> (i32, i32) {
    %c0_i32 = arith.constant 0 : i32
    %c0_i32_0 = arith.constant 0 : i32
    %c0_i32_1 = arith.constant 0 : i32
    return %c0_i32, %c0_i32_0 : i32, i32
  }
  func.func @transform_7(%arg0: i32) -> (i32, i32, i32, i32) {
    %c0_i32 = arith.constant 0 : i32
    %c0_i32_0 = arith.constant 0 : i32
    %c0_i32_1 = arith.constant 0 : i32
    %c0_i32_2 = arith.constant 0 : i32
    return %arg0, %c0_i32, %c0_i32_0, %c0_i32_1 : i32, i32, i32, i32
  }
}

module attributes {stable_mosaic.version = 11 : i64} {
  func.func @kernel(%arg0: i32, %arg1: memref<1x16x8x64xf32, #tpu.memory_space<vmem>>, %arg2: memref<288x32xbf16, #tpu.memory_space<vmem>>, %arg3: memref<1x32xf32, #tpu.memory_space<vmem>>, %arg4: memref<1x32xf32, #tpu.memory_space<vmem>>, %arg5: memref<1x32xf32, #tpu.memory_space<vmem>>, %arg6: memref<32x32xf32, #tpu.memory_space<vmem>>, %arg7: memref<1x72xf32, #tpu.memory_space<vmem>>, %arg8: memref<1x8x8x32xf32, #tpu.memory_space<vmem>>, %arg9: memref<90x128xf32, #tpu.memory_space<vmem>>) attributes {dimension_semantics = [#tpu.dimension_semantics<parallel>], iteration_bounds = array<i64: 2>, scalar_prefetch = 0 : i64, scratch_operands = 1 : i64, tpu.core_type = #tpu.core_type<tc>, window_params = [{transform_indices = @transform_0, window_bounds = array<i64: 1, 16, 8, 64>}, {pipeline_mode = #tpu.pipeline_mode<synchronous>, transform_indices = @transform_1, window_bounds = array<i64: 288, 32>}, {pipeline_mode = #tpu.pipeline_mode<synchronous>, transform_indices = @transform_2, window_bounds = array<i64: 1, 32>}, {pipeline_mode = #tpu.pipeline_mode<synchronous>, transform_indices = @transform_3, window_bounds = array<i64: 1, 32>}, {pipeline_mode = #tpu.pipeline_mode<synchronous>, transform_indices = @transform_4, window_bounds = array<i64: 1, 32>}, {pipeline_mode = #tpu.pipeline_mode<synchronous>, transform_indices = @transform_5, window_bounds = array<i64: 32, 32>}, {pipeline_mode = #tpu.pipeline_mode<synchronous>, transform_indices = @transform_6, window_bounds = array<i64: 1, 72>}, {transform_indices = @transform_7, window_bounds = array<i64: 1, 8, 8, 32>}]} {
    %cst = arith.constant 0.000000e+00 : f32
    %0 = vector.broadcast %cst : f32 to vector<90x128xf32>
    %c0 = arith.constant 0 : index
    %c0_0 = arith.constant 0 : index
    %1 = vector.load %arg9[%c0, %c0_0] : memref<90x128xf32, #tpu.memory_space<vmem>>, vector<90x128xf32>
    tpu.vector_store %arg9[%c0, %c0_0], %0 {strides = array<i32>} : memref<90x128xf32, #tpu.memory_space<vmem>>, vector<90x128xf32>,
    %c0_1 = arith.constant 0 : index
    %c0_2 = arith.constant 0 : index
    %c0_3 = arith.constant 0 : index
    %c0_4 = arith.constant 0 : index
    %2 = vector.load %arg1[%c0_1, %c0_2, %c0_3, %c0_4] : memref<1x16x8x64xf32, #tpu.memory_space<vmem>>, vector<1x1x8x64xf32>
    %3 = vector.shape_cast %2 : vector<1x1x8x64xf32> to vector<8x64xf32>
    %4 = vector.extract_strided_slice %3 {offsets = [0, 0], sizes = [8, 32], strides = [1, 1]} : vector<8x64xf32> to vector<8x32xf32>
    %c0_5 = arith.constant 0 : index
    %c96 = arith.constant 96 : index
    %5 = vector.load %arg9[%c0_5, %c96] : memref<90x128xf32, #tpu.memory_space<vmem>>, vector<8x32xf32>
    tpu.vector_store %arg9[%c0_5, %c96], %4 {strides = array<i32>} : memref<90x128xf32, #tpu.memory_space<vmem>>, vector<8x32xf32>,
    %6 = vector.extract_strided_slice %3 {offsets = [0, 32], sizes = [8, 32], strides = [1, 1]} : vector<8x64xf32> to vector<8x32xf32>
    %c1 = arith.constant 1 : index
    %c64 = arith.constant 64 : index
    %7 = vector.load %arg9[%c1, %c64] : memref<90x128xf32, #tpu.memory_space<vmem>>, vector<8x32xf32>
    tpu.vector_store %arg9[%c1, %c64], %6 {strides = array<i32>} : memref<90x128xf32, #tpu.memory_space<vmem>>, vector<8x32xf32>,
    %c0_6 = arith.constant 0 : index
    %c1_7 = arith.constant 1 : index
    %c0_8 = arith.constant 0 : index
    %c0_9 = arith.constant 0 : index
    %8 = vector.load %arg1[%c0_6, %c1_7, %c0_8, %c0_9] : memref<1x16x8x64xf32, #tpu.memory_space<vmem>>, vector<1x1x8x64xf32>
    %9 = vector.shape_cast %8 : vector<1x1x8x64xf32> to vector<8x64xf32>
    %10 = vector.extract_strided_slice %9 {offsets = [0, 0], sizes = [8, 32], strides = [1, 1]} : vector<8x64xf32> to vector<8x32xf32>
    %c9 = arith.constant 9 : index
    %c32 = arith.constant 32 : index
    %11 = vector.load %arg9[%c9, %c32] : memref<90x128xf32, #tpu.memory_space<vmem>>, vector<8x32xf32>
    tpu.vector_store %arg9[%c9, %c32], %10 {strides = array<i32>} : memref<90x128xf32, #tpu.memory_space<vmem>>, vector<8x32xf32>,
    %12 = vector.extract_strided_slice %9 {offsets = [0, 32], sizes = [8, 32], strides = [1, 1]} : vector<8x64xf32> to vector<8x32xf32>
    %c10 = arith.constant 10 : index
    %c0_10 = arith.constant 0 : index
    %13 = vector.load %arg9[%c10, %c0_10] : memref<90x128xf32, #tpu.memory_space<vmem>>, vector<8x32xf32>
    tpu.vector_store %arg9[%c10, %c0_10], %12 {strides = array<i32>} : memref<90x128xf32, #tpu.memory_space<vmem>>, vector<8x32xf32>,
    %c0_11 = arith.constant 0 : index
    %c2 = arith.constant 2 : index
    %c0_12 = arith.constant 0 : index
    %c0_13 = arith.constant 0 : index
    %14 = vector.load %arg1[%c0_11, %c2, %c0_12, %c0_13] : memref<1x16x8x64xf32, #tpu.memory_space<vmem>>, vector<1x1x8x64xf32>
    %15 = vector.shape_cast %14 : vector<1x1x8x64xf32> to vector<8x64xf32>
    %16 = vector.extract_strided_slice %15 {offsets = [0, 0], sizes = [8, 32], strides = [1, 1]} : vector<8x64xf32> to vector<8x32xf32>
    %c9_14 = arith.constant 9 : index
    %c96_15 = arith.constant 96 : index
    %17 = vector.load %arg9[%c9_14, %c96_15] : memref<90x128xf32, #tpu.memory_space<vmem>>, vector<8x32xf32>
    tpu.vector_store %arg9[%c9_14, %c96_15], %16 {strides = array<i32>} : memref<90x128xf32, #tpu.memory_space<vmem>>, vector<8x32xf32>,
    %18 = vector.extract_strided_slice %15 {offsets = [0, 32], sizes = [8, 32], strides = [1, 1]} : vector<8x64xf32> to vector<8x32xf32>
    %c10_16 = arith.constant 10 : index
    %c64_17 = arith.constant 64 : index
    %19 = vector.load %arg9[%c10_16, %c64_17] : memref<90x128xf32, #tpu.memory_space<vmem>>, vector<8x32xf32>
    tpu.vector_store %arg9[%c10_16, %c64_17], %18 {strides = array<i32>} : memref<90x128xf32, #tpu.memory_space<vmem>>, vector<8x32xf32>,
    %c0_18 = arith.constant 0 : index
    %c3 = arith.constant 3 : index
    %c0_19 = arith.constant 0 : index
    %c0_20 = arith.constant 0 : index
    %20 = vector.load %arg1[%c0_18, %c3, %c0_19, %c0_20] : memref<1x16x8x64xf32, #tpu.memory_space<vmem>>, vector<1x1x8x64xf32>
    %21 = vector.shape_cast %20 : vector<1x1x8x64xf32> to vector<8x64xf32>
    %22 = vector.extract_strided_slice %21 {offsets = [0, 0], sizes = [8, 32], strides = [1, 1]} : vector<8x64xf32> to vector<8x32xf32>
    %c18 = arith.constant 18 : index
    %c32_21 = arith.constant 32 : index
    %23 = vector.load %arg9[%c18, %c32_21] : memref<90x128xf32, #tpu.memory_space<vmem>>, vector<8x32xf32>
    tpu.vector_store %arg9[%c18, %c32_21], %22 {strides = array<i32>} : memref<90x128xf32, #tpu.memory_space<vmem>>, vector<8x32xf32>,
    %24 = vector.extract_strided_slice %21 {offsets = [0, 32], sizes = [8, 32], strides = [1, 1]} : vector<8x64xf32> to vector<8x32xf32>
    %c19 = arith.constant 19 : index
    %c0_22 = arith.constant 0 : index
    %25 = vector.load %arg9[%c19, %c0_22] : memref<90x128xf32, #tpu.memory_space<vmem>>, vector<8x32xf32>
    tpu.vector_store %arg9[%c19, %c0_22], %24 {strides = array<i32>} : memref<90x128xf32, #tpu.memory_space<vmem>>, vector<8x32xf32>,
    %c0_23 = arith.constant 0 : index
    %c4 = arith.constant 4 : index
    %c0_24 = arith.constant 0 : index
    %c0_25 = arith.constant 0 : index
    %26 = vector.load %arg1[%c0_23, %c4, %c0_24, %c0_25] : memref<1x16x8x64xf32, #tpu.memory_space<vmem>>, vector<1x1x8x64xf32>
    %27 = vector.shape_cast %26 : vector<1x1x8x64xf32> to vector<8x64xf32>
    %28 = vector.extract_strided_slice %27 {offsets = [0, 0], sizes = [8, 32], strides = [1, 1]} : vector<8x64xf32> to vector<8x32xf32>
    %c18_26 = arith.constant 18 : index
    %c96_27 = arith.constant 96 : index
    %29 = vector.load %arg9[%c18_26, %c96_27] : memref<90x128xf32, #tpu.memory_space<vmem>>, vector<8x32xf32>
    tpu.vector_store %arg9[%c18_26, %c96_27], %28 {strides = array<i32>} : memref<90x128xf32, #tpu.memory_space<vmem>>, vector<8x32xf32>,
    %30 = vector.extract_strided_slice %27 {offsets = [0, 32], sizes = [8, 32], strides = [1, 1]} : vector<8x64xf32> to vector<8x32xf32>
    %c19_28 = arith.constant 19 : index
    %c64_29 = arith.constant 64 : index
    %31 = vector.load %arg9[%c19_28, %c64_29] : memref<90x128xf32, #tpu.memory_space<vmem>>, vector<8x32xf32>
    tpu.vector_store %arg9[%c19_28, %c64_29], %30 {strides = array<i32>} : memref<90x128xf32, #tpu.memory_space<vmem>>, vector<8x32xf32>,
    %c0_30 = arith.constant 0 : index
    %c5 = arith.constant 5 : index
    %c0_31 = arith.constant 0 : index
    %c0_32 = arith.constant 0 : index
    %32 = vector.load %arg1[%c0_30, %c5, %c0_31, %c0_32] : memref<1x16x8x64xf32, #tpu.memory_space<vmem>>, vector<1x1x8x64xf32>
    %33 = vector.shape_cast %32 : vector<1x1x8x64xf32> to vector<8x64xf32>
    %34 = vector.extract_strided_slice %33 {offsets = [0, 0], sizes = [8, 32], strides = [1, 1]} : vector<8x64xf32> to vector<8x32xf32>
    %c27 = arith.constant 27 : index
    %c32_33 = arith.constant 32 : index
    %35 = vector.load %arg9[%c27, %c32_33] : memref<90x128xf32, #tpu.memory_space<vmem>>, vector<8x32xf32>
    tpu.vector_store %arg9[%c27, %c32_33], %34 {strides = array<i32>} : memref<90x128xf32, #tpu.memory_space<vmem>>, vector<8x32xf32>,
    %36 = vector.extract_strided_slice %33 {offsets = [0, 32], sizes = [8, 32], strides = [1, 1]} : vector<8x64xf32> to vector<8x32xf32>
    %c28 = arith.constant 28 : index
    %c0_34 = arith.constant 0 : index
    %37 = vector.load %arg9[%c28, %c0_34] : memref<90x128xf32, #tpu.memory_space<vmem>>, vector<8x32xf32>
    tpu.vector_store %arg9[%c28, %c0_34], %36 {strides = array<i32>} : memref<90x128xf32, #tpu.memory_space<vmem>>, vector<8x32xf32>,
    %c0_35 = arith.constant 0 : index
    %c6 = arith.constant 6 : index
    %c0_36 = arith.constant 0 : index
    %c0_37 = arith.constant 0 : index
    %38 = vector.load %arg1[%c0_35, %c6, %c0_36, %c0_37] : memref<1x16x8x64xf32, #tpu.memory_space<vmem>>, vector<1x1x8x64xf32>
    %39 = vector.shape_cast %38 : vector<1x1x8x64xf32> to vector<8x64xf32>
    %40 = vector.extract_strided_slice %39 {offsets = [0, 0], sizes = [8, 32], strides = [1, 1]} : vector<8x64xf32> to vector<8x32xf32>
    %c27_38 = arith.constant 27 : index
    %c96_39 = arith.constant 96 : index
    %41 = vector.load %arg9[%c27_38, %c96_39] : memref<90x128xf32, #tpu.memory_space<vmem>>, vector<8x32xf32>
    tpu.vector_store %arg9[%c27_38, %c96_39], %40 {strides = array<i32>} : memref<90x128xf32, #tpu.memory_space<vmem>>, vector<8x32xf32>,
    %42 = vector.extract_strided_slice %39 {offsets = [0, 32], sizes = [8, 32], strides = [1, 1]} : vector<8x64xf32> to vector<8x32xf32>
    %c28_40 = arith.constant 28 : index
    %c64_41 = arith.constant 64 : index
    %43 = vector.load %arg9[%c28_40, %c64_41] : memref<90x128xf32, #tpu.memory_space<vmem>>, vector<8x32xf32>
    tpu.vector_store %arg9[%c28_40, %c64_41], %42 {strides = array<i32>} : memref<90x128xf32, #tpu.memory_space<vmem>>, vector<8x32xf32>,
    %c0_42 = arith.constant 0 : index
    %c7 = arith.constant 7 : index
    %c0_43 = arith.constant 0 : index
    %c0_44 = arith.constant 0 : index
    %44 = vector.load %arg1[%c0_42, %c7, %c0_43, %c0_44] : memref<1x16x8x64xf32, #tpu.memory_space<vmem>>, vector<1x1x8x64xf32>
    %45 = vector.shape_cast %44 : vector<1x1x8x64xf32> to vector<8x64xf32>
    %46 = vector.extract_strided_slice %45 {offsets = [0, 0], sizes = [8, 32], strides = [1, 1]} : vector<8x64xf32> to vector<8x32xf32>
    %c36 = arith.constant 36 : index
    %c32_45 = arith.constant 32 : index
    %47 = vector.load %arg9[%c36, %c32_45] : memref<90x128xf32, #tpu.memory_space<vmem>>, vector<8x32xf32>
    tpu.vector_store %arg9[%c36, %c32_45], %46 {strides = array<i32>} : memref<90x128xf32, #tpu.memory_space<vmem>>, vector<8x32xf32>,
    %48 = vector.extract_strided_slice %45 {offsets = [0, 32], sizes = [8, 32], strides = [1, 1]} : vector<8x64xf32> to vector<8x32xf32>
    %c37 = arith.constant 37 : index
    %c0_46 = arith.constant 0 : index
    %49 = vector.load %arg9[%c37, %c0_46] : memref<90x128xf32, #tpu.memory_space<vmem>>, vector<8x32xf32>
    tpu.vector_store %arg9[%c37, %c0_46], %48 {strides = array<i32>} : memref<90x128xf32, #tpu.memory_space<vmem>>, vector<8x32xf32>,
    %c0_47 = arith.constant 0 : index
    %c8 = arith.constant 8 : index
    %c0_48 = arith.constant 0 : index
    %c0_49 = arith.constant 0 : index
    %50 = vector.load %arg1[%c0_47, %c8, %c0_48, %c0_49] : memref<1x16x8x64xf32, #tpu.memory_space<vmem>>, vector<1x1x8x64xf32>
    %51 = vector.shape_cast %50 : vector<1x1x8x64xf32> to vector<8x64xf32>
    %52 = vector.extract_strided_slice %51 {offsets = [0, 0], sizes = [8, 32], strides = [1, 1]} : vector<8x64xf32> to vector<8x32xf32>
    %c36_50 = arith.constant 36 : index
    %c96_51 = arith.constant 96 : index
    %53 = vector.load %arg9[%c36_50, %c96_51] : memref<90x128xf32, #tpu.memory_space<vmem>>, vector<8x32xf32>
    tpu.vector_store %arg9[%c36_50, %c96_51], %52 {strides = array<i32>} : memref<90x128xf32, #tpu.memory_space<vmem>>, vector<8x32xf32>,
    %54 = vector.extract_strided_slice %51 {offsets = [0, 32], sizes = [8, 32], strides = [1, 1]} : vector<8x64xf32> to vector<8x32xf32>
    %c37_52 = arith.constant 37 : index
    %c64_53 = arith.constant 64 : index
    %55 = vector.load %arg9[%c37_52, %c64_53] : memref<90x128xf32, #tpu.memory_space<vmem>>, vector<8x32xf32>
    tpu.vector_store %arg9[%c37_52, %c64_53], %54 {strides = array<i32>} : memref<90x128xf32, #tpu.memory_space<vmem>>, vector<8x32xf32>,
    %c0_54 = arith.constant 0 : index
    %c9_55 = arith.constant 9 : index
    %c0_56 = arith.constant 0 : index
    %c0_57 = arith.constant 0 : index
    %56 = vector.load %arg1[%c0_54, %c9_55, %c0_56, %c0_57] : memref<1x16x8x64xf32, #tpu.memory_space<vmem>>, vector<1x1x8x64xf32>
    %57 = vector.shape_cast %56 : vector<1x1x8x64xf32> to vector<8x64xf32>
    %58 = vector.extract_strided_slice %57 {offsets = [0, 0], sizes = [8, 32], strides = [1, 1]} : vector<8x64xf32> to vector<8x32xf32>
    %c45 = arith.constant 45 : index
    %c32_58 = arith.constant 32 : index
    %59 = vector.load %arg9[%c45, %c32_58] : memref<90x128xf32, #tpu.memory_space<vmem>>, vector<8x32xf32>
    tpu.vector_store %arg9[%c45, %c32_58], %58 {strides = array<i32>} : memref<90x128xf32, #tpu.memory_space<vmem>>, vector<8x32xf32>,
    %60 = vector.extract_strided_slice %57 {offsets = [0, 32], sizes = [8, 32], strides = [1, 1]} : vector<8x64xf32> to vector<8x32xf32>
    %c46 = arith.constant 46 : index
    %c0_59 = arith.constant 0 : index
    %61 = vector.load %arg9[%c46, %c0_59] : memref<90x128xf32, #tpu.memory_space<vmem>>, vector<8x32xf32>
    tpu.vector_store %arg9[%c46, %c0_59], %60 {strides = array<i32>} : memref<90x128xf32, #tpu.memory_space<vmem>>, vector<8x32xf32>,
    %c0_60 = arith.constant 0 : index
    %c10_61 = arith.constant 10 : index
    %c0_62 = arith.constant 0 : index
    %c0_63 = arith.constant 0 : index
    %62 = vector.load %arg1[%c0_60, %c10_61, %c0_62, %c0_63] : memref<1x16x8x64xf32, #tpu.memory_space<vmem>>, vector<1x1x8x64xf32>
    %63 = vector.shape_cast %62 : vector<1x1x8x64xf32> to vector<8x64xf32>
    %64 = vector.extract_strided_slice %63 {offsets = [0, 0], sizes = [8, 32], strides = [1, 1]} : vector<8x64xf32> to vector<8x32xf32>
    %c45_64 = arith.constant 45 : index
    %c96_65 = arith.constant 96 : index
    %65 = vector.load %arg9[%c45_64, %c96_65] : memref<90x128xf32, #tpu.memory_space<vmem>>, vector<8x32xf32>
    tpu.vector_store %arg9[%c45_64, %c96_65], %64 {strides = array<i32>} : memref<90x128xf32, #tpu.memory_space<vmem>>, vector<8x32xf32>,
    %66 = vector.extract_strided_slice %63 {offsets = [0, 32], sizes = [8, 32], strides = [1, 1]} : vector<8x64xf32> to vector<8x32xf32>
    %c46_66 = arith.constant 46 : index
    %c64_67 = arith.constant 64 : index
    %67 = vector.load %arg9[%c46_66, %c64_67] : memref<90x128xf32, #tpu.memory_space<vmem>>, vector<8x32xf32>
    tpu.vector_store %arg9[%c46_66, %c64_67], %66 {strides = array<i32>} : memref<90x128xf32, #tpu.memory_space<vmem>>, vector<8x32xf32>,
    %c0_68 = arith.constant 0 : index
    %c11 = arith.constant 11 : index
    %c0_69 = arith.constant 0 : index
    %c0_70 = arith.constant 0 : index
    %68 = vector.load %arg1[%c0_68, %c11, %c0_69, %c0_70] : memref<1x16x8x64xf32, #tpu.memory_space<vmem>>, vector<1x1x8x64xf32>
    %69 = vector.shape_cast %68 : vector<1x1x8x64xf32> to vector<8x64xf32>
    %70 = vector.extract_strided_slice %69 {offsets = [0, 0], sizes = [8, 32], strides = [1, 1]} : vector<8x64xf32> to vector<8x32xf32>
    %c54 = arith.constant 54 : index
    %c32_71 = arith.constant 32 : index
    %71 = vector.load %arg9[%c54, %c32_71] : memref<90x128xf32, #tpu.memory_space<vmem>>, vector<8x32xf32>
    tpu.vector_store %arg9[%c54, %c32_71], %70 {strides = array<i32>} : memref<90x128xf32, #tpu.memory_space<vmem>>, vector<8x32xf32>,
    %72 = vector.extract_strided_slice %69 {offsets = [0, 32], sizes = [8, 32], strides = [1, 1]} : vector<8x64xf32> to vector<8x32xf32>
    %c55 = arith.constant 55 : index
    %c0_72 = arith.constant 0 : index
    %73 = vector.load %arg9[%c55, %c0_72] : memref<90x128xf32, #tpu.memory_space<vmem>>, vector<8x32xf32>
    tpu.vector_store %arg9[%c55, %c0_72], %72 {strides = array<i32>} : memref<90x128xf32, #tpu.memory_space<vmem>>, vector<8x32xf32>,
    %c0_73 = arith.constant 0 : index
    %c12 = arith.constant 12 : index
    %c0_74 = arith.constant 0 : index
    %c0_75 = arith.constant 0 : index
    %74 = vector.load %arg1[%c0_73, %c12, %c0_74, %c0_75] : memref<1x16x8x64xf32, #tpu.memory_space<vmem>>, vector<1x1x8x64xf32>
    %75 = vector.shape_cast %74 : vector<1x1x8x64xf32> to vector<8x64xf32>
    %76 = vector.extract_strided_slice %75 {offsets = [0, 0], sizes = [8, 32], strides = [1, 1]} : vector<8x64xf32> to vector<8x32xf32>
    %c54_76 = arith.constant 54 : index
    %c96_77 = arith.constant 96 : index
    %77 = vector.load %arg9[%c54_76, %c96_77] : memref<90x128xf32, #tpu.memory_space<vmem>>, vector<8x32xf32>
    tpu.vector_store %arg9[%c54_76, %c96_77], %76 {strides = array<i32>} : memref<90x128xf32, #tpu.memory_space<vmem>>, vector<8x32xf32>,
    %78 = vector.extract_strided_slice %75 {offsets = [0, 32], sizes = [8, 32], strides = [1, 1]} : vector<8x64xf32> to vector<8x32xf32>
    %c55_78 = arith.constant 55 : index
    %c64_79 = arith.constant 64 : index
    %79 = vector.load %arg9[%c55_78, %c64_79] : memref<90x128xf32, #tpu.memory_space<vmem>>, vector<8x32xf32>
    tpu.vector_store %arg9[%c55_78, %c64_79], %78 {strides = array<i32>} : memref<90x128xf32, #tpu.memory_space<vmem>>, vector<8x32xf32>,
    %c0_80 = arith.constant 0 : index
    %c13 = arith.constant 13 : index
    %c0_81 = arith.constant 0 : index
    %c0_82 = arith.constant 0 : index
    %80 = vector.load %arg1[%c0_80, %c13, %c0_81, %c0_82] : memref<1x16x8x64xf32, #tpu.memory_space<vmem>>, vector<1x1x8x64xf32>
    %81 = vector.shape_cast %80 : vector<1x1x8x64xf32> to vector<8x64xf32>
    %82 = vector.extract_strided_slice %81 {offsets = [0, 0], sizes = [8, 32], strides = [1, 1]} : vector<8x64xf32> to vector<8x32xf32>
    %c63 = arith.constant 63 : index
    %c32_83 = arith.constant 32 : index
    %83 = vector.load %arg9[%c63, %c32_83] : memref<90x128xf32, #tpu.memory_space<vmem>>, vector<8x32xf32>
    tpu.vector_store %arg9[%c63, %c32_83], %82 {strides = array<i32>} : memref<90x128xf32, #tpu.memory_space<vmem>>, vector<8x32xf32>,
    %84 = vector.extract_strided_slice %81 {offsets = [0, 32], sizes = [8, 32], strides = [1, 1]} : vector<8x64xf32> to vector<8x32xf32>
    %c64_84 = arith.constant 64 : index
    %c0_85 = arith.constant 0 : index
    %85 = vector.load %arg9[%c64_84, %c0_85] : memref<90x128xf32, #tpu.memory_space<vmem>>, vector<8x32xf32>
    tpu.vector_store %arg9[%c64_84, %c0_85], %84 {strides = array<i32>} : memref<90x128xf32, #tpu.memory_space<vmem>>, vector<8x32xf32>,
    %c0_86 = arith.constant 0 : index
    %c14 = arith.constant 14 : index
    %c0_87 = arith.constant 0 : index
    %c0_88 = arith.constant 0 : index
    %86 = vector.load %arg1[%c0_86, %c14, %c0_87, %c0_88] : memref<1x16x8x64xf32, #tpu.memory_space<vmem>>, vector<1x1x8x64xf32>
    %87 = vector.shape_cast %86 : vector<1x1x8x64xf32> to vector<8x64xf32>
    %88 = vector.extract_strided_slice %87 {offsets = [0, 0], sizes = [8, 32], strides = [1, 1]} : vector<8x64xf32> to vector<8x32xf32>
    %c63_89 = arith.constant 63 : index
    %c96_90 = arith.constant 96 : index
    %89 = vector.load %arg9[%c63_89, %c96_90] : memref<90x128xf32, #tpu.memory_space<vmem>>, vector<8x32xf32>
    tpu.vector_store %arg9[%c63_89, %c96_90], %88 {strides = array<i32>} : memref<90x128xf32, #tpu.memory_space<vmem>>, vector<8x32xf32>,
    %90 = vector.extract_strided_slice %87 {offsets = [0, 32], sizes = [8, 32], strides = [1, 1]} : vector<8x64xf32> to vector<8x32xf32>
    %c64_91 = arith.constant 64 : index
    %c64_92 = arith.constant 64 : index
    %91 = vector.load %arg9[%c64_91, %c64_92] : memref<90x128xf32, #tpu.memory_space<vmem>>, vector<8x32xf32>
    tpu.vector_store %arg9[%c64_91, %c64_92], %90 {strides = array<i32>} : memref<90x128xf32, #tpu.memory_space<vmem>>, vector<8x32xf32>,
    %c0_93 = arith.constant 0 : index
    %c15 = arith.constant 15 : index
    %c0_94 = arith.constant 0 : index
    %c0_95 = arith.constant 0 : index
    %92 = vector.load %arg1[%c0_93, %c15, %c0_94, %c0_95] : memref<1x16x8x64xf32, #tpu.memory_space<vmem>>, vector<1x1x8x64xf32>
    %93 = vector.shape_cast %92 : vector<1x1x8x64xf32> to vector<8x64xf32>
    %94 = vector.extract_strided_slice %93 {offsets = [0, 0], sizes = [8, 32], strides = [1, 1]} : vector<8x64xf32> to vector<8x32xf32>
    %c72 = arith.constant 72 : index
    %c32_96 = arith.constant 32 : index
    %95 = vector.load %arg9[%c72, %c32_96] : memref<90x128xf32, #tpu.memory_space<vmem>>, vector<8x32xf32>
    tpu.vector_store %arg9[%c72, %c32_96], %94 {strides = array<i32>} : memref<90x128xf32, #tpu.memory_space<vmem>>, vector<8x32xf32>,
    %96 = vector.extract_strided_slice %93 {offsets = [0, 32], sizes = [8, 32], strides = [1, 1]} : vector<8x64xf32> to vector<8x32xf32>
    %c73 = arith.constant 73 : index
    %c0_97 = arith.constant 0 : index
    %97 = vector.load %arg9[%c73, %c0_97] : memref<90x128xf32, #tpu.memory_space<vmem>>, vector<8x32xf32>
    tpu.vector_store %arg9[%c73, %c0_97], %96 {strides = array<i32>} : memref<90x128xf32, #tpu.memory_space<vmem>>, vector<8x32xf32>,
    %c0_98 = arith.constant 0 : index
    %c0_99 = arith.constant 0 : index
    %98 = vector.load %arg9[%c0_98, %c0_99] : memref<90x128xf32, #tpu.memory_space<vmem>>, vector<72x32xf32>
    %c0_100 = arith.constant 0 : index
    %c32_101 = arith.constant 32 : index
    %99 = vector.load %arg9[%c0_100, %c32_101] : memref<90x128xf32, #tpu.memory_space<vmem>>, vector<72x32xf32>
    %c1_102 = arith.constant 1 : index
    %c0_103 = arith.constant 0 : index
    %100 = vector.load %arg9[%c1_102, %c0_103] : memref<90x128xf32, #tpu.memory_space<vmem>>, vector<72x32xf32>
    %c0_104 = arith.constant 0 : index
    %c64_105 = arith.constant 64 : index
    %101 = vector.load %arg9[%c0_104, %c64_105] : memref<90x128xf32, #tpu.memory_space<vmem>>, vector<72x32xf32>
    %c0_106 = arith.constant 0 : index
    %c96_107 = arith.constant 96 : index
    %102 = vector.load %arg9[%c0_106, %c96_107] : memref<90x128xf32, #tpu.memory_space<vmem>>, vector<72x32xf32>
    %c1_108 = arith.constant 1 : index
    %c64_109 = arith.constant 64 : index
    %103 = vector.load %arg9[%c1_108, %c64_109] : memref<90x128xf32, #tpu.memory_space<vmem>>, vector<72x32xf32>
    %c9_110 = arith.constant 9 : index
    %c0_111 = arith.constant 0 : index
    %104 = vector.load %arg9[%c9_110, %c0_111] : memref<90x128xf32, #tpu.memory_space<vmem>>, vector<72x32xf32>
    %c9_112 = arith.constant 9 : index
    %c32_113 = arith.constant 32 : index
    %105 = vector.load %arg9[%c9_112, %c32_113] : memref<90x128xf32, #tpu.memory_space<vmem>>, vector<72x32xf32>
    %c10_114 = arith.constant 10 : index
    %c0_115 = arith.constant 0 : index
    %106 = vector.load %arg9[%c10_114, %c0_115] : memref<90x128xf32, #tpu.memory_space<vmem>>, vector<72x32xf32>
    %107 = tpu.concatenate %98, %99, %100, %101, %102, %103, %104, %105, %106 in 1 : vector<72x32xf32>, vector<72x32xf32>, vector<72x32xf32>, vector<72x32xf32>, vector<72x32xf32>, vector<72x32xf32>, vector<72x32xf32>, vector<72x32xf32>, vector<72x32xf32> -> vector<72x288xf32>
    %108 = arith.truncf %107 : vector<72x288xf32> to vector<72x288xbf16>
    %c0_116 = arith.constant 0 : index
    %c0_117 = arith.constant 0 : index
    %109 = vector.load %arg2[%c0_116, %c0_117] : memref<288x32xbf16, #tpu.memory_space<vmem>>, vector<288x32xbf16>
    %cst_118 = arith.constant dense<0.000000e+00> : vector<72x32xf32>
    %110 = tpu.matmul %108, %109, %cst_118 {dimension_numbers = #tpu.dot_dimension_numbers<[1], [0], [0], [1], [0, 0, 1, 1], [], []>} : vector<72x288xbf16>, vector<288x32xbf16>, vector<72x32xf32> -> vector<72x32xf32>
    %c0_119 = arith.constant 0 : index
    %c0_120 = arith.constant 0 : index
    %111 = vector.load %arg3[%c0_119, %c0_120] : memref<1x32xf32, #tpu.memory_space<vmem>>, vector<1x32xf32>
    %112 = vector.broadcast %111 : vector<1x32xf32> to vector<72x32xf32>
    %113 = arith.addf %110, %112 : vector<72x32xf32>
    %cst_121 = arith.constant 0.000000e+00 : f32
    %114 = vector.broadcast %cst_121 : f32 to vector<72x32xf32>
    %115 = arith.maximumf %113, %114 : vector<72x32xf32>
    %c0_122 = arith.constant 0 : index
    %c0_123 = arith.constant 0 : index
    %116 = vector.load %arg7[%c0_122, %c0_123] : memref<1x72xf32, #tpu.memory_space<vmem>>, vector<1x72xf32>
    %cst_124 = arith.constant dense<0.000000e+00> : vector<1x32xf32>
    %117 = tpu.matmul %116, %115, %cst_124 {dimension_numbers = #tpu.dot_dimension_numbers<[1], [0], [0], [1], [0, 0, 1, 1], [], []>} : vector<1x72xf32>, vector<72x32xf32>, vector<1x32xf32> -> vector<1x32xf32>
    %118 = arith.mulf %115, %115 : vector<72x32xf32>
    %cst_125 = arith.constant dense<0.000000e+00> : vector<1x32xf32>
    %119 = tpu.matmul %116, %118, %cst_125 {dimension_numbers = #tpu.dot_dimension_numbers<[1], [0], [0], [1], [0, 0, 1, 1], [], []>} : vector<1x72xf32>, vector<72x32xf32>, vector<1x32xf32> -> vector<1x32xf32>
    %c0_126 = arith.constant 0 : index
    %c0_127 = arith.constant 0 : index
    %120 = vector.load %arg6[%c0_126, %c0_127] : memref<32x32xf32, #tpu.memory_space<vmem>>, vector<32x32xf32>
    %cst_128 = arith.constant dense<0.000000e+00> : vector<1x32xf32>
    %121 = tpu.matmul %117, %120, %cst_128 {dimension_numbers = #tpu.dot_dimension_numbers<[1], [0], [0], [1], [0, 0, 1, 1], [], []>} : vector<1x32xf32>, vector<32x32xf32>, vector<1x32xf32> -> vector<1x32xf32>
    %cst_129 = arith.constant 1.562500e-02 : f32
    %122 = vector.broadcast %cst_129 : f32 to vector<1x32xf32>
    %123 = arith.mulf %121, %122 : vector<1x32xf32>
    %c0_130 = arith.constant 0 : index
    %c0_131 = arith.constant 0 : index
    %124 = vector.load %arg6[%c0_130, %c0_131] : memref<32x32xf32, #tpu.memory_space<vmem>>, vector<32x32xf32>
    %cst_132 = arith.constant dense<0.000000e+00> : vector<1x32xf32>
    %125 = tpu.matmul %119, %124, %cst_132 {dimension_numbers = #tpu.dot_dimension_numbers<[1], [0], [0], [1], [0, 0, 1, 1], [], []>} : vector<1x32xf32>, vector<32x32xf32>, vector<1x32xf32> -> vector<1x32xf32>
    %cst_133 = arith.constant 1.562500e-02 : f32
    %126 = vector.broadcast %cst_133 : f32 to vector<1x32xf32>
    %127 = arith.mulf %125, %126 : vector<1x32xf32>
    %128 = arith.mulf %123, %123 : vector<1x32xf32>
    %129 = arith.subf %127, %128 : vector<1x32xf32>
    %cst_134 = arith.constant 0.000000e+00 : f32
    %130 = vector.broadcast %cst_134 : f32 to vector<1x32xf32>
    %131 = arith.maximumf %129, %130 : vector<1x32xf32>
    %cst_135 = arith.constant 9.99999974E-6 : f32
    %132 = vector.broadcast %cst_135 : f32 to vector<1x32xf32>
    %133 = arith.addf %131, %132 : vector<1x32xf32>
    %134 = math.rsqrt %133 : vector<1x32xf32>
    %c0_136 = arith.constant 0 : index
    %c0_137 = arith.constant 0 : index
    %135 = vector.load %arg4[%c0_136, %c0_137] : memref<1x32xf32, #tpu.memory_space<vmem>>, vector<1x32xf32>
    %136 = arith.mulf %135, %134 : vector<1x32xf32>
    %c0_138 = arith.constant 0 : index
    %c0_139 = arith.constant 0 : index
    %137 = vector.load %arg5[%c0_138, %c0_139] : memref<1x32xf32, #tpu.memory_space<vmem>>, vector<1x32xf32>
    %138 = arith.mulf %123, %136 : vector<1x32xf32>
    %139 = arith.subf %137, %138 : vector<1x32xf32>
    %140 = vector.broadcast %136 : vector<1x32xf32> to vector<72x32xf32>
    %141 = arith.mulf %115, %140 : vector<72x32xf32>
    %142 = vector.broadcast %139 : vector<1x32xf32> to vector<72x32xf32>
    %143 = arith.addf %141, %142 : vector<72x32xf32>
    %144 = vector.extract_strided_slice %143 {offsets = [0, 0], sizes = [8, 32], strides = [1, 1]} : vector<72x32xf32> to vector<8x32xf32>
    %c0_140 = arith.constant 0 : index
    %c0_141 = arith.constant 0 : index
    %c0_142 = arith.constant 0 : index
    %c0_143 = arith.constant 0 : index
    %145 = vector.load %arg8[%c0_140, %c0_141, %c0_142, %c0_143] : memref<1x8x8x32xf32, #tpu.memory_space<vmem>>, vector<1x1x8x32xf32>
    %146 = vector.shape_cast %145 : vector<1x1x8x32xf32> to vector<8x32xf32>
    %147 = vector.shape_cast %144 : vector<8x32xf32> to vector<1x1x8x32xf32>
    tpu.vector_store %arg8[%c0_140, %c0_141, %c0_142, %c0_143], %147 {strides = array<i32>} : memref<1x8x8x32xf32, #tpu.memory_space<vmem>>, vector<1x1x8x32xf32>,
    %148 = vector.extract_strided_slice %143 {offsets = [9, 0], sizes = [8, 32], strides = [1, 1]} : vector<72x32xf32> to vector<8x32xf32>
    %c0_144 = arith.constant 0 : index
    %c1_145 = arith.constant 1 : index
    %c0_146 = arith.constant 0 : index
    %c0_147 = arith.constant 0 : index
    %149 = vector.load %arg8[%c0_144, %c1_145, %c0_146, %c0_147] : memref<1x8x8x32xf32, #tpu.memory_space<vmem>>, vector<1x1x8x32xf32>
    %150 = vector.shape_cast %149 : vector<1x1x8x32xf32> to vector<8x32xf32>
    %151 = vector.shape_cast %148 : vector<8x32xf32> to vector<1x1x8x32xf32>
    tpu.vector_store %arg8[%c0_144, %c1_145, %c0_146, %c0_147], %151 {strides = array<i32>} : memref<1x8x8x32xf32, #tpu.memory_space<vmem>>, vector<1x1x8x32xf32>,
    %152 = vector.extract_strided_slice %143 {offsets = [18, 0], sizes = [8, 32], strides = [1, 1]} : vector<72x32xf32> to vector<8x32xf32>
    %c0_148 = arith.constant 0 : index
    %c2_149 = arith.constant 2 : index
    %c0_150 = arith.constant 0 : index
    %c0_151 = arith.constant 0 : index
    %153 = vector.load %arg8[%c0_148, %c2_149, %c0_150, %c0_151] : memref<1x8x8x32xf32, #tpu.memory_space<vmem>>, vector<1x1x8x32xf32>
    %154 = vector.shape_cast %153 : vector<1x1x8x32xf32> to vector<8x32xf32>
    %155 = vector.shape_cast %152 : vector<8x32xf32> to vector<1x1x8x32xf32>
    tpu.vector_store %arg8[%c0_148, %c2_149, %c0_150, %c0_151], %155 {strides = array<i32>} : memref<1x8x8x32xf32, #tpu.memory_space<vmem>>, vector<1x1x8x32xf32>,
    %156 = vector.extract_strided_slice %143 {offsets = [27, 0], sizes = [8, 32], strides = [1, 1]} : vector<72x32xf32> to vector<8x32xf32>
    %c0_152 = arith.constant 0 : index
    %c3_153 = arith.constant 3 : index
    %c0_154 = arith.constant 0 : index
    %c0_155 = arith.constant 0 : index
    %157 = vector.load %arg8[%c0_152, %c3_153, %c0_154, %c0_155] : memref<1x8x8x32xf32, #tpu.memory_space<vmem>>, vector<1x1x8x32xf32>
    %158 = vector.shape_cast %157 : vector<1x1x8x32xf32> to vector<8x32xf32>
    %159 = vector.shape_cast %156 : vector<8x32xf32> to vector<1x1x8x32xf32>
    tpu.vector_store %arg8[%c0_152, %c3_153, %c0_154, %c0_155], %159 {strides = array<i32>} : memref<1x8x8x32xf32, #tpu.memory_space<vmem>>, vector<1x1x8x32xf32>,
    %160 = vector.extract_strided_slice %143 {offsets = [36, 0], sizes = [8, 32], strides = [1, 1]} : vector<72x32xf32> to vector<8x32xf32>
    %c0_156 = arith.constant 0 : index
    %c4_157 = arith.constant 4 : index
    %c0_158 = arith.constant 0 : index
    %c0_159 = arith.constant 0 : index
    %161 = vector.load %arg8[%c0_156, %c4_157, %c0_158, %c0_159] : memref<1x8x8x32xf32, #tpu.memory_space<vmem>>, vector<1x1x8x32xf32>
    %162 = vector.shape_cast %161 : vector<1x1x8x32xf32> to vector<8x32xf32>
    %163 = vector.shape_cast %160 : vector<8x32xf32> to vector<1x1x8x32xf32>
    tpu.vector_store %arg8[%c0_156, %c4_157, %c0_158, %c0_159], %163 {strides = array<i32>} : memref<1x8x8x32xf32, #tpu.memory_space<vmem>>, vector<1x1x8x32xf32>,
    %164 = vector.extract_strided_slice %143 {offsets = [45, 0], sizes = [8, 32], strides = [1, 1]} : vector<72x32xf32> to vector<8x32xf32>
    %c0_160 = arith.constant 0 : index
    %c5_161 = arith.constant 5 : index
    %c0_162 = arith.constant 0 : index
    %c0_163 = arith.constant 0 : index
    %165 = vector.load %arg8[%c0_160, %c5_161, %c0_162, %c0_163] : memref<1x8x8x32xf32, #tpu.memory_space<vmem>>, vector<1x1x8x32xf32>
    %166 = vector.shape_cast %165 : vector<1x1x8x32xf32> to vector<8x32xf32>
    %167 = vector.shape_cast %164 : vector<8x32xf32> to vector<1x1x8x32xf32>
    tpu.vector_store %arg8[%c0_160, %c5_161, %c0_162, %c0_163], %167 {strides = array<i32>} : memref<1x8x8x32xf32, #tpu.memory_space<vmem>>, vector<1x1x8x32xf32>,
    %168 = vector.extract_strided_slice %143 {offsets = [54, 0], sizes = [8, 32], strides = [1, 1]} : vector<72x32xf32> to vector<8x32xf32>
    %c0_164 = arith.constant 0 : index
    %c6_165 = arith.constant 6 : index
    %c0_166 = arith.constant 0 : index
    %c0_167 = arith.constant 0 : index
    %169 = vector.load %arg8[%c0_164, %c6_165, %c0_166, %c0_167] : memref<1x8x8x32xf32, #tpu.memory_space<vmem>>, vector<1x1x8x32xf32>
    %170 = vector.shape_cast %169 : vector<1x1x8x32xf32> to vector<8x32xf32>
    %171 = vector.shape_cast %168 : vector<8x32xf32> to vector<1x1x8x32xf32>
    tpu.vector_store %arg8[%c0_164, %c6_165, %c0_166, %c0_167], %171 {strides = array<i32>} : memref<1x8x8x32xf32, #tpu.memory_space<vmem>>, vector<1x1x8x32xf32>,
    %172 = vector.extract_strided_slice %143 {offsets = [63, 0], sizes = [8, 32], strides = [1, 1]} : vector<72x32xf32> to vector<8x32xf32>
    %c0_168 = arith.constant 0 : index
    %c7_169 = arith.constant 7 : index
    %c0_170 = arith.constant 0 : index
    %c0_171 = arith.constant 0 : index
    %173 = vector.load %arg8[%c0_168, %c7_169, %c0_170, %c0_171] : memref<1x8x8x32xf32, #tpu.memory_space<vmem>>, vector<1x1x8x32xf32>
    %174 = vector.shape_cast %173 : vector<1x1x8x32xf32> to vector<8x32xf32>
    %175 = vector.shape_cast %172 : vector<8x32xf32> to vector<1x1x8x32xf32>
    tpu.vector_store %arg8[%c0_168, %c7_169, %c0_170, %c0_171], %175 {strides = array<i32>} : memref<1x8x8x32xf32, #tpu.memory_space<vmem>>, vector<1x1x8x32xf32>,
    return
  }
  func.func @transform_0(%arg0: i32) -> (i32, i32, i32, i32) {
    %c0_i32 = arith.constant 0 : i32
    %c0_i32_0 = arith.constant 0 : i32
    %c0_i32_1 = arith.constant 0 : i32
    %c0_i32_2 = arith.constant 0 : i32
    return %arg0, %c0_i32, %c0_i32_0, %c0_i32_1 : i32, i32, i32, i32
  }
  func.func @transform_1(%arg0: i32) -> (i32, i32) {
    %c0_i32 = arith.constant 0 : i32
    %c0_i32_0 = arith.constant 0 : i32
    %c0_i32_1 = arith.constant 0 : i32
    return %c0_i32, %c0_i32_0 : i32, i32
  }
  func.func @transform_2(%arg0: i32) -> (i32, i32) {
    %c0_i32 = arith.constant 0 : i32
    %c0_i32_0 = arith.constant 0 : i32
    %c0_i32_1 = arith.constant 0 : i32
    return %c0_i32, %c0_i32_0 : i32, i32
  }
  func.func @transform_3(%arg0: i32) -> (i32, i32) {
    %c0_i32 = arith.constant 0 : i32
    %c0_i32_0 = arith.constant 0 : i32
    %c0_i32_1 = arith.constant 0 : i32
    return %c0_i32, %c0_i32_0 : i32, i32
  }
  func.func @transform_4(%arg0: i32) -> (i32, i32) {
    %c0_i32 = arith.constant 0 : i32
    %c0_i32_0 = arith.constant 0 : i32
    %c0_i32_1 = arith.constant 0 : i32
    return %c0_i32, %c0_i32_0 : i32, i32
  }
  func.func @transform_5(%arg0: i32) -> (i32, i32) {
    %c0_i32 = arith.constant 0 : i32
    %c0_i32_0 = arith.constant 0 : i32
    %c0_i32_1 = arith.constant 0 : i32
    return %c0_i32, %c0_i32_0 : i32, i32
  }
  func.func @transform_6(%arg0: i32) -> (i32, i32) {
    %c0_i32 = arith.constant 0 : i32
    %c0_i32_0 = arith.constant 0 : i32
    %c0_i32_1 = arith.constant 0 : i32
    return %c0_i32, %c0_i32_0 : i32, i32
  }
  func.func @transform_7(%arg0: i32) -> (i32, i32, i32, i32) {
    %c0_i32 = arith.constant 0 : i32
    %c0_i32_0 = arith.constant 0 : i32
    %c0_i32_1 = arith.constant 0 : i32
    %c0_i32_2 = arith.constant 0 : i32
    return %arg0, %c0_i32, %c0_i32_0, %c0_i32_1 : i32, i32, i32, i32
  }
}

module attributes {stable_mosaic.version = 11 : i64} {
  func.func @kernel(%arg0: i32, %arg1: memref<1x8x4x64xf32, #tpu.memory_space<vmem>>, %arg2: memref<288x32xbf16, #tpu.memory_space<vmem>>, %arg3: memref<1x32xf32, #tpu.memory_space<vmem>>, %arg4: memref<1x32xf32, #tpu.memory_space<vmem>>, %arg5: memref<1x32xf32, #tpu.memory_space<vmem>>, %arg6: memref<32x32xf32, #tpu.memory_space<vmem>>, %arg7: memref<1x20xf32, #tpu.memory_space<vmem>>, %arg8: memref<1x4x4x32xf32, #tpu.memory_space<vmem>>, %arg9: memref<30x128xf32, #tpu.memory_space<vmem>>) attributes {dimension_semantics = [#tpu.dimension_semantics<parallel>], iteration_bounds = array<i64: 2>, scalar_prefetch = 0 : i64, scratch_operands = 1 : i64, tpu.core_type = #tpu.core_type<tc>, window_params = [{transform_indices = @transform_0, window_bounds = array<i64: 1, 8, 4, 64>}, {pipeline_mode = #tpu.pipeline_mode<synchronous>, transform_indices = @transform_1, window_bounds = array<i64: 288, 32>}, {pipeline_mode = #tpu.pipeline_mode<synchronous>, transform_indices = @transform_2, window_bounds = array<i64: 1, 32>}, {pipeline_mode = #tpu.pipeline_mode<synchronous>, transform_indices = @transform_3, window_bounds = array<i64: 1, 32>}, {pipeline_mode = #tpu.pipeline_mode<synchronous>, transform_indices = @transform_4, window_bounds = array<i64: 1, 32>}, {pipeline_mode = #tpu.pipeline_mode<synchronous>, transform_indices = @transform_5, window_bounds = array<i64: 32, 32>}, {pipeline_mode = #tpu.pipeline_mode<synchronous>, transform_indices = @transform_6, window_bounds = array<i64: 1, 20>}, {transform_indices = @transform_7, window_bounds = array<i64: 1, 4, 4, 32>}]} {
    %cst = arith.constant 0.000000e+00 : f32
    %0 = vector.broadcast %cst : f32 to vector<30x128xf32>
    %c0 = arith.constant 0 : index
    %c0_0 = arith.constant 0 : index
    %1 = vector.load %arg9[%c0, %c0_0] : memref<30x128xf32, #tpu.memory_space<vmem>>, vector<30x128xf32>
    tpu.vector_store %arg9[%c0, %c0_0], %0 {strides = array<i32>} : memref<30x128xf32, #tpu.memory_space<vmem>>, vector<30x128xf32>,
    %c0_1 = arith.constant 0 : index
    %c0_2 = arith.constant 0 : index
    %c0_3 = arith.constant 0 : index
    %c0_4 = arith.constant 0 : index
    %2 = vector.load %arg1[%c0_1, %c0_2, %c0_3, %c0_4] : memref<1x8x4x64xf32, #tpu.memory_space<vmem>>, vector<1x1x4x64xf32>
    %3 = vector.shape_cast %2 : vector<1x1x4x64xf32> to vector<4x64xf32>
    %4 = vector.extract_strided_slice %3 {offsets = [0, 0], sizes = [4, 32], strides = [1, 1]} : vector<4x64xf32> to vector<4x32xf32>
    %c0_5 = arith.constant 0 : index
    %c96 = arith.constant 96 : index
    %5 = vector.load %arg9[%c0_5, %c96] : memref<30x128xf32, #tpu.memory_space<vmem>>, vector<4x32xf32>
    tpu.vector_store %arg9[%c0_5, %c96], %4 {strides = array<i32>} : memref<30x128xf32, #tpu.memory_space<vmem>>, vector<4x32xf32>,
    %6 = vector.extract_strided_slice %3 {offsets = [0, 32], sizes = [4, 32], strides = [1, 1]} : vector<4x64xf32> to vector<4x32xf32>
    %c1 = arith.constant 1 : index
    %c64 = arith.constant 64 : index
    %7 = vector.load %arg9[%c1, %c64] : memref<30x128xf32, #tpu.memory_space<vmem>>, vector<4x32xf32>
    tpu.vector_store %arg9[%c1, %c64], %6 {strides = array<i32>} : memref<30x128xf32, #tpu.memory_space<vmem>>, vector<4x32xf32>,
    %c0_6 = arith.constant 0 : index
    %c1_7 = arith.constant 1 : index
    %c0_8 = arith.constant 0 : index
    %c0_9 = arith.constant 0 : index
    %8 = vector.load %arg1[%c0_6, %c1_7, %c0_8, %c0_9] : memref<1x8x4x64xf32, #tpu.memory_space<vmem>>, vector<1x1x4x64xf32>
    %9 = vector.shape_cast %8 : vector<1x1x4x64xf32> to vector<4x64xf32>
    %10 = vector.extract_strided_slice %9 {offsets = [0, 0], sizes = [4, 32], strides = [1, 1]} : vector<4x64xf32> to vector<4x32xf32>
    %c5 = arith.constant 5 : index
    %c32 = arith.constant 32 : index
    %11 = vector.load %arg9[%c5, %c32] : memref<30x128xf32, #tpu.memory_space<vmem>>, vector<4x32xf32>
    tpu.vector_store %arg9[%c5, %c32], %10 {strides = array<i32>} : memref<30x128xf32, #tpu.memory_space<vmem>>, vector<4x32xf32>,
    %12 = vector.extract_strided_slice %9 {offsets = [0, 32], sizes = [4, 32], strides = [1, 1]} : vector<4x64xf32> to vector<4x32xf32>
    %c6 = arith.constant 6 : index
    %c0_10 = arith.constant 0 : index
    %13 = vector.load %arg9[%c6, %c0_10] : memref<30x128xf32, #tpu.memory_space<vmem>>, vector<4x32xf32>
    tpu.vector_store %arg9[%c6, %c0_10], %12 {strides = array<i32>} : memref<30x128xf32, #tpu.memory_space<vmem>>, vector<4x32xf32>,
    %c0_11 = arith.constant 0 : index
    %c2 = arith.constant 2 : index
    %c0_12 = arith.constant 0 : index
    %c0_13 = arith.constant 0 : index
    %14 = vector.load %arg1[%c0_11, %c2, %c0_12, %c0_13] : memref<1x8x4x64xf32, #tpu.memory_space<vmem>>, vector<1x1x4x64xf32>
    %15 = vector.shape_cast %14 : vector<1x1x4x64xf32> to vector<4x64xf32>
    %16 = vector.extract_strided_slice %15 {offsets = [0, 0], sizes = [4, 32], strides = [1, 1]} : vector<4x64xf32> to vector<4x32xf32>
    %c5_14 = arith.constant 5 : index
    %c96_15 = arith.constant 96 : index
    %17 = vector.load %arg9[%c5_14, %c96_15] : memref<30x128xf32, #tpu.memory_space<vmem>>, vector<4x32xf32>
    tpu.vector_store %arg9[%c5_14, %c96_15], %16 {strides = array<i32>} : memref<30x128xf32, #tpu.memory_space<vmem>>, vector<4x32xf32>,
    %18 = vector.extract_strided_slice %15 {offsets = [0, 32], sizes = [4, 32], strides = [1, 1]} : vector<4x64xf32> to vector<4x32xf32>
    %c6_16 = arith.constant 6 : index
    %c64_17 = arith.constant 64 : index
    %19 = vector.load %arg9[%c6_16, %c64_17] : memref<30x128xf32, #tpu.memory_space<vmem>>, vector<4x32xf32>
    tpu.vector_store %arg9[%c6_16, %c64_17], %18 {strides = array<i32>} : memref<30x128xf32, #tpu.memory_space<vmem>>, vector<4x32xf32>,
    %c0_18 = arith.constant 0 : index
    %c3 = arith.constant 3 : index
    %c0_19 = arith.constant 0 : index
    %c0_20 = arith.constant 0 : index
    %20 = vector.load %arg1[%c0_18, %c3, %c0_19, %c0_20] : memref<1x8x4x64xf32, #tpu.memory_space<vmem>>, vector<1x1x4x64xf32>
    %21 = vector.shape_cast %20 : vector<1x1x4x64xf32> to vector<4x64xf32>
    %22 = vector.extract_strided_slice %21 {offsets = [0, 0], sizes = [4, 32], strides = [1, 1]} : vector<4x64xf32> to vector<4x32xf32>
    %c10 = arith.constant 10 : index
    %c32_21 = arith.constant 32 : index
    %23 = vector.load %arg9[%c10, %c32_21] : memref<30x128xf32, #tpu.memory_space<vmem>>, vector<4x32xf32>
    tpu.vector_store %arg9[%c10, %c32_21], %22 {strides = array<i32>} : memref<30x128xf32, #tpu.memory_space<vmem>>, vector<4x32xf32>,
    %24 = vector.extract_strided_slice %21 {offsets = [0, 32], sizes = [4, 32], strides = [1, 1]} : vector<4x64xf32> to vector<4x32xf32>
    %c11 = arith.constant 11 : index
    %c0_22 = arith.constant 0 : index
    %25 = vector.load %arg9[%c11, %c0_22] : memref<30x128xf32, #tpu.memory_space<vmem>>, vector<4x32xf32>
    tpu.vector_store %arg9[%c11, %c0_22], %24 {strides = array<i32>} : memref<30x128xf32, #tpu.memory_space<vmem>>, vector<4x32xf32>,
    %c0_23 = arith.constant 0 : index
    %c4 = arith.constant 4 : index
    %c0_24 = arith.constant 0 : index
    %c0_25 = arith.constant 0 : index
    %26 = vector.load %arg1[%c0_23, %c4, %c0_24, %c0_25] : memref<1x8x4x64xf32, #tpu.memory_space<vmem>>, vector<1x1x4x64xf32>
    %27 = vector.shape_cast %26 : vector<1x1x4x64xf32> to vector<4x64xf32>
    %28 = vector.extract_strided_slice %27 {offsets = [0, 0], sizes = [4, 32], strides = [1, 1]} : vector<4x64xf32> to vector<4x32xf32>
    %c10_26 = arith.constant 10 : index
    %c96_27 = arith.constant 96 : index
    %29 = vector.load %arg9[%c10_26, %c96_27] : memref<30x128xf32, #tpu.memory_space<vmem>>, vector<4x32xf32>
    tpu.vector_store %arg9[%c10_26, %c96_27], %28 {strides = array<i32>} : memref<30x128xf32, #tpu.memory_space<vmem>>, vector<4x32xf32>,
    %30 = vector.extract_strided_slice %27 {offsets = [0, 32], sizes = [4, 32], strides = [1, 1]} : vector<4x64xf32> to vector<4x32xf32>
    %c11_28 = arith.constant 11 : index
    %c64_29 = arith.constant 64 : index
    %31 = vector.load %arg9[%c11_28, %c64_29] : memref<30x128xf32, #tpu.memory_space<vmem>>, vector<4x32xf32>
    tpu.vector_store %arg9[%c11_28, %c64_29], %30 {strides = array<i32>} : memref<30x128xf32, #tpu.memory_space<vmem>>, vector<4x32xf32>,
    %c0_30 = arith.constant 0 : index
    %c5_31 = arith.constant 5 : index
    %c0_32 = arith.constant 0 : index
    %c0_33 = arith.constant 0 : index
    %32 = vector.load %arg1[%c0_30, %c5_31, %c0_32, %c0_33] : memref<1x8x4x64xf32, #tpu.memory_space<vmem>>, vector<1x1x4x64xf32>
    %33 = vector.shape_cast %32 : vector<1x1x4x64xf32> to vector<4x64xf32>
    %34 = vector.extract_strided_slice %33 {offsets = [0, 0], sizes = [4, 32], strides = [1, 1]} : vector<4x64xf32> to vector<4x32xf32>
    %c15 = arith.constant 15 : index
    %c32_34 = arith.constant 32 : index
    %35 = vector.load %arg9[%c15, %c32_34] : memref<30x128xf32, #tpu.memory_space<vmem>>, vector<4x32xf32>
    tpu.vector_store %arg9[%c15, %c32_34], %34 {strides = array<i32>} : memref<30x128xf32, #tpu.memory_space<vmem>>, vector<4x32xf32>,
    %36 = vector.extract_strided_slice %33 {offsets = [0, 32], sizes = [4, 32], strides = [1, 1]} : vector<4x64xf32> to vector<4x32xf32>
    %c16 = arith.constant 16 : index
    %c0_35 = arith.constant 0 : index
    %37 = vector.load %arg9[%c16, %c0_35] : memref<30x128xf32, #tpu.memory_space<vmem>>, vector<4x32xf32>
    tpu.vector_store %arg9[%c16, %c0_35], %36 {strides = array<i32>} : memref<30x128xf32, #tpu.memory_space<vmem>>, vector<4x32xf32>,
    %c0_36 = arith.constant 0 : index
    %c6_37 = arith.constant 6 : index
    %c0_38 = arith.constant 0 : index
    %c0_39 = arith.constant 0 : index
    %38 = vector.load %arg1[%c0_36, %c6_37, %c0_38, %c0_39] : memref<1x8x4x64xf32, #tpu.memory_space<vmem>>, vector<1x1x4x64xf32>
    %39 = vector.shape_cast %38 : vector<1x1x4x64xf32> to vector<4x64xf32>
    %40 = vector.extract_strided_slice %39 {offsets = [0, 0], sizes = [4, 32], strides = [1, 1]} : vector<4x64xf32> to vector<4x32xf32>
    %c15_40 = arith.constant 15 : index
    %c96_41 = arith.constant 96 : index
    %41 = vector.load %arg9[%c15_40, %c96_41] : memref<30x128xf32, #tpu.memory_space<vmem>>, vector<4x32xf32>
    tpu.vector_store %arg9[%c15_40, %c96_41], %40 {strides = array<i32>} : memref<30x128xf32, #tpu.memory_space<vmem>>, vector<4x32xf32>,
    %42 = vector.extract_strided_slice %39 {offsets = [0, 32], sizes = [4, 32], strides = [1, 1]} : vector<4x64xf32> to vector<4x32xf32>
    %c16_42 = arith.constant 16 : index
    %c64_43 = arith.constant 64 : index
    %43 = vector.load %arg9[%c16_42, %c64_43] : memref<30x128xf32, #tpu.memory_space<vmem>>, vector<4x32xf32>
    tpu.vector_store %arg9[%c16_42, %c64_43], %42 {strides = array<i32>} : memref<30x128xf32, #tpu.memory_space<vmem>>, vector<4x32xf32>,
    %c0_44 = arith.constant 0 : index
    %c7 = arith.constant 7 : index
    %c0_45 = arith.constant 0 : index
    %c0_46 = arith.constant 0 : index
    %44 = vector.load %arg1[%c0_44, %c7, %c0_45, %c0_46] : memref<1x8x4x64xf32, #tpu.memory_space<vmem>>, vector<1x1x4x64xf32>
    %45 = vector.shape_cast %44 : vector<1x1x4x64xf32> to vector<4x64xf32>
    %46 = vector.extract_strided_slice %45 {offsets = [0, 0], sizes = [4, 32], strides = [1, 1]} : vector<4x64xf32> to vector<4x32xf32>
    %c20 = arith.constant 20 : index
    %c32_47 = arith.constant 32 : index
    %47 = vector.load %arg9[%c20, %c32_47] : memref<30x128xf32, #tpu.memory_space<vmem>>, vector<4x32xf32>
    tpu.vector_store %arg9[%c20, %c32_47], %46 {strides = array<i32>} : memref<30x128xf32, #tpu.memory_space<vmem>>, vector<4x32xf32>,
    %48 = vector.extract_strided_slice %45 {offsets = [0, 32], sizes = [4, 32], strides = [1, 1]} : vector<4x64xf32> to vector<4x32xf32>
    %c21 = arith.constant 21 : index
    %c0_48 = arith.constant 0 : index
    %49 = vector.load %arg9[%c21, %c0_48] : memref<30x128xf32, #tpu.memory_space<vmem>>, vector<4x32xf32>
    tpu.vector_store %arg9[%c21, %c0_48], %48 {strides = array<i32>} : memref<30x128xf32, #tpu.memory_space<vmem>>, vector<4x32xf32>,
    %c0_49 = arith.constant 0 : index
    %c0_50 = arith.constant 0 : index
    %50 = vector.load %arg9[%c0_49, %c0_50] : memref<30x128xf32, #tpu.memory_space<vmem>>, vector<20x32xf32>
    %c0_51 = arith.constant 0 : index
    %c32_52 = arith.constant 32 : index
    %51 = vector.load %arg9[%c0_51, %c32_52] : memref<30x128xf32, #tpu.memory_space<vmem>>, vector<20x32xf32>
    %c1_53 = arith.constant 1 : index
    %c0_54 = arith.constant 0 : index
    %52 = vector.load %arg9[%c1_53, %c0_54] : memref<30x128xf32, #tpu.memory_space<vmem>>, vector<20x32xf32>
    %c0_55 = arith.constant 0 : index
    %c64_56 = arith.constant 64 : index
    %53 = vector.load %arg9[%c0_55, %c64_56] : memref<30x128xf32, #tpu.memory_space<vmem>>, vector<20x32xf32>
    %c0_57 = arith.constant 0 : index
    %c96_58 = arith.constant 96 : index
    %54 = vector.load %arg9[%c0_57, %c96_58] : memref<30x128xf32, #tpu.memory_space<vmem>>, vector<20x32xf32>
    %c1_59 = arith.constant 1 : index
    %c64_60 = arith.constant 64 : index
    %55 = vector.load %arg9[%c1_59, %c64_60] : memref<30x128xf32, #tpu.memory_space<vmem>>, vector<20x32xf32>
    %c5_61 = arith.constant 5 : index
    %c0_62 = arith.constant 0 : index
    %56 = vector.load %arg9[%c5_61, %c0_62] : memref<30x128xf32, #tpu.memory_space<vmem>>, vector<20x32xf32>
    %c5_63 = arith.constant 5 : index
    %c32_64 = arith.constant 32 : index
    %57 = vector.load %arg9[%c5_63, %c32_64] : memref<30x128xf32, #tpu.memory_space<vmem>>, vector<20x32xf32>
    %c6_65 = arith.constant 6 : index
    %c0_66 = arith.constant 0 : index
    %58 = vector.load %arg9[%c6_65, %c0_66] : memref<30x128xf32, #tpu.memory_space<vmem>>, vector<20x32xf32>
    %59 = tpu.concatenate %50, %51, %52, %53, %54, %55, %56, %57, %58 in 1 : vector<20x32xf32>, vector<20x32xf32>, vector<20x32xf32>, vector<20x32xf32>, vector<20x32xf32>, vector<20x32xf32>, vector<20x32xf32>, vector<20x32xf32>, vector<20x32xf32> -> vector<20x288xf32>
    %60 = arith.truncf %59 : vector<20x288xf32> to vector<20x288xbf16>
    %c0_67 = arith.constant 0 : index
    %c0_68 = arith.constant 0 : index
    %61 = vector.load %arg2[%c0_67, %c0_68] : memref<288x32xbf16, #tpu.memory_space<vmem>>, vector<288x32xbf16>
    %cst_69 = arith.constant dense<0.000000e+00> : vector<20x32xf32>
    %62 = tpu.matmul %60, %61, %cst_69 {dimension_numbers = #tpu.dot_dimension_numbers<[1], [0], [0], [1], [0, 0, 1, 1], [], []>} : vector<20x288xbf16>, vector<288x32xbf16>, vector<20x32xf32> -> vector<20x32xf32>
    %c0_70 = arith.constant 0 : index
    %c0_71 = arith.constant 0 : index
    %63 = vector.load %arg3[%c0_70, %c0_71] : memref<1x32xf32, #tpu.memory_space<vmem>>, vector<1x32xf32>
    %64 = vector.broadcast %63 : vector<1x32xf32> to vector<20x32xf32>
    %65 = arith.addf %62, %64 : vector<20x32xf32>
    %cst_72 = arith.constant 0.000000e+00 : f32
    %66 = vector.broadcast %cst_72 : f32 to vector<20x32xf32>
    %67 = arith.maximumf %65, %66 : vector<20x32xf32>
    %c0_73 = arith.constant 0 : index
    %c0_74 = arith.constant 0 : index
    %68 = vector.load %arg7[%c0_73, %c0_74] : memref<1x20xf32, #tpu.memory_space<vmem>>, vector<1x20xf32>
    %cst_75 = arith.constant dense<0.000000e+00> : vector<1x32xf32>
    %69 = tpu.matmul %68, %67, %cst_75 {dimension_numbers = #tpu.dot_dimension_numbers<[1], [0], [0], [1], [0, 0, 1, 1], [], []>} : vector<1x20xf32>, vector<20x32xf32>, vector<1x32xf32> -> vector<1x32xf32>
    %70 = arith.mulf %67, %67 : vector<20x32xf32>
    %cst_76 = arith.constant dense<0.000000e+00> : vector<1x32xf32>
    %71 = tpu.matmul %68, %70, %cst_76 {dimension_numbers = #tpu.dot_dimension_numbers<[1], [0], [0], [1], [0, 0, 1, 1], [], []>} : vector<1x20xf32>, vector<20x32xf32>, vector<1x32xf32> -> vector<1x32xf32>
    %c0_77 = arith.constant 0 : index
    %c0_78 = arith.constant 0 : index
    %72 = vector.load %arg6[%c0_77, %c0_78] : memref<32x32xf32, #tpu.memory_space<vmem>>, vector<32x32xf32>
    %cst_79 = arith.constant dense<0.000000e+00> : vector<1x32xf32>
    %73 = tpu.matmul %69, %72, %cst_79 {dimension_numbers = #tpu.dot_dimension_numbers<[1], [0], [0], [1], [0, 0, 1, 1], [], []>} : vector<1x32xf32>, vector<32x32xf32>, vector<1x32xf32> -> vector<1x32xf32>
    %cst_80 = arith.constant 6.250000e-02 : f32
    %74 = vector.broadcast %cst_80 : f32 to vector<1x32xf32>
    %75 = arith.mulf %73, %74 : vector<1x32xf32>
    %c0_81 = arith.constant 0 : index
    %c0_82 = arith.constant 0 : index
    %76 = vector.load %arg6[%c0_81, %c0_82] : memref<32x32xf32, #tpu.memory_space<vmem>>, vector<32x32xf32>
    %cst_83 = arith.constant dense<0.000000e+00> : vector<1x32xf32>
    %77 = tpu.matmul %71, %76, %cst_83 {dimension_numbers = #tpu.dot_dimension_numbers<[1], [0], [0], [1], [0, 0, 1, 1], [], []>} : vector<1x32xf32>, vector<32x32xf32>, vector<1x32xf32> -> vector<1x32xf32>
    %cst_84 = arith.constant 6.250000e-02 : f32
    %78 = vector.broadcast %cst_84 : f32 to vector<1x32xf32>
    %79 = arith.mulf %77, %78 : vector<1x32xf32>
    %80 = arith.mulf %75, %75 : vector<1x32xf32>
    %81 = arith.subf %79, %80 : vector<1x32xf32>
    %cst_85 = arith.constant 0.000000e+00 : f32
    %82 = vector.broadcast %cst_85 : f32 to vector<1x32xf32>
    %83 = arith.maximumf %81, %82 : vector<1x32xf32>
    %cst_86 = arith.constant 9.99999974E-6 : f32
    %84 = vector.broadcast %cst_86 : f32 to vector<1x32xf32>
    %85 = arith.addf %83, %84 : vector<1x32xf32>
    %86 = math.rsqrt %85 : vector<1x32xf32>
    %c0_87 = arith.constant 0 : index
    %c0_88 = arith.constant 0 : index
    %87 = vector.load %arg4[%c0_87, %c0_88] : memref<1x32xf32, #tpu.memory_space<vmem>>, vector<1x32xf32>
    %88 = arith.mulf %87, %86 : vector<1x32xf32>
    %c0_89 = arith.constant 0 : index
    %c0_90 = arith.constant 0 : index
    %89 = vector.load %arg5[%c0_89, %c0_90] : memref<1x32xf32, #tpu.memory_space<vmem>>, vector<1x32xf32>
    %90 = arith.mulf %75, %88 : vector<1x32xf32>
    %91 = arith.subf %89, %90 : vector<1x32xf32>
    %92 = vector.broadcast %88 : vector<1x32xf32> to vector<20x32xf32>
    %93 = arith.mulf %67, %92 : vector<20x32xf32>
    %94 = vector.broadcast %91 : vector<1x32xf32> to vector<20x32xf32>
    %95 = arith.addf %93, %94 : vector<20x32xf32>
    %96 = vector.extract_strided_slice %95 {offsets = [0, 0], sizes = [4, 32], strides = [1, 1]} : vector<20x32xf32> to vector<4x32xf32>
    %c0_91 = arith.constant 0 : index
    %c0_92 = arith.constant 0 : index
    %c0_93 = arith.constant 0 : index
    %c0_94 = arith.constant 0 : index
    %97 = vector.load %arg8[%c0_91, %c0_92, %c0_93, %c0_94] : memref<1x4x4x32xf32, #tpu.memory_space<vmem>>, vector<1x1x4x32xf32>
    %98 = vector.shape_cast %97 : vector<1x1x4x32xf32> to vector<4x32xf32>
    %99 = vector.shape_cast %96 : vector<4x32xf32> to vector<1x1x4x32xf32>
    tpu.vector_store %arg8[%c0_91, %c0_92, %c0_93, %c0_94], %99 {strides = array<i32>} : memref<1x4x4x32xf32, #tpu.memory_space<vmem>>, vector<1x1x4x32xf32>,
    %100 = vector.extract_strided_slice %95 {offsets = [5, 0], sizes = [4, 32], strides = [1, 1]} : vector<20x32xf32> to vector<4x32xf32>
    %c0_95 = arith.constant 0 : index
    %c1_96 = arith.constant 1 : index
    %c0_97 = arith.constant 0 : index
    %c0_98 = arith.constant 0 : index
    %101 = vector.load %arg8[%c0_95, %c1_96, %c0_97, %c0_98] : memref<1x4x4x32xf32, #tpu.memory_space<vmem>>, vector<1x1x4x32xf32>
    %102 = vector.shape_cast %101 : vector<1x1x4x32xf32> to vector<4x32xf32>
    %103 = vector.shape_cast %100 : vector<4x32xf32> to vector<1x1x4x32xf32>
    tpu.vector_store %arg8[%c0_95, %c1_96, %c0_97, %c0_98], %103 {strides = array<i32>} : memref<1x4x4x32xf32, #tpu.memory_space<vmem>>, vector<1x1x4x32xf32>,
    %104 = vector.extract_strided_slice %95 {offsets = [10, 0], sizes = [4, 32], strides = [1, 1]} : vector<20x32xf32> to vector<4x32xf32>
    %c0_99 = arith.constant 0 : index
    %c2_100 = arith.constant 2 : index
    %c0_101 = arith.constant 0 : index
    %c0_102 = arith.constant 0 : index
    %105 = vector.load %arg8[%c0_99, %c2_100, %c0_101, %c0_102] : memref<1x4x4x32xf32, #tpu.memory_space<vmem>>, vector<1x1x4x32xf32>
    %106 = vector.shape_cast %105 : vector<1x1x4x32xf32> to vector<4x32xf32>
    %107 = vector.shape_cast %104 : vector<4x32xf32> to vector<1x1x4x32xf32>
    tpu.vector_store %arg8[%c0_99, %c2_100, %c0_101, %c0_102], %107 {strides = array<i32>} : memref<1x4x4x32xf32, #tpu.memory_space<vmem>>, vector<1x1x4x32xf32>,
    %108 = vector.extract_strided_slice %95 {offsets = [15, 0], sizes = [4, 32], strides = [1, 1]} : vector<20x32xf32> to vector<4x32xf32>
    %c0_103 = arith.constant 0 : index
    %c3_104 = arith.constant 3 : index
    %c0_105 = arith.constant 0 : index
    %c0_106 = arith.constant 0 : index
    %109 = vector.load %arg8[%c0_103, %c3_104, %c0_105, %c0_106] : memref<1x4x4x32xf32, #tpu.memory_space<vmem>>, vector<1x1x4x32xf32>
    %110 = vector.shape_cast %109 : vector<1x1x4x32xf32> to vector<4x32xf32>
    %111 = vector.shape_cast %108 : vector<4x32xf32> to vector<1x1x4x32xf32>
    tpu.vector_store %arg8[%c0_103, %c3_104, %c0_105, %c0_106], %111 {strides = array<i32>} : memref<1x4x4x32xf32, #tpu.memory_space<vmem>>, vector<1x1x4x32xf32>,
    return
  }
  func.func @transform_0(%arg0: i32) -> (i32, i32, i32, i32) {
    %c0_i32 = arith.constant 0 : i32
    %c0_i32_0 = arith.constant 0 : i32
    %c0_i32_1 = arith.constant 0 : i32
    %c0_i32_2 = arith.constant 0 : i32
    return %arg0, %c0_i32, %c0_i32_0, %c0_i32_1 : i32, i32, i32, i32
  }
  func.func @transform_1(%arg0: i32) -> (i32, i32) {
    %c0_i32 = arith.constant 0 : i32
    %c0_i32_0 = arith.constant 0 : i32
    %c0_i32_1 = arith.constant 0 : i32
    return %c0_i32, %c0_i32_0 : i32, i32
  }
  func.func @transform_2(%arg0: i32) -> (i32, i32) {
    %c0_i32 = arith.constant 0 : i32
    %c0_i32_0 = arith.constant 0 : i32
    %c0_i32_1 = arith.constant 0 : i32
    return %c0_i32, %c0_i32_0 : i32, i32
  }
  func.func @transform_3(%arg0: i32) -> (i32, i32) {
    %c0_i32 = arith.constant 0 : i32
    %c0_i32_0 = arith.constant 0 : i32
    %c0_i32_1 = arith.constant 0 : i32
    return %c0_i32, %c0_i32_0 : i32, i32
  }
  func.func @transform_4(%arg0: i32) -> (i32, i32) {
    %c0_i32 = arith.constant 0 : i32
    %c0_i32_0 = arith.constant 0 : i32
    %c0_i32_1 = arith.constant 0 : i32
    return %c0_i32, %c0_i32_0 : i32, i32
  }
  func.func @transform_5(%arg0: i32) -> (i32, i32) {
    %c0_i32 = arith.constant 0 : i32
    %c0_i32_0 = arith.constant 0 : i32
    %c0_i32_1 = arith.constant 0 : i32
    return %c0_i32, %c0_i32_0 : i32, i32
  }
  func.func @transform_6(%arg0: i32) -> (i32, i32) {
    %c0_i32 = arith.constant 0 : i32
    %c0_i32_0 = arith.constant 0 : i32
    %c0_i32_1 = arith.constant 0 : i32
    return %c0_i32, %c0_i32_0 : i32, i32
  }
  func.func @transform_7(%arg0: i32) -> (i32, i32, i32, i32) {
    %c0_i32 = arith.constant 0 : i32
    %c0_i32_0 = arith.constant 0 : i32
    %c0_i32_1 = arith.constant 0 : i32
    %c0_i32_2 = arith.constant 0 : i32
    return %arg0, %c0_i32, %c0_i32_0, %c0_i32_1 : i32, i32, i32, i32
  }
}

module attributes {stable_mosaic.version = 11 : i64} {
  func.func @kernel(%arg0: i32, %arg1: memref<1x4x2x64xf32, #tpu.memory_space<vmem>>, %arg2: memref<288x32xbf16, #tpu.memory_space<vmem>>, %arg3: memref<1x32xf32, #tpu.memory_space<vmem>>, %arg4: memref<1x32xf32, #tpu.memory_space<vmem>>, %arg5: memref<1x32xf32, #tpu.memory_space<vmem>>, %arg6: memref<32x32xf32, #tpu.memory_space<vmem>>, %arg7: memref<1x6xf32, #tpu.memory_space<vmem>>, %arg8: memref<1x2x2x32xf32, #tpu.memory_space<vmem>>, %arg9: memref<12x128xf32, #tpu.memory_space<vmem>>) attributes {dimension_semantics = [#tpu.dimension_semantics<parallel>], iteration_bounds = array<i64: 2>, scalar_prefetch = 0 : i64, scratch_operands = 1 : i64, tpu.core_type = #tpu.core_type<tc>, window_params = [{transform_indices = @transform_0, window_bounds = array<i64: 1, 4, 2, 64>}, {pipeline_mode = #tpu.pipeline_mode<synchronous>, transform_indices = @transform_1, window_bounds = array<i64: 288, 32>}, {pipeline_mode = #tpu.pipeline_mode<synchronous>, transform_indices = @transform_2, window_bounds = array<i64: 1, 32>}, {pipeline_mode = #tpu.pipeline_mode<synchronous>, transform_indices = @transform_3, window_bounds = array<i64: 1, 32>}, {pipeline_mode = #tpu.pipeline_mode<synchronous>, transform_indices = @transform_4, window_bounds = array<i64: 1, 32>}, {pipeline_mode = #tpu.pipeline_mode<synchronous>, transform_indices = @transform_5, window_bounds = array<i64: 32, 32>}, {pipeline_mode = #tpu.pipeline_mode<synchronous>, transform_indices = @transform_6, window_bounds = array<i64: 1, 6>}, {transform_indices = @transform_7, window_bounds = array<i64: 1, 2, 2, 32>}]} {
    %cst = arith.constant 0.000000e+00 : f32
    %0 = vector.broadcast %cst : f32 to vector<12x128xf32>
    %c0 = arith.constant 0 : index
    %c0_0 = arith.constant 0 : index
    %1 = vector.load %arg9[%c0, %c0_0] : memref<12x128xf32, #tpu.memory_space<vmem>>, vector<12x128xf32>
    tpu.vector_store %arg9[%c0, %c0_0], %0 {strides = array<i32>} : memref<12x128xf32, #tpu.memory_space<vmem>>, vector<12x128xf32>,
    %c0_1 = arith.constant 0 : index
    %c0_2 = arith.constant 0 : index
    %c0_3 = arith.constant 0 : index
    %c0_4 = arith.constant 0 : index
    %2 = vector.load %arg1[%c0_1, %c0_2, %c0_3, %c0_4] : memref<1x4x2x64xf32, #tpu.memory_space<vmem>>, vector<1x1x2x64xf32>
    %3 = vector.shape_cast %2 : vector<1x1x2x64xf32> to vector<2x64xf32>
    %4 = vector.extract_strided_slice %3 {offsets = [0, 0], sizes = [2, 32], strides = [1, 1]} : vector<2x64xf32> to vector<2x32xf32>
    %c0_5 = arith.constant 0 : index
    %c96 = arith.constant 96 : index
    %5 = vector.load %arg9[%c0_5, %c96] : memref<12x128xf32, #tpu.memory_space<vmem>>, vector<2x32xf32>
    tpu.vector_store %arg9[%c0_5, %c96], %4 {strides = array<i32>} : memref<12x128xf32, #tpu.memory_space<vmem>>, vector<2x32xf32>,
    %6 = vector.extract_strided_slice %3 {offsets = [0, 32], sizes = [2, 32], strides = [1, 1]} : vector<2x64xf32> to vector<2x32xf32>
    %c1 = arith.constant 1 : index
    %c64 = arith.constant 64 : index
    %7 = vector.load %arg9[%c1, %c64] : memref<12x128xf32, #tpu.memory_space<vmem>>, vector<2x32xf32>
    tpu.vector_store %arg9[%c1, %c64], %6 {strides = array<i32>} : memref<12x128xf32, #tpu.memory_space<vmem>>, vector<2x32xf32>,
    %c0_6 = arith.constant 0 : index
    %c1_7 = arith.constant 1 : index
    %c0_8 = arith.constant 0 : index
    %c0_9 = arith.constant 0 : index
    %8 = vector.load %arg1[%c0_6, %c1_7, %c0_8, %c0_9] : memref<1x4x2x64xf32, #tpu.memory_space<vmem>>, vector<1x1x2x64xf32>
    %9 = vector.shape_cast %8 : vector<1x1x2x64xf32> to vector<2x64xf32>
    %10 = vector.extract_strided_slice %9 {offsets = [0, 0], sizes = [2, 32], strides = [1, 1]} : vector<2x64xf32> to vector<2x32xf32>
    %c3 = arith.constant 3 : index
    %c32 = arith.constant 32 : index
    %11 = vector.load %arg9[%c3, %c32] : memref<12x128xf32, #tpu.memory_space<vmem>>, vector<2x32xf32>
    tpu.vector_store %arg9[%c3, %c32], %10 {strides = array<i32>} : memref<12x128xf32, #tpu.memory_space<vmem>>, vector<2x32xf32>,
    %12 = vector.extract_strided_slice %9 {offsets = [0, 32], sizes = [2, 32], strides = [1, 1]} : vector<2x64xf32> to vector<2x32xf32>
    %c4 = arith.constant 4 : index
    %c0_10 = arith.constant 0 : index
    %13 = vector.load %arg9[%c4, %c0_10] : memref<12x128xf32, #tpu.memory_space<vmem>>, vector<2x32xf32>
    tpu.vector_store %arg9[%c4, %c0_10], %12 {strides = array<i32>} : memref<12x128xf32, #tpu.memory_space<vmem>>, vector<2x32xf32>,
    %c0_11 = arith.constant 0 : index
    %c2 = arith.constant 2 : index
    %c0_12 = arith.constant 0 : index
    %c0_13 = arith.constant 0 : index
    %14 = vector.load %arg1[%c0_11, %c2, %c0_12, %c0_13] : memref<1x4x2x64xf32, #tpu.memory_space<vmem>>, vector<1x1x2x64xf32>
    %15 = vector.shape_cast %14 : vector<1x1x2x64xf32> to vector<2x64xf32>
    %16 = vector.extract_strided_slice %15 {offsets = [0, 0], sizes = [2, 32], strides = [1, 1]} : vector<2x64xf32> to vector<2x32xf32>
    %c3_14 = arith.constant 3 : index
    %c96_15 = arith.constant 96 : index
    %17 = vector.load %arg9[%c3_14, %c96_15] : memref<12x128xf32, #tpu.memory_space<vmem>>, vector<2x32xf32>
    tpu.vector_store %arg9[%c3_14, %c96_15], %16 {strides = array<i32>} : memref<12x128xf32, #tpu.memory_space<vmem>>, vector<2x32xf32>,
    %18 = vector.extract_strided_slice %15 {offsets = [0, 32], sizes = [2, 32], strides = [1, 1]} : vector<2x64xf32> to vector<2x32xf32>
    %c4_16 = arith.constant 4 : index
    %c64_17 = arith.constant 64 : index
    %19 = vector.load %arg9[%c4_16, %c64_17] : memref<12x128xf32, #tpu.memory_space<vmem>>, vector<2x32xf32>
    tpu.vector_store %arg9[%c4_16, %c64_17], %18 {strides = array<i32>} : memref<12x128xf32, #tpu.memory_space<vmem>>, vector<2x32xf32>,
    %c0_18 = arith.constant 0 : index
    %c3_19 = arith.constant 3 : index
    %c0_20 = arith.constant 0 : index
    %c0_21 = arith.constant 0 : index
    %20 = vector.load %arg1[%c0_18, %c3_19, %c0_20, %c0_21] : memref<1x4x2x64xf32, #tpu.memory_space<vmem>>, vector<1x1x2x64xf32>
    %21 = vector.shape_cast %20 : vector<1x1x2x64xf32> to vector<2x64xf32>
    %22 = vector.extract_strided_slice %21 {offsets = [0, 0], sizes = [2, 32], strides = [1, 1]} : vector<2x64xf32> to vector<2x32xf32>
    %c6 = arith.constant 6 : index
    %c32_22 = arith.constant 32 : index
    %23 = vector.load %arg9[%c6, %c32_22] : memref<12x128xf32, #tpu.memory_space<vmem>>, vector<2x32xf32>
    tpu.vector_store %arg9[%c6, %c32_22], %22 {strides = array<i32>} : memref<12x128xf32, #tpu.memory_space<vmem>>, vector<2x32xf32>,
    %24 = vector.extract_strided_slice %21 {offsets = [0, 32], sizes = [2, 32], strides = [1, 1]} : vector<2x64xf32> to vector<2x32xf32>
    %c7 = arith.constant 7 : index
    %c0_23 = arith.constant 0 : index
    %25 = vector.load %arg9[%c7, %c0_23] : memref<12x128xf32, #tpu.memory_space<vmem>>, vector<2x32xf32>
    tpu.vector_store %arg9[%c7, %c0_23], %24 {strides = array<i32>} : memref<12x128xf32, #tpu.memory_space<vmem>>, vector<2x32xf32>,
    %c0_24 = arith.constant 0 : index
    %c0_25 = arith.constant 0 : index
    %26 = vector.load %arg9[%c0_24, %c0_25] : memref<12x128xf32, #tpu.memory_space<vmem>>, vector<6x32xf32>
    %c0_26 = arith.constant 0 : index
    %c32_27 = arith.constant 32 : index
    %27 = vector.load %arg9[%c0_26, %c32_27] : memref<12x128xf32, #tpu.memory_space<vmem>>, vector<6x32xf32>
    %c1_28 = arith.constant 1 : index
    %c0_29 = arith.constant 0 : index
    %28 = vector.load %arg9[%c1_28, %c0_29] : memref<12x128xf32, #tpu.memory_space<vmem>>, vector<6x32xf32>
    %c0_30 = arith.constant 0 : index
    %c64_31 = arith.constant 64 : index
    %29 = vector.load %arg9[%c0_30, %c64_31] : memref<12x128xf32, #tpu.memory_space<vmem>>, vector<6x32xf32>
    %c0_32 = arith.constant 0 : index
    %c96_33 = arith.constant 96 : index
    %30 = vector.load %arg9[%c0_32, %c96_33] : memref<12x128xf32, #tpu.memory_space<vmem>>, vector<6x32xf32>
    %c1_34 = arith.constant 1 : index
    %c64_35 = arith.constant 64 : index
    %31 = vector.load %arg9[%c1_34, %c64_35] : memref<12x128xf32, #tpu.memory_space<vmem>>, vector<6x32xf32>
    %c3_36 = arith.constant 3 : index
    %c0_37 = arith.constant 0 : index
    %32 = vector.load %arg9[%c3_36, %c0_37] : memref<12x128xf32, #tpu.memory_space<vmem>>, vector<6x32xf32>
    %c3_38 = arith.constant 3 : index
    %c32_39 = arith.constant 32 : index
    %33 = vector.load %arg9[%c3_38, %c32_39] : memref<12x128xf32, #tpu.memory_space<vmem>>, vector<6x32xf32>
    %c4_40 = arith.constant 4 : index
    %c0_41 = arith.constant 0 : index
    %34 = vector.load %arg9[%c4_40, %c0_41] : memref<12x128xf32, #tpu.memory_space<vmem>>, vector<6x32xf32>
    %35 = tpu.concatenate %26, %27, %28, %29, %30, %31, %32, %33, %34 in 1 : vector<6x32xf32>, vector<6x32xf32>, vector<6x32xf32>, vector<6x32xf32>, vector<6x32xf32>, vector<6x32xf32>, vector<6x32xf32>, vector<6x32xf32>, vector<6x32xf32> -> vector<6x288xf32>
    %36 = arith.truncf %35 : vector<6x288xf32> to vector<6x288xbf16>
    %c0_42 = arith.constant 0 : index
    %c0_43 = arith.constant 0 : index
    %37 = vector.load %arg2[%c0_42, %c0_43] : memref<288x32xbf16, #tpu.memory_space<vmem>>, vector<288x32xbf16>
    %cst_44 = arith.constant dense<0.000000e+00> : vector<6x32xf32>
    %38 = tpu.matmul %36, %37, %cst_44 {dimension_numbers = #tpu.dot_dimension_numbers<[1], [0], [0], [1], [0, 0, 1, 1], [], []>} : vector<6x288xbf16>, vector<288x32xbf16>, vector<6x32xf32> -> vector<6x32xf32>
    %c0_45 = arith.constant 0 : index
    %c0_46 = arith.constant 0 : index
    %39 = vector.load %arg3[%c0_45, %c0_46] : memref<1x32xf32, #tpu.memory_space<vmem>>, vector<1x32xf32>
    %40 = vector.broadcast %39 : vector<1x32xf32> to vector<6x32xf32>
    %41 = arith.addf %38, %40 : vector<6x32xf32>
    %cst_47 = arith.constant 0.000000e+00 : f32
    %42 = vector.broadcast %cst_47 : f32 to vector<6x32xf32>
    %43 = arith.maximumf %41, %42 : vector<6x32xf32>
    %c0_48 = arith.constant 0 : index
    %c0_49 = arith.constant 0 : index
    %44 = vector.load %arg7[%c0_48, %c0_49] : memref<1x6xf32, #tpu.memory_space<vmem>>, vector<1x6xf32>
    %cst_50 = arith.constant dense<0.000000e+00> : vector<1x32xf32>
    %45 = tpu.matmul %44, %43, %cst_50 {dimension_numbers = #tpu.dot_dimension_numbers<[1], [0], [0], [1], [0, 0, 1, 1], [], []>} : vector<1x6xf32>, vector<6x32xf32>, vector<1x32xf32> -> vector<1x32xf32>
    %46 = arith.mulf %43, %43 : vector<6x32xf32>
    %cst_51 = arith.constant dense<0.000000e+00> : vector<1x32xf32>
    %47 = tpu.matmul %44, %46, %cst_51 {dimension_numbers = #tpu.dot_dimension_numbers<[1], [0], [0], [1], [0, 0, 1, 1], [], []>} : vector<1x6xf32>, vector<6x32xf32>, vector<1x32xf32> -> vector<1x32xf32>
    %c0_52 = arith.constant 0 : index
    %c0_53 = arith.constant 0 : index
    %48 = vector.load %arg6[%c0_52, %c0_53] : memref<32x32xf32, #tpu.memory_space<vmem>>, vector<32x32xf32>
    %cst_54 = arith.constant dense<0.000000e+00> : vector<1x32xf32>
    %49 = tpu.matmul %45, %48, %cst_54 {dimension_numbers = #tpu.dot_dimension_numbers<[1], [0], [0], [1], [0, 0, 1, 1], [], []>} : vector<1x32xf32>, vector<32x32xf32>, vector<1x32xf32> -> vector<1x32xf32>
    %cst_55 = arith.constant 2.500000e-01 : f32
    %50 = vector.broadcast %cst_55 : f32 to vector<1x32xf32>
    %51 = arith.mulf %49, %50 : vector<1x32xf32>
    %c0_56 = arith.constant 0 : index
    %c0_57 = arith.constant 0 : index
    %52 = vector.load %arg6[%c0_56, %c0_57] : memref<32x32xf32, #tpu.memory_space<vmem>>, vector<32x32xf32>
    %cst_58 = arith.constant dense<0.000000e+00> : vector<1x32xf32>
    %53 = tpu.matmul %47, %52, %cst_58 {dimension_numbers = #tpu.dot_dimension_numbers<[1], [0], [0], [1], [0, 0, 1, 1], [], []>} : vector<1x32xf32>, vector<32x32xf32>, vector<1x32xf32> -> vector<1x32xf32>
    %cst_59 = arith.constant 2.500000e-01 : f32
    %54 = vector.broadcast %cst_59 : f32 to vector<1x32xf32>
    %55 = arith.mulf %53, %54 : vector<1x32xf32>
    %56 = arith.mulf %51, %51 : vector<1x32xf32>
    %57 = arith.subf %55, %56 : vector<1x32xf32>
    %cst_60 = arith.constant 0.000000e+00 : f32
    %58 = vector.broadcast %cst_60 : f32 to vector<1x32xf32>
    %59 = arith.maximumf %57, %58 : vector<1x32xf32>
    %cst_61 = arith.constant 9.99999974E-6 : f32
    %60 = vector.broadcast %cst_61 : f32 to vector<1x32xf32>
    %61 = arith.addf %59, %60 : vector<1x32xf32>
    %62 = math.rsqrt %61 : vector<1x32xf32>
    %c0_62 = arith.constant 0 : index
    %c0_63 = arith.constant 0 : index
    %63 = vector.load %arg4[%c0_62, %c0_63] : memref<1x32xf32, #tpu.memory_space<vmem>>, vector<1x32xf32>
    %64 = arith.mulf %63, %62 : vector<1x32xf32>
    %c0_64 = arith.constant 0 : index
    %c0_65 = arith.constant 0 : index
    %65 = vector.load %arg5[%c0_64, %c0_65] : memref<1x32xf32, #tpu.memory_space<vmem>>, vector<1x32xf32>
    %66 = arith.mulf %51, %64 : vector<1x32xf32>
    %67 = arith.subf %65, %66 : vector<1x32xf32>
    %68 = vector.broadcast %64 : vector<1x32xf32> to vector<6x32xf32>
    %69 = arith.mulf %43, %68 : vector<6x32xf32>
    %70 = vector.broadcast %67 : vector<1x32xf32> to vector<6x32xf32>
    %71 = arith.addf %69, %70 : vector<6x32xf32>
    %72 = vector.extract_strided_slice %71 {offsets = [0, 0], sizes = [2, 32], strides = [1, 1]} : vector<6x32xf32> to vector<2x32xf32>
    %c0_66 = arith.constant 0 : index
    %c0_67 = arith.constant 0 : index
    %c0_68 = arith.constant 0 : index
    %c0_69 = arith.constant 0 : index
    %73 = vector.load %arg8[%c0_66, %c0_67, %c0_68, %c0_69] : memref<1x2x2x32xf32, #tpu.memory_space<vmem>>, vector<1x1x2x32xf32>
    %74 = vector.shape_cast %73 : vector<1x1x2x32xf32> to vector<2x32xf32>
    %75 = vector.shape_cast %72 : vector<2x32xf32> to vector<1x1x2x32xf32>
    tpu.vector_store %arg8[%c0_66, %c0_67, %c0_68, %c0_69], %75 {strides = array<i32>} : memref<1x2x2x32xf32, #tpu.memory_space<vmem>>, vector<1x1x2x32xf32>,
    %76 = vector.extract_strided_slice %71 {offsets = [3, 0], sizes = [2, 32], strides = [1, 1]} : vector<6x32xf32> to vector<2x32xf32>
    %c0_70 = arith.constant 0 : index
    %c1_71 = arith.constant 1 : index
    %c0_72 = arith.constant 0 : index
    %c0_73 = arith.constant 0 : index
    %77 = vector.load %arg8[%c0_70, %c1_71, %c0_72, %c0_73] : memref<1x2x2x32xf32, #tpu.memory_space<vmem>>, vector<1x1x2x32xf32>
    %78 = vector.shape_cast %77 : vector<1x1x2x32xf32> to vector<2x32xf32>
    %79 = vector.shape_cast %76 : vector<2x32xf32> to vector<1x1x2x32xf32>
    tpu.vector_store %arg8[%c0_70, %c1_71, %c0_72, %c0_73], %79 {strides = array<i32>} : memref<1x2x2x32xf32, #tpu.memory_space<vmem>>, vector<1x1x2x32xf32>,
    return
  }
  func.func @transform_0(%arg0: i32) -> (i32, i32, i32, i32) {
    %c0_i32 = arith.constant 0 : i32
    %c0_i32_0 = arith.constant 0 : i32
    %c0_i32_1 = arith.constant 0 : i32
    %c0_i32_2 = arith.constant 0 : i32
    return %arg0, %c0_i32, %c0_i32_0, %c0_i32_1 : i32, i32, i32, i32
  }
  func.func @transform_1(%arg0: i32) -> (i32, i32) {
    %c0_i32 = arith.constant 0 : i32
    %c0_i32_0 = arith.constant 0 : i32
    %c0_i32_1 = arith.constant 0 : i32
    return %c0_i32, %c0_i32_0 : i32, i32
  }
  func.func @transform_2(%arg0: i32) -> (i32, i32) {
    %c0_i32 = arith.constant 0 : i32
    %c0_i32_0 = arith.constant 0 : i32
    %c0_i32_1 = arith.constant 0 : i32
    return %c0_i32, %c0_i32_0 : i32, i32
  }
  func.func @transform_3(%arg0: i32) -> (i32, i32) {
    %c0_i32 = arith.constant 0 : i32
    %c0_i32_0 = arith.constant 0 : i32
    %c0_i32_1 = arith.constant 0 : i32
    return %c0_i32, %c0_i32_0 : i32, i32
  }
  func.func @transform_4(%arg0: i32) -> (i32, i32) {
    %c0_i32 = arith.constant 0 : i32
    %c0_i32_0 = arith.constant 0 : i32
    %c0_i32_1 = arith.constant 0 : i32
    return %c0_i32, %c0_i32_0 : i32, i32
  }
  func.func @transform_5(%arg0: i32) -> (i32, i32) {
    %c0_i32 = arith.constant 0 : i32
    %c0_i32_0 = arith.constant 0 : i32
    %c0_i32_1 = arith.constant 0 : i32
    return %c0_i32, %c0_i32_0 : i32, i32
  }
  func.func @transform_6(%arg0: i32) -> (i32, i32) {
    %c0_i32 = arith.constant 0 : i32
    %c0_i32_0 = arith.constant 0 : i32
    %c0_i32_1 = arith.constant 0 : i32
    return %c0_i32, %c0_i32_0 : i32, i32
  }
  func.func @transform_7(%arg0: i32) -> (i32, i32, i32, i32) {
    %c0_i32 = arith.constant 0 : i32
    %c0_i32_0 = arith.constant 0 : i32
    %c0_i32_1 = arith.constant 0 : i32
    %c0_i32_2 = arith.constant 0 : i32
    return %arg0, %c0_i32, %c0_i32_0, %c0_i32_1 : i32, i32, i32, i32
  }
}

</mosaic_0001>

<llo_original>
// kernel: multi_scale_downsampling.6
$region0: #{multi_scale_downsampling.6}
  #allocation0 [shape = 'u32[]', space=smem, size = 0x4, offset = 0x4, fixed_abs, tag = 'smem constant byte address 0x4 - core index']
  #allocation1 [shape = 'u32[72,128]{1,0:T(1,128)}', space=vmem, size = 0x9000, scoped, tag = 'internal scratch']
  #allocation2 [shape = 'f32[30,128]{1,0:T(8,128)}', space=vmem, size = 0x4000, scoped, tag = 'scratch operand']
  %s0 = inlined_call_operand.vmem [shape: f32[2,8,4,64], index: 0, kind: input, shape index: {}]
  %s1 = inlined_call_operand.vmem [shape: bf16[288,32], index: 1, kind: input, shape index: {}]
  %s2 = inlined_call_operand.vmem [shape: f32[1,32], index: 2, kind: input, shape index: {}]
  %s3 = inlined_call_operand.vmem [shape: f32[1,32], index: 3, kind: input, shape index: {}]
  %s4 = inlined_call_operand.vmem [shape: f32[1,32], index: 4, kind: input, shape index: {}]
  %s5 = inlined_call_operand.vmem [shape: f32[32,32], index: 5, kind: input, shape index: {}]
  %s6 = inlined_call_operand.vmem [shape: f32[1,20], index: 6, kind: input, shape index: {}]
  %s7 = inlined_call_operand.vmem [shape: f32[2,4,4,32], index: 7, kind: output, shape index: {}]
  %s8 = sld [smem:[#allocation0]]
  $region61: #{multi_scale_downsampling.6} parent=0
    _
  %s10 = ssub.s32 1, %s8
  %s11 = scalar_select 0, %s10, %s8
  loop: start=0, step=1, limit=4
  $region2: #{multi_scale_downsampling.6} parent=0 // loop_pre_header
    _
  $region3: #{multi_scale_downsampling.6} parent=0 // loop_header
    %s13 = sphi 0, %s17
    %p14 = scmp.ge.s32.totalorder %s13, 4
    %s23 = sphi 0, %s25
    %s26 = sphi 0, %s23
    %s27 = sphi 0, %s26
    %s43 = sphi 0, %s27
    %s47 = sphi 0, %s47
    %s49 = sphi 0, %s47
    %s50 = sphi 0, %s49
    %s64 = sphi 0, %s50
    %s68 = sphi 0, %s68
    %s70 = sphi 0, %s68
    %s71 = sphi 0, %s70
    %s85 = sphi 0, %s71
    %s89 = sphi 0, %s89
    %s91 = sphi 0, %s89
    %s92 = sphi 0, %s91
    %s106 = sphi 0, %s92
    %s110 = sphi 0, %s110
    %s112 = sphi 0, %s110
    %s113 = sphi 0, %s112
    %s127 = sphi 0, %s113
    %s131 = sphi 0, %s131
    %s133 = sphi 0, %s131
    %s134 = sphi 0, %s133
    %s148 = sphi 0, %s134
    %s152 = sphi 0, %s152
    %s154 = sphi 0, %s152
    %s155 = sphi 0, %s154
    %s169 = sphi 0, %s155
    %s175 = sphi 0, %s177
    %s178 = sphi 0, %s175
    %s179 = sphi 0, %s178
    %s195 = sphi 0, %s179
  $region4: #{multi_scale_downsampling.6} parent=0 // loop_header_branch
    %16 = sbr.rel (%p14) target = $region8
  $region5: #{multi_scale_downsampling.6} parent=0 // loop_body
    %s18 = ssub.s32 %s13, 1
    %s19 = ssub.s32 %s13, 2
    %s20 = sadd.s32 %s13, 1
    %s21 = ssub.s32 %s13, %s20
    %p22 = scmp.eq.s32.totalorder %s21, 0
    %s24 = sadd.s32 %s23, 1
    %s25 = scalar_select %p22, %s23, %s24
    %p28 = pneg %p22
    %p29 = scmp.eq.s32.totalorder %s13, 1
    %p30 = por %p28, %p29
    %p31 = scmp.ne.s32.totalorder %s23, %s26
    %p32 = scmp.eq.s32.totalorder %s13, 0
    %p33 = por %p31, %p32
    %p34 = scmp.ne.s32.totalorder %s23, %s26
    %p35 = scmp.eq.s32.totalorder %s18, 1
    %p36 = por %p34, %p35
    %p37 = scmp.ne.s32.totalorder %s26, %s27
    %p38 = scmp.eq.s32.totalorder %s18, 0
    %p39 = por %p37, %p38
    %p40 = scmp.ne.s32.totalorder %s26, %s27
    %p41 = scmp.eq.s32.totalorder %s19, 1
    %p42 = por %p40, %p41
    %p44 = scmp.ne.s32.totalorder %s27, %s43
    %p45 = scmp.eq.s32.totalorder %s19, 0
    %p46 = por %p44, %p45
    %s48 = sadd.s32 %s47, 1
    %p51 = scmp.eq.s32.totalorder %s13, 1
    %p52 = scmp.ne.s32.totalorder %s47, %s49
    %p53 = scmp.eq.s32.totalorder %s13, 0
    %p54 = por %p52, %p53
    %p55 = scmp.ne.s32.totalorder %s47, %s49
    %p56 = scmp.eq.s32.totalorder %s18, 1
    %p57 = por %p55, %p56
    %p58 = scmp.ne.s32.totalorder %s49, %s50
    %p59 = scmp.eq.s32.totalorder %s18, 0
    %p60 = por %p58, %p59
    %p61 = scmp.ne.s32.totalorder %s49, %s50
    %p62 = scmp.eq.s32.totalorder %s19, 1
    %p63 = por %p61, %p62
    %p65 = scmp.ne.s32.totalorder %s50, %s64
    %p66 = scmp.eq.s32.totalorder %s19, 0
    %p67 = por %p65, %p66
    %s69 = sadd.s32 %s68, 1
    %p72 = scmp.eq.s32.totalorder %s13, 1
    %p73 = scmp.ne.s32.totalorder %s68, %s70
    %p74 = scmp.eq.s32.totalorder %s13, 0
    %p75 = por %p73, %p74
    %p76 = scmp.ne.s32.totalorder %s68, %s70
    %p77 = scmp.eq.s32.totalorder %s18, 1
    %p78 = por %p76, %p77
    %p79 = scmp.ne.s32.totalorder %s70, %s71
    %p80 = scmp.eq.s32.totalorder %s18, 0
    %p81 = por %p79, %p80
    %p82 = scmp.ne.s32.totalorder %s70, %s71
    %p83 = scmp.eq.s32.totalorder %s19, 1
    %p84 = por %p82, %p83
    %p86 = scmp.ne.s32.totalorder %s71, %s85
    %p87 = scmp.eq.s32.totalorder %s19, 0
    %p88 = por %p86, %p87
    %s90 = sadd.s32 %s89, 1
    %p93 = scmp.eq.s32.totalorder %s13, 1
    %p94 = scmp.ne.s32.totalorder %s89, %s91
    %p95 = scmp.eq.s32.totalorder %s13, 0
    %p96 = por %p94, %p95
    %p97 = scmp.ne.s32.totalorder %s89, %s91
    %p98 = scmp.eq.s32.totalorder %s18, 1
    %p99 = por %p97, %p98
    %p100 = scmp.ne.s32.totalorder %s91, %s92
    %p101 = scmp.eq.s32.totalorder %s18, 0
    %p102 = por %p100, %p101
    %p103 = scmp.ne.s32.totalorder %s91, %s92
    %p104 = scmp.eq.s32.totalorder %s19, 1
    %p105 = por %p103, %p104
    %p107 = scmp.ne.s32.totalorder %s92, %s106
    %p108 = scmp.eq.s32.totalorder %s19, 0
    %p109 = por %p107, %p108
    %s111 = sadd.s32 %s110, 1
    %p114 = scmp.eq.s32.totalorder %s13, 1
    %p115 = scmp.ne.s32.totalorder %s110, %s112
    %p116 = scmp.eq.s32.totalorder %s13, 0
    %p117 = por %p115, %p116
    %p118 = scmp.ne.s32.totalorder %s110, %s112
    %p119 = scmp.eq.s32.totalorder %s18, 1
    %p120 = por %p118, %p119
    %p121 = scmp.ne.s32.totalorder %s112, %s113
    %p122 = scmp.eq.s32.totalorder %s18, 0
    %p123 = por %p121, %p122
    %p124 = scmp.ne.s32.totalorder %s112, %s113
    %p125 = scmp.eq.s32.totalorder %s19, 1
    %p126 = por %p124, %p125
    %p128 = scmp.ne.s32.totalorder %s113, %s127
    %p129 = scmp.eq.s32.totalorder %s19, 0
    %p130 = por %p128, %p129
    %s132 = sadd.s32 %s131, 1
    %p135 = scmp.eq.s32.totalorder %s13, 1
    %p136 = scmp.ne.s32.totalorder %s131, %s133
    %p137 = scmp.eq.s32.totalorder %s13, 0
    %p138 = por %p136, %p137
    %p139 = scmp.ne.s32.totalorder %s131, %s133
    %p140 = scmp.eq.s32.totalorder %s18, 1
    %p141 = por %p139, %p140
    %p142 = scmp.ne.s32.totalorder %s133, %s134
    %p143 = scmp.eq.s32.totalorder %s18, 0
    %p144 = por %p142, %p143
    %p145 = scmp.ne.s32.totalorder %s133, %s134
    %p146 = scmp.eq.s32.totalorder %s19, 1
    %p147 = por %p145, %p146
    %p149 = scmp.ne.s32.totalorder %s134, %s148
    %p150 = scmp.eq.s32.totalorder %s19, 0
    %p151 = por %p149, %p150
    %s153 = sadd.s32 %s152, 1
    %p156 = scmp.eq.s32.totalorder %s13, 1
    %p157 = scmp.ne.s32.totalorder %s152, %s154
    %p158 = scmp.eq.s32.totalorder %s13, 0
    %p159 = por %p157, %p158
    %p160 = scmp.ne.s32.totalorder %s152, %s154
    %p161 = scmp.eq.s32.totalorder %s18, 1
    %p162 = por %p160, %p161
    %p163 = scmp.ne.s32.totalorder %s154, %s155
    %p164 = scmp.eq.s32.totalorder %s18, 0
    %p165 = por %p163, %p164
    %p166 = scmp.ne.s32.totalorder %s154, %s155
    %p167 = scmp.eq.s32.totalorder %s19, 1
    %p168 = por %p166, %p167
    %p170 = scmp.ne.s32.totalorder %s155, %s169
    %p171 = scmp.eq.s32.totalorder %s19, 0
    %p172 = por %p170, %p171
    %s173 = ssub.s32 %s13, %s20
    %p174 = scmp.eq.s32.totalorder %s173, 0
    %s176 = sadd.s32 %s175, 1
    %s177 = scalar_select %p174, %s175, %s176
    %p180 = pneg %p174
    %p181 = scmp.eq.s32.totalorder %s13, 1
    %p182 = por %p180, %p181
    %p183 = scmp.ne.s32.totalorder %s175, %s178
    %p184 = scmp.eq.s32.totalorder %s13, 0
    %p185 = por %p183, %p184
    %p186 = scmp.ne.s32.totalorder %s175, %s178
    %p187 = scmp.eq.s32.totalorder %s18, 1
    %p188 = por %p186, %p187
    %p189 = scmp.ne.s32.totalorder %s178, %s179
    %p190 = scmp.eq.s32.totalorder %s18, 0
    %p191 = por %p189, %p190
    %p192 = scmp.ne.s32.totalorder %s178, %s179
    %p193 = scmp.eq.s32.totalorder %s19, 1
    %p194 = por %p192, %p193
    %p196 = scmp.ne.s32.totalorder %s179, %s195
    %p197 = scmp.eq.s32.totalorder %s19, 0
    %p198 = por %p196, %p197
    %p199 = scmp.le.s32.totalorder 1, %s13
    %p200 = scmp.lt.s32.totalorder %s13, 3
    %p201 = pnand %p199, %p200
    %p202 = pneg %p201
    // Predicated region
    $region9: #{multi_scale_downsampling.6} parent=5 // pred_check
      _
    $region10: #{multi_scale_downsampling.6} parent=5 // pred_check_branch
      %204 = sbr.rel (%p201) target = $region12
    $region11: #{multi_scale_downsampling.6} parent=5 // pred_region
      %s205 = ssub.s32 %s13, 1
      // Predicated region
      $region13: #{multi_scale_downsampling.6} parent=11 // pred_check
        %p206 = pneg %p60
      $region14: #{multi_scale_downsampling.6} parent=11 // pred_check_branch
        %208 = sbr.rel (%p206) target = $region16
      $region15: #{multi_scale_downsampling.6} parent=11 // pred_region
        _
      $region16: #{multi_scale_downsampling.6} parent=11 // pred_fallthru
        _
      // Predicated region
      $region17: #{multi_scale_downsampling.6} parent=11 // pred_check
        %p209 = pneg %p81
      $region18: #{multi_scale_downsampling.6} parent=11 // pred_check_branch
        %211 = sbr.rel (%p209) target = $region20
      $region19: #{multi_scale_downsampling.6} parent=11 // pred_region
        _
      $region20: #{multi_scale_downsampling.6} parent=11 // pred_fallthru
        _
      // Predicated region
      $region21: #{multi_scale_downsampling.6} parent=11 // pred_check
        %p212 = pneg %p102
      $region22: #{multi_scale_downsampling.6} parent=11 // pred_check_branch
        %214 = sbr.rel (%p212) target = $region24
      $region23: #{multi_scale_downsampling.6} parent=11 // pred_region
        _
      $region24: #{multi_scale_downsampling.6} parent=11 // pred_fallthru
        _
      // Predicated region
      $region25: #{multi_scale_downsampling.6} parent=11 // pred_check
        %p215 = pneg %p123
      $region26: #{multi_scale_downsampling.6} parent=11 // pred_check_branch
        %217 = sbr.rel (%p215) target = $region28
      $region27: #{multi_scale_downsampling.6} parent=11 // pred_region
        _
      $region28: #{multi_scale_downsampling.6} parent=11 // pred_fallthru
        _
      // Predicated region
      $region29: #{multi_scale_downsampling.6} parent=11 // pred_check
        %p218 = pneg %p144
      $region30: #{multi_scale_downsampling.6} parent=11 // pred_check_branch
        %220 = sbr.rel (%p218) target = $region32
      $region31: #{multi_scale_downsampling.6} parent=11 // pred_region
        _
      $region32: #{multi_scale_downsampling.6} parent=11 // pred_fallthru
        _
      // Predicated region
      $region33: #{multi_scale_downsampling.6} parent=11 // pred_check
        %p221 = pneg %p165
      $region34: #{multi_scale_downsampling.6} parent=11 // pred_check_branch
        %223 = sbr.rel (%p221) target = $region36
      $region35: #{multi_scale_downsampling.6} parent=11 // pred_region
        _
      $region36: #{multi_scale_downsampling.6} parent=11 // pred_fallthru
        _
    $region12: #{multi_scale_downsampling.6} parent=5 // pred_fallthru
      _
    %p224 = scmp.lt.s32.totalorder %s13, 2
    // Predicated region
    $region37: #{multi_scale_downsampling.6} parent=5 // pred_check
      %p225 = pneg %p224
    $region38: #{multi_scale_downsampling.6} parent=5 // pred_check_branch
      %227 = sbr.rel (%p225) target = $region40
    $region39: #{multi_scale_downsampling.6} parent=5 // pred_region
      // Predicated region
      $region41: #{multi_scale_downsampling.6} parent=39 // pred_check
        %p228 = pneg %p33
      $region42: #{multi_scale_downsampling.6} parent=39 // pred_check_branch
        %230 = sbr.rel (%p228) target = $region44
      $region43: #{multi_scale_downsampling.6} parent=39 // pred_region
        %p231 = scmp.lt.s32.totalorder %s13, 1
        %s232 = scalar_select %p231, %s13, 1
        %s233 = smul.addr %s232, 8
        %s234 = smul.addr %s233, 4
        %s235 = scalar_lea.vmem %s0, %s234
      $region44: #{multi_scale_downsampling.6} parent=39 // pred_fallthru
        _
    $region40: #{multi_scale_downsampling.6} parent=5 // pred_fallthru
      _
    %p236 = scmp.le.s32.totalorder 1, %s13
    %p237 = scmp.lt.s32.totalorder %s13, 3
    %p238 = pnand %p236, %p237
    %p239 = pneg %p238
    // Predicated region
    $region45: #{multi_scale_downsampling.6} parent=5 // pred_check
      _
    $region46: #{multi_scale_downsampling.6} parent=5 // pred_check_branch
      %241 = sbr.rel (%p238) target = $region48
    $region47: #{multi_scale_downsampling.6} parent=5 // pred_region
      %s242 = ssub.s32 %s13, 1
      %p243 = scmp.lt.s32.totalorder %s18, 1
      %s244 = scalar_select %p243, %s18, 1
      %s245 = smul.addr %s244, 8
      %s246 = smul.addr %s245, 4
      %s247 = scalar_lea.vmem %s0, %s246
      %p248 = pneg %p39
      %p249 = pneg %p36
      %p250 = pneg %p60
      %p251 = pneg %p57
      %p252 = pneg %p81
      %p253 = pneg %p78
      %p254 = pneg %p102
      %p255 = pneg %p99
      %p256 = pneg %p123
      %p257 = pneg %p120
      %p258 = pneg %p144
      %p259 = pneg %p141
      %p260 = pneg %p165
      %p261 = pneg %p162
      %p262 = pneg %p191
      %p263 = pneg %p188
      %p264 = scmp.lt.s32.totalorder %s18, 1
      %s265 = scalar_select %p264, %s18, 1
      %s266 = smul.addr %s265, 4
      %s267 = smul.addr %s266, 4
      %s268 = scalar_lea.vmem %s7, %s267
      %p269 = scmp.lt.s32.totalorder %s18, 1
      %s270 = scalar_select %p269, %s18, 1
      %s271 = smul.addr %s270, 8
      %s272 = smul.addr %s271, 4
      %s273 = scalar_lea.vmem %s0, %s272
      %p274 = scmp.lt.s32.totalorder %s18, 1
      %s275 = scalar_select %p274, %s18, 1
      %s276 = smul.addr %s275, 4
      %s277 = smul.addr %s276, 4
      %s278 = scalar_lea.vmem %s7, %s277
      %280 = vst [vmem:[#allocation2] sm:$0xff] 0.0
      %281 = vst [vmem:[#allocation2 + $0x8] sm:$0xff] 0.0
      %282 = vst [vmem:[#allocation2 + $0x10] sm:$0xff] 0.0
      %283 = vst [vmem:[#allocation2 + $0x18] sm:$0x3f] 0.0
      %v284 = vld [vmem:[%s273] sm:$0xf]
      %286 = vrot.lane.b32.xlu0 %v284, 96
      %v287 = vpop.permute.xlu0 %286
      %vm289 = vcmask 1044224
      %290 = vst.msk [vmem:[#allocation2] sm:$0xf] %vm289, %v287
      %291 = vrot.lane.b32.xlu0 %v284, 32
      %v292 = vpop.permute.xlu0 %291
      %vm294 = vcmask 781824
      %295 = vst.msk [vmem:[#allocation2 + $0x1] sm:$0xf] %vm294, %v292
      %s296 = scalar_lea.vmem %s273, 4
      %v297 = vld [vmem:[%s296] sm:$0xf]
      %299 = vrot.lane.b32.xlu0 %v297, 32
      %v300 = vpop.permute.xlu0 %299
      %vm302 = vcmask 519424
      %303 = vst.msk [vmem:[#allocation2 + $0x5] sm:$0xf] %vm302, %v300
      %304 = vrot.lane.b32.xlu0 %v297, 96
      %v305 = vpop.permute.xlu0 %304
      %vm307 = vcmask 257024
      %308 = vst.msk [vmem:[#allocation2 + $0x6] sm:$0xf] %vm307, %v305
      %s309 = scalar_lea.vmem %s273, 8
      %v310 = vld [vmem:[%s309] sm:$0xf]
      %312 = vrot.lane.b32.xlu0 %v310, 96
      %v313 = vpop.permute.xlu0 %312
      %315 = vst.msk [vmem:[#allocation2 + $0x5] sm:$0xf] %vm289, %v313
      %316 = vrot.lane.b32.xlu0 %v310, 32
      %v317 = vpop.permute.xlu0 %316
      %319 = vst.msk [vmem:[#allocation2 + $0x6] sm:$0xf] %vm294, %v317
      %s320 = scalar_lea.vmem %s273, 12
      %v321 = vld [vmem:[%s320] sm:$0xf]
      %323 = vrot.lane.b32.xlu0 %v321, 32
      %v324 = vpop.permute.xlu0 %323
      %326 = vst.msk [vmem:[#allocation2 + $0xa] sm:$0xf] %vm302, %v324
      %327 = vrot.lane.b32.xlu0 %v321, 96
      %v328 = vpop.permute.xlu0 %327
      %330 = vst.msk [vmem:[#allocation2 + $0xb] sm:$0xf] %vm307, %v328
      %s331 = scalar_lea.vmem %s273, 16
      %v332 = vld [vmem:[%s331] sm:$0xf]
      %334 = vrot.lane.b32.xlu0 %v332, 96
      %v335 = vpop.permute.xlu0 %334
      %337 = vst.msk [vmem:[#allocation2 + $0xa] sm:$0xf] %vm289, %v335
      %338 = vrot.lane.b32.xlu0 %v332, 32
      %v339 = vpop.permute.xlu0 %338
      %341 = vst.msk [vmem:[#allocation2 + $0xb] sm:$0xf] %vm294, %v339
      %s342 = scalar_lea.vmem %s273, 20
      %v343 = vld [vmem:[%s342] sm:$0xf]
      %345 = vrot.lane.b32.xlu0 %v343, 32
      %v346 = vpop.permute.xlu0 %345
      %348 = vst.msk [vmem:[#allocation2 + $0xf] sm:$0xf] %vm302, %v346
      %349 = vrot.lane.b32.xlu0 %v343, 96
      %v350 = vpop.permute.xlu0 %349
      %352 = vst.msk [vmem:[#allocation2 + $0x10] sm:$0xf] %vm307, %v350
      %s353 = scalar_lea.vmem %s273, 24
      %v354 = vld [vmem:[%s353] sm:$0xf]
      %356 = vrot.lane.b32.xlu0 %v354, 96
      %v357 = vpop.permute.xlu0 %356
      %359 = vst.msk [vmem:[#allocation2 + $0xf] sm:$0xf] %vm289, %v357
      %360 = vrot.lane.b32.xlu0 %v354, 32
      %v361 = vpop.permute.xlu0 %360
      %363 = vst.msk [vmem:[#allocation2 + $0x10] sm:$0xf] %vm294, %v361
      %s364 = scalar_lea.vmem %s273, 28
      %v365 = vld [vmem:[%s364] sm:$0xf]
      %367 = vrot.lane.b32.xlu0 %v365, 32
      %v368 = vpop.permute.xlu0 %367
      %370 = vst.msk [vmem:[#allocation2 + $0x14] sm:$0xf] %vm302, %v368
      %371 = vrot.lane.b32.xlu0 %v365, 96
      %v372 = vpop.permute.xlu0 %371
      %374 = vst.msk [vmem:[#allocation2 + $0x15] sm:$0xf] %vm307, %v372
      %v375 = vld [vmem:[#allocation2] sm:$0xff]
      %v376 = vld [vmem:[#allocation2 + $0x8] sm:$0xff]
      %v377 = vld [vmem:[#allocation2 + $0x10] sm:$0xf]
      %v378 = vld [vmem:[#allocation2 + $0x1] sm:$0xff]
      %v379 = vld [vmem:[#allocation2 + $0x9] sm:$0xff]
      %v380 = vld [vmem:[#allocation2 + $0x11] sm:$0xf]
      %v381 = vld [vmem:[#allocation2 + $0x5] sm:$0xff]
      %v382 = vld [vmem:[#allocation2 + $0xd] sm:$0xff]
      %v383 = vld [vmem:[#allocation2 + $0x15] sm:$0xf]
      %v384 = vld [vmem:[#allocation2 + $0x6] sm:$0xff]
      %v385 = vld [vmem:[#allocation2 + $0xe] sm:$0xff]
      %v386 = vld [vmem:[#allocation2 + $0x16] sm:$0xf]
      %390 = vrot.lane.b32.xlu0 %v378, 64
      %v391 = vpop.permute.xlu0 %390
      %392 = vrot.lane.b32.xlu0 %v379, 64
      %v393 = vpop.permute.xlu0 %392
      %394 = vrot.lane.b32.xlu0 %v380, 64
      %v395 = vpop.permute.xlu0 %394
      %402 = vrot.lane.b32.xlu0 %v375, 32
      %v403 = vpop.permute.xlu0 %402
      %404 = vrot.lane.b32.xlu0 %v376, 32
      %v405 = vpop.permute.xlu0 %404
      %406 = vrot.lane.b32.xlu0 %v377, 32
      %v407 = vpop.permute.xlu0 %406
      %411 = vrot.lane.b32.xlu0 %v378, 96
      %v412 = vpop.permute.xlu0 %411
      %413 = vrot.lane.b32.xlu0 %v379, 96
      %v414 = vpop.permute.xlu0 %413
      %415 = vrot.lane.b32.xlu0 %v380, 96
      %v416 = vpop.permute.xlu0 %415
      %423 = vrot.lane.b32.xlu0 %v381, 64
      %v424 = vpop.permute.xlu0 %423
      %425 = vrot.lane.b32.xlu0 %v382, 64
      %v426 = vpop.permute.xlu0 %425
      %427 = vrot.lane.b32.xlu0 %v383, 64
      %v428 = vpop.permute.xlu0 %427
      %vm432 = vcmask 261120
      %vm433 = vcmask 523264
      %v434 = vsel %vm433, %v375, %v391
      %v435 = vsel %vm433, %v376, %v393
      %v436 = vsel %vm433, %v377, %v395
      %vm437 = vcmask 785408
      %v438 = vsel %vm437, %v434, %v403
      %v439 = vsel %vm437, %v435, %v405
      %v440 = vsel %vm437, %v436, %v407
      %v441 = vsel %vm432, %v403, %v412
      %v442 = vsel %vm432, %v405, %v414
      %v443 = vsel %vm432, %v407, %v416
      %v444 = vsel %vm433, %v441, %v424
      %v445 = vsel %vm433, %v442, %v426
      %v446 = vsel %vm433, %v443, %v428
      %v447 = vsel %vm437, %v444, %v424
      %v448 = vsel %vm437, %v445, %v426
      %v449 = vsel %vm437, %v446, %v428
      %v450 = vpack.c.bf16 %v439, %v438
      %v451 = vpack.c.bf16 %v448, %v447
      %v452 = vpack.c.bf16 %v385, %v384
      %v453 = vpack.c.bf16 %v440, %v440
      %v454 = vpack.c.bf16 %v449, %v449
      %v455 = vpack.c.bf16 %v386, %v386
      %v456 = vld [vmem:[%s1] sm:$0xf]
      %v457 = vld [vmem:[%s1 + $0x4] sm:$0xf]
      %v458 = vld [vmem:[%s1 + $0x8] sm:$0xf]
      %v459 = vld [vmem:[%s1 + $0xc] sm:$0xf]
      %v460 = vld [vmem:[%s1 + $0x10] sm:$0xf]
      %v461 = vld [vmem:[%s1 + $0x14] sm:$0xf]
      %v462 = vld [vmem:[%s1 + $0x18] sm:$0xf]
      %v463 = vld [vmem:[%s1 + $0x1c] sm:$0xf]
      %v464 = vld [vmem:[%s1 + $0x20] sm:$0xf]
      %v465 = vld [vmem:[%s1 + $0x24] sm:$0xf]
      %v466 = vld [vmem:[%s1 + $0x28] sm:$0xf]
      %v467 = vld [vmem:[%s1 + $0x2c] sm:$0xf]
      %v468 = vld [vmem:[%s1 + $0x30] sm:$0xf]
      %v469 = vld [vmem:[%s1 + $0x34] sm:$0xf]
      %v470 = vld [vmem:[%s1 + $0x38] sm:$0xf]
      %v471 = vld [vmem:[%s1 + $0x3c] sm:$0xf]
      %v472 = vld [vmem:[%s1 + $0x40] sm:$0xf]
      %v473 = vld [vmem:[%s1 + $0x44] sm:$0xf]
      %v474 = vld [vmem:[%s1 + $0x48] sm:$0xf]
      %v475 = vld [vmem:[%s1 + $0x4c] sm:$0xf]
      %v476 = vld [vmem:[%s1 + $0x50] sm:$0xf]
      %v477 = vld [vmem:[%s1 + $0x54] sm:$0xf]
      %v478 = vld [vmem:[%s1 + $0x58] sm:$0xf]
      %v479 = vld [vmem:[%s1 + $0x5c] sm:$0xf]
      %v480 = vld [vmem:[%s1 + $0x60] sm:$0xf]
      %v481 = vld [vmem:[%s1 + $0x64] sm:$0xf]
      %v482 = vld [vmem:[%s1 + $0x68] sm:$0xf]
      %v483 = vld [vmem:[%s1 + $0x6c] sm:$0xf]
      %v484 = vld [vmem:[%s1 + $0x70] sm:$0xf]
      %v485 = vld [vmem:[%s1 + $0x74] sm:$0xf]
      %v486 = vld [vmem:[%s1 + $0x78] sm:$0xf]
      %v487 = vld [vmem:[%s1 + $0x7c] sm:$0xf]
      %v488 = vld [vmem:[%s1 + $0x80] sm:$0xf]
      %v489 = vld [vmem:[%s1 + $0x84] sm:$0xf]
      %v490 = vld [vmem:[%s1 + $0x88] sm:$0xf]
      %v491 = vld [vmem:[%s1 + $0x8c] sm:$0xf]
      %v492 = vld [vmem:[%s2] sm:$0x1]
      %v494 = vperm.slane %v492, 0
      %v532 = vunpack.c.l.b16 %v456
      %v533 = vunpack.c.l.b16 %v457
      %v534 = vunpack.c.l.b16 %v458
      %v535 = vunpack.c.l.b16 %v459
      %v536 = vunpack.c.l.b16 %v460
      %v537 = vunpack.c.l.b16 %v461
      %v538 = vunpack.c.l.b16 %v462
      %v539 = vunpack.c.l.b16 %v463
      %v540 = vunpack.c.l.b16 %v464
      %v541 = vunpack.c.l.b16 %v465
      %v542 = vunpack.c.l.b16 %v466
      %v543 = vunpack.c.l.b16 %v467
      %v544 = vunpack.c.l.b16 %v468
      %v545 = vunpack.c.l.b16 %v469
      %v546 = vunpack.c.l.b16 %v470
      %v547 = vunpack.c.l.b16 %v471
      %v548 = vunpack.c.l.b16 %v472
      %v549 = vunpack.c.l.b16 %v473
      %v550 = vunpack.c.l.b16 %v474
      %v551 = vunpack.c.l.b16 %v475
      %v552 = vunpack.c.l.b16 %v476
      %v553 = vunpack.c.l.b16 %v477
      %v554 = vunpack.c.l.b16 %v478
      %v555 = vunpack.c.l.b16 %v479
      %v556 = vunpack.c.l.b16 %v480
      %v557 = vunpack.c.l.b16 %v481
      %v558 = vunpack.c.l.b16 %v482
      %v559 = vunpack.c.l.b16 %v483
      %v560 = vunpack.c.l.b16 %v484
      %v561 = vunpack.c.l.b16 %v485
      %v562 = vunpack.c.l.b16 %v486
      %v563 = vunpack.c.l.b16 %v487
      %v564 = vunpack.c.l.b16 %v488
      %v565 = vunpack.c.l.b16 %v489
      %v566 = vunpack.c.l.b16 %v490
      %v567 = vunpack.c.l.b16 %v491
      %v568 = vpack.c.b16 %v533, %v532
      %v569 = vpack.c.b16 %v535, %v534
      %v570 = vpack.c.b16 %v537, %v536
      %v571 = vpack.c.b16 %v539, %v538
      %v572 = vpack.c.b16 %v541, %v540
      %v573 = vpack.c.b16 %v543, %v542
      %v574 = vpack.c.b16 %v545, %v544
      %v575 = vpack.c.b16 %v547, %v546
      %v576 = vpack.c.b16 %v549, %v548
      %v577 = vpack.c.b16 %v551, %v550
      %v578 = vpack.c.b16 %v553, %v552
      %v579 = vpack.c.b16 %v555, %v554
      %v580 = vpack.c.b16 %v557, %v556
      %v581 = vpack.c.b16 %v559, %v558
      %v582 = vpack.c.b16 %v561, %v560
      %v583 = vpack.c.b16 %v563, %v562
      %v584 = vpack.c.b16 %v565, %v564
      %v585 = vpack.c.b16 %v567, %v566
      %v605 = vsel %vm432, %v452, 0
      %v608 = vsel %vm432, %v455, 0
      %610 = vmatpush.bf16.msra.mxu0 %v575
      %611 = vmatpush.bf16.msra.mxu0 %v574
      %612 = vmatpush.bf16.msra.mxu0 %v573
      %613 = vmatpush.bf16.msra.mxu0 %v572
      %614 = vmatpush.bf16.msra.mxu0 %v571
      %615 = vmatpush.bf16.msra.mxu0 %v570
      %616 = vmatpush.bf16.msra.mxu0 %v569
      %617 = vmatpush.bf16.msra.mxu0 %v568
      %618 = vmatmul.bf16.gmra.mxu0 %v450
      %v619 = vpop.f32.mrf.mxu0
      %v620 = vadd.f32 %v494, %v619
      %v621 = vpop.f32.mrf.mxu0
      %v622 = vadd.f32 %v494, %v621
      %623 = vmatmul.bf16.gmra.mxu0 %v453
      %v624 = vpop.f32.mrf.mxu0
      %v625 = vadd.f32 %v494, %v624
      %v626 = vpop.f32.mrf.mxu0
      %627 = vdwg.mxu0
      %628 = vmatpush.bf16.msra.mxu0 %v583
      %629 = vmatpush.bf16.msra.mxu0 %v582
      %630 = vmatpush.bf16.msra.mxu0 %v581
      %631 = vmatpush.bf16.msra.mxu0 %v580
      %632 = vmatpush.bf16.msra.mxu0 %v579
      %633 = vmatpush.bf16.msra.mxu0 %v578
      %634 = vmatpush.bf16.msra.mxu0 %v577
      %635 = vmatpush.bf16.msra.mxu0 %v576
      %636 = vmatmul.bf16.gmra.mxu0 %v451
      %v637 = vpop.f32.mrf.mxu0
      %v638 = vadd.f32 %v620, %v637
      %v639 = vpop.f32.mrf.mxu0
      %v640 = vadd.f32 %v622, %v639
      %641 = vmatmul.bf16.gmra.mxu0 %v454
      %v642 = vpop.f32.mrf.mxu0
      %v643 = vadd.f32 %v625, %v642
      %v644 = vpop.f32.mrf.mxu0
      %645 = vdwg.mxu0
      %646 = vmatpush.bf16.msra.mxu0 0
      %647 = vmatpush.bf16.msra.mxu0 0
      %648 = vmatpush.bf16.msra.mxu0 0
      %649 = vmatpush.bf16.msra.mxu0 0
      %650 = vmatpush.bf16.msra.mxu0 0
      %651 = vmatpush.bf16.msra.mxu0 0
      %652 = vmatpush.bf16.msra.mxu0 %v585
      %653 = vmatpush.bf16.msra.mxu0 %v584
      %654 = vmatmul.bf16.gmra.mxu0 %v605
      %v655 = vpop.f32.mrf.mxu0
      %v656 = vadd.f32 %v638, %v655
      %v657 = vpop.f32.mrf.mxu0
      %v658 = vadd.f32 %v640, %v657
      %659 = vmatmul.bf16.gmra.mxu0 %v608
      %v660 = vpop.f32.mrf.mxu0
      %v661 = vadd.f32 %v643, %v660
      %v662 = vpop.f32.mrf.mxu0
      %663 = vdwg.mxu0
      %v664 = vmax.f32 %v656, 0.0
      %v665 = vmax.f32 %v658, 0.0
      %v666 = vmax.f32 %v661, 0.0
      %v667 = vld [vmem:[%s6] sm:$0x1]
      %vm668 = vcmask 162816
      %v670 = vsel %vm668, %v667, 0
      %vm672 = vcmask 1043456
      %v674 = vsel %vm672, %v666, 0
      %676 = vmatpush.msra.mxu0 0.0
      %677 = vmatpush.msra.mxu0 0.0
      %678 = vmatpush.msra.mxu0 0.0
      %679 = vmatpush.msra.mxu0 0.0
      %680 = vmatpush.msra.mxu0 0.0
      %681 = vmatpush.msra.mxu0 0.0
      %682 = vmatpush.msra.mxu0 0.0
      %683 = vmatpush.msra.mxu0 0.0
      %684 = vmatpush.msra.mxu0 0.0
      %685 = vmatpush.msra.mxu0 0.0
      %686 = vmatpush.msra.mxu0 0.0
      %687 = vmatpush.msra.mxu0 0.0
      %688 = vmatpush.msra.mxu0 0.0
      %689 = vmatpush.msra.mxu0 %v674
      %690 = vmatpush.msra.mxu0 %v665
      %691 = vmatpush.msra.mxu0 %v664
      %692 = vmatmul.f32.gmra.mxu0 %v670
      %v693 = vpop.f32.mrf.mxu0
      %v694 = vadd.f32 0.0, %v693
      %695 = vdwg.mxu0
      %v696 = vmul.f32 %v664, %v664
      %v697 = vmul.f32 %v665, %v665
      %v698 = vmul.f32 %v666, %v666
      %v700 = vsel %vm672, %v698, 0
      %702 = vmatpush.msra.mxu0 0.0
      %703 = vmatpush.msra.mxu0 0.0
      %704 = vmatpush.msra.mxu0 0.0
      %705 = vmatpush.msra.mxu0 0.0
      %706 = vmatpush.msra.mxu0 0.0
      %707 = vmatpush.msra.mxu0 0.0
      %708 = vmatpush.msra.mxu0 0.0
      %709 = vmatpush.msra.mxu0 0.0
      %710 = vmatpush.msra.mxu0 0.0
      %711 = vmatpush.msra.mxu0 0.0
      %712 = vmatpush.msra.mxu0 0.0
      %713 = vmatpush.msra.mxu0 0.0
      %714 = vmatpush.msra.mxu0 0.0
      %715 = vmatpush.msra.mxu0 %v700
      %716 = vmatpush.msra.mxu0 %v697
      %717 = vmatpush.msra.mxu0 %v696
      %718 = vmatmul.f32.gmra.mxu0 %v670
      %v719 = vpop.f32.mrf.mxu0
      %v720 = vadd.f32 0.0, %v719
      %721 = vdwg.mxu0
      %v722 = vld [vmem:[%s5] sm:$0xff]
      %v723 = vld [vmem:[%s5 + $0x8] sm:$0xff]
      %v724 = vld [vmem:[%s5 + $0x10] sm:$0xff]
      %v725 = vld [vmem:[%s5 + $0x18] sm:$0xff]
      %v727 = vsel %vm432, %v694, 0
      %729 = vmatpush.msra.mxu0 0.0
      %730 = vmatpush.msra.mxu0 0.0
      %731 = vmatpush.msra.mxu0 0.0
      %732 = vmatpush.msra.mxu0 0.0
      %733 = vmatpush.msra.mxu0 0.0
      %734 = vmatpush.msra.mxu0 0.0
      %735 = vmatpush.msra.mxu0 0.0
      %736 = vmatpush.msra.mxu0 0.0
      %737 = vmatpush.msra.mxu0 0.0
      %738 = vmatpush.msra.mxu0 0.0
      %739 = vmatpush.msra.mxu0 0.0
      %740 = vmatpush.msra.mxu0 0.0
      %741 = vmatpush.msra.mxu0 %v725
      %742 = vmatpush.msra.mxu0 %v724
      %743 = vmatpush.msra.mxu0 %v723
      %744 = vmatpush.msra.mxu0 %v722
      %745 = vmatmul.f32.gmra.mxu0 %v727
      %v746 = vpop.f32.mrf.mxu0
      %v747 = vadd.f32 0.0, %v746
      %748 = vdwg.mxu0
      %v749 = vmul.f32 %v747, 0.0625
      %v751 = vsel %vm432, %v720, 0
      %753 = vmatpush.msra.mxu0 0.0
      %754 = vmatpush.msra.mxu0 0.0
      %755 = vmatpush.msra.mxu0 0.0
      %756 = vmatpush.msra.mxu0 0.0
      %757 = vmatpush.msra.mxu0 0.0
      %758 = vmatpush.msra.mxu0 0.0
      %759 = vmatpush.msra.mxu0 0.0
      %760 = vmatpush.msra.mxu0 0.0
      %761 = vmatpush.msra.mxu0 0.0
      %762 = vmatpush.msra.mxu0 0.0
      %763 = vmatpush.msra.mxu0 0.0
      %764 = vmatpush.msra.mxu0 0.0
      %765 = vmatpush.msra.mxu0 %v725
      %766 = vmatpush.msra.mxu0 %v724
      %767 = vmatpush.msra.mxu0 %v723
      %768 = vmatpush.msra.mxu0 %v722
      %769 = vmatmul.f32.gmra.mxu0 %v751
      %v770 = vpop.f32.mrf.mxu0
      %v771 = vadd.f32 0.0, %v770
      %772 = vdwg.mxu0
      %v773 = vmul.f32 %v771, 0.0625
      %v774 = vmul.f32 %v749, %v749
      %v775 = vsub.f32 %v773, %v774
      %v776 = vmax.f32 %v775, 0.0
      %v777 = vadd.f32 %v776, 1e-05
      %v778 = vrsqrt.pop %v777
      %v779 = vmul.f32 %v778, %v777
      %v780 = vmul.f32 %v779, %v778
      %v781 = vmul.f32 0.5, %v780
      %v782 = vsub.f32 1.5, %v781
      %v783 = vmul.f32 %v778, %v782
      %vm784 = vweird.f32 %v777
      %vm785 = vweird.f32 %v778
      %vm786 = vmor %vm784, %vm785
      %v787 = vsel %vm786, %v778, %v783
      %v788 = vld [vmem:[%s3] sm:$0x1]
      %v789 = vmul.f32 %v788, %v787
      %v790 = vld [vmem:[%s4] sm:$0x1]
      %v791 = vmul.f32 %v749, %v789
      %v792 = vsub.f32 %v790, %v791
      %v794 = vperm.slane %v789, 0
      %v796 = vmul.f32 %v664, %v794
      %v797 = vmul.f32 %v665, %v794
      %v798 = vmul.f32 %v666, %v794
      %v800 = vperm.slane %v792, 0
      %v802 = vadd.f32 %v796, %v800
      %v803 = vadd.f32 %v797, %v800
      %v804 = vadd.f32 %v798, %v800
      %805 = vst.msk [vmem:[%s278] sm:$0xf] %vm307, %v802
      %s806 = scalar_lea.vmem %s278, 4
      %vm807 = vcmask 261125
      %808 = vst.msk [vmem:[%s806 - $0x5] sm:$0xe0] %vm807, %v802
      %vm809 = vcmask 253952
      %810 = vst.msk [vmem:[%s806 + $0x3] sm:$0x1] %vm809, %v803
      %s811 = scalar_lea.vmem %s278, 8
      %vm812 = vcmask 259074
      %813 = vst.msk [vmem:[%s811 - $0x2] sm:$0x3c] %vm812, %v803
      %s814 = scalar_lea.vmem %s278, 12
      %vm815 = vcmask 261127
      %816 = vst.msk [vmem:[%s814 - $0x7] sm:$0x80] %vm815, %v803
      %vm817 = vcmask 256000
      %818 = vst.msk [vmem:[%s814 + $0x1] sm:$0x7] %vm817, %v804
      %p819 = scmp.lt.s32.totalorder %s18, 1
      %s820 = scalar_select %p819, %s18, 1
      %s821 = smul.addr %s820, 4
      %s822 = smul.addr %s821, 4
      %s823 = scalar_lea.vmem %s7, %s822
      // Predicated region
      $region49: #{multi_scale_downsampling.6} parent=47 // pred_check
        %p824 = pneg %p188
      $region50: #{multi_scale_downsampling.6} parent=47 // pred_check_branch
        %826 = sbr.rel (%p824) target = $region52
      $region51: #{multi_scale_downsampling.6} parent=47 // pred_region
        _
      $region52: #{multi_scale_downsampling.6} parent=47 // pred_fallthru
        _
    $region48: #{multi_scale_downsampling.6} parent=5 // pred_fallthru
      _
    %p827 = scmp.le.s32.totalorder 2, %s13
    // Predicated region
    $region53: #{multi_scale_downsampling.6} parent=5 // pred_check
      %p828 = pneg %p827
    $region54: #{multi_scale_downsampling.6} parent=5 // pred_check_branch
      %830 = sbr.rel (%p828) target = $region56
    $region55: #{multi_scale_downsampling.6} parent=5 // pred_region
      %s831 = ssub.s32 %s13, 2
      // Predicated region
      $region57: #{multi_scale_downsampling.6} parent=55 // pred_check
        %p832 = pneg %p194
      $region58: #{multi_scale_downsampling.6} parent=55 // pred_check_branch
        %834 = sbr.rel (%p832) target = $region60
      $region59: #{multi_scale_downsampling.6} parent=55 // pred_region
        %p835 = scmp.lt.s32.totalorder %s19, 1
        %s836 = scalar_select %p835, %s19, 1
        %s837 = smul.addr %s836, 4
        %s838 = smul.addr %s837, 4
        %s839 = scalar_lea.vmem %s7, %s838
      $region60: #{multi_scale_downsampling.6} parent=55 // pred_fallthru
        _
    $region56: #{multi_scale_downsampling.6} parent=5 // pred_fallthru
      _
  $region6: #{multi_scale_downsampling.6} parent=0 // loop_footer
    %s17 = sadd.s32 1, %s13
  $region7: #{multi_scale_downsampling.6} parent=0 // loop_footer_branch
    %12 = sbr.rel target = $region3
  $region8: #{multi_scale_downsampling.6} parent=0 // loop_exit
    _

// kernel: multi_scale_downsampling.5
$region0: #{multi_scale_downsampling.5}
  #allocation0 [shape = 'u32[]', space=smem, size = 0x4, offset = 0x4, fixed_abs, tag = 'smem constant byte address 0x4 - core index']
  #allocation1 [shape = 'u32[72,128]{1,0:T(1,128)}', space=vmem, size = 0x9000, scoped, tag = 'internal scratch']
  #allocation2 [shape = 'f32[90,128]{1,0:T(8,128)}', space=vmem, size = 0xc000, scoped, tag = 'scratch operand']
  %s0 = inlined_call_operand.vmem [shape: f32[2,16,8,64], index: 0, kind: input, shape index: {}]
  %s1 = inlined_call_operand.vmem [shape: bf16[288,32], index: 1, kind: input, shape index: {}]
  %s2 = inlined_call_operand.vmem [shape: f32[1,32], index: 2, kind: input, shape index: {}]
  %s3 = inlined_call_operand.vmem [shape: f32[1,32], index: 3, kind: input, shape index: {}]
  %s4 = inlined_call_operand.vmem [shape: f32[1,32], index: 4, kind: input, shape index: {}]
  %s5 = inlined_call_operand.vmem [shape: f32[32,32], index: 5, kind: input, shape index: {}]
  %s6 = inlined_call_operand.vmem [shape: f32[1,72], index: 6, kind: input, shape index: {}]
  %s7 = inlined_call_operand.vmem [shape: f32[2,8,8,32], index: 7, kind: output, shape index: {}]
  %s8 = sld [smem:[#allocation0]]
  $region61: #{multi_scale_downsampling.5} parent=0
    _
  %s10 = ssub.s32 1, %s8
  %s11 = scalar_select 0, %s10, %s8
  loop: start=0, step=1, limit=4
  $region2: #{multi_scale_downsampling.5} parent=0 // loop_pre_header
    _
  $region3: #{multi_scale_downsampling.5} parent=0 // loop_header
    %s13 = sphi 0, %s17
    %p14 = scmp.ge.s32.totalorder %s13, 4
    %s23 = sphi 0, %s25
    %s26 = sphi 0, %s23
    %s27 = sphi 0, %s26
    %s43 = sphi 0, %s27
    %s47 = sphi 0, %s47
    %s49 = sphi 0, %s47
    %s50 = sphi 0, %s49
    %s64 = sphi 0, %s50
    %s68 = sphi 0, %s68
    %s70 = sphi 0, %s68
    %s71 = sphi 0, %s70
    %s85 = sphi 0, %s71
    %s89 = sphi 0, %s89
    %s91 = sphi 0, %s89
    %s92 = sphi 0, %s91
    %s106 = sphi 0, %s92
    %s110 = sphi 0, %s110
    %s112 = sphi 0, %s110
    %s113 = sphi 0, %s112
    %s127 = sphi 0, %s113
    %s131 = sphi 0, %s131
    %s133 = sphi 0, %s131
    %s134 = sphi 0, %s133
    %s148 = sphi 0, %s134
    %s152 = sphi 0, %s152
    %s154 = sphi 0, %s152
    %s155 = sphi 0, %s154
    %s169 = sphi 0, %s155
    %s175 = sphi 0, %s177
    %s178 = sphi 0, %s175
    %s179 = sphi 0, %s178
    %s195 = sphi 0, %s179
  $region4: #{multi_scale_downsampling.5} parent=0 // loop_header_branch
    %16 = sbr.rel (%p14) target = $region8
  $region5: #{multi_scale_downsampling.5} parent=0 // loop_body
    %s18 = ssub.s32 %s13, 1
    %s19 = ssub.s32 %s13, 2
    %s20 = sadd.s32 %s13, 1
    %s21 = ssub.s32 %s13, %s20
    %p22 = scmp.eq.s32.totalorder %s21, 0
    %s24 = sadd.s32 %s23, 1
    %s25 = scalar_select %p22, %s23, %s24
    %p28 = pneg %p22
    %p29 = scmp.eq.s32.totalorder %s13, 1
    %p30 = por %p28, %p29
    %p31 = scmp.ne.s32.totalorder %s23, %s26
    %p32 = scmp.eq.s32.totalorder %s13, 0
    %p33 = por %p31, %p32
    %p34 = scmp.ne.s32.totalorder %s23, %s26
    %p35 = scmp.eq.s32.totalorder %s18, 1
    %p36 = por %p34, %p35
    %p37 = scmp.ne.s32.totalorder %s26, %s27
    %p38 = scmp.eq.s32.totalorder %s18, 0
    %p39 = por %p37, %p38
    %p40 = scmp.ne.s32.totalorder %s26, %s27
    %p41 = scmp.eq.s32.totalorder %s19, 1
    %p42 = por %p40, %p41
    %p44 = scmp.ne.s32.totalorder %s27, %s43
    %p45 = scmp.eq.s32.totalorder %s19, 0
    %p46 = por %p44, %p45
    %s48 = sadd.s32 %s47, 1
    %p51 = scmp.eq.s32.totalorder %s13, 1
    %p52 = scmp.ne.s32.totalorder %s47, %s49
    %p53 = scmp.eq.s32.totalorder %s13, 0
    %p54 = por %p52, %p53
    %p55 = scmp.ne.s32.totalorder %s47, %s49
    %p56 = scmp.eq.s32.totalorder %s18, 1
    %p57 = por %p55, %p56
    %p58 = scmp.ne.s32.totalorder %s49, %s50
    %p59 = scmp.eq.s32.totalorder %s18, 0
    %p60 = por %p58, %p59
    %p61 = scmp.ne.s32.totalorder %s49, %s50
    %p62 = scmp.eq.s32.totalorder %s19, 1
    %p63 = por %p61, %p62
    %p65 = scmp.ne.s32.totalorder %s50, %s64
    %p66 = scmp.eq.s32.totalorder %s19, 0
    %p67 = por %p65, %p66
    %s69 = sadd.s32 %s68, 1
    %p72 = scmp.eq.s32.totalorder %s13, 1
    %p73 = scmp.ne.s32.totalorder %s68, %s70
    %p74 = scmp.eq.s32.totalorder %s13, 0
    %p75 = por %p73, %p74
    %p76 = scmp.ne.s32.totalorder %s68, %s70
    %p77 = scmp.eq.s32.totalorder %s18, 1
    %p78 = por %p76, %p77
    %p79 = scmp.ne.s32.totalorder %s70, %s71
    %p80 = scmp.eq.s32.totalorder %s18, 0
    %p81 = por %p79, %p80
    %p82 = scmp.ne.s32.totalorder %s70, %s71
    %p83 = scmp.eq.s32.totalorder %s19, 1
    %p84 = por %p82, %p83
    %p86 = scmp.ne.s32.totalorder %s71, %s85
    %p87 = scmp.eq.s32.totalorder %s19, 0
    %p88 = por %p86, %p87
    %s90 = sadd.s32 %s89, 1
    %p93 = scmp.eq.s32.totalorder %s13, 1
    %p94 = scmp.ne.s32.totalorder %s89, %s91
    %p95 = scmp.eq.s32.totalorder %s13, 0
    %p96 = por %p94, %p95
    %p97 = scmp.ne.s32.totalorder %s89, %s91
    %p98 = scmp.eq.s32.totalorder %s18, 1
    %p99 = por %p97, %p98
    %p100 = scmp.ne.s32.totalorder %s91, %s92
    %p101 = scmp.eq.s32.totalorder %s18, 0
    %p102 = por %p100, %p101
    %p103 = scmp.ne.s32.totalorder %s91, %s92
    %p104 = scmp.eq.s32.totalorder %s19, 1
    %p105 = por %p103, %p104
    %p107 = scmp.ne.s32.totalorder %s92, %s106
    %p108 = scmp.eq.s32.totalorder %s19, 0
    %p109 = por %p107, %p108
    %s111 = sadd.s32 %s110, 1
    %p114 = scmp.eq.s32.totalorder %s13, 1
    %p115 = scmp.ne.s32.totalorder %s110, %s112
    %p116 = scmp.eq.s32.totalorder %s13, 0
    %p117 = por %p115, %p116
    %p118 = scmp.ne.s32.totalorder %s110, %s112
    %p119 = scmp.eq.s32.totalorder %s18, 1
    %p120 = por %p118, %p119
    %p121 = scmp.ne.s32.totalorder %s112, %s113
    %p122 = scmp.eq.s32.totalorder %s18, 0
    %p123 = por %p121, %p122
    %p124 = scmp.ne.s32.totalorder %s112, %s113
    %p125 = scmp.eq.s32.totalorder %s19, 1
    %p126 = por %p124, %p125
    %p128 = scmp.ne.s32.totalorder %s113, %s127
    %p129 = scmp.eq.s32.totalorder %s19, 0
    %p130 = por %p128, %p129
    %s132 = sadd.s32 %s131, 1
    %p135 = scmp.eq.s32.totalorder %s13, 1
    %p136 = scmp.ne.s32.totalorder %s131, %s133
    %p137 = scmp.eq.s32.totalorder %s13, 0
    %p138 = por %p136, %p137
    %p139 = scmp.ne.s32.totalorder %s131, %s133
    %p140 = scmp.eq.s32.totalorder %s18, 1
    %p141 = por %p139, %p140
    %p142 = scmp.ne.s32.totalorder %s133, %s134
    %p143 = scmp.eq.s32.totalorder %s18, 0
    %p144 = por %p142, %p143
    %p145 = scmp.ne.s32.totalorder %s133, %s134
    %p146 = scmp.eq.s32.totalorder %s19, 1
    %p147 = por %p145, %p146
    %p149 = scmp.ne.s32.totalorder %s134, %s148
    %p150 = scmp.eq.s32.totalorder %s19, 0
    %p151 = por %p149, %p150
    %s153 = sadd.s32 %s152, 1
    %p156 = scmp.eq.s32.totalorder %s13, 1
    %p157 = scmp.ne.s32.totalorder %s152, %s154
    %p158 = scmp.eq.s32.totalorder %s13, 0
    %p159 = por %p157, %p158
    %p160 = scmp.ne.s32.totalorder %s152, %s154
    %p161 = scmp.eq.s32.totalorder %s18, 1
    %p162 = por %p160, %p161
    %p163 = scmp.ne.s32.totalorder %s154, %s155
    %p164 = scmp.eq.s32.totalorder %s18, 0
    %p165 = por %p163, %p164
    %p166 = scmp.ne.s32.totalorder %s154, %s155
    %p167 = scmp.eq.s32.totalorder %s19, 1
    %p168 = por %p166, %p167
    %p170 = scmp.ne.s32.totalorder %s155, %s169
    %p171 = scmp.eq.s32.totalorder %s19, 0
    %p172 = por %p170, %p171
    %s173 = ssub.s32 %s13, %s20
    %p174 = scmp.eq.s32.totalorder %s173, 0
    %s176 = sadd.s32 %s175, 1
    %s177 = scalar_select %p174, %s175, %s176
    %p180 = pneg %p174
    %p181 = scmp.eq.s32.totalorder %s13, 1
    %p182 = por %p180, %p181
    %p183 = scmp.ne.s32.totalorder %s175, %s178
    %p184 = scmp.eq.s32.totalorder %s13, 0
    %p185 = por %p183, %p184
    %p186 = scmp.ne.s32.totalorder %s175, %s178
    %p187 = scmp.eq.s32.totalorder %s18, 1
    %p188 = por %p186, %p187
    %p189 = scmp.ne.s32.totalorder %s178, %s179
    %p190 = scmp.eq.s32.totalorder %s18, 0
    %p191 = por %p189, %p190
    %p192 = scmp.ne.s32.totalorder %s178, %s179
    %p193 = scmp.eq.s32.totalorder %s19, 1
    %p194 = por %p192, %p193
    %p196 = scmp.ne.s32.totalorder %s179, %s195
    %p197 = scmp.eq.s32.totalorder %s19, 0
    %p198 = por %p196, %p197
    %p199 = scmp.le.s32.totalorder 1, %s13
    %p200 = scmp.lt.s32.totalorder %s13, 3
    %p201 = pnand %p199, %p200
    %p202 = pneg %p201
    // Predicated region
    $region9: #{multi_scale_downsampling.5} parent=5 // pred_check
      _
    $region10: #{multi_scale_downsampling.5} parent=5 // pred_check_branch
      %204 = sbr.rel (%p201) target = $region12
    $region11: #{multi_scale_downsampling.5} parent=5 // pred_region
      %s205 = ssub.s32 %s13, 1
      // Predicated region
      $region13: #{multi_scale_downsampling.5} parent=11 // pred_check
        %p206 = pneg %p60
      $region14: #{multi_scale_downsampling.5} parent=11 // pred_check_branch
        %208 = sbr.rel (%p206) target = $region16
      $region15: #{multi_scale_downsampling.5} parent=11 // pred_region
        _
      $region16: #{multi_scale_downsampling.5} parent=11 // pred_fallthru
        _
      // Predicated region
      $region17: #{multi_scale_downsampling.5} parent=11 // pred_check
        %p209 = pneg %p81
      $region18: #{multi_scale_downsampling.5} parent=11 // pred_check_branch
        %211 = sbr.rel (%p209) target = $region20
      $region19: #{multi_scale_downsampling.5} parent=11 // pred_region
        _
      $region20: #{multi_scale_downsampling.5} parent=11 // pred_fallthru
        _
      // Predicated region
      $region21: #{multi_scale_downsampling.5} parent=11 // pred_check
        %p212 = pneg %p102
      $region22: #{multi_scale_downsampling.5} parent=11 // pred_check_branch
        %214 = sbr.rel (%p212) target = $region24
      $region23: #{multi_scale_downsampling.5} parent=11 // pred_region
        _
      $region24: #{multi_scale_downsampling.5} parent=11 // pred_fallthru
        _
      // Predicated region
      $region25: #{multi_scale_downsampling.5} parent=11 // pred_check
        %p215 = pneg %p123
      $region26: #{multi_scale_downsampling.5} parent=11 // pred_check_branch
        %217 = sbr.rel (%p215) target = $region28
      $region27: #{multi_scale_downsampling.5} parent=11 // pred_region
        _
      $region28: #{multi_scale_downsampling.5} parent=11 // pred_fallthru
        _
      // Predicated region
      $region29: #{multi_scale_downsampling.5} parent=11 // pred_check
        %p218 = pneg %p144
      $region30: #{multi_scale_downsampling.5} parent=11 // pred_check_branch
        %220 = sbr.rel (%p218) target = $region32
      $region31: #{multi_scale_downsampling.5} parent=11 // pred_region
        _
      $region32: #{multi_scale_downsampling.5} parent=11 // pred_fallthru
        _
      // Predicated region
      $region33: #{multi_scale_downsampling.5} parent=11 // pred_check
        %p221 = pneg %p165
      $region34: #{multi_scale_downsampling.5} parent=11 // pred_check_branch
        %223 = sbr.rel (%p221) target = $region36
      $region35: #{multi_scale_downsampling.5} parent=11 // pred_region
        _
      $region36: #{multi_scale_downsampling.5} parent=11 // pred_fallthru
        _
    $region12: #{multi_scale_downsampling.5} parent=5 // pred_fallthru
      _
    %p224 = scmp.lt.s32.totalorder %s13, 2
    // Predicated region
    $region37: #{multi_scale_downsampling.5} parent=5 // pred_check
      %p225 = pneg %p224
    $region38: #{multi_scale_downsampling.5} parent=5 // pred_check_branch
      %227 = sbr.rel (%p225) target = $region40
    $region39: #{multi_scale_downsampling.5} parent=5 // pred_region
      // Predicated region
      $region41: #{multi_scale_downsampling.5} parent=39 // pred_check
        %p228 = pneg %p33
      $region42: #{multi_scale_downsampling.5} parent=39 // pred_check_branch
        %230 = sbr.rel (%p228) target = $region44
      $region43: #{multi_scale_downsampling.5} parent=39 // pred_region
        %p231 = scmp.lt.s32.totalorder %s13, 1
        %s232 = scalar_select %p231, %s13, 1
        %s233 = smul.addr %s232, 16
        %s234 = smul.addr %s233, 8
        %s235 = scalar_lea.vmem %s0, %s234
      $region44: #{multi_scale_downsampling.5} parent=39 // pred_fallthru
        _
    $region40: #{multi_scale_downsampling.5} parent=5 // pred_fallthru
      _
    %p236 = scmp.le.s32.totalorder 1, %s13
    %p237 = scmp.lt.s32.totalorder %s13, 3
    %p238 = pnand %p236, %p237
    %p239 = pneg %p238
    // Predicated region
    $region45: #{multi_scale_downsampling.5} parent=5 // pred_check
      _
    $region46: #{multi_scale_downsampling.5} parent=5 // pred_check_branch
      %241 = sbr.rel (%p238) target = $region48
    $region47: #{multi_scale_downsampling.5} parent=5 // pred_region
      %s242 = ssub.s32 %s13, 1
      %p243 = scmp.lt.s32.totalorder %s18, 1
      %s244 = scalar_select %p243, %s18, 1
      %s245 = smul.addr %s244, 16
      %s246 = smul.addr %s245, 8
      %s247 = scalar_lea.vmem %s0, %s246
      %p248 = pneg %p39
      %p249 = pneg %p36
      %p250 = pneg %p60
      %p251 = pneg %p57
      %p252 = pneg %p81
      %p253 = pneg %p78
      %p254 = pneg %p102
      %p255 = pneg %p99
      %p256 = pneg %p123
      %p257 = pneg %p120
      %p258 = pneg %p144
      %p259 = pneg %p141
      %p260 = pneg %p165
      %p261 = pneg %p162
      %p262 = pneg %p191
      %p263 = pneg %p188
      %p264 = scmp.lt.s32.totalorder %s18, 1
      %s265 = scalar_select %p264, %s18, 1
      %s266 = smul.addr %s265, 8
      %s267 = smul.addr %s266, 8
      %s268 = scalar_lea.vmem %s7, %s267
      %p269 = scmp.lt.s32.totalorder %s18, 1
      %s270 = scalar_select %p269, %s18, 1
      %s271 = smul.addr %s270, 16
      %s272 = smul.addr %s271, 8
      %s273 = scalar_lea.vmem %s0, %s272
      %p274 = scmp.lt.s32.totalorder %s18, 1
      %s275 = scalar_select %p274, %s18, 1
      %s276 = smul.addr %s275, 8
      %s277 = smul.addr %s276, 8
      %s278 = scalar_lea.vmem %s7, %s277
      %280 = vst [vmem:[#allocation2] sm:$0xff] 0.0
      %281 = vst [vmem:[#allocation2 + $0x8] sm:$0xff] 0.0
      %282 = vst [vmem:[#allocation2 + $0x10] sm:$0xff] 0.0
      %283 = vst [vmem:[#allocation2 + $0x18] sm:$0xff] 0.0
      %284 = vst [vmem:[#allocation2 + $0x20] sm:$0xff] 0.0
      %285 = vst [vmem:[#allocation2 + $0x28] sm:$0xff] 0.0
      %286 = vst [vmem:[#allocation2 + $0x30] sm:$0xff] 0.0
      %287 = vst [vmem:[#allocation2 + $0x38] sm:$0xff] 0.0
      %288 = vst [vmem:[#allocation2 + $0x40] sm:$0xff] 0.0
      %289 = vst [vmem:[#allocation2 + $0x48] sm:$0xff] 0.0
      %290 = vst [vmem:[#allocation2 + $0x50] sm:$0xff] 0.0
      %291 = vst [vmem:[#allocation2 + $0x58] sm:$0x3] 0.0
      %v292 = vld [vmem:[%s273] sm:$0xff]
      %294 = vrot.lane.b32.xlu0 %v292, 96
      %v295 = vpop.permute.xlu0 %294
      %vm297 = vcmask 1048320
      %298 = vst.msk [vmem:[#allocation2] sm:$0xff] %vm297, %v295
      %299 = vrot.lane.b32.xlu0 %v292, 32
      %v300 = vpop.permute.xlu0 %299
      %vm302 = vcmask 785920
      %303 = vst.msk [vmem:[#allocation2 + $0x1] sm:$0xff] %vm302, %v300
      %s304 = scalar_lea.vmem %s273, 8
      %v305 = vld [vmem:[%s304] sm:$0xff]
      %307 = vrot.lane.b32.xlu0 %v305, 32
      %v308 = vpop.permute.xlu0 %307
      %vm310 = vcmask 523520
      %311 = vst.msk [vmem:[#allocation2 + $0x9] sm:$0xff] %vm310, %v308
      %312 = vrot.lane.b32.xlu0 %v305, 96
      %v313 = vpop.permute.xlu0 %312
      %vm315 = vcmask 261120
      %316 = vst.msk [vmem:[#allocation2 + $0xa] sm:$0xff] %vm315, %v313
      %s317 = scalar_lea.vmem %s273, 16
      %v318 = vld [vmem:[%s317] sm:$0xff]
      %320 = vrot.lane.b32.xlu0 %v318, 96
      %v321 = vpop.permute.xlu0 %320
      %323 = vst.msk [vmem:[#allocation2 + $0x9] sm:$0xff] %vm297, %v321
      %324 = vrot.lane.b32.xlu0 %v318, 32
      %v325 = vpop.permute.xlu0 %324
      %327 = vst.msk [vmem:[#allocation2 + $0xa] sm:$0xff] %vm302, %v325
      %s328 = scalar_lea.vmem %s273, 24
      %v329 = vld [vmem:[%s328] sm:$0xff]
      %331 = vrot.lane.b32.xlu0 %v329, 32
      %v332 = vpop.permute.xlu0 %331
      %334 = vst.msk [vmem:[#allocation2 + $0x12] sm:$0xff] %vm310, %v332
      %335 = vrot.lane.b32.xlu0 %v329, 96
      %v336 = vpop.permute.xlu0 %335
      %338 = vst.msk [vmem:[#allocation2 + $0x13] sm:$0xff] %vm315, %v336
      %s339 = scalar_lea.vmem %s273, 32
      %v340 = vld [vmem:[%s339] sm:$0xff]
      %342 = vrot.lane.b32.xlu0 %v340, 96
      %v343 = vpop.permute.xlu0 %342
      %345 = vst.msk [vmem:[#allocation2 + $0x12] sm:$0xff] %vm297, %v343
      %346 = vrot.lane.b32.xlu0 %v340, 32
      %v347 = vpop.permute.xlu0 %346
      %349 = vst.msk [vmem:[#allocation2 + $0x13] sm:$0xff] %vm302, %v347
      %s350 = scalar_lea.vmem %s273, 40
      %v351 = vld [vmem:[%s350] sm:$0xff]
      %353 = vrot.lane.b32.xlu0 %v351, 32
      %v354 = vpop.permute.xlu0 %353
      %356 = vst.msk [vmem:[#allocation2 + $0x1b] sm:$0xff] %vm310, %v354
      %357 = vrot.lane.b32.xlu0 %v351, 96
      %v358 = vpop.permute.xlu0 %357
      %360 = vst.msk [vmem:[#allocation2 + $0x1c] sm:$0xff] %vm315, %v358
      %s361 = scalar_lea.vmem %s273, 48
      %v362 = vld [vmem:[%s361] sm:$0xff]
      %364 = vrot.lane.b32.xlu0 %v362, 96
      %v365 = vpop.permute.xlu0 %364
      %367 = vst.msk [vmem:[#allocation2 + $0x1b] sm:$0xff] %vm297, %v365
      %368 = vrot.lane.b32.xlu0 %v362, 32
      %v369 = vpop.permute.xlu0 %368
      %371 = vst.msk [vmem:[#allocation2 + $0x1c] sm:$0xff] %vm302, %v369
      %s372 = scalar_lea.vmem %s273, 56
      %v373 = vld [vmem:[%s372] sm:$0xff]
      %375 = vrot.lane.b32.xlu0 %v373, 32
      %v376 = vpop.permute.xlu0 %375
      %378 = vst.msk [vmem:[#allocation2 + $0x24] sm:$0xff] %vm310, %v376
      %379 = vrot.lane.b32.xlu0 %v373, 96
      %v380 = vpop.permute.xlu0 %379
      %382 = vst.msk [vmem:[#allocation2 + $0x25] sm:$0xff] %vm315, %v380
      %s383 = scalar_lea.vmem %s273, 64
      %v384 = vld [vmem:[%s383] sm:$0xff]
      %386 = vrot.lane.b32.xlu0 %v384, 96
      %v387 = vpop.permute.xlu0 %386
      %389 = vst.msk [vmem:[#allocation2 + $0x24] sm:$0xff] %vm297, %v387
      %390 = vrot.lane.b32.xlu0 %v384, 32
      %v391 = vpop.permute.xlu0 %390
      %393 = vst.msk [vmem:[#allocation2 + $0x25] sm:$0xff] %vm302, %v391
      %s394 = scalar_lea.vmem %s273, 72
      %v395 = vld [vmem:[%s394] sm:$0xff]
      %397 = vrot.lane.b32.xlu0 %v395, 32
      %v398 = vpop.permute.xlu0 %397
      %400 = vst.msk [vmem:[#allocation2 + $0x2d] sm:$0xff] %vm310, %v398
      %401 = vrot.lane.b32.xlu0 %v395, 96
      %v402 = vpop.permute.xlu0 %401
      %404 = vst.msk [vmem:[#allocation2 + $0x2e] sm:$0xff] %vm315, %v402
      %s405 = scalar_lea.vmem %s273, 80
      %v406 = vld [vmem:[%s405] sm:$0xff]
      %408 = vrot.lane.b32.xlu0 %v406, 96
      %v409 = vpop.permute.xlu0 %408
      %411 = vst.msk [vmem:[#allocation2 + $0x2d] sm:$0xff] %vm297, %v409
      %412 = vrot.lane.b32.xlu0 %v406, 32
      %v413 = vpop.permute.xlu0 %412
      %415 = vst.msk [vmem:[#allocation2 + $0x2e] sm:$0xff] %vm302, %v413
      %s416 = scalar_lea.vmem %s273, 88
      %v417 = vld [vmem:[%s416] sm:$0xff]
      %419 = vrot.lane.b32.xlu0 %v417, 32
      %v420 = vpop.permute.xlu0 %419
      %422 = vst.msk [vmem:[#allocation2 + $0x36] sm:$0xff] %vm310, %v420
      %423 = vrot.lane.b32.xlu0 %v417, 96
      %v424 = vpop.permute.xlu0 %423
      %426 = vst.msk [vmem:[#allocation2 + $0x37] sm:$0xff] %vm315, %v424
      %s427 = scalar_lea.vmem %s273, 96
      %v428 = vld [vmem:[%s427] sm:$0xff]
      %430 = vrot.lane.b32.xlu0 %v428, 96
      %v431 = vpop.permute.xlu0 %430
      %433 = vst.msk [vmem:[#allocation2 + $0x36] sm:$0xff] %vm297, %v431
      %434 = vrot.lane.b32.xlu0 %v428, 32
      %v435 = vpop.permute.xlu0 %434
      %437 = vst.msk [vmem:[#allocation2 + $0x37] sm:$0xff] %vm302, %v435
      %s438 = scalar_lea.vmem %s273, 104
      %v439 = vld [vmem:[%s438] sm:$0xff]
      %441 = vrot.lane.b32.xlu0 %v439, 32
      %v442 = vpop.permute.xlu0 %441
      %444 = vst.msk [vmem:[#allocation2 + $0x3f] sm:$0xff] %vm310, %v442
      %445 = vrot.lane.b32.xlu0 %v439, 96
      %v446 = vpop.permute.xlu0 %445
      %448 = vst.msk [vmem:[#allocation2 + $0x40] sm:$0xff] %vm315, %v446
      %s449 = scalar_lea.vmem %s273, 112
      %v450 = vld [vmem:[%s449] sm:$0xff]
      %452 = vrot.lane.b32.xlu0 %v450, 96
      %v453 = vpop.permute.xlu0 %452
      %455 = vst.msk [vmem:[#allocation2 + $0x3f] sm:$0xff] %vm297, %v453
      %456 = vrot.lane.b32.xlu0 %v450, 32
      %v457 = vpop.permute.xlu0 %456
      %459 = vst.msk [vmem:[#allocation2 + $0x40] sm:$0xff] %vm302, %v457
      %s460 = scalar_lea.vmem %s273, 120
      %v461 = vld [vmem:[%s460] sm:$0xff]
      %463 = vrot.lane.b32.xlu0 %v461, 32
      %v464 = vpop.permute.xlu0 %463
      %466 = vst.msk [vmem:[#allocation2 + $0x48] sm:$0xff] %vm310, %v464
      %467 = vrot.lane.b32.xlu0 %v461, 96
      %v468 = vpop.permute.xlu0 %467
      %470 = vst.msk [vmem:[#allocation2 + $0x49] sm:$0xff] %vm315, %v468
      %v471 = vld [vmem:[#allocation2] sm:$0xff]
      %v472 = vld [vmem:[#allocation2 + $0x8] sm:$0xff]
      %v473 = vld [vmem:[#allocation2 + $0x10] sm:$0xff]
      %v474 = vld [vmem:[#allocation2 + $0x18] sm:$0xff]
      %v475 = vld [vmem:[#allocation2 + $0x20] sm:$0xff]
      %v476 = vld [vmem:[#allocation2 + $0x28] sm:$0xff]
      %v477 = vld [vmem:[#allocation2 + $0x30] sm:$0xff]
      %v478 = vld [vmem:[#allocation2 + $0x38] sm:$0xff]
      %v479 = vld [vmem:[#allocation2 + $0x40] sm:$0xff]
      %v480 = vld [vmem:[#allocation2 + $0x1] sm:$0xff]
      %v481 = vld [vmem:[#allocation2 + $0x9] sm:$0xff]
      %v482 = vld [vmem:[#allocation2 + $0x11] sm:$0xff]
      %v483 = vld [vmem:[#allocation2 + $0x19] sm:$0xff]
      %v484 = vld [vmem:[#allocation2 + $0x21] sm:$0xff]
      %v485 = vld [vmem:[#allocation2 + $0x29] sm:$0xff]
      %v486 = vld [vmem:[#allocation2 + $0x31] sm:$0xff]
      %v487 = vld [vmem:[#allocation2 + $0x39] sm:$0xff]
      %v488 = vld [vmem:[#allocation2 + $0x41] sm:$0xff]
      %v489 = vld [vmem:[#allocation2 + $0x49] sm:$0xff]
      %v490 = vld [vmem:[#allocation2 + $0xa] sm:$0xff]
      %v491 = vld [vmem:[#allocation2 + $0x12] sm:$0xff]
      %v492 = vld [vmem:[#allocation2 + $0x1a] sm:$0xff]
      %v493 = vld [vmem:[#allocation2 + $0x22] sm:$0xff]
      %v494 = vld [vmem:[#allocation2 + $0x2a] sm:$0xff]
      %v495 = vld [vmem:[#allocation2 + $0x32] sm:$0xff]
      %v496 = vld [vmem:[#allocation2 + $0x3a] sm:$0xff]
      %v497 = vld [vmem:[#allocation2 + $0x42] sm:$0xff]
      %v498 = vld [vmem:[#allocation2 + $0x4a] sm:$0xff]
      %508 = vrot.lane.b32.xlu0 %v480, 64
      %v509 = vpop.permute.xlu0 %508
      %510 = vrot.lane.b32.xlu0 %v481, 64
      %v511 = vpop.permute.xlu0 %510
      %512 = vrot.lane.b32.xlu0 %v482, 64
      %v513 = vpop.permute.xlu0 %512
      %514 = vrot.lane.b32.xlu0 %v483, 64
      %v515 = vpop.permute.xlu0 %514
      %516 = vrot.lane.b32.xlu0 %v484, 64
      %v517 = vpop.permute.xlu0 %516
      %518 = vrot.lane.b32.xlu0 %v485, 64
      %v519 = vpop.permute.xlu0 %518
      %520 = vrot.lane.b32.xlu0 %v486, 64
      %v521 = vpop.permute.xlu0 %520
      %522 = vrot.lane.b32.xlu0 %v487, 64
      %v523 = vpop.permute.xlu0 %522
      %524 = vrot.lane.b32.xlu0 %v488, 64
      %v525 = vpop.permute.xlu0 %524
      %544 = vrot.lane.b32.xlu0 %v471, 32
      %v545 = vpop.permute.xlu0 %544
      %546 = vrot.lane.b32.xlu0 %v472, 32
      %v547 = vpop.permute.xlu0 %546
      %548 = vrot.lane.b32.xlu0 %v473, 32
      %v549 = vpop.permute.xlu0 %548
      %550 = vrot.lane.b32.xlu0 %v474, 32
      %v551 = vpop.permute.xlu0 %550
      %552 = vrot.lane.b32.xlu0 %v475, 32
      %v553 = vpop.permute.xlu0 %552
      %554 = vrot.lane.b32.xlu0 %v476, 32
      %v555 = vpop.permute.xlu0 %554
      %556 = vrot.lane.b32.xlu0 %v477, 32
      %v557 = vpop.permute.xlu0 %556
      %558 = vrot.lane.b32.xlu0 %v478, 32
      %v559 = vpop.permute.xlu0 %558
      %560 = vrot.lane.b32.xlu0 %v479, 32
      %v561 = vpop.permute.xlu0 %560
      %571 = vrot.lane.b32.xlu0 %v480, 96
      %v572 = vpop.permute.xlu0 %571
      %573 = vrot.lane.b32.xlu0 %v481, 96
      %v574 = vpop.permute.xlu0 %573
      %575 = vrot.lane.b32.xlu0 %v482, 96
      %v576 = vpop.permute.xlu0 %575
      %577 = vrot.lane.b32.xlu0 %v483, 96
      %v578 = vpop.permute.xlu0 %577
      %579 = vrot.lane.b32.xlu0 %v484, 96
      %v580 = vpop.permute.xlu0 %579
      %581 = vrot.lane.b32.xlu0 %v485, 96
      %v582 = vpop.permute.xlu0 %581
      %583 = vrot.lane.b32.xlu0 %v486, 96
      %v584 = vpop.permute.xlu0 %583
      %585 = vrot.lane.b32.xlu0 %v487, 96
      %v586 = vpop.permute.xlu0 %585
      %587 = vrot.lane.b32.xlu0 %v488, 96
      %v588 = vpop.permute.xlu0 %587
      %599 = vrot.lane.b32.xlu0 %v489, 64
      %v600 = vpop.permute.xlu0 %599
      %vm602 = vcmask 523264
      %v603 = vsel %vm602, %v471, %v509
      %v604 = vsel %vm602, %v472, %v511
      %v605 = vsel %vm602, %v473, %v513
      %v606 = vsel %vm602, %v474, %v515
      %v607 = vsel %vm602, %v475, %v517
      %v608 = vsel %vm602, %v476, %v519
      %v609 = vsel %vm602, %v477, %v521
      %v610 = vsel %vm602, %v478, %v523
      %v611 = vsel %vm602, %v479, %v525
      %vm612 = vcmask 785408
      %v613 = vsel %vm612, %v603, %v545
      %v614 = vsel %vm612, %v604, %v547
      %v615 = vsel %vm612, %v605, %v549
      %v616 = vsel %vm612, %v606, %v551
      %v617 = vsel %vm612, %v607, %v553
      %v618 = vsel %vm612, %v608, %v555
      %v619 = vsel %vm612, %v609, %v557
      %v620 = vsel %vm612, %v610, %v559
      %v621 = vsel %vm612, %v611, %v561
      %v622 = vsel %vm315, %v545, %v572
      %v623 = vsel %vm315, %v547, %v574
      %v624 = vsel %vm315, %v549, %v576
      %v625 = vsel %vm315, %v551, %v578
      %v626 = vsel %vm315, %v553, %v580
      %v627 = vsel %vm315, %v555, %v582
      %v628 = vsel %vm315, %v557, %v584
      %v629 = vsel %vm315, %v559, %v586
      %v630 = vsel %vm315, %v561, %v588
      %v631 = vsel %vm602, %v622, %v511
      %v632 = vsel %vm602, %v623, %v513
      %v633 = vsel %vm602, %v624, %v515
      %v634 = vsel %vm602, %v625, %v517
      %v635 = vsel %vm602, %v626, %v519
      %v636 = vsel %vm602, %v627, %v521
      %v637 = vsel %vm602, %v628, %v523
      %v638 = vsel %vm602, %v629, %v525
      %v639 = vsel %vm602, %v630, %v600
      %v640 = vsel %vm612, %v631, %v511
      %v641 = vsel %vm612, %v632, %v513
      %v642 = vsel %vm612, %v633, %v515
      %v643 = vsel %vm612, %v634, %v517
      %v644 = vsel %vm612, %v635, %v519
      %v645 = vsel %vm612, %v636, %v521
      %v646 = vsel %vm612, %v637, %v523
      %v647 = vsel %vm612, %v638, %v525
      %v648 = vsel %vm612, %v639, %v600
      %v649 = vpack.c.bf16 %v614, %v613
      %v650 = vpack.c.bf16 %v641, %v640
      %v651 = vpack.c.bf16 %v491, %v490
      %v652 = vpack.c.bf16 %v616, %v615
      %v653 = vpack.c.bf16 %v643, %v642
      %v654 = vpack.c.bf16 %v493, %v492
      %v655 = vpack.c.bf16 %v618, %v617
      %v656 = vpack.c.bf16 %v645, %v644
      %v657 = vpack.c.bf16 %v495, %v494
      %v658 = vpack.c.bf16 %v620, %v619
      %v659 = vpack.c.bf16 %v647, %v646
      %v660 = vpack.c.bf16 %v497, %v496
      %v661 = vpack.c.bf16 %v621, %v621
      %v662 = vpack.c.bf16 %v648, %v648
      %v663 = vpack.c.bf16 %v498, %v498
      %v664 = vld [vmem:[%s1] sm:$0xf]
      %v665 = vld [vmem:[%s1 + $0x4] sm:$0xf]
      %v666 = vld [vmem:[%s1 + $0x8] sm:$0xf]
      %v667 = vld [vmem:[%s1 + $0xc] sm:$0xf]
      %v668 = vld [vmem:[%s1 + $0x10] sm:$0xf]
      %v669 = vld [vmem:[%s1 + $0x14] sm:$0xf]
      %v670 = vld [vmem:[%s1 + $0x18] sm:$0xf]
      %v671 = vld [vmem:[%s1 + $0x1c] sm:$0xf]
      %v672 = vld [vmem:[%s1 + $0x20] sm:$0xf]
      %v673 = vld [vmem:[%s1 + $0x24] sm:$0xf]
      %v674 = vld [vmem:[%s1 + $0x28] sm:$0xf]
      %v675 = vld [vmem:[%s1 + $0x2c] sm:$0xf]
      %v676 = vld [vmem:[%s1 + $0x30] sm:$0xf]
      %v677 = vld [vmem:[%s1 + $0x34] sm:$0xf]
      %v678 = vld [vmem:[%s1 + $0x38] sm:$0xf]
      %v679 = vld [vmem:[%s1 + $0x3c] sm:$0xf]
      %v680 = vld [vmem:[%s1 + $0x40] sm:$0xf]
      %v681 = vld [vmem:[%s1 + $0x44] sm:$0xf]
      %v682 = vld [vmem:[%s1 + $0x48] sm:$0xf]
      %v683 = vld [vmem:[%s1 + $0x4c] sm:$0xf]
      %v684 = vld [vmem:[%s1 + $0x50] sm:$0xf]
      %v685 = vld [vmem:[%s1 + $0x54] sm:$0xf]
      %v686 = vld [vmem:[%s1 + $0x58] sm:$0xf]
      %v687 = vld [vmem:[%s1 + $0x5c] sm:$0xf]
      %v688 = vld [vmem:[%s1 + $0x60] sm:$0xf]
      %v689 = vld [vmem:[%s1 + $0x64] sm:$0xf]
      %v690 = vld [vmem:[%s1 + $0x68] sm:$0xf]
      %v691 = vld [vmem:[%s1 + $0x6c] sm:$0xf]
      %v692 = vld [vmem:[%s1 + $0x70] sm:$0xf]
      %v693 = vld [vmem:[%s1 + $0x74] sm:$0xf]
      %v694 = vld [vmem:[%s1 + $0x78] sm:$0xf]
      %v695 = vld [vmem:[%s1 + $0x7c] sm:$0xf]
      %v696 = vld [vmem:[%s1 + $0x80] sm:$0xf]
      %v697 = vld [vmem:[%s1 + $0x84] sm:$0xf]
      %v698 = vld [vmem:[%s1 + $0x88] sm:$0xf]
      %v699 = vld [vmem:[%s1 + $0x8c] sm:$0xf]
      %v700 = vld [vmem:[%s2] sm:$0x1]
      %v702 = vperm.slane %v700, 0
      %v740 = vunpack.c.l.b16 %v664
      %v741 = vunpack.c.l.b16 %v665
      %v742 = vunpack.c.l.b16 %v666
      %v743 = vunpack.c.l.b16 %v667
      %v744 = vunpack.c.l.b16 %v668
      %v745 = vunpack.c.l.b16 %v669
      %v746 = vunpack.c.l.b16 %v670
      %v747 = vunpack.c.l.b16 %v671
      %v748 = vunpack.c.l.b16 %v672
      %v749 = vunpack.c.l.b16 %v673
      %v750 = vunpack.c.l.b16 %v674
      %v751 = vunpack.c.l.b16 %v675
      %v752 = vunpack.c.l.b16 %v676
      %v753 = vunpack.c.l.b16 %v677
      %v754 = vunpack.c.l.b16 %v678
      %v755 = vunpack.c.l.b16 %v679
      %v756 = vunpack.c.l.b16 %v680
      %v757 = vunpack.c.l.b16 %v681
      %v758 = vunpack.c.l.b16 %v682
      %v759 = vunpack.c.l.b16 %v683
      %v760 = vunpack.c.l.b16 %v684
      %v761 = vunpack.c.l.b16 %v685
      %v762 = vunpack.c.l.b16 %v686
      %v763 = vunpack.c.l.b16 %v687
      %v764 = vunpack.c.l.b16 %v688
      %v765 = vunpack.c.l.b16 %v689
      %v766 = vunpack.c.l.b16 %v690
      %v767 = vunpack.c.l.b16 %v691
      %v768 = vunpack.c.l.b16 %v692
      %v769 = vunpack.c.l.b16 %v693
      %v770 = vunpack.c.l.b16 %v694
      %v771 = vunpack.c.l.b16 %v695
      %v772 = vunpack.c.l.b16 %v696
      %v773 = vunpack.c.l.b16 %v697
      %v774 = vunpack.c.l.b16 %v698
      %v775 = vunpack.c.l.b16 %v699
      %v776 = vpack.c.b16 %v741, %v740
      %v777 = vpack.c.b16 %v743, %v742
      %v778 = vpack.c.b16 %v745, %v744
      %v779 = vpack.c.b16 %v747, %v746
      %v780 = vpack.c.b16 %v749, %v748
      %v781 = vpack.c.b16 %v751, %v750
      %v782 = vpack.c.b16 %v753, %v752
      %v783 = vpack.c.b16 %v755, %v754
      %v784 = vpack.c.b16 %v757, %v756
      %v785 = vpack.c.b16 %v759, %v758
      %v786 = vpack.c.b16 %v761, %v760
      %v787 = vpack.c.b16 %v763, %v762
      %v788 = vpack.c.b16 %v765, %v764
      %v789 = vpack.c.b16 %v767, %v766
      %v790 = vpack.c.b16 %v769, %v768
      %v791 = vpack.c.b16 %v771, %v770
      %v792 = vpack.c.b16 %v773, %v772
      %v793 = vpack.c.b16 %v775, %v774
      %v813 = vsel %vm315, %v651, 0
      %v816 = vsel %vm315, %v654, 0
      %v819 = vsel %vm315, %v657, 0
      %v822 = vsel %vm315, %v660, 0
      %v825 = vsel %vm315, %v663, 0
      %827 = vmatpush.bf16.msra.mxu0 %v783
      %828 = vmatpush.bf16.msra.mxu0 %v782
      %829 = vmatpush.bf16.msra.mxu0 %v781
      %830 = vmatpush.bf16.msra.mxu0 %v780
      %831 = vmatpush.bf16.msra.mxu0 %v779
      %832 = vmatpush.bf16.msra.mxu0 %v778
      %833 = vmatpush.bf16.msra.mxu0 %v777
      %834 = vmatpush.bf16.msra.mxu0 %v776
      %835 = vmatmul.bf16.gmra.mxu0 %v649
      %v836 = vpop.f32.mrf.mxu0
      %v837 = vadd.f32 %v702, %v836
      %v838 = vpop.f32.mrf.mxu0
      %v839 = vadd.f32 %v702, %v838
      %840 = vmatmul.bf16.gmra.mxu0 %v652
      %v841 = vpop.f32.mrf.mxu0
      %v842 = vadd.f32 %v702, %v841
      %v843 = vpop.f32.mrf.mxu0
      %v844 = vadd.f32 %v702, %v843
      %845 = vmatmul.bf16.gmra.mxu0 %v655
      %v846 = vpop.f32.mrf.mxu0
      %v847 = vadd.f32 %v702, %v846
      %v848 = vpop.f32.mrf.mxu0
      %v849 = vadd.f32 %v702, %v848
      %850 = vmatmul.bf16.gmra.mxu0 %v658
      %v851 = vpop.f32.mrf.mxu0
      %v852 = vadd.f32 %v702, %v851
      %v853 = vpop.f32.mrf.mxu0
      %v854 = vadd.f32 %v702, %v853
      %855 = vmatmul.bf16.gmra.mxu0 %v661
      %v856 = vpop.f32.mrf.mxu0
      %v857 = vadd.f32 %v702, %v856
      %v858 = vpop.f32.mrf.mxu0
      %859 = vdwg.mxu0
      %860 = vmatpush.bf16.msra.mxu0 %v791
      %861 = vmatpush.bf16.msra.mxu0 %v790
      %862 = vmatpush.bf16.msra.mxu0 %v789
      %863 = vmatpush.bf16.msra.mxu0 %v788
      %864 = vmatpush.bf16.msra.mxu0 %v787
      %865 = vmatpush.bf16.msra.mxu0 %v786
      %866 = vmatpush.bf16.msra.mxu0 %v785
      %867 = vmatpush.bf16.msra.mxu0 %v784
      %868 = vmatmul.bf16.gmra.mxu0 %v650
      %v869 = vpop.f32.mrf.mxu0
      %v870 = vadd.f32 %v837, %v869
      %v871 = vpop.f32.mrf.mxu0
      %v872 = vadd.f32 %v839, %v871
      %873 = vmatmul.bf16.gmra.mxu0 %v653
      %v874 = vpop.f32.mrf.mxu0
      %v875 = vadd.f32 %v842, %v874
      %v876 = vpop.f32.mrf.mxu0
      %v877 = vadd.f32 %v844, %v876
      %878 = vmatmul.bf16.gmra.mxu0 %v656
      %v879 = vpop.f32.mrf.mxu0
      %v880 = vadd.f32 %v847, %v879
      %v881 = vpop.f32.mrf.mxu0
      %v882 = vadd.f32 %v849, %v881
      %883 = vmatmul.bf16.gmra.mxu0 %v659
      %v884 = vpop.f32.mrf.mxu0
      %v885 = vadd.f32 %v852, %v884
      %v886 = vpop.f32.mrf.mxu0
      %v887 = vadd.f32 %v854, %v886
      %888 = vmatmul.bf16.gmra.mxu0 %v662
      %v889 = vpop.f32.mrf.mxu0
      %v890 = vadd.f32 %v857, %v889
      %v891 = vpop.f32.mrf.mxu0
      %892 = vdwg.mxu0
      %893 = vmatpush.bf16.msra.mxu0 0
      %894 = vmatpush.bf16.msra.mxu0 0
      %895 = vmatpush.bf16.msra.mxu0 0
      %896 = vmatpush.bf16.msra.mxu0 0
      %897 = vmatpush.bf16.msra.mxu0 0
      %898 = vmatpush.bf16.msra.mxu0 0
      %899 = vmatpush.bf16.msra.mxu0 %v793
      %900 = vmatpush.bf16.msra.mxu0 %v792
      %901 = vmatmul.bf16.gmra.mxu0 %v813
      %v902 = vpop.f32.mrf.mxu0
      %v903 = vadd.f32 %v870, %v902
      %v904 = vpop.f32.mrf.mxu0
      %v905 = vadd.f32 %v872, %v904
      %906 = vmatmul.bf16.gmra.mxu0 %v816
      %v907 = vpop.f32.mrf.mxu0
      %v908 = vadd.f32 %v875, %v907
      %v909 = vpop.f32.mrf.mxu0
      %v910 = vadd.f32 %v877, %v909
      %911 = vmatmul.bf16.gmra.mxu0 %v819
      %v912 = vpop.f32.mrf.mxu0
      %v913 = vadd.f32 %v880, %v912
      %v914 = vpop.f32.mrf.mxu0
      %v915 = vadd.f32 %v882, %v914
      %916 = vmatmul.bf16.gmra.mxu0 %v822
      %v917 = vpop.f32.mrf.mxu0
      %v918 = vadd.f32 %v885, %v917
      %v919 = vpop.f32.mrf.mxu0
      %v920 = vadd.f32 %v887, %v919
      %921 = vmatmul.bf16.gmra.mxu0 %v825
      %v922 = vpop.f32.mrf.mxu0
      %v923 = vadd.f32 %v890, %v922
      %v924 = vpop.f32.mrf.mxu0
      %925 = vdwg.mxu0
      %v926 = vmax.f32 %v903, 0.0
      %v927 = vmax.f32 %v905, 0.0
      %v928 = vmax.f32 %v908, 0.0
      %v929 = vmax.f32 %v910, 0.0
      %v930 = vmax.f32 %v913, 0.0
      %v931 = vmax.f32 %v915, 0.0
      %v932 = vmax.f32 %v918, 0.0
      %v933 = vmax.f32 %v920, 0.0
      %v934 = vmax.f32 %v923, 0.0
      %v935 = vld [vmem:[%s6] sm:$0x1]
      %vm936 = vcmask 588800
      %v938 = vsel %vm936, %v935, 0
      %940 = vmatpush.msra.mxu0 0.0
      %941 = vmatpush.msra.mxu0 0.0
      %942 = vmatpush.msra.mxu0 0.0
      %943 = vmatpush.msra.mxu0 0.0
      %944 = vmatpush.msra.mxu0 0.0
      %945 = vmatpush.msra.mxu0 0.0
      %946 = vmatpush.msra.mxu0 0.0
      %947 = vmatpush.msra.mxu0 %v934
      %948 = vmatpush.msra.mxu0 %v933
      %949 = vmatpush.msra.mxu0 %v932
      %950 = vmatpush.msra.mxu0 %v931
      %951 = vmatpush.msra.mxu0 %v930
      %952 = vmatpush.msra.mxu0 %v929
      %953 = vmatpush.msra.mxu0 %v928
      %954 = vmatpush.msra.mxu0 %v927
      %955 = vmatpush.msra.mxu0 %v926
      %956 = vmatmul.f32.gmra.mxu0 %v938
      %v957 = vpop.f32.mrf.mxu0
      %v958 = vadd.f32 0.0, %v957
      %959 = vdwg.mxu0
      %v960 = vmul.f32 %v926, %v926
      %v961 = vmul.f32 %v927, %v927
      %v962 = vmul.f32 %v928, %v928
      %v963 = vmul.f32 %v929, %v929
      %v964 = vmul.f32 %v930, %v930
      %v965 = vmul.f32 %v931, %v931
      %v966 = vmul.f32 %v932, %v932
      %v967 = vmul.f32 %v933, %v933
      %v968 = vmul.f32 %v934, %v934
      %969 = vmatpush.msra.mxu0 0.0
      %970 = vmatpush.msra.mxu0 0.0
      %971 = vmatpush.msra.mxu0 0.0
      %972 = vmatpush.msra.mxu0 0.0
      %973 = vmatpush.msra.mxu0 0.0
      %974 = vmatpush.msra.mxu0 0.0
      %975 = vmatpush.msra.mxu0 0.0
      %976 = vmatpush.msra.mxu0 %v968
      %977 = vmatpush.msra.mxu0 %v967
      %978 = vmatpush.msra.mxu0 %v966
      %979 = vmatpush.msra.mxu0 %v965
      %980 = vmatpush.msra.mxu0 %v964
      %981 = vmatpush.msra.mxu0 %v963
      %982 = vmatpush.msra.mxu0 %v962
      %983 = vmatpush.msra.mxu0 %v961
      %984 = vmatpush.msra.mxu0 %v960
      %985 = vmatmul.f32.gmra.mxu0 %v938
      %v986 = vpop.f32.mrf.mxu0
      %v987 = vadd.f32 0.0, %v986
      %988 = vdwg.mxu0
      %v989 = vld [vmem:[%s5] sm:$0xff]
      %v990 = vld [vmem:[%s5 + $0x8] sm:$0xff]
      %v991 = vld [vmem:[%s5 + $0x10] sm:$0xff]
      %v992 = vld [vmem:[%s5 + $0x18] sm:$0xff]
      %v994 = vsel %vm315, %v958, 0
      %996 = vmatpush.msra.mxu0 0.0
      %997 = vmatpush.msra.mxu0 0.0
      %998 = vmatpush.msra.mxu0 0.0
      %999 = vmatpush.msra.mxu0 0.0
      %1000 = vmatpush.msra.mxu0 0.0
      %1001 = vmatpush.msra.mxu0 0.0
      %1002 = vmatpush.msra.mxu0 0.0
      %1003 = vmatpush.msra.mxu0 0.0
      %1004 = vmatpush.msra.mxu0 0.0
      %1005 = vmatpush.msra.mxu0 0.0
      %1006 = vmatpush.msra.mxu0 0.0
      %1007 = vmatpush.msra.mxu0 0.0
      %1008 = vmatpush.msra.mxu0 %v992
      %1009 = vmatpush.msra.mxu0 %v991
      %1010 = vmatpush.msra.mxu0 %v990
      %1011 = vmatpush.msra.mxu0 %v989
      %1012 = vmatmul.f32.gmra.mxu0 %v994
      %v1013 = vpop.f32.mrf.mxu0
      %v1014 = vadd.f32 0.0, %v1013
      %1015 = vdwg.mxu0
      %v1016 = vmul.f32 %v1014, 0.015625
      %v1018 = vsel %vm315, %v987, 0
      %1020 = vmatpush.msra.mxu0 0.0
      %1021 = vmatpush.msra.mxu0 0.0
      %1022 = vmatpush.msra.mxu0 0.0
      %1023 = vmatpush.msra.mxu0 0.0
      %1024 = vmatpush.msra.mxu0 0.0
      %1025 = vmatpush.msra.mxu0 0.0
      %1026 = vmatpush.msra.mxu0 0.0
      %1027 = vmatpush.msra.mxu0 0.0
      %1028 = vmatpush.msra.mxu0 0.0
      %1029 = vmatpush.msra.mxu0 0.0
      %1030 = vmatpush.msra.mxu0 0.0
      %1031 = vmatpush.msra.mxu0 0.0
      %1032 = vmatpush.msra.mxu0 %v992
      %1033 = vmatpush.msra.mxu0 %v991
      %1034 = vmatpush.msra.mxu0 %v990
      %1035 = vmatpush.msra.mxu0 %v989
      %1036 = vmatmul.f32.gmra.mxu0 %v1018
      %v1037 = vpop.f32.mrf.mxu0
      %v1038 = vadd.f32 0.0, %v1037
      %1039 = vdwg.mxu0
      %v1040 = vmul.f32 %v1038, 0.015625
      %v1041 = vmul.f32 %v1016, %v1016
      %v1042 = vsub.f32 %v1040, %v1041
      %v1043 = vmax.f32 %v1042, 0.0
      %v1044 = vadd.f32 %v1043, 1e-05
      %v1045 = vrsqrt.pop %v1044
      %v1046 = vmul.f32 %v1045, %v1044
      %v1047 = vmul.f32 %v1046, %v1045
      %v1048 = vmul.f32 0.5, %v1047
      %v1049 = vsub.f32 1.5, %v1048
      %v1050 = vmul.f32 %v1045, %v1049
      %vm1051 = vweird.f32 %v1044
      %vm1052 = vweird.f32 %v1045
      %vm1053 = vmor %vm1051, %vm1052
      %v1054 = vsel %vm1053, %v1045, %v1050
      %v1055 = vld [vmem:[%s3] sm:$0x1]
      %v1056 = vmul.f32 %v1055, %v1054
      %v1057 = vld [vmem:[%s4] sm:$0x1]
      %v1058 = vmul.f32 %v1016, %v1056
      %v1059 = vsub.f32 %v1057, %v1058
      %v1061 = vperm.slane %v1056, 0
      %v1063 = vmul.f32 %v926, %v1061
      %v1064 = vmul.f32 %v927, %v1061
      %v1065 = vmul.f32 %v928, %v1061
      %v1066 = vmul.f32 %v929, %v1061
      %v1067 = vmul.f32 %v930, %v1061
      %v1068 = vmul.f32 %v931, %v1061
      %v1069 = vmul.f32 %v932, %v1061
      %v1070 = vmul.f32 %v933, %v1061
      %v1071 = vmul.f32 %v934, %v1061
      %v1073 = vperm.slane %v1059, 0
      %v1075 = vadd.f32 %v1063, %v1073
      %v1076 = vadd.f32 %v1064, %v1073
      %v1077 = vadd.f32 %v1065, %v1073
      %v1078 = vadd.f32 %v1066, %v1073
      %v1079 = vadd.f32 %v1067, %v1073
      %v1080 = vadd.f32 %v1068, %v1073
      %v1081 = vadd.f32 %v1069, %v1073
      %v1082 = vadd.f32 %v1070, %v1073
      %v1083 = vadd.f32 %v1071, %v1073
      %1084 = vst.msk [vmem:[%s278] sm:$0xff] %vm315, %v1075
      %s1085 = scalar_lea.vmem %s278, 8
      %vm1086 = vcmask 261121
      %1087 = vst.msk [vmem:[%s1085 - $0x1] sm:$0xfe] %vm1086, %v1076
      %vm1088 = vcmask 253952
      %1089 = vst.msk [vmem:[%s1085 + $0x7] sm:$0x1] %vm1088, %v1077
      %s1090 = scalar_lea.vmem %s278, 16
      %vm1091 = vcmask 261122
      %1092 = vst.msk [vmem:[%s1090 - $0x2] sm:$0xfc] %vm1091, %v1077
      %vm1093 = vcmask 254976
      %1094 = vst.msk [vmem:[%s1090 + $0x6] sm:$0x3] %vm1093, %v1078
      %s1095 = scalar_lea.vmem %s278, 24
      %vm1096 = vcmask 261123
      %1097 = vst.msk [vmem:[%s1095 - $0x3] sm:$0xf8] %vm1096, %v1078
      %vm1098 = vcmask 256000
      %1099 = vst.msk [vmem:[%s1095 + $0x5] sm:$0x7] %vm1098, %v1079
      %s1100 = scalar_lea.vmem %s278, 32
      %vm1101 = vcmask 261124
      %1102 = vst.msk [vmem:[%s1100 - $0x4] sm:$0xf0] %vm1101, %v1079
      %vm1103 = vcmask 257024
      %1104 = vst.msk [vmem:[%s1100 + $0x4] sm:$0xf] %vm1103, %v1080
      %s1105 = scalar_lea.vmem %s278, 40
      %vm1106 = vcmask 261125
      %1107 = vst.msk [vmem:[%s1105 - $0x5] sm:$0xe0] %vm1106, %v1080
      %vm1108 = vcmask 258048
      %1109 = vst.msk [vmem:[%s1105 + $0x3] sm:$0x1f] %vm1108, %v1081
      %s1110 = scalar_lea.vmem %s278, 48
      %vm1111 = vcmask 261126
      %1112 = vst.msk [vmem:[%s1110 - $0x6] sm:$0xc0] %vm1111, %v1081
      %vm1113 = vcmask 259072
      %1114 = vst.msk [vmem:[%s1110 + $0x2] sm:$0x3f] %vm1113, %v1082
      %s1115 = scalar_lea.vmem %s278, 56
      %vm1116 = vcmask 261127
      %1117 = vst.msk [vmem:[%s1115 - $0x7] sm:$0x80] %vm1116, %v1082
      %vm1118 = vcmask 260096
      %1119 = vst.msk [vmem:[%s1115 + $0x1] sm:$0x7f] %vm1118, %v1083
      %p1120 = scmp.lt.s32.totalorder %s18, 1
      %s1121 = scalar_select %p1120, %s18, 1
      %s1122 = smul.addr %s1121, 8
      %s1123 = smul.addr %s1122, 8
      %s1124 = scalar_lea.vmem %s7, %s1123
      // Predicated region
      $region49: #{multi_scale_downsampling.5} parent=47 // pred_check
        %p1125 = pneg %p188
      $region50: #{multi_scale_downsampling.5} parent=47 // pred_check_branch
        %1127 = sbr.rel (%p1125) target = $region52
      $region51: #{multi_scale_downsampling.5} parent=47 // pred_region
        _
      $region52: #{multi_scale_downsampling.5} parent=47 // pred_fallthru
        _
    $region48: #{multi_scale_downsampling.5} parent=5 // pred_fallthru
      _
    %p1128 = scmp.le.s32.totalorder 2, %s13
    // Predicated region
    $region53: #{multi_scale_downsampling.5} parent=5 // pred_check
      %p1129 = pneg %p1128
    $region54: #{multi_scale_downsampling.5} parent=5 // pred_check_branch
      %1131 = sbr.rel (%p1129) target = $region56
    $region55: #{multi_scale_downsampling.5} parent=5 // pred_region
      %s1132 = ssub.s32 %s13, 2
      // Predicated region
      $region57: #{multi_scale_downsampling.5} parent=55 // pred_check
        %p1133 = pneg %p194
      $region58: #{multi_scale_downsampling.5} parent=55 // pred_check_branch
        %1135 = sbr.rel (%p1133) target = $region60
      $region59: #{multi_scale_downsampling.5} parent=55 // pred_region
        %p1136 = scmp.lt.s32.totalorder %s19, 1
        %s1137 = scalar_select %p1136, %s19, 1
        %s1138 = smul.addr %s1137, 8
        %s1139 = smul.addr %s1138, 8
        %s1140 = scalar_lea.vmem %s7, %s1139
      $region60: #{multi_scale_downsampling.5} parent=55 // pred_fallthru
        _
    $region56: #{multi_scale_downsampling.5} parent=5 // pred_fallthru
      _
  $region6: #{multi_scale_downsampling.5} parent=0 // loop_footer
    %s17 = sadd.s32 1, %s13
  $region7: #{multi_scale_downsampling.5} parent=0 // loop_footer_branch
    %12 = sbr.rel target = $region3
  $region8: #{multi_scale_downsampling.5} parent=0 // loop_exit
    _

// kernel: multi_scale_downsampling.7
$region0: #{multi_scale_downsampling.7}
  #allocation0 [shape = 'u32[]', space=smem, size = 0x4, offset = 0x4, fixed_abs, tag = 'smem constant byte address 0x4 - core index']
  #allocation1 [shape = 'u32[72,128]{1,0:T(1,128)}', space=vmem, size = 0x9000, scoped, tag = 'internal scratch']
  #allocation2 [shape = 'f32[12,128]{1,0:T(8,128)}', space=vmem, size = 0x2000, scoped, tag = 'scratch operand']
  %s0 = inlined_call_operand.vmem [shape: f32[2,4,2,64], index: 0, kind: input, shape index: {}]
  %s1 = inlined_call_operand.vmem [shape: bf16[288,32], index: 1, kind: input, shape index: {}]
  %s2 = inlined_call_operand.vmem [shape: f32[1,32], index: 2, kind: input, shape index: {}]
  %s3 = inlined_call_operand.vmem [shape: f32[1,32], index: 3, kind: input, shape index: {}]
  %s4 = inlined_call_operand.vmem [shape: f32[1,32], index: 4, kind: input, shape index: {}]
  %s5 = inlined_call_operand.vmem [shape: f32[32,32], index: 5, kind: input, shape index: {}]
  %s6 = inlined_call_operand.vmem [shape: f32[1,6], index: 6, kind: input, shape index: {}]
  %s7 = inlined_call_operand.hbm [shape: f32[2,2,2,32], index: 7, kind: output, shape index: {}]
  %s8 = sld [smem:[#allocation0]]
  $region61: #{multi_scale_downsampling.7} parent=0
    _
  %s10 = ssub.s32 1, %s8
  %s11 = scalar_select 0, %s10, %s8
  $region1: #{multi_scale_downsampling.7} parent=0
    #allocation3 [shape = 'u8[4096]{0}', space=vmem, size = 0x1000, scoped, tag = 'output window, operand 0']
    #allocation4 [shape = 's32[2]{0}', space=sflag, size = 0x8, scoped, tag = 'scoped memory for multi_scale_downsampling.7']
    %12 = vsyncpa [#allocation4], 0
    %s13 = scalar_lea.sflag [#allocation4], 1
    %14 = vsyncpa %s13, 0
    loop: start=0, step=1, limit=4
    $region2: #{multi_scale_downsampling.7} parent=1 // loop_pre_header
      _
    $region3: #{multi_scale_downsampling.7} parent=1 // loop_header
      %s16 = sphi 0, %s20
      %p17 = scmp.ge.s32.totalorder %s16, 4
      %s26 = sphi 0, %s28
      %s29 = sphi 0, %s26
      %s30 = sphi 0, %s29
      %s46 = sphi 0, %s30
      %s50 = sphi 0, %s50
      %s52 = sphi 0, %s50
      %s53 = sphi 0, %s52
      %s67 = sphi 0, %s53
      %s71 = sphi 0, %s71
      %s73 = sphi 0, %s71
      %s74 = sphi 0, %s73
      %s88 = sphi 0, %s74
      %s92 = sphi 0, %s92
      %s94 = sphi 0, %s92
      %s95 = sphi 0, %s94
      %s109 = sphi 0, %s95
      %s113 = sphi 0, %s113
      %s115 = sphi 0, %s113
      %s116 = sphi 0, %s115
      %s130 = sphi 0, %s116
      %s134 = sphi 0, %s134
      %s136 = sphi 0, %s134
      %s137 = sphi 0, %s136
      %s151 = sphi 0, %s137
      %s155 = sphi 0, %s155
      %s157 = sphi 0, %s155
      %s158 = sphi 0, %s157
      %s172 = sphi 0, %s158
      %s178 = sphi 0, %s180
      %s181 = sphi 0, %s178
      %s182 = sphi 0, %s181
      %s198 = sphi 0, %s182
    $region4: #{multi_scale_downsampling.7} parent=1 // loop_header_branch
      %19 = sbr.rel (%p17) target = $region8
    $region5: #{multi_scale_downsampling.7} parent=1 // loop_body
      %s21 = ssub.s32 %s16, 1
      %s22 = ssub.s32 %s16, 2
      %s23 = sadd.s32 %s16, 1
      %s24 = ssub.s32 %s16, %s23
      %p25 = scmp.eq.s32.totalorder %s24, 0
      %s27 = sadd.s32 %s26, 1
      %s28 = scalar_select %p25, %s26, %s27
      %p31 = pneg %p25
      %p32 = scmp.eq.s32.totalorder %s16, 1
      %p33 = por %p31, %p32
      %p34 = scmp.ne.s32.totalorder %s26, %s29
      %p35 = scmp.eq.s32.totalorder %s16, 0
      %p36 = por %p34, %p35
      %p37 = scmp.ne.s32.totalorder %s26, %s29
      %p38 = scmp.eq.s32.totalorder %s21, 1
      %p39 = por %p37, %p38
      %p40 = scmp.ne.s32.totalorder %s29, %s30
      %p41 = scmp.eq.s32.totalorder %s21, 0
      %p42 = por %p40, %p41
      %p43 = scmp.ne.s32.totalorder %s29, %s30
      %p44 = scmp.eq.s32.totalorder %s22, 1
      %p45 = por %p43, %p44
      %p47 = scmp.ne.s32.totalorder %s30, %s46
      %p48 = scmp.eq.s32.totalorder %s22, 0
      %p49 = por %p47, %p48
      %s51 = sadd.s32 %s50, 1
      %p54 = scmp.eq.s32.totalorder %s16, 1
      %p55 = scmp.ne.s32.totalorder %s50, %s52
      %p56 = scmp.eq.s32.totalorder %s16, 0
      %p57 = por %p55, %p56
      %p58 = scmp.ne.s32.totalorder %s50, %s52
      %p59 = scmp.eq.s32.totalorder %s21, 1
      %p60 = por %p58, %p59
      %p61 = scmp.ne.s32.totalorder %s52, %s53
      %p62 = scmp.eq.s32.totalorder %s21, 0
      %p63 = por %p61, %p62
      %p64 = scmp.ne.s32.totalorder %s52, %s53
      %p65 = scmp.eq.s32.totalorder %s22, 1
      %p66 = por %p64, %p65
      %p68 = scmp.ne.s32.totalorder %s53, %s67
      %p69 = scmp.eq.s32.totalorder %s22, 0
      %p70 = por %p68, %p69
      %s72 = sadd.s32 %s71, 1
      %p75 = scmp.eq.s32.totalorder %s16, 1
      %p76 = scmp.ne.s32.totalorder %s71, %s73
      %p77 = scmp.eq.s32.totalorder %s16, 0
      %p78 = por %p76, %p77
      %p79 = scmp.ne.s32.totalorder %s71, %s73
      %p80 = scmp.eq.s32.totalorder %s21, 1
      %p81 = por %p79, %p80
      %p82 = scmp.ne.s32.totalorder %s73, %s74
      %p83 = scmp.eq.s32.totalorder %s21, 0
      %p84 = por %p82, %p83
      %p85 = scmp.ne.s32.totalorder %s73, %s74
      %p86 = scmp.eq.s32.totalorder %s22, 1
      %p87 = por %p85, %p86
      %p89 = scmp.ne.s32.totalorder %s74, %s88
      %p90 = scmp.eq.s32.totalorder %s22, 0
      %p91 = por %p89, %p90
      %s93 = sadd.s32 %s92, 1
      %p96 = scmp.eq.s32.totalorder %s16, 1
      %p97 = scmp.ne.s32.totalorder %s92, %s94
      %p98 = scmp.eq.s32.totalorder %s16, 0
      %p99 = por %p97, %p98
      %p100 = scmp.ne.s32.totalorder %s92, %s94
      %p101 = scmp.eq.s32.totalorder %s21, 1
      %p102 = por %p100, %p101
      %p103 = scmp.ne.s32.totalorder %s94, %s95
      %p104 = scmp.eq.s32.totalorder %s21, 0
      %p105 = por %p103, %p104
      %p106 = scmp.ne.s32.totalorder %s94, %s95
      %p107 = scmp.eq.s32.totalorder %s22, 1
      %p108 = por %p106, %p107
      %p110 = scmp.ne.s32.totalorder %s95, %s109
      %p111 = scmp.eq.s32.totalorder %s22, 0
      %p112 = por %p110, %p111
      %s114 = sadd.s32 %s113, 1
      %p117 = scmp.eq.s32.totalorder %s16, 1
      %p118 = scmp.ne.s32.totalorder %s113, %s115
      %p119 = scmp.eq.s32.totalorder %s16, 0
      %p120 = por %p118, %p119
      %p121 = scmp.ne.s32.totalorder %s113, %s115
      %p122 = scmp.eq.s32.totalorder %s21, 1
      %p123 = por %p121, %p122
      %p124 = scmp.ne.s32.totalorder %s115, %s116
      %p125 = scmp.eq.s32.totalorder %s21, 0
      %p126 = por %p124, %p125
      %p127 = scmp.ne.s32.totalorder %s115, %s116
      %p128 = scmp.eq.s32.totalorder %s22, 1
      %p129 = por %p127, %p128
      %p131 = scmp.ne.s32.totalorder %s116, %s130
      %p132 = scmp.eq.s32.totalorder %s22, 0
      %p133 = por %p131, %p132
      %s135 = sadd.s32 %s134, 1
      %p138 = scmp.eq.s32.totalorder %s16, 1
      %p139 = scmp.ne.s32.totalorder %s134, %s136
      %p140 = scmp.eq.s32.totalorder %s16, 0
      %p141 = por %p139, %p140
      %p142 = scmp.ne.s32.totalorder %s134, %s136
      %p143 = scmp.eq.s32.totalorder %s21, 1
      %p144 = por %p142, %p143
      %p145 = scmp.ne.s32.totalorder %s136, %s137
      %p146 = scmp.eq.s32.totalorder %s21, 0
      %p147 = por %p145, %p146
      %p148 = scmp.ne.s32.totalorder %s136, %s137
      %p149 = scmp.eq.s32.totalorder %s22, 1
      %p150 = por %p148, %p149
      %p152 = scmp.ne.s32.totalorder %s137, %s151
      %p153 = scmp.eq.s32.totalorder %s22, 0
      %p154 = por %p152, %p153
      %s156 = sadd.s32 %s155, 1
      %p159 = scmp.eq.s32.totalorder %s16, 1
      %p160 = scmp.ne.s32.totalorder %s155, %s157
      %p161 = scmp.eq.s32.totalorder %s16, 0
      %p162 = por %p160, %p161
      %p163 = scmp.ne.s32.totalorder %s155, %s157
      %p164 = scmp.eq.s32.totalorder %s21, 1
      %p165 = por %p163, %p164
      %p166 = scmp.ne.s32.totalorder %s157, %s158
      %p167 = scmp.eq.s32.totalorder %s21, 0
      %p168 = por %p166, %p167
      %p169 = scmp.ne.s32.totalorder %s157, %s158
      %p170 = scmp.eq.s32.totalorder %s22, 1
      %p171 = por %p169, %p170
      %p173 = scmp.ne.s32.totalorder %s158, %s172
      %p174 = scmp.eq.s32.totalorder %s22, 0
      %p175 = por %p173, %p174
      %s176 = ssub.s32 %s16, %s23
      %p177 = scmp.eq.s32.totalorder %s176, 0
      %s179 = sadd.s32 %s178, 1
      %s180 = scalar_select %p177, %s178, %s179
      %p183 = pneg %p177
      %p184 = scmp.eq.s32.totalorder %s16, 1
      %p185 = por %p183, %p184
      %p186 = scmp.ne.s32.totalorder %s178, %s181
      %p187 = scmp.eq.s32.totalorder %s16, 0
      %p188 = por %p186, %p187
      %p189 = scmp.ne.s32.totalorder %s178, %s181
      %p190 = scmp.eq.s32.totalorder %s21, 1
      %p191 = por %p189, %p190
      %p192 = scmp.ne.s32.totalorder %s181, %s182
      %p193 = scmp.eq.s32.totalorder %s21, 0
      %p194 = por %p192, %p193
      %p195 = scmp.ne.s32.totalorder %s181, %s182
      %p196 = scmp.eq.s32.totalorder %s22, 1
      %p197 = por %p195, %p196
      %p199 = scmp.ne.s32.totalorder %s182, %s198
      %p200 = scmp.eq.s32.totalorder %s22, 0
      %p201 = por %p199, %p200
      %p202 = scmp.le.s32.totalorder 1, %s16
      %p203 = scmp.lt.s32.totalorder %s16, 3
      %p204 = pnand %p202, %p203
      %p205 = pneg %p204
      // Predicated region
      $region9: #{multi_scale_downsampling.7} parent=5 // pred_check
        _
      $region10: #{multi_scale_downsampling.7} parent=5 // pred_check_branch
        %207 = sbr.rel (%p204) target = $region12
      $region11: #{multi_scale_downsampling.7} parent=5 // pred_region
        %s208 = ssub.s32 %s16, 1
        // Predicated region
        $region13: #{multi_scale_downsampling.7} parent=11 // pred_check
          %p209 = pneg %p63
        $region14: #{multi_scale_downsampling.7} parent=11 // pred_check_branch
          %211 = sbr.rel (%p209) target = $region16
        $region15: #{multi_scale_downsampling.7} parent=11 // pred_region
          _
        $region16: #{multi_scale_downsampling.7} parent=11 // pred_fallthru
          _
        // Predicated region
        $region17: #{multi_scale_downsampling.7} parent=11 // pred_check
          %p212 = pneg %p84
        $region18: #{multi_scale_downsampling.7} parent=11 // pred_check_branch
          %214 = sbr.rel (%p212) target = $region20
        $region19: #{multi_scale_downsampling.7} parent=11 // pred_region
          _
        $region20: #{multi_scale_downsampling.7} parent=11 // pred_fallthru
          _
        // Predicated region
        $region21: #{multi_scale_downsampling.7} parent=11 // pred_check
          %p215 = pneg %p105
        $region22: #{multi_scale_downsampling.7} parent=11 // pred_check_branch
          %217 = sbr.rel (%p215) target = $region24
        $region23: #{multi_scale_downsampling.7} parent=11 // pred_region
          _
        $region24: #{multi_scale_downsampling.7} parent=11 // pred_fallthru
          _
        // Predicated region
        $region25: #{multi_scale_downsampling.7} parent=11 // pred_check
          %p218 = pneg %p126
        $region26: #{multi_scale_downsampling.7} parent=11 // pred_check_branch
          %220 = sbr.rel (%p218) target = $region28
        $region27: #{multi_scale_downsampling.7} parent=11 // pred_region
          _
        $region28: #{multi_scale_downsampling.7} parent=11 // pred_fallthru
          _
        // Predicated region
        $region29: #{multi_scale_downsampling.7} parent=11 // pred_check
          %p221 = pneg %p147
        $region30: #{multi_scale_downsampling.7} parent=11 // pred_check_branch
          %223 = sbr.rel (%p221) target = $region32
        $region31: #{multi_scale_downsampling.7} parent=11 // pred_region
          _
        $region32: #{multi_scale_downsampling.7} parent=11 // pred_fallthru
          _
        // Predicated region
        $region33: #{multi_scale_downsampling.7} parent=11 // pred_check
          %p224 = pneg %p168
        $region34: #{multi_scale_downsampling.7} parent=11 // pred_check_branch
          %226 = sbr.rel (%p224) target = $region36
        $region35: #{multi_scale_downsampling.7} parent=11 // pred_region
          _
        $region36: #{multi_scale_downsampling.7} parent=11 // pred_fallthru
          _
      $region12: #{multi_scale_downsampling.7} parent=5 // pred_fallthru
        _
      %p227 = scmp.lt.s32.totalorder %s16, 2
      // Predicated region
      $region37: #{multi_scale_downsampling.7} parent=5 // pred_check
        %p228 = pneg %p227
      $region38: #{multi_scale_downsampling.7} parent=5 // pred_check_branch
        %230 = sbr.rel (%p228) target = $region40
      $region39: #{multi_scale_downsampling.7} parent=5 // pred_region
        // Predicated region
        $region41: #{multi_scale_downsampling.7} parent=39 // pred_check
          %p231 = pneg %p36
        $region42: #{multi_scale_downsampling.7} parent=39 // pred_check_branch
          %233 = sbr.rel (%p231) target = $region44
        $region43: #{multi_scale_downsampling.7} parent=39 // pred_region
          %p234 = scmp.lt.s32.totalorder %s16, 1
          %s235 = scalar_select %p234, %s16, 1
          %s236 = smul.addr %s235, 4
          %s237 = smul.addr %s236, 2
          %s238 = scalar_lea.vmem %s0, %s237
        $region44: #{multi_scale_downsampling.7} parent=39 // pred_fallthru
          _
      $region40: #{multi_scale_downsampling.7} parent=5 // pred_fallthru
        _
      %p239 = scmp.le.s32.totalorder 1, %s16
      %p240 = scmp.lt.s32.totalorder %s16, 3
      %p241 = pnand %p239, %p240
      %p242 = pneg %p241
      // Predicated region
      $region45: #{multi_scale_downsampling.7} parent=5 // pred_check
        _
      $region46: #{multi_scale_downsampling.7} parent=5 // pred_check_branch
        %244 = sbr.rel (%p241) target = $region48
      $region47: #{multi_scale_downsampling.7} parent=5 // pred_region
        %s245 = ssub.s32 %s16, 1
        %p246 = scmp.lt.s32.totalorder %s21, 1
        %s247 = scalar_select %p246, %s21, 1
        %s248 = smul.addr %s247, 4
        %s249 = smul.addr %s248, 2
        %s250 = scalar_lea.vmem %s0, %s249
        %p251 = pneg %p42
        %p252 = pneg %p39
        %p253 = pneg %p63
        %p254 = pneg %p60
        %p255 = pneg %p84
        %p256 = pneg %p81
        %p257 = pneg %p105
        %p258 = pneg %p102
        %p259 = pneg %p126
        %p260 = pneg %p123
        %p261 = pneg %p147
        %p262 = pneg %p144
        %p263 = pneg %p168
        %p264 = pneg %p165
        %p265 = pneg %p194
        %p266 = pneg %p191
        %s267 = sand.u32 %s181, 1
        %s268 = scalar_lea.sflag [#allocation4], %s267
        %s269 = sand.u32 %s181, 1
        %s270 = smul.addr %s269, 4
        %s271 = scalar_lea.vmem [#allocation3], %s270
        %p272 = scmp.lt.s32.totalorder %s21, 1
        %s273 = scalar_select %p272, %s21, 1
        %s274 = smul.addr %s273, 4
        %s275 = smul.addr %s274, 2
        %s276 = scalar_lea.vmem %s0, %s275
        %278 = vst [vmem:[#allocation2] sm:$0xff] 0.0
        %279 = vst [vmem:[#allocation2 + $0x8] sm:$0xf] 0.0
        %v280 = vld [vmem:[%s276] sm:$0x3]
        %282 = vrot.lane.b32.xlu0 %v280, 96
        %v283 = vpop.permute.xlu0 %282
        %vm285 = vcmask 1042176
        %286 = vst.msk [vmem:[#allocation2] sm:$0x3] %vm285, %v283
        %287 = vrot.lane.b32.xlu0 %v280, 32
        %v288 = vpop.permute.xlu0 %287
        %vm290 = vcmask 779776
        %291 = vst.msk [vmem:[#allocation2 + $0x1] sm:$0x3] %vm290, %v288
        %s292 = scalar_lea.vmem %s276, 2
        %v293 = vld [vmem:[%s292] sm:$0x3]
        %295 = vrot.lane.b32.xlu0 %v293, 32
        %v296 = vpop.permute.xlu0 %295
        %vm298 = vcmask 517376
        %299 = vst.msk [vmem:[#allocation2 + $0x3] sm:$0x3] %vm298, %v296
        %300 = vrot.lane.b32.xlu0 %v293, 96
        %v301 = vpop.permute.xlu0 %300
        %vm303 = vcmask 254976
        %304 = vst.msk [vmem:[#allocation2 + $0x4] sm:$0x3] %vm303, %v301
        %s305 = scalar_lea.vmem %s276, 4
        %v306 = vld [vmem:[%s305] sm:$0x3]
        %308 = vrot.lane.b32.xlu0 %v306, 96
        %v309 = vpop.permute.xlu0 %308
        %311 = vst.msk [vmem:[#allocation2 + $0x3] sm:$0x3] %vm285, %v309
        %312 = vrot.lane.b32.xlu0 %v306, 32
        %v313 = vpop.permute.xlu0 %312
        %315 = vst.msk [vmem:[#allocation2 + $0x4] sm:$0x3] %vm290, %v313
        %s316 = scalar_lea.vmem %s276, 6
        %v317 = vld [vmem:[%s316] sm:$0x3]
        %319 = vrot.lane.b32.xlu0 %v317, 32
        %v320 = vpop.permute.xlu0 %319
        %322 = vst.msk [vmem:[#allocation2 + $0x6] sm:$0x3] %vm298, %v320
        %323 = vrot.lane.b32.xlu0 %v317, 96
        %v324 = vpop.permute.xlu0 %323
        %326 = vst.msk [vmem:[#allocation2 + $0x7] sm:$0x3] %vm303, %v324
        %v327 = vld [vmem:[#allocation2] sm:$0x3f]
        %v328 = vld [vmem:[#allocation2 + $0x1] sm:$0x3f]
        %v329 = vld [vmem:[#allocation2 + $0x3] sm:$0x3f]
        %v330 = vld [vmem:[#allocation2 + $0x4] sm:$0x3f]
        %332 = vrot.lane.b32.xlu0 %v328, 64
        %v333 = vpop.permute.xlu0 %332
        %336 = vrot.lane.b32.xlu0 %v327, 32
        %v337 = vpop.permute.xlu0 %336
        %339 = vrot.lane.b32.xlu0 %v328, 96
        %v340 = vpop.permute.xlu0 %339
        %343 = vrot.lane.b32.xlu0 %v329, 64
        %v344 = vpop.permute.xlu0 %343
        %vm346 = vcmask 261120
        %vm347 = vcmask 523264
        %v348 = vsel %vm347, %v327, %v333
        %vm349 = vcmask 785408
        %v350 = vsel %vm349, %v348, %v337
        %v351 = vsel %vm346, %v337, %v340
        %v352 = vsel %vm347, %v351, %v344
        %v353 = vsel %vm349, %v352, %v344
        %v354 = vpack.c.bf16 %v350, %v350
        %v355 = vpack.c.bf16 %v353, %v353
        %v356 = vpack.c.bf16 %v330, %v330
        %v357 = vld [vmem:[%s1] sm:$0xf]
        %v358 = vld [vmem:[%s1 + $0x4] sm:$0xf]
        %v359 = vld [vmem:[%s1 + $0x8] sm:$0xf]
        %v360 = vld [vmem:[%s1 + $0xc] sm:$0xf]
        %v361 = vld [vmem:[%s1 + $0x10] sm:$0xf]
        %v362 = vld [vmem:[%s1 + $0x14] sm:$0xf]
        %v363 = vld [vmem:[%s1 + $0x18] sm:$0xf]
        %v364 = vld [vmem:[%s1 + $0x1c] sm:$0xf]
        %v365 = vld [vmem:[%s1 + $0x20] sm:$0xf]
        %v366 = vld [vmem:[%s1 + $0x24] sm:$0xf]
        %v367 = vld [vmem:[%s1 + $0x28] sm:$0xf]
        %v368 = vld [vmem:[%s1 + $0x2c] sm:$0xf]
        %v369 = vld [vmem:[%s1 + $0x30] sm:$0xf]
        %v370 = vld [vmem:[%s1 + $0x34] sm:$0xf]
        %v371 = vld [vmem:[%s1 + $0x38] sm:$0xf]
        %v372 = vld [vmem:[%s1 + $0x3c] sm:$0xf]
        %v373 = vld [vmem:[%s1 + $0x40] sm:$0xf]
        %v374 = vld [vmem:[%s1 + $0x44] sm:$0xf]
        %v375 = vld [vmem:[%s1 + $0x48] sm:$0xf]
        %v376 = vld [vmem:[%s1 + $0x4c] sm:$0xf]
        %v377 = vld [vmem:[%s1 + $0x50] sm:$0xf]
        %v378 = vld [vmem:[%s1 + $0x54] sm:$0xf]
        %v379 = vld [vmem:[%s1 + $0x58] sm:$0xf]
        %v380 = vld [vmem:[%s1 + $0x5c] sm:$0xf]
        %v381 = vld [vmem:[%s1 + $0x60] sm:$0xf]
        %v382 = vld [vmem:[%s1 + $0x64] sm:$0xf]
        %v383 = vld [vmem:[%s1 + $0x68] sm:$0xf]
        %v384 = vld [vmem:[%s1 + $0x6c] sm:$0xf]
        %v385 = vld [vmem:[%s1 + $0x70] sm:$0xf]
        %v386 = vld [vmem:[%s1 + $0x74] sm:$0xf]
        %v387 = vld [vmem:[%s1 + $0x78] sm:$0xf]
        %v388 = vld [vmem:[%s1 + $0x7c] sm:$0xf]
        %v389 = vld [vmem:[%s1 + $0x80] sm:$0xf]
        %v390 = vld [vmem:[%s1 + $0x84] sm:$0xf]
        %v391 = vld [vmem:[%s1 + $0x88] sm:$0xf]
        %v392 = vld [vmem:[%s1 + $0x8c] sm:$0xf]
        %v393 = vld [vmem:[%s2] sm:$0x1]
        %v395 = vperm.slane %v393, 0
        %v433 = vunpack.c.l.b16 %v357
        %v434 = vunpack.c.l.b16 %v358
        %v435 = vunpack.c.l.b16 %v359
        %v436 = vunpack.c.l.b16 %v360
        %v437 = vunpack.c.l.b16 %v361
        %v438 = vunpack.c.l.b16 %v362
        %v439 = vunpack.c.l.b16 %v363
        %v440 = vunpack.c.l.b16 %v364
        %v441 = vunpack.c.l.b16 %v365
        %v442 = vunpack.c.l.b16 %v366
        %v443 = vunpack.c.l.b16 %v367
        %v444 = vunpack.c.l.b16 %v368
        %v445 = vunpack.c.l.b16 %v369
        %v446 = vunpack.c.l.b16 %v370
        %v447 = vunpack.c.l.b16 %v371
        %v448 = vunpack.c.l.b16 %v372
        %v449 = vunpack.c.l.b16 %v373
        %v450 = vunpack.c.l.b16 %v374
        %v451 = vunpack.c.l.b16 %v375
        %v452 = vunpack.c.l.b16 %v376
        %v453 = vunpack.c.l.b16 %v377
        %v454 = vunpack.c.l.b16 %v378
        %v455 = vunpack.c.l.b16 %v379
        %v456 = vunpack.c.l.b16 %v380
        %v457 = vunpack.c.l.b16 %v381
        %v458 = vunpack.c.l.b16 %v382
        %v459 = vunpack.c.l.b16 %v383
        %v460 = vunpack.c.l.b16 %v384
        %v461 = vunpack.c.l.b16 %v385
        %v462 = vunpack.c.l.b16 %v386
        %v463 = vunpack.c.l.b16 %v387
        %v464 = vunpack.c.l.b16 %v388
        %v465 = vunpack.c.l.b16 %v389
        %v466 = vunpack.c.l.b16 %v390
        %v467 = vunpack.c.l.b16 %v391
        %v468 = vunpack.c.l.b16 %v392
        %v469 = vpack.c.b16 %v434, %v433
        %v470 = vpack.c.b16 %v436, %v435
        %v471 = vpack.c.b16 %v438, %v437
        %v472 = vpack.c.b16 %v440, %v439
        %v473 = vpack.c.b16 %v442, %v441
        %v474 = vpack.c.b16 %v444, %v443
        %v475 = vpack.c.b16 %v446, %v445
        %v476 = vpack.c.b16 %v448, %v447
        %v477 = vpack.c.b16 %v450, %v449
        %v478 = vpack.c.b16 %v452, %v451
        %v479 = vpack.c.b16 %v454, %v453
        %v480 = vpack.c.b16 %v456, %v455
        %v481 = vpack.c.b16 %v458, %v457
        %v482 = vpack.c.b16 %v460, %v459
        %v483 = vpack.c.b16 %v462, %v461
        %v484 = vpack.c.b16 %v464, %v463
        %v485 = vpack.c.b16 %v466, %v465
        %v486 = vpack.c.b16 %v468, %v467
        %v506 = vsel %vm346, %v356, 0
        %508 = vmatpush.bf16.msra.mxu0 %v476
        %509 = vmatpush.bf16.msra.mxu0 %v475
        %510 = vmatpush.bf16.msra.mxu0 %v474
        %511 = vmatpush.bf16.msra.mxu0 %v473
        %512 = vmatpush.bf16.msra.mxu0 %v472
        %513 = vmatpush.bf16.msra.mxu0 %v471
        %514 = vmatpush.bf16.msra.mxu0 %v470
        %515 = vmatpush.bf16.msra.mxu0 %v469
        %516 = vmatmul.bf16.gmra.mxu0 %v354
        %v517 = vpop.f32.mrf.mxu0
        %v518 = vadd.f32 %v395, %v517
        %v519 = vpop.f32.mrf.mxu0
        %520 = vdwg.mxu0
        %521 = vmatpush.bf16.msra.mxu0 %v484
        %522 = vmatpush.bf16.msra.mxu0 %v483
        %523 = vmatpush.bf16.msra.mxu0 %v482
        %524 = vmatpush.bf16.msra.mxu0 %v481
        %525 = vmatpush.bf16.msra.mxu0 %v480
        %526 = vmatpush.bf16.msra.mxu0 %v479
        %527 = vmatpush.bf16.msra.mxu0 %v478
        %528 = vmatpush.bf16.msra.mxu0 %v477
        %529 = vmatmul.bf16.gmra.mxu0 %v355
        %v530 = vpop.f32.mrf.mxu0
        %v531 = vadd.f32 %v518, %v530
        %v532 = vpop.f32.mrf.mxu0
        %533 = vdwg.mxu0
        %534 = vmatpush.bf16.msra.mxu0 0
        %535 = vmatpush.bf16.msra.mxu0 0
        %536 = vmatpush.bf16.msra.mxu0 0
        %537 = vmatpush.bf16.msra.mxu0 0
        %538 = vmatpush.bf16.msra.mxu0 0
        %539 = vmatpush.bf16.msra.mxu0 0
        %540 = vmatpush.bf16.msra.mxu0 %v486
        %541 = vmatpush.bf16.msra.mxu0 %v485
        %542 = vmatmul.bf16.gmra.mxu0 %v506
        %v543 = vpop.f32.mrf.mxu0
        %v544 = vadd.f32 %v531, %v543
        %v545 = vpop.f32.mrf.mxu0
        %546 = vdwg.mxu0
        %v547 = vmax.f32 %v544, 0.0
        %v548 = vld [vmem:[%s6] sm:$0x1]
        %vm549 = vcmask 48128
        %v551 = vsel %vm549, %v548, 0
        %vm553 = vcmask 1045504
        %v555 = vsel %vm553, %v547, 0
        %557 = vmatpush.msra.mxu0 0.0
        %558 = vmatpush.msra.mxu0 0.0
        %559 = vmatpush.msra.mxu0 0.0
        %560 = vmatpush.msra.mxu0 0.0
        %561 = vmatpush.msra.mxu0 0.0
        %562 = vmatpush.msra.mxu0 0.0
        %563 = vmatpush.msra.mxu0 0.0
        %564 = vmatpush.msra.mxu0 0.0
        %565 = vmatpush.msra.mxu0 0.0
        %566 = vmatpush.msra.mxu0 0.0
        %567 = vmatpush.msra.mxu0 0.0
        %568 = vmatpush.msra.mxu0 0.0
        %569 = vmatpush.msra.mxu0 0.0
        %570 = vmatpush.msra.mxu0 0.0
        %571 = vmatpush.msra.mxu0 0.0
        %572 = vmatpush.msra.mxu0 %v555
        %573 = vmatmul.f32.gmra.mxu0 %v551
        %v574 = vpop.f32.mrf.mxu0
        %v575 = vadd.f32 0.0, %v574
        %576 = vdwg.mxu0
        %v577 = vmul.f32 %v547, %v547
        %v579 = vsel %vm553, %v577, 0
        %581 = vmatpush.msra.mxu0 0.0
        %582 = vmatpush.msra.mxu0 0.0
        %583 = vmatpush.msra.mxu0 0.0
        %584 = vmatpush.msra.mxu0 0.0
        %585 = vmatpush.msra.mxu0 0.0
        %586 = vmatpush.msra.mxu0 0.0
        %587 = vmatpush.msra.mxu0 0.0
        %588 = vmatpush.msra.mxu0 0.0
        %589 = vmatpush.msra.mxu0 0.0
        %590 = vmatpush.msra.mxu0 0.0
        %591 = vmatpush.msra.mxu0 0.0
        %592 = vmatpush.msra.mxu0 0.0
        %593 = vmatpush.msra.mxu0 0.0
        %594 = vmatpush.msra.mxu0 0.0
        %595 = vmatpush.msra.mxu0 0.0
        %596 = vmatpush.msra.mxu0 %v579
        %597 = vmatmul.f32.gmra.mxu0 %v551
        %v598 = vpop.f32.mrf.mxu0
        %v599 = vadd.f32 0.0, %v598
        %600 = vdwg.mxu0
        %v601 = vld [vmem:[%s5] sm:$0xff]
        %v602 = vld [vmem:[%s5 + $0x8] sm:$0xff]
        %v603 = vld [vmem:[%s5 + $0x10] sm:$0xff]
        %v604 = vld [vmem:[%s5 + $0x18] sm:$0xff]
        %v606 = vsel %vm346, %v575, 0
        %608 = vmatpush.msra.mxu0 0.0
        %609 = vmatpush.msra.mxu0 0.0
        %610 = vmatpush.msra.mxu0 0.0
        %611 = vmatpush.msra.mxu0 0.0
        %612 = vmatpush.msra.mxu0 0.0
        %613 = vmatpush.msra.mxu0 0.0
        %614 = vmatpush.msra.mxu0 0.0
        %615 = vmatpush.msra.mxu0 0.0
        %616 = vmatpush.msra.mxu0 0.0
        %617 = vmatpush.msra.mxu0 0.0
        %618 = vmatpush.msra.mxu0 0.0
        %619 = vmatpush.msra.mxu0 0.0
        %620 = vmatpush.msra.mxu0 %v604
        %621 = vmatpush.msra.mxu0 %v603
        %622 = vmatpush.msra.mxu0 %v602
        %623 = vmatpush.msra.mxu0 %v601
        %624 = vmatmul.f32.gmra.mxu0 %v606
        %v625 = vpop.f32.mrf.mxu0
        %v626 = vadd.f32 0.0, %v625
        %627 = vdwg.mxu0
        %v628 = vmul.f32 %v626, 0.25
        %v630 = vsel %vm346, %v599, 0
        %632 = vmatpush.msra.mxu0 0.0
        %633 = vmatpush.msra.mxu0 0.0
        %634 = vmatpush.msra.mxu0 0.0
        %635 = vmatpush.msra.mxu0 0.0
        %636 = vmatpush.msra.mxu0 0.0
        %637 = vmatpush.msra.mxu0 0.0
        %638 = vmatpush.msra.mxu0 0.0
        %639 = vmatpush.msra.mxu0 0.0
        %640 = vmatpush.msra.mxu0 0.0
        %641 = vmatpush.msra.mxu0 0.0
        %642 = vmatpush.msra.mxu0 0.0
        %643 = vmatpush.msra.mxu0 0.0
        %644 = vmatpush.msra.mxu0 %v604
        %645 = vmatpush.msra.mxu0 %v603
        %646 = vmatpush.msra.mxu0 %v602
        %647 = vmatpush.msra.mxu0 %v601
        %648 = vmatmul.f32.gmra.mxu0 %v630
        %v649 = vpop.f32.mrf.mxu0
        %v650 = vadd.f32 0.0, %v649
        %651 = vdwg.mxu0
        %v652 = vmul.f32 %v650, 0.25
        %v653 = vmul.f32 %v628, %v628
        %v654 = vsub.f32 %v652, %v653
        %v655 = vmax.f32 %v654, 0.0
        %v656 = vadd.f32 %v655, 1e-05
        %v657 = vrsqrt.pop %v656
        %v658 = vmul.f32 %v657, %v656
        %v659 = vmul.f32 %v658, %v657
        %v660 = vmul.f32 0.5, %v659
        %v661 = vsub.f32 1.5, %v660
        %v662 = vmul.f32 %v657, %v661
        %vm663 = vweird.f32 %v656
        %vm664 = vweird.f32 %v657
        %vm665 = vmor %vm663, %vm664
        %v666 = vsel %vm665, %v657, %v662
        %v667 = vld [vmem:[%s3] sm:$0x1]
        %v668 = vmul.f32 %v667, %v666
        %v669 = vld [vmem:[%s4] sm:$0x1]
        %v670 = vmul.f32 %v628, %v668
        %v671 = vsub.f32 %v669, %v670
        %v673 = vperm.slane %v668, 0
        %v675 = vmul.f32 %v547, %v673
        %v677 = vperm.slane %v671, 0
        %v679 = vadd.f32 %v675, %v677
        %680 = vst.msk [vmem:[%s271] sm:$0x3] %vm303, %v679
        %s681 = scalar_lea.vmem %s271, 2 [#allocation3]
        %vm682 = vcmask 258051
        %683 = vst.msk [vmem:[%s681 - $0x3] sm:$0x18] %vm682, %v679
        %s684 = sand.u32 %s181, 1
        %s685 = scalar_lea.sflag [#allocation4], %s684
        %s686 = sand.u32 %s181, 1
        %s687 = smul.addr %s686, 4
        %s688 = scalar_lea.vmem [#allocation3], %s687
        // Predicated region
        $region49: #{multi_scale_downsampling.7} parent=47 // pred_check
          %p689 = pneg %p191
        $region50: #{multi_scale_downsampling.7} parent=47 // pred_check_branch
          %691 = sbr.rel (%p689) target = $region52
        $region51: #{multi_scale_downsampling.7} parent=47 // pred_region
          %693 = vsyncadd %s685, 0
          %s694 = smul.addr %s21, 2
          %s695 = smul.addr %s694, 2
          %s696 = scalar_lea.hbm %s7, %s695
          %s697 = sshll.u32 %s688, 4
          %s698 = int_to_ptr.vmem [resolvable:$true] %s697
          %s699 = sshll.u32 %s696, 4
          %s700 = int_to_ptr.hbm [resolvable:$true] %s699
          %705 = dma.vmem_to_hbm [thread:$0]  %s698, 64, %s700, %s685, 32, 32, 2
        $region52: #{multi_scale_downsampling.7} parent=47 // pred_fallthru
          _
      $region48: #{multi_scale_downsampling.7} parent=5 // pred_fallthru
        _
      %p706 = scmp.le.s32.totalorder 2, %s16
      // Predicated region
      $region53: #{multi_scale_downsampling.7} parent=5 // pred_check
        %p707 = pneg %p706
      $region54: #{multi_scale_downsampling.7} parent=5 // pred_check_branch
        %709 = sbr.rel (%p707) target = $region56
      $region55: #{multi_scale_downsampling.7} parent=5 // pred_region
        %s710 = ssub.s32 %s16, 2
        // Predicated region
        $region57: #{multi_scale_downsampling.7} parent=55 // pred_check
          %p711 = pneg %p197
        $region58: #{multi_scale_downsampling.7} parent=55 // pred_check_branch
          %713 = sbr.rel (%p711) target = $region60
        $region59: #{multi_scale_downsampling.7} parent=55 // pred_region
          %s714 = sand.u32 %s182, 1
          %s715 = scalar_lea.sflag [#allocation4], %s714
          %s716 = sand.u32 %s182, 1
          %s717 = smul.addr %s716, 4
          %s718 = scalar_lea.vmem [#allocation3], %s717
          %720 = dma.done %s715, 64
        $region60: #{multi_scale_downsampling.7} parent=55 // pred_fallthru
          _
      $region56: #{multi_scale_downsampling.7} parent=5 // pred_fallthru
        _
    $region6: #{multi_scale_downsampling.7} parent=1 // loop_footer
      %s20 = sadd.s32 1, %s16
    $region7: #{multi_scale_downsampling.7} parent=1 // loop_footer_branch
      %15 = sbr.rel target = $region3
    $region8: #{multi_scale_downsampling.7} parent=1 // loop_exit
      _
    %721 = vsyncpa [#allocation4], 1
    %s722 = scalar_lea.sflag [#allocation4], 1
    %723 = vsyncpa %s722, 1

// kernel: multi_scale_downsampling.4
$region0: #{multi_scale_downsampling.4}
  #allocation0 [shape = 'u32[]', space=smem, size = 0x4, offset = 0x4, fixed_abs, tag = 'smem constant byte address 0x4 - core index']
  #allocation1 [shape = 'u32[72,128]{1,0:T(1,128)}', space=vmem, size = 0x9000, scoped, tag = 'internal scratch']
  #allocation2 [shape = 'f32[342,4]{1,0:T(8,128)}', space=vmem, size = 0x2b000, scoped, tag = 'scratch operand']
  %s0 = inlined_call_operand.vmem [shape: f32[2,16,16,4], index: 0, kind: input, shape index: {}]
  %s1 = inlined_call_operand.vmem [shape: bf16[36,32], index: 1, kind: input, shape index: {}]
  %s2 = inlined_call_operand.vmem [shape: f32[1,32], index: 2, kind: input, shape index: {}]
  %s3 = inlined_call_operand.vmem [shape: f32[1,32], index: 3, kind: input, shape index: {}]
  %s4 = inlined_call_operand.vmem [shape: f32[1,32], index: 4, kind: input, shape index: {}]
  %s5 = inlined_call_operand.vmem [shape: f32[32,32], index: 5, kind: input, shape index: {}]
  %s6 = inlined_call_operand.vmem [shape: f32[1,288], index: 6, kind: input, shape index: {}]
  %s7 = inlined_call_operand.vmem [shape: f32[2,16,16,32], index: 7, kind: output, shape index: {}]
  %s8 = sld [smem:[#allocation0]]
  $region61: #{multi_scale_downsampling.4} parent=0
    _
  %s10 = ssub.s32 1, %s8
  %s11 = scalar_select 0, %s10, %s8
  loop: start=0, step=1, limit=4
  $region2: #{multi_scale_downsampling.4} parent=0 // loop_pre_header
    _
  $region3: #{multi_scale_downsampling.4} parent=0 // loop_header
    %s13 = sphi 0, %s17
    %p14 = scmp.ge.s32.totalorder %s13, 4
    %s23 = sphi 0, %s25
    %s26 = sphi 0, %s23
    %s27 = sphi 0, %s26
    %s43 = sphi 0, %s27
    %s47 = sphi 0, %s47
    %s49 = sphi 0, %s47
    %s50 = sphi 0, %s49
    %s64 = sphi 0, %s50
    %s68 = sphi 0, %s68
    %s70 = sphi 0, %s68
    %s71 = sphi 0, %s70
    %s85 = sphi 0, %s71
    %s89 = sphi 0, %s89
    %s91 = sphi 0, %s89
    %s92 = sphi 0, %s91
    %s106 = sphi 0, %s92
    %s110 = sphi 0, %s110
    %s112 = sphi 0, %s110
    %s113 = sphi 0, %s112
    %s127 = sphi 0, %s113
    %s131 = sphi 0, %s131
    %s133 = sphi 0, %s131
    %s134 = sphi 0, %s133
    %s148 = sphi 0, %s134
    %s152 = sphi 0, %s152
    %s154 = sphi 0, %s152
    %s155 = sphi 0, %s154
    %s169 = sphi 0, %s155
    %s175 = sphi 0, %s177
    %s178 = sphi 0, %s175
    %s179 = sphi 0, %s178
    %s195 = sphi 0, %s179
  $region4: #{multi_scale_downsampling.4} parent=0 // loop_header_branch
    %16 = sbr.rel (%p14) target = $region8
  $region5: #{multi_scale_downsampling.4} parent=0 // loop_body
    %s18 = ssub.s32 %s13, 1
    %s19 = ssub.s32 %s13, 2
    %s20 = sadd.s32 %s13, 1
    %s21 = ssub.s32 %s13, %s20
    %p22 = scmp.eq.s32.totalorder %s21, 0
    %s24 = sadd.s32 %s23, 1
    %s25 = scalar_select %p22, %s23, %s24
    %p28 = pneg %p22
    %p29 = scmp.eq.s32.totalorder %s13, 1
    %p30 = por %p28, %p29
    %p31 = scmp.ne.s32.totalorder %s23, %s26
    %p32 = scmp.eq.s32.totalorder %s13, 0
    %p33 = por %p31, %p32
    %p34 = scmp.ne.s32.totalorder %s23, %s26
    %p35 = scmp.eq.s32.totalorder %s18, 1
    %p36 = por %p34, %p35
    %p37 = scmp.ne.s32.totalorder %s26, %s27
    %p38 = scmp.eq.s32.totalorder %s18, 0
    %p39 = por %p37, %p38
    %p40 = scmp.ne.s32.totalorder %s26, %s27
    %p41 = scmp.eq.s32.totalorder %s19, 1
    %p42 = por %p40, %p41
    %p44 = scmp.ne.s32.totalorder %s27, %s43
    %p45 = scmp.eq.s32.totalorder %s19, 0
    %p46 = por %p44, %p45
    %s48 = sadd.s32 %s47, 1
    %p51 = scmp.eq.s32.totalorder %s13, 1
    %p52 = scmp.ne.s32.totalorder %s47, %s49
    %p53 = scmp.eq.s32.totalorder %s13, 0
    %p54 = por %p52, %p53
    %p55 = scmp.ne.s32.totalorder %s47, %s49
    %p56 = scmp.eq.s32.totalorder %s18, 1
    %p57 = por %p55, %p56
    %p58 = scmp.ne.s32.totalorder %s49, %s50
    %p59 = scmp.eq.s32.totalorder %s18, 0
    %p60 = por %p58, %p59
    %p61 = scmp.ne.s32.totalorder %s49, %s50
    %p62 = scmp.eq.s32.totalorder %s19, 1
    %p63 = por %p61, %p62
    %p65 = scmp.ne.s32.totalorder %s50, %s64
    %p66 = scmp.eq.s32.totalorder %s19, 0
    %p67 = por %p65, %p66
    %s69 = sadd.s32 %s68, 1
    %p72 = scmp.eq.s32.totalorder %s13, 1
    %p73 = scmp.ne.s32.totalorder %s68, %s70
    %p74 = scmp.eq.s32.totalorder %s13, 0
    %p75 = por %p73, %p74
    %p76 = scmp.ne.s32.totalorder %s68, %s70
    %p77 = scmp.eq.s32.totalorder %s18, 1
    %p78 = por %p76, %p77
    %p79 = scmp.ne.s32.totalorder %s70, %s71
    %p80 = scmp.eq.s32.totalorder %s18, 0
    %p81 = por %p79, %p80
    %p82 = scmp.ne.s32.totalorder %s70, %s71
    %p83 = scmp.eq.s32.totalorder %s19, 1
    %p84 = por %p82, %p83
    %p86 = scmp.ne.s32.totalorder %s71, %s85
    %p87 = scmp.eq.s32.totalorder %s19, 0
    %p88 = por %p86, %p87
    %s90 = sadd.s32 %s89, 1
    %p93 = scmp.eq.s32.totalorder %s13, 1
    %p94 = scmp.ne.s32.totalorder %s89, %s91
    %p95 = scmp.eq.s32.totalorder %s13, 0
    %p96 = por %p94, %p95
    %p97 = scmp.ne.s32.totalorder %s89, %s91
    %p98 = scmp.eq.s32.totalorder %s18, 1
    %p99 = por %p97, %p98
    %p100 = scmp.ne.s32.totalorder %s91, %s92
    %p101 = scmp.eq.s32.totalorder %s18, 0
    %p102 = por %p100, %p101
    %p103 = scmp.ne.s32.totalorder %s91, %s92
    %p104 = scmp.eq.s32.totalorder %s19, 1
    %p105 = por %p103, %p104
    %p107 = scmp.ne.s32.totalorder %s92, %s106
    %p108 = scmp.eq.s32.totalorder %s19, 0
    %p109 = por %p107, %p108
    %s111 = sadd.s32 %s110, 1
    %p114 = scmp.eq.s32.totalorder %s13, 1
    %p115 = scmp.ne.s32.totalorder %s110, %s112
    %p116 = scmp.eq.s32.totalorder %s13, 0
    %p117 = por %p115, %p116
    %p118 = scmp.ne.s32.totalorder %s110, %s112
    %p119 = scmp.eq.s32.totalorder %s18, 1
    %p120 = por %p118, %p119
    %p121 = scmp.ne.s32.totalorder %s112, %s113
    %p122 = scmp.eq.s32.totalorder %s18, 0
    %p123 = por %p121, %p122
    %p124 = scmp.ne.s32.totalorder %s112, %s113
    %p125 = scmp.eq.s32.totalorder %s19, 1
    %p126 = por %p124, %p125
    %p128 = scmp.ne.s32.totalorder %s113, %s127
    %p129 = scmp.eq.s32.totalorder %s19, 0
    %p130 = por %p128, %p129
    %s132 = sadd.s32 %s131, 1
    %p135 = scmp.eq.s32.totalorder %s13, 1
    %p136 = scmp.ne.s32.totalorder %s131, %s133
    %p137 = scmp.eq.s32.totalorder %s13, 0
    %p138 = por %p136, %p137
    %p139 = scmp.ne.s32.totalorder %s131, %s133
    %p140 = scmp.eq.s32.totalorder %s18, 1
    %p141 = por %p139, %p140
    %p142 = scmp.ne.s32.totalorder %s133, %s134
    %p143 = scmp.eq.s32.totalorder %s18, 0
    %p144 = por %p142, %p143
    %p145 = scmp.ne.s32.totalorder %s133, %s134
    %p146 = scmp.eq.s32.totalorder %s19, 1
    %p147 = por %p145, %p146
    %p149 = scmp.ne.s32.totalorder %s134, %s148
    %p150 = scmp.eq.s32.totalorder %s19, 0
    %p151 = por %p149, %p150
    %s153 = sadd.s32 %s152, 1
    %p156 = scmp.eq.s32.totalorder %s13, 1
    %p157 = scmp.ne.s32.totalorder %s152, %s154
    %p158 = scmp.eq.s32.totalorder %s13, 0
    %p159 = por %p157, %p158
    %p160 = scmp.ne.s32.totalorder %s152, %s154
    %p161 = scmp.eq.s32.totalorder %s18, 1
    %p162 = por %p160, %p161
    %p163 = scmp.ne.s32.totalorder %s154, %s155
    %p164 = scmp.eq.s32.totalorder %s18, 0
    %p165 = por %p163, %p164
    %p166 = scmp.ne.s32.totalorder %s154, %s155
    %p167 = scmp.eq.s32.totalorder %s19, 1
    %p168 = por %p166, %p167
    %p170 = scmp.ne.s32.totalorder %s155, %s169
    %p171 = scmp.eq.s32.totalorder %s19, 0
    %p172 = por %p170, %p171
    %s173 = ssub.s32 %s13, %s20
    %p174 = scmp.eq.s32.totalorder %s173, 0
    %s176 = sadd.s32 %s175, 1
    %s177 = scalar_select %p174, %s175, %s176
    %p180 = pneg %p174
    %p181 = scmp.eq.s32.totalorder %s13, 1
    %p182 = por %p180, %p181
    %p183 = scmp.ne.s32.totalorder %s175, %s178
    %p184 = scmp.eq.s32.totalorder %s13, 0
    %p185 = por %p183, %p184
    %p186 = scmp.ne.s32.totalorder %s175, %s178
    %p187 = scmp.eq.s32.totalorder %s18, 1
    %p188 = por %p186, %p187
    %p189 = scmp.ne.s32.totalorder %s178, %s179
    %p190 = scmp.eq.s32.totalorder %s18, 0
    %p191 = por %p189, %p190
    %p192 = scmp.ne.s32.totalorder %s178, %s179
    %p193 = scmp.eq.s32.totalorder %s19, 1
    %p194 = por %p192, %p193
    %p196 = scmp.ne.s32.totalorder %s179, %s195
    %p197 = scmp.eq.s32.totalorder %s19, 0
    %p198 = por %p196, %p197
    %p199 = scmp.le.s32.totalorder 1, %s13
    %p200 = scmp.lt.s32.totalorder %s13, 3
    %p201 = pnand %p199, %p200
    %p202 = pneg %p201
    // Predicated region
    $region9: #{multi_scale_downsampling.4} parent=5 // pred_check
      _
    $region10: #{multi_scale_downsampling.4} parent=5 // pred_check_branch
      %204 = sbr.rel (%p201) target = $region12
    $region11: #{multi_scale_downsampling.4} parent=5 // pred_region
      %s205 = ssub.s32 %s13, 1
      // Predicated region
      $region13: #{multi_scale_downsampling.4} parent=11 // pred_check
        %p206 = pneg %p60
      $region14: #{multi_scale_downsampling.4} parent=11 // pred_check_branch
        %208 = sbr.rel (%p206) target = $region16
      $region15: #{multi_scale_downsampling.4} parent=11 // pred_region
        _
      $region16: #{multi_scale_downsampling.4} parent=11 // pred_fallthru
        _
      // Predicated region
      $region17: #{multi_scale_downsampling.4} parent=11 // pred_check
        %p209 = pneg %p81
      $region18: #{multi_scale_downsampling.4} parent=11 // pred_check_branch
        %211 = sbr.rel (%p209) target = $region20
      $region19: #{multi_scale_downsampling.4} parent=11 // pred_region
        _
      $region20: #{multi_scale_downsampling.4} parent=11 // pred_fallthru
        _
      // Predicated region
      $region21: #{multi_scale_downsampling.4} parent=11 // pred_check
        %p212 = pneg %p102
      $region22: #{multi_scale_downsampling.4} parent=11 // pred_check_branch
        %214 = sbr.rel (%p212) target = $region24
      $region23: #{multi_scale_downsampling.4} parent=11 // pred_region
        _
      $region24: #{multi_scale_downsampling.4} parent=11 // pred_fallthru
        _
      // Predicated region
      $region25: #{multi_scale_downsampling.4} parent=11 // pred_check
        %p215 = pneg %p123
      $region26: #{multi_scale_downsampling.4} parent=11 // pred_check_branch
        %217 = sbr.rel (%p215) target = $region28
      $region27: #{multi_scale_downsampling.4} parent=11 // pred_region
        _
      $region28: #{multi_scale_downsampling.4} parent=11 // pred_fallthru
        _
      // Predicated region
      $region29: #{multi_scale_downsampling.4} parent=11 // pred_check
        %p218 = pneg %p144
      $region30: #{multi_scale_downsampling.4} parent=11 // pred_check_branch
        %220 = sbr.rel (%p218) target = $region32
      $region31: #{multi_scale_downsampling.4} parent=11 // pred_region
        _
      $region32: #{multi_scale_downsampling.4} parent=11 // pred_fallthru
        _
      // Predicated region
      $region33: #{multi_scale_downsampling.4} parent=11 // pred_check
        %p221 = pneg %p165
      $region34: #{multi_scale_downsampling.4} parent=11 // pred_check_branch
        %223 = sbr.rel (%p221) target = $region36
      $region35: #{multi_scale_downsampling.4} parent=11 // pred_region
        _
      $region36: #{multi_scale_downsampling.4} parent=11 // pred_fallthru
        _
    $region12: #{multi_scale_downsampling.4} parent=5 // pred_fallthru
      _
    %p224 = scmp.lt.s32.totalorder %s13, 2
    // Predicated region
    $region37: #{multi_scale_downsampling.4} parent=5 // pred_check
      %p225 = pneg %p224
    $region38: #{multi_scale_downsampling.4} parent=5 // pred_check_branch
      %227 = sbr.rel (%p225) target = $region40
    $region39: #{multi_scale_downsampling.4} parent=5 // pred_region
      // Predicated region
      $region41: #{multi_scale_downsampling.4} parent=39 // pred_check
        %p228 = pneg %p33
      $region42: #{multi_scale_downsampling.4} parent=39 // pred_check_branch
        %230 = sbr.rel (%p228) target = $region44
      $region43: #{multi_scale_downsampling.4} parent=39 // pred_region
        %p231 = scmp.lt.s32.totalorder %s13, 1
        %s232 = scalar_select %p231, %s13, 1
        %s233 = smul.addr %s232, 32
        %s234 = smul.addr %s233, 8
        %s235 = scalar_lea.vmem %s0, %s234
      $region44: #{multi_scale_downsampling.4} parent=39 // pred_fallthru
        _
    $region40: #{multi_scale_downsampling.4} parent=5 // pred_fallthru
      _
    %p236 = scmp.le.s32.totalorder 1, %s13
    %p237 = scmp.lt.s32.totalorder %s13, 3
    %p238 = pnand %p236, %p237
    %p239 = pneg %p238
    // Predicated region
    $region45: #{multi_scale_downsampling.4} parent=5 // pred_check
      _
    $region46: #{multi_scale_downsampling.4} parent=5 // pred_check_branch
      %241 = sbr.rel (%p238) target = $region48
    $region47: #{multi_scale_downsampling.4} parent=5 // pred_region
      %s242 = ssub.s32 %s13, 1
      %p243 = scmp.lt.s32.totalorder %s18, 1
      %s244 = scalar_select %p243, %s18, 1
      %s245 = smul.addr %s244, 32
      %s246 = smul.addr %s245, 8
      %s247 = scalar_lea.vmem %s0, %s246
      %p248 = pneg %p39
      %p249 = pneg %p36
      %p250 = pneg %p60
      %p251 = pneg %p57
      %p252 = pneg %p81
      %p253 = pneg %p78
      %p254 = pneg %p102
      %p255 = pneg %p99
      %p256 = pneg %p123
      %p257 = pneg %p120
      %p258 = pneg %p144
      %p259 = pneg %p141
      %p260 = pneg %p165
      %p261 = pneg %p162
      %p262 = pneg %p191
      %p263 = pneg %p188
      %p264 = scmp.lt.s32.totalorder %s18, 1
      %s265 = scalar_select %p264, %s18, 1
      %s266 = smul.addr %s265, 32
      %s267 = smul.addr %s266, 8
      %s268 = scalar_lea.vmem %s7, %s267
      %p269 = scmp.lt.s32.totalorder %s18, 1
      %s270 = scalar_select %p269, %s18, 1
      %s271 = smul.addr %s270, 32
      %s272 = smul.addr %s271, 8
      %s273 = scalar_lea.vmem %s0, %s272
      %p274 = scmp.lt.s32.totalorder %s18, 1
      %s275 = scalar_select %p274, %s18, 1
      %s276 = smul.addr %s275, 32
      %s277 = smul.addr %s276, 8
      %s278 = scalar_lea.vmem %s7, %s277
      %vm280 = vcmask 31744
      %281 = vst.msk [vmem:[#allocation2] sm:$0xff] %vm280, 0.0
      %282 = vst.msk [vmem:[#allocation2 + $0x8] sm:$0xff] %vm280, 0.0
      %283 = vst.msk [vmem:[#allocation2 + $0x10] sm:$0xff] %vm280, 0.0
      %284 = vst.msk [vmem:[#allocation2 + $0x18] sm:$0xff] %vm280, 0.0
      %285 = vst.msk [vmem:[#allocation2 + $0x20] sm:$0xff] %vm280, 0.0
      %286 = vst.msk [vmem:[#allocation2 + $0x28] sm:$0xff] %vm280, 0.0
      %287 = vst.msk [vmem:[#allocation2 + $0x30] sm:$0xff] %vm280, 0.0
      %288 = vst.msk [vmem:[#allocation2 + $0x38] sm:$0xff] %vm280, 0.0
      %289 = vst.msk [vmem:[#allocation2 + $0x40] sm:$0xff] %vm280, 0.0
      %290 = vst.msk [vmem:[#allocation2 + $0x48] sm:$0xff] %vm280, 0.0
      %291 = vst.msk [vmem:[#allocation2 + $0x50] sm:$0xff] %vm280, 0.0
      %292 = vst.msk [vmem:[#allocation2 + $0x58] sm:$0xff] %vm280, 0.0
      %293 = vst.msk [vmem:[#allocation2 + $0x60] sm:$0xff] %vm280, 0.0
      %294 = vst.msk [vmem:[#allocation2 + $0x68] sm:$0xff] %vm280, 0.0
      %295 = vst.msk [vmem:[#allocation2 + $0x70] sm:$0xff] %vm280, 0.0
      %296 = vst.msk [vmem:[#allocation2 + $0x78] sm:$0xff] %vm280, 0.0
      %297 = vst.msk [vmem:[#allocation2 + $0x80] sm:$0xff] %vm280, 0.0
      %298 = vst.msk [vmem:[#allocation2 + $0x88] sm:$0xff] %vm280, 0.0
      %299 = vst.msk [vmem:[#allocation2 + $0x90] sm:$0xff] %vm280, 0.0
      %300 = vst.msk [vmem:[#allocation2 + $0x98] sm:$0xff] %vm280, 0.0
      %301 = vst.msk [vmem:[#allocation2 + $0xa0] sm:$0xff] %vm280, 0.0
      %302 = vst.msk [vmem:[#allocation2 + $0xa8] sm:$0xff] %vm280, 0.0
      %303 = vst.msk [vmem:[#allocation2 + $0xb0] sm:$0xff] %vm280, 0.0
      %304 = vst.msk [vmem:[#allocation2 + $0xb8] sm:$0xff] %vm280, 0.0
      %305 = vst.msk [vmem:[#allocation2 + $0xc0] sm:$0xff] %vm280, 0.0
      %306 = vst.msk [vmem:[#allocation2 + $0xc8] sm:$0xff] %vm280, 0.0
      %307 = vst.msk [vmem:[#allocation2 + $0xd0] sm:$0xff] %vm280, 0.0
      %308 = vst.msk [vmem:[#allocation2 + $0xd8] sm:$0xff] %vm280, 0.0
      %309 = vst.msk [vmem:[#allocation2 + $0xe0] sm:$0xff] %vm280, 0.0
      %310 = vst.msk [vmem:[#allocation2 + $0xe8] sm:$0xff] %vm280, 0.0
      %311 = vst.msk [vmem:[#allocation2 + $0xf0] sm:$0xff] %vm280, 0.0
      %312 = vst.msk [vmem:[#allocation2 + $0xf8] sm:$0xff] %vm280, 0.0
      %313 = vst.msk [vmem:[#allocation2 + $0x100] sm:$0xff] %vm280, 0.0
      %314 = vst.msk [vmem:[#allocation2 + $0x108] sm:$0xff] %vm280, 0.0
      %315 = vst.msk [vmem:[#allocation2 + $0x110] sm:$0xff] %vm280, 0.0
      %316 = vst.msk [vmem:[#allocation2 + $0x118] sm:$0xff] %vm280, 0.0
      %317 = vst.msk [vmem:[#allocation2 + $0x120] sm:$0xff] %vm280, 0.0
      %318 = vst.msk [vmem:[#allocation2 + $0x128] sm:$0xff] %vm280, 0.0
      %319 = vst.msk [vmem:[#allocation2 + $0x130] sm:$0xff] %vm280, 0.0
      %320 = vst.msk [vmem:[#allocation2 + $0x138] sm:$0xff] %vm280, 0.0
      %321 = vst.msk [vmem:[#allocation2 + $0x140] sm:$0xff] %vm280, 0.0
      %322 = vst.msk [vmem:[#allocation2 + $0x148] sm:$0xff] %vm280, 0.0
      %vm323 = vcmask 29696
      %324 = vst.msk [vmem:[#allocation2 + $0x150] sm:$0x3f] %vm323, 0.0
      %v325 = vld [vmem:[%s273] sm:$0xff]
      %v326 = vld [vmem:[%s273 + $0x8] sm:$0xff]
      %327 = vst.msk [vmem:[#allocation2 + $0x13] sm:$0xff] %vm280, %v325
      %328 = vst.msk [vmem:[#allocation2 + $0x1b] sm:$0xff] %vm280, %v326
      %s329 = scalar_lea.vmem %s273, 16
      %v330 = vld [vmem:[%s329] sm:$0xff]
      %v331 = vld [vmem:[%s329 + $0x8] sm:$0xff]
      %332 = vst.msk [vmem:[#allocation2 + $0x25] sm:$0xff] %vm280, %v330
      %333 = vst.msk [vmem:[#allocation2 + $0x2d] sm:$0xff] %vm280, %v331
      %s334 = scalar_lea.vmem %s273, 32
      %v335 = vld [vmem:[%s334] sm:$0xff]
      %v336 = vld [vmem:[%s334 + $0x8] sm:$0xff]
      %337 = vst.msk [vmem:[#allocation2 + $0x37] sm:$0xff] %vm280, %v335
      %338 = vst.msk [vmem:[#allocation2 + $0x3f] sm:$0xff] %vm280, %v336
      %s339 = scalar_lea.vmem %s273, 48
      %v340 = vld [vmem:[%s339] sm:$0xff]
      %v341 = vld [vmem:[%s339 + $0x8] sm:$0xff]
      %342 = vst.msk [vmem:[#allocation2 + $0x49] sm:$0xff] %vm280, %v340
      %343 = vst.msk [vmem:[#allocation2 + $0x51] sm:$0xff] %vm280, %v341
      %s344 = scalar_lea.vmem %s273, 64
      %v345 = vld [vmem:[%s344] sm:$0xff]
      %v346 = vld [vmem:[%s344 + $0x8] sm:$0xff]
      %347 = vst.msk [vmem:[#allocation2 + $0x5b] sm:$0xff] %vm280, %v345
      %348 = vst.msk [vmem:[#allocation2 + $0x63] sm:$0xff] %vm280, %v346
      %s349 = scalar_lea.vmem %s273, 80
      %v350 = vld [vmem:[%s349] sm:$0xff]
      %v351 = vld [vmem:[%s349 + $0x8] sm:$0xff]
      %352 = vst.msk [vmem:[#allocation2 + $0x6d] sm:$0xff] %vm280, %v350
      %353 = vst.msk [vmem:[#allocation2 + $0x75] sm:$0xff] %vm280, %v351
      %s354 = scalar_lea.vmem %s273, 96
      %v355 = vld [vmem:[%s354] sm:$0xff]
      %v356 = vld [vmem:[%s354 + $0x8] sm:$0xff]
      %357 = vst.msk [vmem:[#allocation2 + $0x7f] sm:$0xff] %vm280, %v355
      %358 = vst.msk [vmem:[#allocation2 + $0x87] sm:$0xff] %vm280, %v356
      %s359 = scalar_lea.vmem %s273, 112
      %v360 = vld [vmem:[%s359] sm:$0xff]
      %v361 = vld [vmem:[%s359 + $0x8] sm:$0xff]
      %362 = vst.msk [vmem:[#allocation2 + $0x91] sm:$0xff] %vm280, %v360
      %363 = vst.msk [vmem:[#allocation2 + $0x99] sm:$0xff] %vm280, %v361
      %s364 = scalar_lea.vmem %s273, 128
      %v365 = vld [vmem:[%s364] sm:$0xff]
      %v366 = vld [vmem:[%s364 + $0x8] sm:$0xff]
      %367 = vst.msk [vmem:[#allocation2 + $0xa3] sm:$0xff] %vm280, %v365
      %368 = vst.msk [vmem:[#allocation2 + $0xab] sm:$0xff] %vm280, %v366
      %s369 = scalar_lea.vmem %s273, 144
      %v370 = vld [vmem:[%s369] sm:$0xff]
      %v371 = vld [vmem:[%s369 + $0x8] sm:$0xff]
      %372 = vst.msk [vmem:[#allocation2 + $0xb5] sm:$0xff] %vm280, %v370
      %373 = vst.msk [vmem:[#allocation2 + $0xbd] sm:$0xff] %vm280, %v371
      %s374 = scalar_lea.vmem %s273, 160
      %v375 = vld [vmem:[%s374] sm:$0xff]
      %v376 = vld [vmem:[%s374 + $0x8] sm:$0xff]
      %377 = vst.msk [vmem:[#allocation2 + $0xc7] sm:$0xff] %vm280, %v375
      %378 = vst.msk [vmem:[#allocation2 + $0xcf] sm:$0xff] %vm280, %v376
      %s379 = scalar_lea.vmem %s273, 176
      %v380 = vld [vmem:[%s379] sm:$0xff]
      %v381 = vld [vmem:[%s379 + $0x8] sm:$0xff]
      %382 = vst.msk [vmem:[#allocation2 + $0xd9] sm:$0xff] %vm280, %v380
      %383 = vst.msk [vmem:[#allocation2 + $0xe1] sm:$0xff] %vm280, %v381
      %s384 = scalar_lea.vmem %s273, 192
      %v385 = vld [vmem:[%s384] sm:$0xff]
      %v386 = vld [vmem:[%s384 + $0x8] sm:$0xff]
      %387 = vst.msk [vmem:[#allocation2 + $0xeb] sm:$0xff] %vm280, %v385
      %388 = vst.msk [vmem:[#allocation2 + $0xf3] sm:$0xff] %vm280, %v386
      %s389 = scalar_lea.vmem %s273, 208
      %v390 = vld [vmem:[%s389] sm:$0xff]
      %v391 = vld [vmem:[%s389 + $0x8] sm:$0xff]
      %392 = vst.msk [vmem:[#allocation2 + $0xfd] sm:$0xff] %vm280, %v390
      %393 = vst.msk [vmem:[#allocation2 + $0x105] sm:$0xff] %vm280, %v391
      %s394 = scalar_lea.vmem %s273, 224
      %v395 = vld [vmem:[%s394] sm:$0xff]
      %v396 = vld [vmem:[%s394 + $0x8] sm:$0xff]
      %397 = vst.msk [vmem:[#allocation2 + $0x10f] sm:$0xff] %vm280, %v395
      %398 = vst.msk [vmem:[#allocation2 + $0x117] sm:$0xff] %vm280, %v396
      %s399 = scalar_lea.vmem %s273, 240
      %v400 = vld [vmem:[%s399] sm:$0xff]
      %v401 = vld [vmem:[%s399 + $0x8] sm:$0xff]
      %402 = vst.msk [vmem:[#allocation2 + $0x121] sm:$0xff] %vm280, %v400
      %403 = vst.msk [vmem:[#allocation2 + $0x129] sm:$0xff] %vm280, %v401
      %v404 = vld [vmem:[#allocation2] sm:$0xff]
      %v405 = vld [vmem:[#allocation2 + $0x8] sm:$0xff]
      %v406 = vld [vmem:[#allocation2 + $0x10] sm:$0xff]
      %v407 = vld [vmem:[#allocation2 + $0x18] sm:$0xff]
      %v408 = vld [vmem:[#allocation2 + $0x20] sm:$0xff]
      %v409 = vld [vmem:[#allocation2 + $0x28] sm:$0xff]
      %v410 = vld [vmem:[#allocation2 + $0x30] sm:$0xff]
      %v411 = vld [vmem:[#allocation2 + $0x38] sm:$0xff]
      %v412 = vld [vmem:[#allocation2 + $0x40] sm:$0xff]
      %v413 = vld [vmem:[#allocation2 + $0x48] sm:$0xff]
      %v414 = vld [vmem:[#allocation2 + $0x50] sm:$0xff]
      %v415 = vld [vmem:[#allocation2 + $0x58] sm:$0xff]
      %v416 = vld [vmem:[#allocation2 + $0x60] sm:$0xff]
      %v417 = vld [vmem:[#allocation2 + $0x68] sm:$0xff]
      %v418 = vld [vmem:[#allocation2 + $0x70] sm:$0xff]
      %v419 = vld [vmem:[#allocation2 + $0x78] sm:$0xff]
      %v420 = vld [vmem:[#allocation2 + $0x80] sm:$0xff]
      %v421 = vld [vmem:[#allocation2 + $0x88] sm:$0xff]
      %v422 = vld [vmem:[#allocation2 + $0x90] sm:$0xff]
      %v423 = vld [vmem:[#allocation2 + $0x98] sm:$0xff]
      %v424 = vld [vmem:[#allocation2 + $0xa0] sm:$0xff]
      %v425 = vld [vmem:[#allocation2 + $0xa8] sm:$0xff]
      %v426 = vld [vmem:[#allocation2 + $0xb0] sm:$0xff]
      %v427 = vld [vmem:[#allocation2 + $0xb8] sm:$0xff]
      %v428 = vld [vmem:[#allocation2 + $0xc0] sm:$0xff]
      %v429 = vld [vmem:[#allocation2 + $0xc8] sm:$0xff]
      %v430 = vld [vmem:[#allocation2 + $0xd0] sm:$0xff]
      %v431 = vld [vmem:[#allocation2 + $0xd8] sm:$0xff]
      %v432 = vld [vmem:[#allocation2 + $0xe0] sm:$0xff]
      %v433 = vld [vmem:[#allocation2 + $0xe8] sm:$0xff]
      %v434 = vld [vmem:[#allocation2 + $0xf0] sm:$0xff]
      %v435 = vld [vmem:[#allocation2 + $0xf8] sm:$0xff]
      %v436 = vld [vmem:[#allocation2 + $0x100] sm:$0xff]
      %v437 = vld [vmem:[#allocation2 + $0x108] sm:$0xff]
      %v438 = vld [vmem:[#allocation2 + $0x110] sm:$0xff]
      %v439 = vld [vmem:[#allocation2 + $0x118] sm:$0xff]
      %v440 = vld [vmem:[#allocation2 + $0x1] sm:$0xff]
      %v441 = vld [vmem:[#allocation2 + $0x9] sm:$0xff]
      %v442 = vld [vmem:[#allocation2 + $0x11] sm:$0xff]
      %v443 = vld [vmem:[#allocation2 + $0x19] sm:$0xff]
      %v444 = vld [vmem:[#allocation2 + $0x21] sm:$0xff]
      %v445 = vld [vmem:[#allocation2 + $0x29] sm:$0xff]
      %v446 = vld [vmem:[#allocation2 + $0x31] sm:$0xff]
      %v447 = vld [vmem:[#allocation2 + $0x39] sm:$0xff]
      %v448 = vld [vmem:[#allocation2 + $0x41] sm:$0xff]
      %v449 = vld [vmem:[#allocation2 + $0x49] sm:$0xff]
      %v450 = vld [vmem:[#allocation2 + $0x51] sm:$0xff]
      %v451 = vld [vmem:[#allocation2 + $0x59] sm:$0xff]
      %v452 = vld [vmem:[#allocation2 + $0x61] sm:$0xff]
      %v453 = vld [vmem:[#allocation2 + $0x69] sm:$0xff]
      %v454 = vld [vmem:[#allocation2 + $0x71] sm:$0xff]
      %v455 = vld [vmem:[#allocation2 + $0x79] sm:$0xff]
      %v456 = vld [vmem:[#allocation2 + $0x81] sm:$0xff]
      %v457 = vld [vmem:[#allocation2 + $0x89] sm:$0xff]
      %v458 = vld [vmem:[#allocation2 + $0x91] sm:$0xff]
      %v459 = vld [vmem:[#allocation2 + $0x99] sm:$0xff]
      %v460 = vld [vmem:[#allocation2 + $0xa1] sm:$0xff]
      %v461 = vld [vmem:[#allocation2 + $0xa9] sm:$0xff]
      %v462 = vld [vmem:[#allocation2 + $0xb1] sm:$0xff]
      %v463 = vld [vmem:[#allocation2 + $0xb9] sm:$0xff]
      %v464 = vld [vmem:[#allocation2 + $0xc1] sm:$0xff]
      %v465 = vld [vmem:[#allocation2 + $0xc9] sm:$0xff]
      %v466 = vld [vmem:[#allocation2 + $0xd1] sm:$0xff]
      %v467 = vld [vmem:[#allocation2 + $0xd9] sm:$0xff]
      %v468 = vld [vmem:[#allocation2 + $0xe1] sm:$0xff]
      %v469 = vld [vmem:[#allocation2 + $0xe9] sm:$0xff]
      %v470 = vld [vmem:[#allocation2 + $0xf1] sm:$0xff]
      %v471 = vld [vmem:[#allocation2 + $0xf9] sm:$0xff]
      %v472 = vld [vmem:[#allocation2 + $0x101] sm:$0xff]
      %v473 = vld [vmem:[#allocation2 + $0x109] sm:$0xff]
      %v474 = vld [vmem:[#allocation2 + $0x111] sm:$0xff]
      %v475 = vld [vmem:[#allocation2 + $0x119] sm:$0xff]
      %v476 = vld [vmem:[#allocation2 + $0x2] sm:$0xff]
      %v477 = vld [vmem:[#allocation2 + $0xa] sm:$0xff]
      %v478 = vld [vmem:[#allocation2 + $0x12] sm:$0xff]
      %v479 = vld [vmem:[#allocation2 + $0x1a] sm:$0xff]
      %v480 = vld [vmem:[#allocation2 + $0x22] sm:$0xff]
      %v481 = vld [vmem:[#allocation2 + $0x2a] sm:$0xff]
      %v482 = vld [vmem:[#allocation2 + $0x32] sm:$0xff]
      %v483 = vld [vmem:[#allocation2 + $0x3a] sm:$0xff]
      %v484 = vld [vmem:[#allocation2 + $0x42] sm:$0xff]
      %v485 = vld [vmem:[#allocation2 + $0x4a] sm:$0xff]
      %v486 = vld [vmem:[#allocation2 + $0x52] sm:$0xff]
      %v487 = vld [vmem:[#allocation2 + $0x5a] sm:$0xff]
      %v488 = vld [vmem:[#allocation2 + $0x62] sm:$0xff]
      %v489 = vld [vmem:[#allocation2 + $0x6a] sm:$0xff]
      %v490 = vld [vmem:[#allocation2 + $0x72] sm:$0xff]
      %v491 = vld [vmem:[#allocation2 + $0x7a] sm:$0xff]
      %v492 = vld [vmem:[#allocation2 + $0x82] sm:$0xff]
      %v493 = vld [vmem:[#allocation2 + $0x8a] sm:$0xff]
      %v494 = vld [vmem:[#allocation2 + $0x92] sm:$0xff]
      %v495 = vld [vmem:[#allocation2 + $0x9a] sm:$0xff]
      %v496 = vld [vmem:[#allocation2 + $0xa2] sm:$0xff]
      %v497 = vld [vmem:[#allocation2 + $0xaa] sm:$0xff]
      %v498 = vld [vmem:[#allocation2 + $0xb2] sm:$0xff]
      %v499 = vld [vmem:[#allocation2 + $0xba] sm:$0xff]
      %v500 = vld [vmem:[#allocation2 + $0xc2] sm:$0xff]
      %v501 = vld [vmem:[#allocation2 + $0xca] sm:$0xff]
      %v502 = vld [vmem:[#allocation2 + $0xd2] sm:$0xff]
      %v503 = vld [vmem:[#allocation2 + $0xda] sm:$0xff]
      %v504 = vld [vmem:[#allocation2 + $0xe2] sm:$0xff]
      %v505 = vld [vmem:[#allocation2 + $0xea] sm:$0xff]
      %v506 = vld [vmem:[#allocation2 + $0xf2] sm:$0xff]
      %v507 = vld [vmem:[#allocation2 + $0xfa] sm:$0xff]
      %v508 = vld [vmem:[#allocation2 + $0x102] sm:$0xff]
      %v509 = vld [vmem:[#allocation2 + $0x10a] sm:$0xff]
      %v510 = vld [vmem:[#allocation2 + $0x112] sm:$0xff]
      %v511 = vld [vmem:[#allocation2 + $0x11a] sm:$0xff]
      %v512 = vld [vmem:[#allocation2 + $0x122] sm:$0xff]
      %v513 = vld [vmem:[#allocation2 + $0x12a] sm:$0xff]
      %v514 = vld [vmem:[#allocation2 + $0x13] sm:$0xff]
      %v515 = vld [vmem:[#allocation2 + $0x1b] sm:$0xff]
      %v516 = vld [vmem:[#allocation2 + $0x23] sm:$0xff]
      %v517 = vld [vmem:[#allocation2 + $0x2b] sm:$0xff]
      %v518 = vld [vmem:[#allocation2 + $0x33] sm:$0xff]
      %v519 = vld [vmem:[#allocation2 + $0x3b] sm:$0xff]
      %v520 = vld [vmem:[#allocation2 + $0x43] sm:$0xff]
      %v521 = vld [vmem:[#allocation2 + $0x4b] sm:$0xff]
      %v522 = vld [vmem:[#allocation2 + $0x53] sm:$0xff]
      %v523 = vld [vmem:[#allocation2 + $0x5b] sm:$0xff]
      %v524 = vld [vmem:[#allocation2 + $0x63] sm:$0xff]
      %v525 = vld [vmem:[#allocation2 + $0x6b] sm:$0xff]
      %v526 = vld [vmem:[#allocation2 + $0x73] sm:$0xff]
      %v527 = vld [vmem:[#allocation2 + $0x7b] sm:$0xff]
      %v528 = vld [vmem:[#allocation2 + $0x83] sm:$0xff]
      %v529 = vld [vmem:[#allocation2 + $0x8b] sm:$0xff]
      %v530 = vld [vmem:[#allocation2 + $0x93] sm:$0xff]
      %v531 = vld [vmem:[#allocation2 + $0x9b] sm:$0xff]
      %v532 = vld [vmem:[#allocation2 + $0xa3] sm:$0xff]
      %v533 = vld [vmem:[#allocation2 + $0xab] sm:$0xff]
      %v534 = vld [vmem:[#allocation2 + $0xb3] sm:$0xff]
      %v535 = vld [vmem:[#allocation2 + $0xbb] sm:$0xff]
      %v536 = vld [vmem:[#allocation2 + $0xc3] sm:$0xff]
      %v537 = vld [vmem:[#allocation2 + $0xcb] sm:$0xff]
      %v538 = vld [vmem:[#allocation2 + $0xd3] sm:$0xff]
      %v539 = vld [vmem:[#allocation2 + $0xdb] sm:$0xff]
      %v540 = vld [vmem:[#allocation2 + $0xe3] sm:$0xff]
      %v541 = vld [vmem:[#allocation2 + $0xeb] sm:$0xff]
      %v542 = vld [vmem:[#allocation2 + $0xf3] sm:$0xff]
      %v543 = vld [vmem:[#allocation2 + $0xfb] sm:$0xff]
      %v544 = vld [vmem:[#allocation2 + $0x103] sm:$0xff]
      %v545 = vld [vmem:[#allocation2 + $0x10b] sm:$0xff]
      %v546 = vld [vmem:[#allocation2 + $0x113] sm:$0xff]
      %v547 = vld [vmem:[#allocation2 + $0x11b] sm:$0xff]
      %v548 = vld [vmem:[#allocation2 + $0x123] sm:$0xff]
      %v549 = vld [vmem:[#allocation2 + $0x12b] sm:$0xff]
      %v550 = vld [vmem:[#allocation2 + $0x14] sm:$0xff]
      %v551 = vld [vmem:[#allocation2 + $0x1c] sm:$0xff]
      %v552 = vld [vmem:[#allocation2 + $0x24] sm:$0xff]
      %v553 = vld [vmem:[#allocation2 + $0x2c] sm:$0xff]
      %v554 = vld [vmem:[#allocation2 + $0x34] sm:$0xff]
      %v555 = vld [vmem:[#allocation2 + $0x3c] sm:$0xff]
      %v556 = vld [vmem:[#allocation2 + $0x44] sm:$0xff]
      %v557 = vld [vmem:[#allocation2 + $0x4c] sm:$0xff]
      %v558 = vld [vmem:[#allocation2 + $0x54] sm:$0xff]
      %v559 = vld [vmem:[#allocation2 + $0x5c] sm:$0xff]
      %v560 = vld [vmem:[#allocation2 + $0x64] sm:$0xff]
      %v561 = vld [vmem:[#allocation2 + $0x6c] sm:$0xff]
      %v562 = vld [vmem:[#allocation2 + $0x74] sm:$0xff]
      %v563 = vld [vmem:[#allocation2 + $0x7c] sm:$0xff]
      %v564 = vld [vmem:[#allocation2 + $0x84] sm:$0xff]
      %v565 = vld [vmem:[#allocation2 + $0x8c] sm:$0xff]
      %v566 = vld [vmem:[#allocation2 + $0x94] sm:$0xff]
      %v567 = vld [vmem:[#allocation2 + $0x9c] sm:$0xff]
      %v568 = vld [vmem:[#allocation2 + $0xa4] sm:$0xff]
      %v569 = vld [vmem:[#allocation2 + $0xac] sm:$0xff]
      %v570 = vld [vmem:[#allocation2 + $0xb4] sm:$0xff]
      %v571 = vld [vmem:[#allocation2 + $0xbc] sm:$0xff]
      %v572 = vld [vmem:[#allocation2 + $0xc4] sm:$0xff]
      %v573 = vld [vmem:[#allocation2 + $0xcc] sm:$0xff]
      %v574 = vld [vmem:[#allocation2 + $0xd4] sm:$0xff]
      %v575 = vld [vmem:[#allocation2 + $0xdc] sm:$0xff]
      %v576 = vld [vmem:[#allocation2 + $0xe4] sm:$0xff]
      %v577 = vld [vmem:[#allocation2 + $0xec] sm:$0xff]
      %v578 = vld [vmem:[#allocation2 + $0xf4] sm:$0xff]
      %v579 = vld [vmem:[#allocation2 + $0xfc] sm:$0xff]
      %v580 = vld [vmem:[#allocation2 + $0x104] sm:$0xff]
      %v581 = vld [vmem:[#allocation2 + $0x10c] sm:$0xff]
      %v582 = vld [vmem:[#allocation2 + $0x114] sm:$0xff]
      %v583 = vld [vmem:[#allocation2 + $0x11c] sm:$0xff]
      %v584 = vld [vmem:[#allocation2 + $0x124] sm:$0xff]
      %v585 = vld [vmem:[#allocation2 + $0x12c] sm:$0xff]
      %v586 = vld [vmem:[#allocation2 + $0x134] sm:$0xff]
      %v587 = vld [vmem:[#allocation2 + $0x13c] sm:$0xff]
      %v588 = vld [vmem:[#allocation2 + $0x25] sm:$0xff]
      %v589 = vld [vmem:[#allocation2 + $0x2d] sm:$0xff]
      %v590 = vld [vmem:[#allocation2 + $0x35] sm:$0xff]
      %v591 = vld [vmem:[#allocation2 + $0x3d] sm:$0xff]
      %v592 = vld [vmem:[#allocation2 + $0x45] sm:$0xff]
      %v593 = vld [vmem:[#allocation2 + $0x4d] sm:$0xff]
      %v594 = vld [vmem:[#allocation2 + $0x55] sm:$0xff]
      %v595 = vld [vmem:[#allocation2 + $0x5d] sm:$0xff]
      %v596 = vld [vmem:[#allocation2 + $0x65] sm:$0xff]
      %v597 = vld [vmem:[#allocation2 + $0x6d] sm:$0xff]
      %v598 = vld [vmem:[#allocation2 + $0x75] sm:$0xff]
      %v599 = vld [vmem:[#allocation2 + $0x7d] sm:$0xff]
      %v600 = vld [vmem:[#allocation2 + $0x85] sm:$0xff]
      %v601 = vld [vmem:[#allocation2 + $0x8d] sm:$0xff]
      %v602 = vld [vmem:[#allocation2 + $0x95] sm:$0xff]
      %v603 = vld [vmem:[#allocation2 + $0x9d] sm:$0xff]
      %v604 = vld [vmem:[#allocation2 + $0xa5] sm:$0xff]
      %v605 = vld [vmem:[#allocation2 + $0xad] sm:$0xff]
      %v606 = vld [vmem:[#allocation2 + $0xb5] sm:$0xff]
      %v607 = vld [vmem:[#allocation2 + $0xbd] sm:$0xff]
      %v608 = vld [vmem:[#allocation2 + $0xc5] sm:$0xff]
      %v609 = vld [vmem:[#allocation2 + $0xcd] sm:$0xff]
      %v610 = vld [vmem:[#allocation2 + $0xd5] sm:$0xff]
      %v611 = vld [vmem:[#allocation2 + $0xdd] sm:$0xff]
      %v612 = vld [vmem:[#allocation2 + $0xe5] sm:$0xff]
      %v613 = vld [vmem:[#allocation2 + $0xed] sm:$0xff]
      %v614 = vld [vmem:[#allocation2 + $0xf5] sm:$0xff]
      %v615 = vld [vmem:[#allocation2 + $0xfd] sm:$0xff]
      %v616 = vld [vmem:[#allocation2 + $0x105] sm:$0xff]
      %v617 = vld [vmem:[#allocation2 + $0x10d] sm:$0xff]
      %v618 = vld [vmem:[#allocation2 + $0x115] sm:$0xff]
      %v619 = vld [vmem:[#allocation2 + $0x11d] sm:$0xff]
      %v620 = vld [vmem:[#allocation2 + $0x125] sm:$0xff]
      %v621 = vld [vmem:[#allocation2 + $0x12d] sm:$0xff]
      %v622 = vld [vmem:[#allocation2 + $0x135] sm:$0xff]
      %v623 = vld [vmem:[#allocation2 + $0x13d] sm:$0xff]
      %v624 = vld [vmem:[#allocation2 + $0x26] sm:$0xff]
      %v625 = vld [vmem:[#allocation2 + $0x2e] sm:$0xff]
      %v626 = vld [vmem:[#allocation2 + $0x36] sm:$0xff]
      %v627 = vld [vmem:[#allocation2 + $0x3e] sm:$0xff]
      %v628 = vld [vmem:[#allocation2 + $0x46] sm:$0xff]
      %v629 = vld [vmem:[#allocation2 + $0x4e] sm:$0xff]
      %v630 = vld [vmem:[#allocation2 + $0x56] sm:$0xff]
      %v631 = vld [vmem:[#allocation2 + $0x5e] sm:$0xff]
      %v632 = vld [vmem:[#allocation2 + $0x66] sm:$0xff]
      %v633 = vld [vmem:[#allocation2 + $0x6e] sm:$0xff]
      %v634 = vld [vmem:[#allocation2 + $0x76] sm:$0xff]
      %v635 = vld [vmem:[#allocation2 + $0x7e] sm:$0xff]
      %v636 = vld [vmem:[#allocation2 + $0x86] sm:$0xff]
      %v637 = vld [vmem:[#allocation2 + $0x8e] sm:$0xff]
      %v638 = vld [vmem:[#allocation2 + $0x96] sm:$0xff]
      %v639 = vld [vmem:[#allocation2 + $0x9e] sm:$0xff]
      %v640 = vld [vmem:[#allocation2 + $0xa6] sm:$0xff]
      %v641 = vld [vmem:[#allocation2 + $0xae] sm:$0xff]
      %v642 = vld [vmem:[#allocation2 + $0xb6] sm:$0xff]
      %v643 = vld [vmem:[#allocation2 + $0xbe] sm:$0xff]
      %v644 = vld [vmem:[#allocation2 + $0xc6] sm:$0xff]
      %v645 = vld [vmem:[#allocation2 + $0xce] sm:$0xff]
      %v646 = vld [vmem:[#allocation2 + $0xd6] sm:$0xff]
      %v647 = vld [vmem:[#allocation2 + $0xde] sm:$0xff]
      %v648 = vld [vmem:[#allocation2 + $0xe6] sm:$0xff]
      %v649 = vld [vmem:[#allocation2 + $0xee] sm:$0xff]
      %v650 = vld [vmem:[#allocation2 + $0xf6] sm:$0xff]
      %v651 = vld [vmem:[#allocation2 + $0xfe] sm:$0xff]
      %v652 = vld [vmem:[#allocation2 + $0x106] sm:$0xff]
      %v653 = vld [vmem:[#allocation2 + $0x10e] sm:$0xff]
      %v654 = vld [vmem:[#allocation2 + $0x116] sm:$0xff]
      %v655 = vld [vmem:[#allocation2 + $0x11e] sm:$0xff]
      %v656 = vld [vmem:[#allocation2 + $0x126] sm:$0xff]
      %v657 = vld [vmem:[#allocation2 + $0x12e] sm:$0xff]
      %v658 = vld [vmem:[#allocation2 + $0x136] sm:$0xff]
      %v659 = vld [vmem:[#allocation2 + $0x13e] sm:$0xff]
      %696 = vrot.lane.b32.xlu0 %v440, 4
      %v697 = vpop.permute.xlu0 %696
      %698 = vrot.lane.b32.xlu0 %v441, 4
      %v699 = vpop.permute.xlu0 %698
      %700 = vrot.lane.b32.xlu0 %v442, 4
      %v701 = vpop.permute.xlu0 %700
      %702 = vrot.lane.b32.xlu0 %v443, 4
      %v703 = vpop.permute.xlu0 %702
      %704 = vrot.lane.b32.xlu0 %v444, 4
      %v705 = vpop.permute.xlu0 %704
      %706 = vrot.lane.b32.xlu0 %v445, 4
      %v707 = vpop.permute.xlu0 %706
      %708 = vrot.lane.b32.xlu0 %v446, 4
      %v709 = vpop.permute.xlu0 %708
      %710 = vrot.lane.b32.xlu0 %v447, 4
      %v711 = vpop.permute.xlu0 %710
      %712 = vrot.lane.b32.xlu0 %v448, 4
      %v713 = vpop.permute.xlu0 %712
      %714 = vrot.lane.b32.xlu0 %v449, 4
      %v715 = vpop.permute.xlu0 %714
      %716 = vrot.lane.b32.xlu0 %v450, 4
      %v717 = vpop.permute.xlu0 %716
      %718 = vrot.lane.b32.xlu0 %v451, 4
      %v719 = vpop.permute.xlu0 %718
      %720 = vrot.lane.b32.xlu0 %v452, 4
      %v721 = vpop.permute.xlu0 %720
      %722 = vrot.lane.b32.xlu0 %v453, 4
      %v723 = vpop.permute.xlu0 %722
      %724 = vrot.lane.b32.xlu0 %v454, 4
      %v725 = vpop.permute.xlu0 %724
      %726 = vrot.lane.b32.xlu0 %v455, 4
      %v727 = vpop.permute.xlu0 %726
      %728 = vrot.lane.b32.xlu0 %v456, 4
      %v729 = vpop.permute.xlu0 %728
      %730 = vrot.lane.b32.xlu0 %v457, 4
      %v731 = vpop.permute.xlu0 %730
      %732 = vrot.lane.b32.xlu0 %v458, 4
      %v733 = vpop.permute.xlu0 %732
      %734 = vrot.lane.b32.xlu0 %v459, 4
      %v735 = vpop.permute.xlu0 %734
      %736 = vrot.lane.b32.xlu0 %v460, 4
      %v737 = vpop.permute.xlu0 %736
      %738 = vrot.lane.b32.xlu0 %v461, 4
      %v739 = vpop.permute.xlu0 %738
      %740 = vrot.lane.b32.xlu0 %v462, 4
      %v741 = vpop.permute.xlu0 %740
      %742 = vrot.lane.b32.xlu0 %v463, 4
      %v743 = vpop.permute.xlu0 %742
      %744 = vrot.lane.b32.xlu0 %v464, 4
      %v745 = vpop.permute.xlu0 %744
      %746 = vrot.lane.b32.xlu0 %v465, 4
      %v747 = vpop.permute.xlu0 %746
      %748 = vrot.lane.b32.xlu0 %v466, 4
      %v749 = vpop.permute.xlu0 %748
      %750 = vrot.lane.b32.xlu0 %v467, 4
      %v751 = vpop.permute.xlu0 %750
      %752 = vrot.lane.b32.xlu0 %v468, 4
      %v753 = vpop.permute.xlu0 %752
      %754 = vrot.lane.b32.xlu0 %v469, 4
      %v755 = vpop.permute.xlu0 %754
      %756 = vrot.lane.b32.xlu0 %v470, 4
      %v757 = vpop.permute.xlu0 %756
      %758 = vrot.lane.b32.xlu0 %v471, 4
      %v759 = vpop.permute.xlu0 %758
      %760 = vrot.lane.b32.xlu0 %v472, 4
      %v761 = vpop.permute.xlu0 %760
      %762 = vrot.lane.b32.xlu0 %v473, 4
      %v763 = vpop.permute.xlu0 %762
      %764 = vrot.lane.b32.xlu0 %v474, 4
      %v765 = vpop.permute.xlu0 %764
      %766 = vrot.lane.b32.xlu0 %v475, 4
      %v767 = vpop.permute.xlu0 %766
      %840 = vrot.lane.b32.xlu0 %v476, 8
      %v841 = vpop.permute.xlu0 %840
      %842 = vrot.lane.b32.xlu0 %v477, 8
      %v843 = vpop.permute.xlu0 %842
      %844 = vrot.lane.b32.xlu0 %v478, 8
      %v845 = vpop.permute.xlu0 %844
      %846 = vrot.lane.b32.xlu0 %v479, 8
      %v847 = vpop.permute.xlu0 %846
      %848 = vrot.lane.b32.xlu0 %v480, 8
      %v849 = vpop.permute.xlu0 %848
      %850 = vrot.lane.b32.xlu0 %v481, 8
      %v851 = vpop.permute.xlu0 %850
      %852 = vrot.lane.b32.xlu0 %v482, 8
      %v853 = vpop.permute.xlu0 %852
      %854 = vrot.lane.b32.xlu0 %v483, 8
      %v855 = vpop.permute.xlu0 %854
      %856 = vrot.lane.b32.xlu0 %v484, 8
      %v857 = vpop.permute.xlu0 %856
      %858 = vrot.lane.b32.xlu0 %v485, 8
      %v859 = vpop.permute.xlu0 %858
      %860 = vrot.lane.b32.xlu0 %v486, 8
      %v861 = vpop.permute.xlu0 %860
      %862 = vrot.lane.b32.xlu0 %v487, 8
      %v863 = vpop.permute.xlu0 %862
      %864 = vrot.lane.b32.xlu0 %v488, 8
      %v865 = vpop.permute.xlu0 %864
      %866 = vrot.lane.b32.xlu0 %v489, 8
      %v867 = vpop.permute.xlu0 %866
      %868 = vrot.lane.b32.xlu0 %v490, 8
      %v869 = vpop.permute.xlu0 %868
      %870 = vrot.lane.b32.xlu0 %v491, 8
      %v871 = vpop.permute.xlu0 %870
      %872 = vrot.lane.b32.xlu0 %v492, 8
      %v873 = vpop.permute.xlu0 %872
      %874 = vrot.lane.b32.xlu0 %v493, 8
      %v875 = vpop.permute.xlu0 %874
      %876 = vrot.lane.b32.xlu0 %v494, 8
      %v877 = vpop.permute.xlu0 %876
      %878 = vrot.lane.b32.xlu0 %v495, 8
      %v879 = vpop.permute.xlu0 %878
      %880 = vrot.lane.b32.xlu0 %v496, 8
      %v881 = vpop.permute.xlu0 %880
      %882 = vrot.lane.b32.xlu0 %v497, 8
      %v883 = vpop.permute.xlu0 %882
      %884 = vrot.lane.b32.xlu0 %v498, 8
      %v885 = vpop.permute.xlu0 %884
      %886 = vrot.lane.b32.xlu0 %v499, 8
      %v887 = vpop.permute.xlu0 %886
      %888 = vrot.lane.b32.xlu0 %v500, 8
      %v889 = vpop.permute.xlu0 %888
      %890 = vrot.lane.b32.xlu0 %v501, 8
      %v891 = vpop.permute.xlu0 %890
      %892 = vrot.lane.b32.xlu0 %v502, 8
      %v893 = vpop.permute.xlu0 %892
      %894 = vrot.lane.b32.xlu0 %v503, 8
      %v895 = vpop.permute.xlu0 %894
      %896 = vrot.lane.b32.xlu0 %v504, 8
      %v897 = vpop.permute.xlu0 %896
      %898 = vrot.lane.b32.xlu0 %v505, 8
      %v899 = vpop.permute.xlu0 %898
      %900 = vrot.lane.b32.xlu0 %v506, 8
      %v901 = vpop.permute.xlu0 %900
      %902 = vrot.lane.b32.xlu0 %v507, 8
      %v903 = vpop.permute.xlu0 %902
      %904 = vrot.lane.b32.xlu0 %v508, 8
      %v905 = vpop.permute.xlu0 %904
      %906 = vrot.lane.b32.xlu0 %v509, 8
      %v907 = vpop.permute.xlu0 %906
      %908 = vrot.lane.b32.xlu0 %v510, 8
      %v909 = vpop.permute.xlu0 %908
      %910 = vrot.lane.b32.xlu0 %v511, 8
      %v911 = vpop.permute.xlu0 %910
      %950 = vrot.lane.b32.xlu0 %v478, 12
      %v951 = vpop.permute.xlu0 %950
      %952 = vrot.lane.b32.xlu0 %v479, 12
      %v953 = vpop.permute.xlu0 %952
      %954 = vrot.lane.b32.xlu0 %v480, 12
      %v955 = vpop.permute.xlu0 %954
      %956 = vrot.lane.b32.xlu0 %v481, 12
      %v957 = vpop.permute.xlu0 %956
      %958 = vrot.lane.b32.xlu0 %v482, 12
      %v959 = vpop.permute.xlu0 %958
      %960 = vrot.lane.b32.xlu0 %v483, 12
      %v961 = vpop.permute.xlu0 %960
      %962 = vrot.lane.b32.xlu0 %v484, 12
      %v963 = vpop.permute.xlu0 %962
      %964 = vrot.lane.b32.xlu0 %v485, 12
      %v965 = vpop.permute.xlu0 %964
      %966 = vrot.lane.b32.xlu0 %v486, 12
      %v967 = vpop.permute.xlu0 %966
      %968 = vrot.lane.b32.xlu0 %v487, 12
      %v969 = vpop.permute.xlu0 %968
      %970 = vrot.lane.b32.xlu0 %v488, 12
      %v971 = vpop.permute.xlu0 %970
      %972 = vrot.lane.b32.xlu0 %v489, 12
      %v973 = vpop.permute.xlu0 %972
      %974 = vrot.lane.b32.xlu0 %v490, 12
      %v975 = vpop.permute.xlu0 %974
      %976 = vrot.lane.b32.xlu0 %v491, 12
      %v977 = vpop.permute.xlu0 %976
      %978 = vrot.lane.b32.xlu0 %v492, 12
      %v979 = vpop.permute.xlu0 %978
      %980 = vrot.lane.b32.xlu0 %v493, 12
      %v981 = vpop.permute.xlu0 %980
      %982 = vrot.lane.b32.xlu0 %v494, 12
      %v983 = vpop.permute.xlu0 %982
      %984 = vrot.lane.b32.xlu0 %v495, 12
      %v985 = vpop.permute.xlu0 %984
      %986 = vrot.lane.b32.xlu0 %v496, 12
      %v987 = vpop.permute.xlu0 %986
      %988 = vrot.lane.b32.xlu0 %v497, 12
      %v989 = vpop.permute.xlu0 %988
      %990 = vrot.lane.b32.xlu0 %v498, 12
      %v991 = vpop.permute.xlu0 %990
      %992 = vrot.lane.b32.xlu0 %v499, 12
      %v993 = vpop.permute.xlu0 %992
      %994 = vrot.lane.b32.xlu0 %v500, 12
      %v995 = vpop.permute.xlu0 %994
      %996 = vrot.lane.b32.xlu0 %v501, 12
      %v997 = vpop.permute.xlu0 %996
      %998 = vrot.lane.b32.xlu0 %v502, 12
      %v999 = vpop.permute.xlu0 %998
      %1000 = vrot.lane.b32.xlu0 %v503, 12
      %v1001 = vpop.permute.xlu0 %1000
      %1002 = vrot.lane.b32.xlu0 %v504, 12
      %v1003 = vpop.permute.xlu0 %1002
      %1004 = vrot.lane.b32.xlu0 %v505, 12
      %v1005 = vpop.permute.xlu0 %1004
      %1006 = vrot.lane.b32.xlu0 %v506, 12
      %v1007 = vpop.permute.xlu0 %1006
      %1008 = vrot.lane.b32.xlu0 %v507, 12
      %v1009 = vpop.permute.xlu0 %1008
      %1010 = vrot.lane.b32.xlu0 %v508, 12
      %v1011 = vpop.permute.xlu0 %1010
      %1012 = vrot.lane.b32.xlu0 %v509, 12
      %v1013 = vpop.permute.xlu0 %1012
      %1014 = vrot.lane.b32.xlu0 %v510, 12
      %v1015 = vpop.permute.xlu0 %1014
      %1016 = vrot.lane.b32.xlu0 %v511, 12
      %v1017 = vpop.permute.xlu0 %1016
      %1018 = vrot.lane.b32.xlu0 %v512, 12
      %v1019 = vpop.permute.xlu0 %1018
      %1020 = vrot.lane.b32.xlu0 %v513, 12
      %v1021 = vpop.permute.xlu0 %1020
      %1094 = vrot.lane.b32.xlu0 %v514, 16
      %v1095 = vpop.permute.xlu0 %1094
      %1096 = vrot.lane.b32.xlu0 %v515, 16
      %v1097 = vpop.permute.xlu0 %1096
      %1098 = vrot.lane.b32.xlu0 %v516, 16
      %v1099 = vpop.permute.xlu0 %1098
      %1100 = vrot.lane.b32.xlu0 %v517, 16
      %v1101 = vpop.permute.xlu0 %1100
      %1102 = vrot.lane.b32.xlu0 %v518, 16
      %v1103 = vpop.permute.xlu0 %1102
      %1104 = vrot.lane.b32.xlu0 %v519, 16
      %v1105 = vpop.permute.xlu0 %1104
      %1106 = vrot.lane.b32.xlu0 %v520, 16
      %v1107 = vpop.permute.xlu0 %1106
      %1108 = vrot.lane.b32.xlu0 %v521, 16
      %v1109 = vpop.permute.xlu0 %1108
      %1110 = vrot.lane.b32.xlu0 %v522, 16
      %v1111 = vpop.permute.xlu0 %1110
      %1112 = vrot.lane.b32.xlu0 %v523, 16
      %v1113 = vpop.permute.xlu0 %1112
      %1114 = vrot.lane.b32.xlu0 %v524, 16
      %v1115 = vpop.permute.xlu0 %1114
      %1116 = vrot.lane.b32.xlu0 %v525, 16
      %v1117 = vpop.permute.xlu0 %1116
      %1118 = vrot.lane.b32.xlu0 %v526, 16
      %v1119 = vpop.permute.xlu0 %1118
      %1120 = vrot.lane.b32.xlu0 %v527, 16
      %v1121 = vpop.permute.xlu0 %1120
      %1122 = vrot.lane.b32.xlu0 %v528, 16
      %v1123 = vpop.permute.xlu0 %1122
      %1124 = vrot.lane.b32.xlu0 %v529, 16
      %v1125 = vpop.permute.xlu0 %1124
      %1126 = vrot.lane.b32.xlu0 %v530, 16
      %v1127 = vpop.permute.xlu0 %1126
      %1128 = vrot.lane.b32.xlu0 %v531, 16
      %v1129 = vpop.permute.xlu0 %1128
      %1130 = vrot.lane.b32.xlu0 %v532, 16
      %v1131 = vpop.permute.xlu0 %1130
      %1132 = vrot.lane.b32.xlu0 %v533, 16
      %v1133 = vpop.permute.xlu0 %1132
      %1134 = vrot.lane.b32.xlu0 %v534, 16
      %v1135 = vpop.permute.xlu0 %1134
      %1136 = vrot.lane.b32.xlu0 %v535, 16
      %v1137 = vpop.permute.xlu0 %1136
      %1138 = vrot.lane.b32.xlu0 %v536, 16
      %v1139 = vpop.permute.xlu0 %1138
      %1140 = vrot.lane.b32.xlu0 %v537, 16
      %v1141 = vpop.permute.xlu0 %1140
      %1142 = vrot.lane.b32.xlu0 %v538, 16
      %v1143 = vpop.permute.xlu0 %1142
      %1144 = vrot.lane.b32.xlu0 %v539, 16
      %v1145 = vpop.permute.xlu0 %1144
      %1146 = vrot.lane.b32.xlu0 %v540, 16
      %v1147 = vpop.permute.xlu0 %1146
      %1148 = vrot.lane.b32.xlu0 %v541, 16
      %v1149 = vpop.permute.xlu0 %1148
      %1150 = vrot.lane.b32.xlu0 %v542, 16
      %v1151 = vpop.permute.xlu0 %1150
      %1152 = vrot.lane.b32.xlu0 %v543, 16
      %v1153 = vpop.permute.xlu0 %1152
      %1154 = vrot.lane.b32.xlu0 %v544, 16
      %v1155 = vpop.permute.xlu0 %1154
      %1156 = vrot.lane.b32.xlu0 %v545, 16
      %v1157 = vpop.permute.xlu0 %1156
      %1158 = vrot.lane.b32.xlu0 %v546, 16
      %v1159 = vpop.permute.xlu0 %1158
      %1160 = vrot.lane.b32.xlu0 %v547, 16
      %v1161 = vpop.permute.xlu0 %1160
      %1162 = vrot.lane.b32.xlu0 %v548, 16
      %v1163 = vpop.permute.xlu0 %1162
      %1164 = vrot.lane.b32.xlu0 %v549, 16
      %v1165 = vpop.permute.xlu0 %1164
      %1238 = vrot.lane.b32.xlu0 %v550, 20
      %v1239 = vpop.permute.xlu0 %1238
      %1240 = vrot.lane.b32.xlu0 %v551, 20
      %v1241 = vpop.permute.xlu0 %1240
      %1242 = vrot.lane.b32.xlu0 %v552, 20
      %v1243 = vpop.permute.xlu0 %1242
      %1244 = vrot.lane.b32.xlu0 %v553, 20
      %v1245 = vpop.permute.xlu0 %1244
      %1246 = vrot.lane.b32.xlu0 %v554, 20
      %v1247 = vpop.permute.xlu0 %1246
      %1248 = vrot.lane.b32.xlu0 %v555, 20
      %v1249 = vpop.permute.xlu0 %1248
      %1250 = vrot.lane.b32.xlu0 %v556, 20
      %v1251 = vpop.permute.xlu0 %1250
      %1252 = vrot.lane.b32.xlu0 %v557, 20
      %v1253 = vpop.permute.xlu0 %1252
      %1254 = vrot.lane.b32.xlu0 %v558, 20
      %v1255 = vpop.permute.xlu0 %1254
      %1256 = vrot.lane.b32.xlu0 %v559, 20
      %v1257 = vpop.permute.xlu0 %1256
      %1258 = vrot.lane.b32.xlu0 %v560, 20
      %v1259 = vpop.permute.xlu0 %1258
      %1260 = vrot.lane.b32.xlu0 %v561, 20
      %v1261 = vpop.permute.xlu0 %1260
      %1262 = vrot.lane.b32.xlu0 %v562, 20
      %v1263 = vpop.permute.xlu0 %1262
      %1264 = vrot.lane.b32.xlu0 %v563, 20
      %v1265 = vpop.permute.xlu0 %1264
      %1266 = vrot.lane.b32.xlu0 %v564, 20
      %v1267 = vpop.permute.xlu0 %1266
      %1268 = vrot.lane.b32.xlu0 %v565, 20
      %v1269 = vpop.permute.xlu0 %1268
      %1270 = vrot.lane.b32.xlu0 %v566, 20
      %v1271 = vpop.permute.xlu0 %1270
      %1272 = vrot.lane.b32.xlu0 %v567, 20
      %v1273 = vpop.permute.xlu0 %1272
      %1274 = vrot.lane.b32.xlu0 %v568, 20
      %v1275 = vpop.permute.xlu0 %1274
      %1276 = vrot.lane.b32.xlu0 %v569, 20
      %v1277 = vpop.permute.xlu0 %1276
      %1278 = vrot.lane.b32.xlu0 %v570, 20
      %v1279 = vpop.permute.xlu0 %1278
      %1280 = vrot.lane.b32.xlu0 %v571, 20
      %v1281 = vpop.permute.xlu0 %1280
      %1282 = vrot.lane.b32.xlu0 %v572, 20
      %v1283 = vpop.permute.xlu0 %1282
      %1284 = vrot.lane.b32.xlu0 %v573, 20
      %v1285 = vpop.permute.xlu0 %1284
      %1286 = vrot.lane.b32.xlu0 %v574, 20
      %v1287 = vpop.permute.xlu0 %1286
      %1288 = vrot.lane.b32.xlu0 %v575, 20
      %v1289 = vpop.permute.xlu0 %1288
      %1290 = vrot.lane.b32.xlu0 %v576, 20
      %v1291 = vpop.permute.xlu0 %1290
      %1292 = vrot.lane.b32.xlu0 %v577, 20
      %v1293 = vpop.permute.xlu0 %1292
      %1294 = vrot.lane.b32.xlu0 %v578, 20
      %v1295 = vpop.permute.xlu0 %1294
      %1296 = vrot.lane.b32.xlu0 %v579, 20
      %v1297 = vpop.permute.xlu0 %1296
      %1298 = vrot.lane.b32.xlu0 %v580, 20
      %v1299 = vpop.permute.xlu0 %1298
      %1300 = vrot.lane.b32.xlu0 %v581, 20
      %v1301 = vpop.permute.xlu0 %1300
      %1302 = vrot.lane.b32.xlu0 %v582, 20
      %v1303 = vpop.permute.xlu0 %1302
      %1304 = vrot.lane.b32.xlu0 %v583, 20
      %v1305 = vpop.permute.xlu0 %1304
      %1306 = vrot.lane.b32.xlu0 %v584, 20
      %v1307 = vpop.permute.xlu0 %1306
      %1308 = vrot.lane.b32.xlu0 %v585, 20
      %v1309 = vpop.permute.xlu0 %1308
      %1348 = vrot.lane.b32.xlu0 %v552, 24
      %v1349 = vpop.permute.xlu0 %1348
      %1350 = vrot.lane.b32.xlu0 %v553, 24
      %v1351 = vpop.permute.xlu0 %1350
      %1352 = vrot.lane.b32.xlu0 %v554, 24
      %v1353 = vpop.permute.xlu0 %1352
      %1354 = vrot.lane.b32.xlu0 %v555, 24
      %v1355 = vpop.permute.xlu0 %1354
      %1356 = vrot.lane.b32.xlu0 %v556, 24
      %v1357 = vpop.permute.xlu0 %1356
      %1358 = vrot.lane.b32.xlu0 %v557, 24
      %v1359 = vpop.permute.xlu0 %1358
      %1360 = vrot.lane.b32.xlu0 %v558, 24
      %v1361 = vpop.permute.xlu0 %1360
      %1362 = vrot.lane.b32.xlu0 %v559, 24
      %v1363 = vpop.permute.xlu0 %1362
      %1364 = vrot.lane.b32.xlu0 %v560, 24
      %v1365 = vpop.permute.xlu0 %1364
      %1366 = vrot.lane.b32.xlu0 %v561, 24
      %v1367 = vpop.permute.xlu0 %1366
      %1368 = vrot.lane.b32.xlu0 %v562, 24
      %v1369 = vpop.permute.xlu0 %1368
      %1370 = vrot.lane.b32.xlu0 %v563, 24
      %v1371 = vpop.permute.xlu0 %1370
      %1372 = vrot.lane.b32.xlu0 %v564, 24
      %v1373 = vpop.permute.xlu0 %1372
      %1374 = vrot.lane.b32.xlu0 %v565, 24
      %v1375 = vpop.permute.xlu0 %1374
      %1376 = vrot.lane.b32.xlu0 %v566, 24
      %v1377 = vpop.permute.xlu0 %1376
      %1378 = vrot.lane.b32.xlu0 %v567, 24
      %v1379 = vpop.permute.xlu0 %1378
      %1380 = vrot.lane.b32.xlu0 %v568, 24
      %v1381 = vpop.permute.xlu0 %1380
      %1382 = vrot.lane.b32.xlu0 %v569, 24
      %v1383 = vpop.permute.xlu0 %1382
      %1384 = vrot.lane.b32.xlu0 %v570, 24
      %v1385 = vpop.permute.xlu0 %1384
      %1386 = vrot.lane.b32.xlu0 %v571, 24
      %v1387 = vpop.permute.xlu0 %1386
      %1388 = vrot.lane.b32.xlu0 %v572, 24
      %v1389 = vpop.permute.xlu0 %1388
      %1390 = vrot.lane.b32.xlu0 %v573, 24
      %v1391 = vpop.permute.xlu0 %1390
      %1392 = vrot.lane.b32.xlu0 %v574, 24
      %v1393 = vpop.permute.xlu0 %1392
      %1394 = vrot.lane.b32.xlu0 %v575, 24
      %v1395 = vpop.permute.xlu0 %1394
      %1396 = vrot.lane.b32.xlu0 %v576, 24
      %v1397 = vpop.permute.xlu0 %1396
      %1398 = vrot.lane.b32.xlu0 %v577, 24
      %v1399 = vpop.permute.xlu0 %1398
      %1400 = vrot.lane.b32.xlu0 %v578, 24
      %v1401 = vpop.permute.xlu0 %1400
      %1402 = vrot.lane.b32.xlu0 %v579, 24
      %v1403 = vpop.permute.xlu0 %1402
      %1404 = vrot.lane.b32.xlu0 %v580, 24
      %v1405 = vpop.permute.xlu0 %1404
      %1406 = vrot.lane.b32.xlu0 %v581, 24
      %v1407 = vpop.permute.xlu0 %1406
      %1408 = vrot.lane.b32.xlu0 %v582, 24
      %v1409 = vpop.permute.xlu0 %1408
      %1410 = vrot.lane.b32.xlu0 %v583, 24
      %v1411 = vpop.permute.xlu0 %1410
      %1412 = vrot.lane.b32.xlu0 %v584, 24
      %v1413 = vpop.permute.xlu0 %1412
      %1414 = vrot.lane.b32.xlu0 %v585, 24
      %v1415 = vpop.permute.xlu0 %1414
      %1416 = vrot.lane.b32.xlu0 %v586, 24
      %v1417 = vpop.permute.xlu0 %1416
      %1418 = vrot.lane.b32.xlu0 %v587, 24
      %v1419 = vpop.permute.xlu0 %1418
      %1492 = vrot.lane.b32.xlu0 %v588, 28
      %v1493 = vpop.permute.xlu0 %1492
      %1494 = vrot.lane.b32.xlu0 %v589, 28
      %v1495 = vpop.permute.xlu0 %1494
      %1496 = vrot.lane.b32.xlu0 %v590, 28
      %v1497 = vpop.permute.xlu0 %1496
      %1498 = vrot.lane.b32.xlu0 %v591, 28
      %v1499 = vpop.permute.xlu0 %1498
      %1500 = vrot.lane.b32.xlu0 %v592, 28
      %v1501 = vpop.permute.xlu0 %1500
      %1502 = vrot.lane.b32.xlu0 %v593, 28
      %v1503 = vpop.permute.xlu0 %1502
      %1504 = vrot.lane.b32.xlu0 %v594, 28
      %v1505 = vpop.permute.xlu0 %1504
      %1506 = vrot.lane.b32.xlu0 %v595, 28
      %v1507 = vpop.permute.xlu0 %1506
      %1508 = vrot.lane.b32.xlu0 %v596, 28
      %v1509 = vpop.permute.xlu0 %1508
      %1510 = vrot.lane.b32.xlu0 %v597, 28
      %v1511 = vpop.permute.xlu0 %1510
      %1512 = vrot.lane.b32.xlu0 %v598, 28
      %v1513 = vpop.permute.xlu0 %1512
      %1514 = vrot.lane.b32.xlu0 %v599, 28
      %v1515 = vpop.permute.xlu0 %1514
      %1516 = vrot.lane.b32.xlu0 %v600, 28
      %v1517 = vpop.permute.xlu0 %1516
      %1518 = vrot.lane.b32.xlu0 %v601, 28
      %v1519 = vpop.permute.xlu0 %1518
      %1520 = vrot.lane.b32.xlu0 %v602, 28
      %v1521 = vpop.permute.xlu0 %1520
      %1522 = vrot.lane.b32.xlu0 %v603, 28
      %v1523 = vpop.permute.xlu0 %1522
      %1524 = vrot.lane.b32.xlu0 %v604, 28
      %v1525 = vpop.permute.xlu0 %1524
      %1526 = vrot.lane.b32.xlu0 %v605, 28
      %v1527 = vpop.permute.xlu0 %1526
      %1528 = vrot.lane.b32.xlu0 %v606, 28
      %v1529 = vpop.permute.xlu0 %1528
      %1530 = vrot.lane.b32.xlu0 %v607, 28
      %v1531 = vpop.permute.xlu0 %1530
      %1532 = vrot.lane.b32.xlu0 %v608, 28
      %v1533 = vpop.permute.xlu0 %1532
      %1534 = vrot.lane.b32.xlu0 %v609, 28
      %v1535 = vpop.permute.xlu0 %1534
      %1536 = vrot.lane.b32.xlu0 %v610, 28
      %v1537 = vpop.permute.xlu0 %1536
      %1538 = vrot.lane.b32.xlu0 %v611, 28
      %v1539 = vpop.permute.xlu0 %1538
      %1540 = vrot.lane.b32.xlu0 %v612, 28
      %v1541 = vpop.permute.xlu0 %1540
      %1542 = vrot.lane.b32.xlu0 %v613, 28
      %v1543 = vpop.permute.xlu0 %1542
      %1544 = vrot.lane.b32.xlu0 %v614, 28
      %v1545 = vpop.permute.xlu0 %1544
      %1546 = vrot.lane.b32.xlu0 %v615, 28
      %v1547 = vpop.permute.xlu0 %1546
      %1548 = vrot.lane.b32.xlu0 %v616, 28
      %v1549 = vpop.permute.xlu0 %1548
      %1550 = vrot.lane.b32.xlu0 %v617, 28
      %v1551 = vpop.permute.xlu0 %1550
      %1552 = vrot.lane.b32.xlu0 %v618, 28
      %v1553 = vpop.permute.xlu0 %1552
      %1554 = vrot.lane.b32.xlu0 %v619, 28
      %v1555 = vpop.permute.xlu0 %1554
      %1556 = vrot.lane.b32.xlu0 %v620, 28
      %v1557 = vpop.permute.xlu0 %1556
      %1558 = vrot.lane.b32.xlu0 %v621, 28
      %v1559 = vpop.permute.xlu0 %1558
      %1560 = vrot.lane.b32.xlu0 %v622, 28
      %v1561 = vpop.permute.xlu0 %1560
      %1562 = vrot.lane.b32.xlu0 %v623, 28
      %v1563 = vpop.permute.xlu0 %1562
      %1636 = vrot.lane.b32.xlu0 %v624, 32
      %v1637 = vpop.permute.xlu0 %1636
      %1638 = vrot.lane.b32.xlu0 %v625, 32
      %v1639 = vpop.permute.xlu0 %1638
      %1640 = vrot.lane.b32.xlu0 %v626, 32
      %v1641 = vpop.permute.xlu0 %1640
      %1642 = vrot.lane.b32.xlu0 %v627, 32
      %v1643 = vpop.permute.xlu0 %1642
      %1644 = vrot.lane.b32.xlu0 %v628, 32
      %v1645 = vpop.permute.xlu0 %1644
      %1646 = vrot.lane.b32.xlu0 %v629, 32
      %v1647 = vpop.permute.xlu0 %1646
      %1648 = vrot.lane.b32.xlu0 %v630, 32
      %v1649 = vpop.permute.xlu0 %1648
      %1650 = vrot.lane.b32.xlu0 %v631, 32
      %v1651 = vpop.permute.xlu0 %1650
      %1652 = vrot.lane.b32.xlu0 %v632, 32
      %v1653 = vpop.permute.xlu0 %1652
      %1654 = vrot.lane.b32.xlu0 %v633, 32
      %v1655 = vpop.permute.xlu0 %1654
      %1656 = vrot.lane.b32.xlu0 %v634, 32
      %v1657 = vpop.permute.xlu0 %1656
      %1658 = vrot.lane.b32.xlu0 %v635, 32
      %v1659 = vpop.permute.xlu0 %1658
      %1660 = vrot.lane.b32.xlu0 %v636, 32
      %v1661 = vpop.permute.xlu0 %1660
      %1662 = vrot.lane.b32.xlu0 %v637, 32
      %v1663 = vpop.permute.xlu0 %1662
      %1664 = vrot.lane.b32.xlu0 %v638, 32
      %v1665 = vpop.permute.xlu0 %1664
      %1666 = vrot.lane.b32.xlu0 %v639, 32
      %v1667 = vpop.permute.xlu0 %1666
      %1668 = vrot.lane.b32.xlu0 %v640, 32
      %v1669 = vpop.permute.xlu0 %1668
      %1670 = vrot.lane.b32.xlu0 %v641, 32
      %v1671 = vpop.permute.xlu0 %1670
      %1672 = vrot.lane.b32.xlu0 %v642, 32
      %v1673 = vpop.permute.xlu0 %1672
      %1674 = vrot.lane.b32.xlu0 %v643, 32
      %v1675 = vpop.permute.xlu0 %1674
      %1676 = vrot.lane.b32.xlu0 %v644, 32
      %v1677 = vpop.permute.xlu0 %1676
      %1678 = vrot.lane.b32.xlu0 %v645, 32
      %v1679 = vpop.permute.xlu0 %1678
      %1680 = vrot.lane.b32.xlu0 %v646, 32
      %v1681 = vpop.permute.xlu0 %1680
      %1682 = vrot.lane.b32.xlu0 %v647, 32
      %v1683 = vpop.permute.xlu0 %1682
      %1684 = vrot.lane.b32.xlu0 %v648, 32
      %v1685 = vpop.permute.xlu0 %1684
      %1686 = vrot.lane.b32.xlu0 %v649, 32
      %v1687 = vpop.permute.xlu0 %1686
      %1688 = vrot.lane.b32.xlu0 %v650, 32
      %v1689 = vpop.permute.xlu0 %1688
      %1690 = vrot.lane.b32.xlu0 %v651, 32
      %v1691 = vpop.permute.xlu0 %1690
      %1692 = vrot.lane.b32.xlu0 %v652, 32
      %v1693 = vpop.permute.xlu0 %1692
      %1694 = vrot.lane.b32.xlu0 %v653, 32
      %v1695 = vpop.permute.xlu0 %1694
      %1696 = vrot.lane.b32.xlu0 %v654, 32
      %v1697 = vpop.permute.xlu0 %1696
      %1698 = vrot.lane.b32.xlu0 %v655, 32
      %v1699 = vpop.permute.xlu0 %1698
      %1700 = vrot.lane.b32.xlu0 %v656, 32
      %v1701 = vpop.permute.xlu0 %1700
      %1702 = vrot.lane.b32.xlu0 %v657, 32
      %v1703 = vpop.permute.xlu0 %1702
      %1704 = vrot.lane.b32.xlu0 %v658, 32
      %v1705 = vpop.permute.xlu0 %1704
      %1706 = vrot.lane.b32.xlu0 %v659, 32
      %v1707 = vpop.permute.xlu0 %1706
      %v1744 = vsel %vm280, %v404, %v697
      %v1745 = vsel %vm280, %v405, %v699
      %v1746 = vsel %vm280, %v406, %v701
      %v1747 = vsel %vm280, %v407, %v703
      %v1748 = vsel %vm280, %v408, %v705
      %v1749 = vsel %vm280, %v409, %v707
      %v1750 = vsel %vm280, %v410, %v709
      %v1751 = vsel %vm280, %v411, %v711
      %v1752 = vsel %vm280, %v412, %v713
      %v1753 = vsel %vm280, %v413, %v715
      %v1754 = vsel %vm280, %v414, %v717
      %v1755 = vsel %vm280, %v415, %v719
      %v1756 = vsel %vm280, %v416, %v721
      %v1757 = vsel %vm280, %v417, %v723
      %v1758 = vsel %vm280, %v418, %v725
      %v1759 = vsel %vm280, %v419, %v727
      %v1760 = vsel %vm280, %v420, %v729
      %v1761 = vsel %vm280, %v421, %v731
      %v1762 = vsel %vm280, %v422, %v733
      %v1763 = vsel %vm280, %v423, %v735
      %v1764 = vsel %vm280, %v424, %v737
      %v1765 = vsel %vm280, %v425, %v739
      %v1766 = vsel %vm280, %v426, %v741
      %v1767 = vsel %vm280, %v427, %v743
      %v1768 = vsel %vm280, %v428, %v745
      %v1769 = vsel %vm280, %v429, %v747
      %v1770 = vsel %vm280, %v430, %v749
      %v1771 = vsel %vm280, %v431, %v751
      %v1772 = vsel %vm280, %v432, %v753
      %v1773 = vsel %vm280, %v433, %v755
      %v1774 = vsel %vm280, %v434, %v757
      %v1775 = vsel %vm280, %v435, %v759
      %v1776 = vsel %vm280, %v436, %v761
      %v1777 = vsel %vm280, %v437, %v763
      %v1778 = vsel %vm280, %v438, %v765
      %v1779 = vsel %vm280, %v439, %v767
      %vm1780 = vcmask 64512
      %v1781 = vsel %vm1780, %v1744, %v841
      %v1782 = vsel %vm1780, %v1745, %v843
      %v1783 = vsel %vm1780, %v1746, %v845
      %v1784 = vsel %vm1780, %v1747, %v847
      %v1785 = vsel %vm1780, %v1748, %v849
      %v1786 = vsel %vm1780, %v1749, %v851
      %v1787 = vsel %vm1780, %v1750, %v853
      %v1788 = vsel %vm1780, %v1751, %v855
      %v1789 = vsel %vm1780, %v1752, %v857
      %v1790 = vsel %vm1780, %v1753, %v859
      %v1791 = vsel %vm1780, %v1754, %v861
      %v1792 = vsel %vm1780, %v1755, %v863
      %v1793 = vsel %vm1780, %v1756, %v865
      %v1794 = vsel %vm1780, %v1757, %v867
      %v1795 = vsel %vm1780, %v1758, %v869
      %v1796 = vsel %vm1780, %v1759, %v871
      %v1797 = vsel %vm1780, %v1760, %v873
      %v1798 = vsel %vm1780, %v1761, %v875
      %v1799 = vsel %vm1780, %v1762, %v877
      %v1800 = vsel %vm1780, %v1763, %v879
      %v1801 = vsel %vm1780, %v1764, %v881
      %v1802 = vsel %vm1780, %v1765, %v883
      %v1803 = vsel %vm1780, %v1766, %v885
      %v1804 = vsel %vm1780, %v1767, %v887
      %v1805 = vsel %vm1780, %v1768, %v889
      %v1806 = vsel %vm1780, %v1769, %v891
      %v1807 = vsel %vm1780, %v1770, %v893
      %v1808 = vsel %vm1780, %v1771, %v895
      %v1809 = vsel %vm1780, %v1772, %v897
      %v1810 = vsel %vm1780, %v1773, %v899
      %v1811 = vsel %vm1780, %v1774, %v901
      %v1812 = vsel %vm1780, %v1775, %v903
      %v1813 = vsel %vm1780, %v1776, %v905
      %v1814 = vsel %vm1780, %v1777, %v907
      %v1815 = vsel %vm1780, %v1778, %v909
      %v1816 = vsel %vm1780, %v1779, %v911
      %vm1817 = vcmask 97280
      %v1818 = vsel %vm1817, %v1781, %v951
      %v1819 = vsel %vm1817, %v1782, %v953
      %v1820 = vsel %vm1817, %v1783, %v955
      %v1821 = vsel %vm1817, %v1784, %v957
      %v1822 = vsel %vm1817, %v1785, %v959
      %v1823 = vsel %vm1817, %v1786, %v961
      %v1824 = vsel %vm1817, %v1787, %v963
      %v1825 = vsel %vm1817, %v1788, %v965
      %v1826 = vsel %vm1817, %v1789, %v967
      %v1827 = vsel %vm1817, %v1790, %v969
      %v1828 = vsel %vm1817, %v1791, %v971
      %v1829 = vsel %vm1817, %v1792, %v973
      %v1830 = vsel %vm1817, %v1793, %v975
      %v1831 = vsel %vm1817, %v1794, %v977
      %v1832 = vsel %vm1817, %v1795, %v979
      %v1833 = vsel %vm1817, %v1796, %v981
      %v1834 = vsel %vm1817, %v1797, %v983
      %v1835 = vsel %vm1817, %v1798, %v985
      %v1836 = vsel %vm1817, %v1799, %v987
      %v1837 = vsel %vm1817, %v1800, %v989
      %v1838 = vsel %vm1817, %v1801, %v991
      %v1839 = vsel %vm1817, %v1802, %v993
      %v1840 = vsel %vm1817, %v1803, %v995
      %v1841 = vsel %vm1817, %v1804, %v997
      %v1842 = vsel %vm1817, %v1805, %v999
      %v1843 = vsel %vm1817, %v1806, %v1001
      %v1844 = vsel %vm1817, %v1807, %v1003
      %v1845 = vsel %vm1817, %v1808, %v1005
      %v1846 = vsel %vm1817, %v1809, %v1007
      %v1847 = vsel %vm1817, %v1810, %v1009
      %v1848 = vsel %vm1817, %v1811, %v1011
      %v1849 = vsel %vm1817, %v1812, %v1013
      %v1850 = vsel %vm1817, %v1813, %v1015
      %v1851 = vsel %vm1817, %v1814, %v1017
      %v1852 = vsel %vm1817, %v1815, %v1019
      %v1853 = vsel %vm1817, %v1816, %v1021
      %vm1854 = vcmask 130048
      %v1855 = vsel %vm1854, %v1818, %v1095
      %v1856 = vsel %vm1854, %v1819, %v1097
      %v1857 = vsel %vm1854, %v1820, %v1099
      %v1858 = vsel %vm1854, %v1821, %v1101
      %v1859 = vsel %vm1854, %v1822, %v1103
      %v1860 = vsel %vm1854, %v1823, %v1105
      %v1861 = vsel %vm1854, %v1824, %v1107
      %v1862 = vsel %vm1854, %v1825, %v1109
      %v1863 = vsel %vm1854, %v1826, %v1111
      %v1864 = vsel %vm1854, %v1827, %v1113
      %v1865 = vsel %vm1854, %v1828, %v1115
      %v1866 = vsel %vm1854, %v1829, %v1117
      %v1867 = vsel %vm1854, %v1830, %v1119
      %v1868 = vsel %vm1854, %v1831, %v1121
      %v1869 = vsel %vm1854, %v1832, %v1123
      %v1870 = vsel %vm1854, %v1833, %v1125
      %v1871 = vsel %vm1854, %v1834, %v1127
      %v1872 = vsel %vm1854, %v1835, %v1129
      %v1873 = vsel %vm1854, %v1836, %v1131
      %v1874 = vsel %vm1854, %v1837, %v1133
      %v1875 = vsel %vm1854, %v1838, %v1135
      %v1876 = vsel %vm1854, %v1839, %v1137
      %v1877 = vsel %vm1854, %v1840, %v1139
      %v1878 = vsel %vm1854, %v1841, %v1141
      %v1879 = vsel %vm1854, %v1842, %v1143
      %v1880 = vsel %vm1854, %v1843, %v1145
      %v1881 = vsel %vm1854, %v1844, %v1147
      %v1882 = vsel %vm1854, %v1845, %v1149
      %v1883 = vsel %vm1854, %v1846, %v1151
      %v1884 = vsel %vm1854, %v1847, %v1153
      %v1885 = vsel %vm1854, %v1848, %v1155
      %v1886 = vsel %vm1854, %v1849, %v1157
      %v1887 = vsel %vm1854, %v1850, %v1159
      %v1888 = vsel %vm1854, %v1851, %v1161
      %v1889 = vsel %vm1854, %v1852, %v1163
      %v1890 = vsel %vm1854, %v1853, %v1165
      %vm1891 = vcmask 162816
      %v1892 = vsel %vm1891, %v1855, %v1239
      %v1893 = vsel %vm1891, %v1856, %v1241
      %v1894 = vsel %vm1891, %v1857, %v1243
      %v1895 = vsel %vm1891, %v1858, %v1245
      %v1896 = vsel %vm1891, %v1859, %v1247
      %v1897 = vsel %vm1891, %v1860, %v1249
      %v1898 = vsel %vm1891, %v1861, %v1251
      %v1899 = vsel %vm1891, %v1862, %v1253
      %v1900 = vsel %vm1891, %v1863, %v1255
      %v1901 = vsel %vm1891, %v1864, %v1257
      %v1902 = vsel %vm1891, %v1865, %v1259
      %v1903 = vsel %vm1891, %v1866, %v1261
      %v1904 = vsel %vm1891, %v1867, %v1263
      %v1905 = vsel %vm1891, %v1868, %v1265
      %v1906 = vsel %vm1891, %v1869, %v1267
      %v1907 = vsel %vm1891, %v1870, %v1269
      %v1908 = vsel %vm1891, %v1871, %v1271
      %v1909 = vsel %vm1891, %v1872, %v1273
      %v1910 = vsel %vm1891, %v1873, %v1275
      %v1911 = vsel %vm1891, %v1874, %v1277
      %v1912 = vsel %vm1891, %v1875, %v1279
      %v1913 = vsel %vm1891, %v1876, %v1281
      %v1914 = vsel %vm1891, %v1877, %v1283
      %v1915 = vsel %vm1891, %v1878, %v1285
      %v1916 = vsel %vm1891, %v1879, %v1287
      %v1917 = vsel %vm1891, %v1880, %v1289
      %v1918 = vsel %vm1891, %v1881, %v1291
      %v1919 = vsel %vm1891, %v1882, %v1293
      %v1920 = vsel %vm1891, %v1883, %v1295
      %v1921 = vsel %vm1891, %v1884, %v1297
      %v1922 = vsel %vm1891, %v1885, %v1299
      %v1923 = vsel %vm1891, %v1886, %v1301
      %v1924 = vsel %vm1891, %v1887, %v1303
      %v1925 = vsel %vm1891, %v1888, %v1305
      %v1926 = vsel %vm1891, %v1889, %v1307
      %v1927 = vsel %vm1891, %v1890, %v1309
      %vm1928 = vcmask 195584
      %v1929 = vsel %vm1928, %v1892, %v1349
      %v1930 = vsel %vm1928, %v1893, %v1351
      %v1931 = vsel %vm1928, %v1894, %v1353
      %v1932 = vsel %vm1928, %v1895, %v1355
      %v1933 = vsel %vm1928, %v1896, %v1357
      %v1934 = vsel %vm1928, %v1897, %v1359
      %v1935 = vsel %vm1928, %v1898, %v1361
      %v1936 = vsel %vm1928, %v1899, %v1363
      %v1937 = vsel %vm1928, %v1900, %v1365
      %v1938 = vsel %vm1928, %v1901, %v1367
      %v1939 = vsel %vm1928, %v1902, %v1369
      %v1940 = vsel %vm1928, %v1903, %v1371
      %v1941 = vsel %vm1928, %v1904, %v1373
      %v1942 = vsel %vm1928, %v1905, %v1375
      %v1943 = vsel %vm1928, %v1906, %v1377
      %v1944 = vsel %vm1928, %v1907, %v1379
      %v1945 = vsel %vm1928, %v1908, %v1381
      %v1946 = vsel %vm1928, %v1909, %v1383
      %v1947 = vsel %vm1928, %v1910, %v1385
      %v1948 = vsel %vm1928, %v1911, %v1387
      %v1949 = vsel %vm1928, %v1912, %v1389
      %v1950 = vsel %vm1928, %v1913, %v1391
      %v1951 = vsel %vm1928, %v1914, %v1393
      %v1952 = vsel %vm1928, %v1915, %v1395
      %v1953 = vsel %vm1928, %v1916, %v1397
      %v1954 = vsel %vm1928, %v1917, %v1399
      %v1955 = vsel %vm1928, %v1918, %v1401
      %v1956 = vsel %vm1928, %v1919, %v1403
      %v1957 = vsel %vm1928, %v1920, %v1405
      %v1958 = vsel %vm1928, %v1921, %v1407
      %v1959 = vsel %vm1928, %v1922, %v1409
      %v1960 = vsel %vm1928, %v1923, %v1411
      %v1961 = vsel %vm1928, %v1924, %v1413
      %v1962 = vsel %vm1928, %v1925, %v1415
      %v1963 = vsel %vm1928, %v1926, %v1417
      %v1964 = vsel %vm1928, %v1927, %v1419
      %vm1965 = vcmask 228352
      %v1966 = vsel %vm1965, %v1929, %v1493
      %v1967 = vsel %vm1965, %v1930, %v1495
      %v1968 = vsel %vm1965, %v1931, %v1497
      %v1969 = vsel %vm1965, %v1932, %v1499
      %v1970 = vsel %vm1965, %v1933, %v1501
      %v1971 = vsel %vm1965, %v1934, %v1503
      %v1972 = vsel %vm1965, %v1935, %v1505
      %v1973 = vsel %vm1965, %v1936, %v1507
      %v1974 = vsel %vm1965, %v1937, %v1509
      %v1975 = vsel %vm1965, %v1938, %v1511
      %v1976 = vsel %vm1965, %v1939, %v1513
      %v1977 = vsel %vm1965, %v1940, %v1515
      %v1978 = vsel %vm1965, %v1941, %v1517
      %v1979 = vsel %vm1965, %v1942, %v1519
      %v1980 = vsel %vm1965, %v1943, %v1521
      %v1981 = vsel %vm1965, %v1944, %v1523
      %v1982 = vsel %vm1965, %v1945, %v1525
      %v1983 = vsel %vm1965, %v1946, %v1527
      %v1984 = vsel %vm1965, %v1947, %v1529
      %v1985 = vsel %vm1965, %v1948, %v1531
      %v1986 = vsel %vm1965, %v1949, %v1533
      %v1987 = vsel %vm1965, %v1950, %v1535
      %v1988 = vsel %vm1965, %v1951, %v1537
      %v1989 = vsel %vm1965, %v1952, %v1539
      %v1990 = vsel %vm1965, %v1953, %v1541
      %v1991 = vsel %vm1965, %v1954, %v1543
      %v1992 = vsel %vm1965, %v1955, %v1545
      %v1993 = vsel %vm1965, %v1956, %v1547
      %v1994 = vsel %vm1965, %v1957, %v1549
      %v1995 = vsel %vm1965, %v1958, %v1551
      %v1996 = vsel %vm1965, %v1959, %v1553
      %v1997 = vsel %vm1965, %v1960, %v1555
      %v1998 = vsel %vm1965, %v1961, %v1557
      %v1999 = vsel %vm1965, %v1962, %v1559
      %v2000 = vsel %vm1965, %v1963, %v1561
      %v2001 = vsel %vm1965, %v1964, %v1563
      %vm2002 = vcmask 261120
      %v2003 = vsel %vm2002, %v1966, %v1637
      %v2004 = vsel %vm2002, %v1967, %v1639
      %v2005 = vsel %vm2002, %v1968, %v1641
      %v2006 = vsel %vm2002, %v1969, %v1643
      %v2007 = vsel %vm2002, %v1970, %v1645
      %v2008 = vsel %vm2002, %v1971, %v1647
      %v2009 = vsel %vm2002, %v1972, %v1649
      %v2010 = vsel %vm2002, %v1973, %v1651
      %v2011 = vsel %vm2002, %v1974, %v1653
      %v2012 = vsel %vm2002, %v1975, %v1655
      %v2013 = vsel %vm2002, %v1976, %v1657
      %v2014 = vsel %vm2002, %v1977, %v1659
      %v2015 = vsel %vm2002, %v1978, %v1661
      %v2016 = vsel %vm2002, %v1979, %v1663
      %v2017 = vsel %vm2002, %v1980, %v1665
      %v2018 = vsel %vm2002, %v1981, %v1667
      %v2019 = vsel %vm2002, %v1982, %v1669
      %v2020 = vsel %vm2002, %v1983, %v1671
      %v2021 = vsel %vm2002, %v1984, %v1673
      %v2022 = vsel %vm2002, %v1985, %v1675
      %v2023 = vsel %vm2002, %v1986, %v1677
      %v2024 = vsel %vm2002, %v1987, %v1679
      %v2025 = vsel %vm2002, %v1988, %v1681
      %v2026 = vsel %vm2002, %v1989, %v1683
      %v2027 = vsel %vm2002, %v1990, %v1685
      %v2028 = vsel %vm2002, %v1991, %v1687
      %v2029 = vsel %vm2002, %v1992, %v1689
      %v2030 = vsel %vm2002, %v1993, %v1691
      %v2031 = vsel %vm2002, %v1994, %v1693
      %v2032 = vsel %vm2002, %v1995, %v1695
      %v2033 = vsel %vm2002, %v1996, %v1697
      %v2034 = vsel %vm2002, %v1997, %v1699
      %v2035 = vsel %vm2002, %v1998, %v1701
      %v2036 = vsel %vm2002, %v1999, %v1703
      %v2037 = vsel %vm2002, %v2000, %v1705
      %v2038 = vsel %vm2002, %v2001, %v1707
      %v2039 = vpack.c.bf16 %v2004, %v2003
      %v2040 = vpack.c.bf16 %v2006, %v2005
      %v2041 = vpack.c.bf16 %v2008, %v2007
      %v2042 = vpack.c.bf16 %v2010, %v2009
      %v2043 = vpack.c.bf16 %v2012, %v2011
      %v2044 = vpack.c.bf16 %v2014, %v2013
      %v2045 = vpack.c.bf16 %v2016, %v2015
      %v2046 = vpack.c.bf16 %v2018, %v2017
      %v2047 = vpack.c.bf16 %v2020, %v2019
      %v2048 = vpack.c.bf16 %v2022, %v2021
      %v2049 = vpack.c.bf16 %v2024, %v2023
      %v2050 = vpack.c.bf16 %v2026, %v2025
      %v2051 = vpack.c.bf16 %v2028, %v2027
      %v2052 = vpack.c.bf16 %v2030, %v2029
      %v2053 = vpack.c.bf16 %v2032, %v2031
      %v2054 = vpack.c.bf16 %v2034, %v2033
      %v2055 = vpack.c.bf16 %v2036, %v2035
      %v2056 = vpack.c.bf16 %v2038, %v2037
      %v2057 = vld [vmem:[%s1] sm:$0xf]
      %v2058 = vld [vmem:[%s1 + $0x4] sm:$0xf]
      %v2059 = vld [vmem:[%s1 + $0x8] sm:$0xf]
      %v2060 = vld [vmem:[%s1 + $0xc] sm:$0xf]
      %v2061 = vld [vmem:[%s1 + $0x10] sm:$0x3]
      %v2062 = vld [vmem:[%s2] sm:$0x1]
      %v2064 = vperm.slane %v2062, 0
      %v2071 = vunpack.c.l.b16 %v2057
      %v2072 = vunpack.c.l.b16 %v2058
      %v2073 = vunpack.c.l.b16 %v2059
      %v2074 = vunpack.c.l.b16 %v2060
      %v2075 = vunpack.c.l.b16 %v2061
      %v2076 = vpack.c.b16 %v2072, %v2071
      %v2077 = vpack.c.b16 %v2074, %v2073
      %v2078 = vpack.c.b16 %v2075, %v2075
      %vm2081 = vcmask 293888
      %v2083 = vsel %vm2081, %v2039, 0
      %v2086 = vsel %vm2081, %v2040, 0
      %v2089 = vsel %vm2081, %v2041, 0
      %v2092 = vsel %vm2081, %v2042, 0
      %v2095 = vsel %vm2081, %v2043, 0
      %v2098 = vsel %vm2081, %v2044, 0
      %v2101 = vsel %vm2081, %v2045, 0
      %v2104 = vsel %vm2081, %v2046, 0
      %v2107 = vsel %vm2081, %v2047, 0
      %v2110 = vsel %vm2081, %v2048, 0
      %v2113 = vsel %vm2081, %v2049, 0
      %v2116 = vsel %vm2081, %v2050, 0
      %v2119 = vsel %vm2081, %v2051, 0
      %v2122 = vsel %vm2081, %v2052, 0
      %v2125 = vsel %vm2081, %v2053, 0
      %v2128 = vsel %vm2081, %v2054, 0
      %v2131 = vsel %vm2081, %v2055, 0
      %v2134 = vsel %vm2081, %v2056, 0
      %vm2136 = vcmask 1041408
      %v2138 = vsel %vm2136, %v2078, 0
      %2140 = vmatpush.bf16.msra.mxu0 0
      %2141 = vmatpush.bf16.msra.mxu0 0
      %2142 = vmatpush.bf16.msra.mxu0 0
      %2143 = vmatpush.bf16.msra.mxu0 0
      %2144 = vmatpush.bf16.msra.mxu0 0
      %2145 = vmatpush.bf16.msra.mxu0 %v2138
      %2146 = vmatpush.bf16.msra.mxu0 %v2077
      %2147 = vmatpush.bf16.msra.mxu0 %v2076
      %2148 = vmatmul.bf16.gmra.mxu0 %v2083
      %v2149 = vpop.f32.mrf.mxu0
      %v2150 = vadd.f32 %v2064, %v2149
      %v2151 = vpop.f32.mrf.mxu0
      %v2152 = vadd.f32 %v2064, %v2151
      %2153 = vmatmul.bf16.gmra.mxu0 %v2086
      %v2154 = vpop.f32.mrf.mxu0
      %v2155 = vadd.f32 %v2064, %v2154
      %v2156 = vpop.f32.mrf.mxu0
      %v2157 = vadd.f32 %v2064, %v2156
      %2158 = vmatmul.bf16.gmra.mxu0 %v2089
      %v2159 = vpop.f32.mrf.mxu0
      %v2160 = vadd.f32 %v2064, %v2159
      %v2161 = vpop.f32.mrf.mxu0
      %v2162 = vadd.f32 %v2064, %v2161
      %2163 = vmatmul.bf16.gmra.mxu0 %v2092
      %v2164 = vpop.f32.mrf.mxu0
      %v2165 = vadd.f32 %v2064, %v2164
      %v2166 = vpop.f32.mrf.mxu0
      %v2167 = vadd.f32 %v2064, %v2166
      %2168 = vmatmul.bf16.gmra.mxu0 %v2095
      %v2169 = vpop.f32.mrf.mxu0
      %v2170 = vadd.f32 %v2064, %v2169
      %v2171 = vpop.f32.mrf.mxu0
      %v2172 = vadd.f32 %v2064, %v2171
      %2173 = vmatmul.bf16.gmra.mxu0 %v2098
      %v2174 = vpop.f32.mrf.mxu0
      %v2175 = vadd.f32 %v2064, %v2174
      %v2176 = vpop.f32.mrf.mxu0
      %v2177 = vadd.f32 %v2064, %v2176
      %2178 = vmatmul.bf16.gmra.mxu0 %v2101
      %v2179 = vpop.f32.mrf.mxu0
      %v2180 = vadd.f32 %v2064, %v2179
      %v2181 = vpop.f32.mrf.mxu0
      %v2182 = vadd.f32 %v2064, %v2181
      %2183 = vmatmul.bf16.gmra.mxu0 %v2104
      %v2184 = vpop.f32.mrf.mxu0
      %v2185 = vadd.f32 %v2064, %v2184
      %v2186 = vpop.f32.mrf.mxu0
      %v2187 = vadd.f32 %v2064, %v2186
      %2188 = vmatmul.bf16.gmra.mxu0 %v2107
      %v2189 = vpop.f32.mrf.mxu0
      %v2190 = vadd.f32 %v2064, %v2189
      %v2191 = vpop.f32.mrf.mxu0
      %v2192 = vadd.f32 %v2064, %v2191
      %2193 = vmatmul.bf16.gmra.mxu0 %v2110
      %v2194 = vpop.f32.mrf.mxu0
      %v2195 = vadd.f32 %v2064, %v2194
      %v2196 = vpop.f32.mrf.mxu0
      %v2197 = vadd.f32 %v2064, %v2196
      %2198 = vmatmul.bf16.gmra.mxu0 %v2113
      %v2199 = vpop.f32.mrf.mxu0
      %v2200 = vadd.f32 %v2064, %v2199
      %v2201 = vpop.f32.mrf.mxu0
      %v2202 = vadd.f32 %v2064, %v2201
      %2203 = vmatmul.bf16.gmra.mxu0 %v2116
      %v2204 = vpop.f32.mrf.mxu0
      %v2205 = vadd.f32 %v2064, %v2204
      %v2206 = vpop.f32.mrf.mxu0
      %v2207 = vadd.f32 %v2064, %v2206
      %2208 = vmatmul.bf16.gmra.mxu0 %v2119
      %v2209 = vpop.f32.mrf.mxu0
      %v2210 = vadd.f32 %v2064, %v2209
      %v2211 = vpop.f32.mrf.mxu0
      %v2212 = vadd.f32 %v2064, %v2211
      %2213 = vmatmul.bf16.gmra.mxu0 %v2122
      %v2214 = vpop.f32.mrf.mxu0
      %v2215 = vadd.f32 %v2064, %v2214
      %v2216 = vpop.f32.mrf.mxu0
      %v2217 = vadd.f32 %v2064, %v2216
      %2218 = vmatmul.bf16.gmra.mxu0 %v2125
      %v2219 = vpop.f32.mrf.mxu0
      %v2220 = vadd.f32 %v2064, %v2219
      %v2221 = vpop.f32.mrf.mxu0
      %v2222 = vadd.f32 %v2064, %v2221
      %2223 = vmatmul.bf16.gmra.mxu0 %v2128
      %v2224 = vpop.f32.mrf.mxu0
      %v2225 = vadd.f32 %v2064, %v2224
      %v2226 = vpop.f32.mrf.mxu0
      %v2227 = vadd.f32 %v2064, %v2226
      %2228 = vmatmul.bf16.gmra.mxu0 %v2131
      %v2229 = vpop.f32.mrf.mxu0
      %v2230 = vadd.f32 %v2064, %v2229
      %v2231 = vpop.f32.mrf.mxu0
      %v2232 = vadd.f32 %v2064, %v2231
      %2233 = vmatmul.bf16.gmra.mxu0 %v2134
      %v2234 = vpop.f32.mrf.mxu0
      %v2235 = vadd.f32 %v2064, %v2234
      %v2236 = vpop.f32.mrf.mxu0
      %v2237 = vadd.f32 %v2064, %v2236
      %2238 = vdwg.mxu0
      %v2239 = vmax.f32 %v2150, 0.0
      %v2240 = vmax.f32 %v2152, 0.0
      %v2241 = vmax.f32 %v2155, 0.0
      %v2242 = vmax.f32 %v2157, 0.0
      %v2243 = vmax.f32 %v2160, 0.0
      %v2244 = vmax.f32 %v2162, 0.0
      %v2245 = vmax.f32 %v2165, 0.0
      %v2246 = vmax.f32 %v2167, 0.0
      %v2247 = vmax.f32 %v2170, 0.0
      %v2248 = vmax.f32 %v2172, 0.0
      %v2249 = vmax.f32 %v2175, 0.0
      %v2250 = vmax.f32 %v2177, 0.0
      %v2251 = vmax.f32 %v2180, 0.0
      %v2252 = vmax.f32 %v2182, 0.0
      %v2253 = vmax.f32 %v2185, 0.0
      %v2254 = vmax.f32 %v2187, 0.0
      %v2255 = vmax.f32 %v2190, 0.0
      %v2256 = vmax.f32 %v2192, 0.0
      %v2257 = vmax.f32 %v2195, 0.0
      %v2258 = vmax.f32 %v2197, 0.0
      %v2259 = vmax.f32 %v2200, 0.0
      %v2260 = vmax.f32 %v2202, 0.0
      %v2261 = vmax.f32 %v2205, 0.0
      %v2262 = vmax.f32 %v2207, 0.0
      %v2263 = vmax.f32 %v2210, 0.0
      %v2264 = vmax.f32 %v2212, 0.0
      %v2265 = vmax.f32 %v2215, 0.0
      %v2266 = vmax.f32 %v2217, 0.0
      %v2267 = vmax.f32 %v2220, 0.0
      %v2268 = vmax.f32 %v2222, 0.0
      %v2269 = vmax.f32 %v2225, 0.0
      %v2270 = vmax.f32 %v2227, 0.0
      %v2271 = vmax.f32 %v2230, 0.0
      %v2272 = vmax.f32 %v2232, 0.0
      %v2273 = vmax.f32 %v2235, 0.0
      %v2274 = vmax.f32 %v2237, 0.0
      %v2275 = vld [vmem:[%s6] sm:$0x7]
      %v2277 = vperm.slane %v2275, 0
      %v2278 = vperm.slane %v2275, 1
      %v2279 = vperm.slane %v2275, 2
      %v2282 = vsel %vm2002, %v2279, 0
      %2284 = vmatpush.msra.mxu0 %v2254
      %2285 = vmatpush.msra.mxu0 %v2253
      %2286 = vmatpush.msra.mxu0 %v2252
      %2287 = vmatpush.msra.mxu0 %v2251
      %2288 = vmatpush.msra.mxu0 %v2250
      %2289 = vmatpush.msra.mxu0 %v2249
      %2290 = vmatpush.msra.mxu0 %v2248
      %2291 = vmatpush.msra.mxu0 %v2247
      %2292 = vmatpush.msra.mxu0 %v2246
      %2293 = vmatpush.msra.mxu0 %v2245
      %2294 = vmatpush.msra.mxu0 %v2244
      %2295 = vmatpush.msra.mxu0 %v2243
      %2296 = vmatpush.msra.mxu0 %v2242
      %2297 = vmatpush.msra.mxu0 %v2241
      %2298 = vmatpush.msra.mxu0 %v2240
      %2299 = vmatpush.msra.mxu0 %v2239
      %2300 = vmatmul.f32.gmra.mxu0 %v2277
      %v2301 = vpop.f32.mrf.mxu0
      %v2302 = vadd.f32 0.0, %v2301
      %2303 = vdwg.mxu0
      %2304 = vmatpush.msra.mxu0 %v2270
      %2305 = vmatpush.msra.mxu0 %v2269
      %2306 = vmatpush.msra.mxu0 %v2268
      %2307 = vmatpush.msra.mxu0 %v2267
      %2308 = vmatpush.msra.mxu0 %v2266
      %2309 = vmatpush.msra.mxu0 %v2265
      %2310 = vmatpush.msra.mxu0 %v2264
      %2311 = vmatpush.msra.mxu0 %v2263
      %2312 = vmatpush.msra.mxu0 %v2262
      %2313 = vmatpush.msra.mxu0 %v2261
      %2314 = vmatpush.msra.mxu0 %v2260
      %2315 = vmatpush.msra.mxu0 %v2259
      %2316 = vmatpush.msra.mxu0 %v2258
      %2317 = vmatpush.msra.mxu0 %v2257
      %2318 = vmatpush.msra.mxu0 %v2256
      %2319 = vmatpush.msra.mxu0 %v2255
      %2320 = vmatmul.f32.gmra.mxu0 %v2278
      %v2321 = vpop.f32.mrf.mxu0
      %v2322 = vadd.f32 %v2302, %v2321
      %2323 = vdwg.mxu0
      %2324 = vmatpush.msra.mxu0 0.0
      %2325 = vmatpush.msra.mxu0 0.0
      %2326 = vmatpush.msra.mxu0 0.0
      %2327 = vmatpush.msra.mxu0 0.0
      %2328 = vmatpush.msra.mxu0 0.0
      %2329 = vmatpush.msra.mxu0 0.0
      %2330 = vmatpush.msra.mxu0 0.0
      %2331 = vmatpush.msra.mxu0 0.0
      %2332 = vmatpush.msra.mxu0 0.0
      %2333 = vmatpush.msra.mxu0 0.0
      %2334 = vmatpush.msra.mxu0 0.0
      %2335 = vmatpush.msra.mxu0 0.0
      %2336 = vmatpush.msra.mxu0 %v2274
      %2337 = vmatpush.msra.mxu0 %v2273
      %2338 = vmatpush.msra.mxu0 %v2272
      %2339 = vmatpush.msra.mxu0 %v2271
      %2340 = vmatmul.f32.gmra.mxu0 %v2282
      %v2341 = vpop.f32.mrf.mxu0
      %v2342 = vadd.f32 %v2322, %v2341
      %2343 = vdwg.mxu0
      %v2344 = vmul.f32 %v2239, %v2239
      %v2345 = vmul.f32 %v2240, %v2240
      %v2346 = vmul.f32 %v2241, %v2241
      %v2347 = vmul.f32 %v2242, %v2242
      %v2348 = vmul.f32 %v2243, %v2243
      %v2349 = vmul.f32 %v2244, %v2244
      %v2350 = vmul.f32 %v2245, %v2245
      %v2351 = vmul.f32 %v2246, %v2246
      %v2352 = vmul.f32 %v2247, %v2247
      %v2353 = vmul.f32 %v2248, %v2248
      %v2354 = vmul.f32 %v2249, %v2249
      %v2355 = vmul.f32 %v2250, %v2250
      %v2356 = vmul.f32 %v2251, %v2251
      %v2357 = vmul.f32 %v2252, %v2252
      %v2358 = vmul.f32 %v2253, %v2253
      %v2359 = vmul.f32 %v2254, %v2254
      %v2360 = vmul.f32 %v2255, %v2255
      %v2361 = vmul.f32 %v2256, %v2256
      %v2362 = vmul.f32 %v2257, %v2257
      %v2363 = vmul.f32 %v2258, %v2258
      %v2364 = vmul.f32 %v2259, %v2259
      %v2365 = vmul.f32 %v2260, %v2260
      %v2366 = vmul.f32 %v2261, %v2261
      %v2367 = vmul.f32 %v2262, %v2262
      %v2368 = vmul.f32 %v2263, %v2263
      %v2369 = vmul.f32 %v2264, %v2264
      %v2370 = vmul.f32 %v2265, %v2265
      %v2371 = vmul.f32 %v2266, %v2266
      %v2372 = vmul.f32 %v2267, %v2267
      %v2373 = vmul.f32 %v2268, %v2268
      %v2374 = vmul.f32 %v2269, %v2269
      %v2375 = vmul.f32 %v2270, %v2270
      %v2376 = vmul.f32 %v2271, %v2271
      %v2377 = vmul.f32 %v2272, %v2272
      %v2378 = vmul.f32 %v2273, %v2273
      %v2379 = vmul.f32 %v2274, %v2274
      %2380 = vmatpush.msra.mxu0 %v2359
      %2381 = vmatpush.msra.mxu0 %v2358
      %2382 = vmatpush.msra.mxu0 %v2357
      %2383 = vmatpush.msra.mxu0 %v2356
      %2384 = vmatpush.msra.mxu0 %v2355
      %2385 = vmatpush.msra.mxu0 %v2354
      %2386 = vmatpush.msra.mxu0 %v2353
      %2387 = vmatpush.msra.mxu0 %v2352
      %2388 = vmatpush.msra.mxu0 %v2351
      %2389 = vmatpush.msra.mxu0 %v2350
      %2390 = vmatpush.msra.mxu0 %v2349
      %2391 = vmatpush.msra.mxu0 %v2348
      %2392 = vmatpush.msra.mxu0 %v2347
      %2393 = vmatpush.msra.mxu0 %v2346
      %2394 = vmatpush.msra.mxu0 %v2345
      %2395 = vmatpush.msra.mxu0 %v2344
      %2396 = vmatmul.f32.gmra.mxu0 %v2277
      %v2397 = vpop.f32.mrf.mxu0
      %v2398 = vadd.f32 0.0, %v2397
      %2399 = vdwg.mxu0
      %2400 = vmatpush.msra.mxu0 %v2375
      %2401 = vmatpush.msra.mxu0 %v2374
      %2402 = vmatpush.msra.mxu0 %v2373
      %2403 = vmatpush.msra.mxu0 %v2372
      %2404 = vmatpush.msra.mxu0 %v2371
      %2405 = vmatpush.msra.mxu0 %v2370
      %2406 = vmatpush.msra.mxu0 %v2369
      %2407 = vmatpush.msra.mxu0 %v2368
      %2408 = vmatpush.msra.mxu0 %v2367
      %2409 = vmatpush.msra.mxu0 %v2366
      %2410 = vmatpush.msra.mxu0 %v2365
      %2411 = vmatpush.msra.mxu0 %v2364
      %2412 = vmatpush.msra.mxu0 %v2363
      %2413 = vmatpush.msra.mxu0 %v2362
      %2414 = vmatpush.msra.mxu0 %v2361
      %2415 = vmatpush.msra.mxu0 %v2360
      %2416 = vmatmul.f32.gmra.mxu0 %v2278
      %v2417 = vpop.f32.mrf.mxu0
      %v2418 = vadd.f32 %v2398, %v2417
      %2419 = vdwg.mxu0
      %2420 = vmatpush.msra.mxu0 0.0
      %2421 = vmatpush.msra.mxu0 0.0
      %2422 = vmatpush.msra.mxu0 0.0
      %2423 = vmatpush.msra.mxu0 0.0
      %2424 = vmatpush.msra.mxu0 0.0
      %2425 = vmatpush.msra.mxu0 0.0
      %2426 = vmatpush.msra.mxu0 0.0
      %2427 = vmatpush.msra.mxu0 0.0
      %2428 = vmatpush.msra.mxu0 0.0
      %2429 = vmatpush.msra.mxu0 0.0
      %2430 = vmatpush.msra.mxu0 0.0
      %2431 = vmatpush.msra.mxu0 0.0
      %2432 = vmatpush.msra.mxu0 %v2379
      %2433 = vmatpush.msra.mxu0 %v2378
      %2434 = vmatpush.msra.mxu0 %v2377
      %2435 = vmatpush.msra.mxu0 %v2376
      %2436 = vmatmul.f32.gmra.mxu0 %v2282
      %v2437 = vpop.f32.mrf.mxu0
      %v2438 = vadd.f32 %v2418, %v2437
      %2439 = vdwg.mxu0
      %v2440 = vld [vmem:[%s5] sm:$0xff]
      %v2441 = vld [vmem:[%s5 + $0x8] sm:$0xff]
      %v2442 = vld [vmem:[%s5 + $0x10] sm:$0xff]
      %v2443 = vld [vmem:[%s5 + $0x18] sm:$0xff]
      %v2445 = vsel %vm2002, %v2342, 0
      %2447 = vmatpush.msra.mxu0 0.0
      %2448 = vmatpush.msra.mxu0 0.0
      %2449 = vmatpush.msra.mxu0 0.0
      %2450 = vmatpush.msra.mxu0 0.0
      %2451 = vmatpush.msra.mxu0 0.0
      %2452 = vmatpush.msra.mxu0 0.0
      %2453 = vmatpush.msra.mxu0 0.0
      %2454 = vmatpush.msra.mxu0 0.0
      %2455 = vmatpush.msra.mxu0 0.0
      %2456 = vmatpush.msra.mxu0 0.0
      %2457 = vmatpush.msra.mxu0 0.0
      %2458 = vmatpush.msra.mxu0 0.0
      %2459 = vmatpush.msra.mxu0 %v2443
      %2460 = vmatpush.msra.mxu0 %v2442
      %2461 = vmatpush.msra.mxu0 %v2441
      %2462 = vmatpush.msra.mxu0 %v2440
      %2463 = vmatmul.f32.gmra.mxu0 %v2445
      %v2464 = vpop.f32.mrf.mxu0
      %v2465 = vadd.f32 0.0, %v2464
      %2466 = vdwg.mxu0
      %v2467 = vmul.f32 %v2465, 0.00390625
      %v2469 = vsel %vm2002, %v2438, 0
      %2471 = vmatpush.msra.mxu0 0.0
      %2472 = vmatpush.msra.mxu0 0.0
      %2473 = vmatpush.msra.mxu0 0.0
      %2474 = vmatpush.msra.mxu0 0.0
      %2475 = vmatpush.msra.mxu0 0.0
      %2476 = vmatpush.msra.mxu0 0.0
      %2477 = vmatpush.msra.mxu0 0.0
      %2478 = vmatpush.msra.mxu0 0.0
      %2479 = vmatpush.msra.mxu0 0.0
      %2480 = vmatpush.msra.mxu0 0.0
      %2481 = vmatpush.msra.mxu0 0.0
      %2482 = vmatpush.msra.mxu0 0.0
      %2483 = vmatpush.msra.mxu0 %v2443
      %2484 = vmatpush.msra.mxu0 %v2442
      %2485 = vmatpush.msra.mxu0 %v2441
      %2486 = vmatpush.msra.mxu0 %v2440
      %2487 = vmatmul.f32.gmra.mxu0 %v2469
      %v2488 = vpop.f32.mrf.mxu0
      %v2489 = vadd.f32 0.0, %v2488
      %2490 = vdwg.mxu0
      %v2491 = vmul.f32 %v2489, 0.00390625
      %v2492 = vmul.f32 %v2467, %v2467
      %v2493 = vsub.f32 %v2491, %v2492
      %v2494 = vmax.f32 %v2493, 0.0
      %v2495 = vadd.f32 %v2494, 1e-05
      %v2496 = vrsqrt.pop %v2495
      %v2497 = vmul.f32 %v2496, %v2495
      %v2498 = vmul.f32 %v2497, %v2496
      %v2499 = vmul.f32 0.5, %v2498
      %v2500 = vsub.f32 1.5, %v2499
      %v2501 = vmul.f32 %v2496, %v2500
      %vm2502 = vweird.f32 %v2495
      %vm2503 = vweird.f32 %v2496
      %vm2504 = vmor %vm2502, %vm2503
      %v2505 = vsel %vm2504, %v2496, %v2501
      %v2506 = vld [vmem:[%s3] sm:$0x1]
      %v2507 = vmul.f32 %v2506, %v2505
      %v2508 = vld [vmem:[%s4] sm:$0x1]
      %v2509 = vmul.f32 %v2467, %v2507
      %v2510 = vsub.f32 %v2508, %v2509
      %v2512 = vperm.slane %v2507, 0
      %v2514 = vmul.f32 %v2239, %v2512
      %v2515 = vmul.f32 %v2240, %v2512
      %v2516 = vmul.f32 %v2241, %v2512
      %v2517 = vmul.f32 %v2242, %v2512
      %v2518 = vmul.f32 %v2243, %v2512
      %v2519 = vmul.f32 %v2244, %v2512
      %v2520 = vmul.f32 %v2245, %v2512
      %v2521 = vmul.f32 %v2246, %v2512
      %v2522 = vmul.f32 %v2247, %v2512
      %v2523 = vmul.f32 %v2248, %v2512
      %v2524 = vmul.f32 %v2249, %v2512
      %v2525 = vmul.f32 %v2250, %v2512
      %v2526 = vmul.f32 %v2251, %v2512
      %v2527 = vmul.f32 %v2252, %v2512
      %v2528 = vmul.f32 %v2253, %v2512
      %v2529 = vmul.f32 %v2254, %v2512
      %v2530 = vmul.f32 %v2255, %v2512
      %v2531 = vmul.f32 %v2256, %v2512
      %v2532 = vmul.f32 %v2257, %v2512
      %v2533 = vmul.f32 %v2258, %v2512
      %v2534 = vmul.f32 %v2259, %v2512
      %v2535 = vmul.f32 %v2260, %v2512
      %v2536 = vmul.f32 %v2261, %v2512
      %v2537 = vmul.f32 %v2262, %v2512
      %v2538 = vmul.f32 %v2263, %v2512
      %v2539 = vmul.f32 %v2264, %v2512
      %v2540 = vmul.f32 %v2265, %v2512
      %v2541 = vmul.f32 %v2266, %v2512
      %v2542 = vmul.f32 %v2267, %v2512
      %v2543 = vmul.f32 %v2268, %v2512
      %v2544 = vmul.f32 %v2269, %v2512
      %v2545 = vmul.f32 %v2270, %v2512
      %v2546 = vmul.f32 %v2271, %v2512
      %v2547 = vmul.f32 %v2272, %v2512
      %v2548 = vmul.f32 %v2273, %v2512
      %v2549 = vmul.f32 %v2274, %v2512
      %v2551 = vperm.slane %v2510, 0
      %v2553 = vadd.f32 %v2514, %v2551
      %v2554 = vadd.f32 %v2515, %v2551
      %v2555 = vadd.f32 %v2516, %v2551
      %v2556 = vadd.f32 %v2517, %v2551
      %v2557 = vadd.f32 %v2518, %v2551
      %v2558 = vadd.f32 %v2519, %v2551
      %v2559 = vadd.f32 %v2520, %v2551
      %v2560 = vadd.f32 %v2521, %v2551
      %v2561 = vadd.f32 %v2522, %v2551
      %v2562 = vadd.f32 %v2523, %v2551
      %v2563 = vadd.f32 %v2524, %v2551
      %v2564 = vadd.f32 %v2525, %v2551
      %v2565 = vadd.f32 %v2526, %v2551
      %v2566 = vadd.f32 %v2527, %v2551
      %v2567 = vadd.f32 %v2528, %v2551
      %v2568 = vadd.f32 %v2529, %v2551
      %v2569 = vadd.f32 %v2530, %v2551
      %v2570 = vadd.f32 %v2531, %v2551
      %v2571 = vadd.f32 %v2532, %v2551
      %v2572 = vadd.f32 %v2533, %v2551
      %v2573 = vadd.f32 %v2534, %v2551
      %v2574 = vadd.f32 %v2535, %v2551
      %v2575 = vadd.f32 %v2536, %v2551
      %v2576 = vadd.f32 %v2537, %v2551
      %v2577 = vadd.f32 %v2538, %v2551
      %v2578 = vadd.f32 %v2539, %v2551
      %v2579 = vadd.f32 %v2540, %v2551
      %v2580 = vadd.f32 %v2541, %v2551
      %v2581 = vadd.f32 %v2542, %v2551
      %v2582 = vadd.f32 %v2543, %v2551
      %v2583 = vadd.f32 %v2544, %v2551
      %v2584 = vadd.f32 %v2545, %v2551
      %v2585 = vadd.f32 %v2546, %v2551
      %v2586 = vadd.f32 %v2547, %v2551
      %v2587 = vadd.f32 %v2548, %v2551
      %v2588 = vadd.f32 %v2549, %v2551
      %2589 = vst.msk [vmem:[%s278] sm:$0xff] %vm2002, %v2553
      %2590 = vst.msk [vmem:[%s278 + $0x8] sm:$0xff] %vm2002, %v2554
      %s2591 = scalar_lea.vmem %s278, 16
      %vm2592 = vcmask 261122
      %2593 = vst.msk [vmem:[%s2591 - $0x2] sm:$0xfc] %vm2592, %v2555
      %2594 = vst.msk [vmem:[%s2591 + $0x6] sm:$0xff] %vm2002, %v2556
      %vm2595 = vcmask 254976
      %2596 = vst.msk [vmem:[%s2591 + $0xe] sm:$0x3] %vm2595, %v2557
      %s2597 = scalar_lea.vmem %s278, 32
      %vm2598 = vcmask 261124
      %2599 = vst.msk [vmem:[%s2597 - $0x4] sm:$0xf0] %vm2598, %v2557
      %2600 = vst.msk [vmem:[%s2597 + $0x4] sm:$0xff] %vm2002, %v2558
      %vm2601 = vcmask 257024
      %2602 = vst.msk [vmem:[%s2597 + $0xc] sm:$0xf] %vm2601, %v2559
      %s2603 = scalar_lea.vmem %s278, 48
      %vm2604 = vcmask 261126
      %2605 = vst.msk [vmem:[%s2603 - $0x6] sm:$0xc0] %vm2604, %v2559
      %2606 = vst.msk [vmem:[%s2603 + $0x2] sm:$0xff] %vm2002, %v2560
      %vm2607 = vcmask 259072
      %2608 = vst.msk [vmem:[%s2603 + $0xa] sm:$0x3f] %vm2607, %v2561
      %s2609 = scalar_lea.vmem %s278, 64
      %2610 = vst.msk [vmem:[%s2609] sm:$0xff] %vm2002, %v2562
      %2611 = vst.msk [vmem:[%s2609 + $0x8] sm:$0xff] %vm2002, %v2563
      %s2612 = scalar_lea.vmem %s278, 80
      %2613 = vst.msk [vmem:[%s2612 - $0x2] sm:$0xfc] %vm2592, %v2564
      %2614 = vst.msk [vmem:[%s2612 + $0x6] sm:$0xff] %vm2002, %v2565
      %2615 = vst.msk [vmem:[%s2612 + $0xe] sm:$0x3] %vm2595, %v2566
      %s2616 = scalar_lea.vmem %s278, 96
      %2617 = vst.msk [vmem:[%s2616 - $0x4] sm:$0xf0] %vm2598, %v2566
      %2618 = vst.msk [vmem:[%s2616 + $0x4] sm:$0xff] %vm2002, %v2567
      %2619 = vst.msk [vmem:[%s2616 + $0xc] sm:$0xf] %vm2601, %v2568
      %s2620 = scalar_lea.vmem %s278, 112
      %2621 = vst.msk [vmem:[%s2620 - $0x6] sm:$0xc0] %vm2604, %v2568
      %2622 = vst.msk [vmem:[%s2620 + $0x2] sm:$0xff] %vm2002, %v2569
      %2623 = vst.msk [vmem:[%s2620 + $0xa] sm:$0x3f] %vm2607, %v2570
      %s2624 = scalar_lea.vmem %s278, 128
      %2625 = vst.msk [vmem:[%s2624] sm:$0xff] %vm2002, %v2571
      %2626 = vst.msk [vmem:[%s2624 + $0x8] sm:$0xff] %vm2002, %v2572
      %s2627 = scalar_lea.vmem %s278, 144
      %2628 = vst.msk [vmem:[%s2627 - $0x2] sm:$0xfc] %vm2592, %v2573
      %2629 = vst.msk [vmem:[%s2627 + $0x6] sm:$0xff] %vm2002, %v2574
      %2630 = vst.msk [vmem:[%s2627 + $0xe] sm:$0x3] %vm2595, %v2575
      %s2631 = scalar_lea.vmem %s278, 160
      %2632 = vst.msk [vmem:[%s2631 - $0x4] sm:$0xf0] %vm2598, %v2575
      %2633 = vst.msk [vmem:[%s2631 + $0x4] sm:$0xff] %vm2002, %v2576
      %2634 = vst.msk [vmem:[%s2631 + $0xc] sm:$0xf] %vm2601, %v2577
      %s2635 = scalar_lea.vmem %s278, 176
      %2636 = vst.msk [vmem:[%s2635 - $0x6] sm:$0xc0] %vm2604, %v2577
      %2637 = vst.msk [vmem:[%s2635 + $0x2] sm:$0xff] %vm2002, %v2578
      %2638 = vst.msk [vmem:[%s2635 + $0xa] sm:$0x3f] %vm2607, %v2579
      %s2639 = scalar_lea.vmem %s278, 192
      %2640 = vst.msk [vmem:[%s2639] sm:$0xff] %vm2002, %v2580
      %2641 = vst.msk [vmem:[%s2639 + $0x8] sm:$0xff] %vm2002, %v2581
      %s2642 = scalar_lea.vmem %s278, 208
      %2643 = vst.msk [vmem:[%s2642 - $0x2] sm:$0xfc] %vm2592, %v2582
      %2644 = vst.msk [vmem:[%s2642 + $0x6] sm:$0xff] %vm2002, %v2583
      %2645 = vst.msk [vmem:[%s2642 + $0xe] sm:$0x3] %vm2595, %v2584
      %s2646 = scalar_lea.vmem %s278, 224
      %2647 = vst.msk [vmem:[%s2646 - $0x4] sm:$0xf0] %vm2598, %v2584
      %2648 = vst.msk [vmem:[%s2646 + $0x4] sm:$0xff] %vm2002, %v2585
      %2649 = vst.msk [vmem:[%s2646 + $0xc] sm:$0xf] %vm2601, %v2586
      %s2650 = scalar_lea.vmem %s278, 240
      %2651 = vst.msk [vmem:[%s2650 - $0x6] sm:$0xc0] %vm2604, %v2586
      %2652 = vst.msk [vmem:[%s2650 + $0x2] sm:$0xff] %vm2002, %v2587
      %2653 = vst.msk [vmem:[%s2650 + $0xa] sm:$0x3f] %vm2607, %v2588
      %p2654 = scmp.lt.s32.totalorder %s18, 1
      %s2655 = scalar_select %p2654, %s18, 1
      %s2656 = smul.addr %s2655, 32
      %s2657 = smul.addr %s2656, 8
      %s2658 = scalar_lea.vmem %s7, %s2657
      // Predicated region
      $region49: #{multi_scale_downsampling.4} parent=47 // pred_check
        %p2659 = pneg %p188
      $region50: #{multi_scale_downsampling.4} parent=47 // pred_check_branch
        %2661 = sbr.rel (%p2659) target = $region52
      $region51: #{multi_scale_downsampling.4} parent=47 // pred_region
        _
      $region52: #{multi_scale_downsampling.4} parent=47 // pred_fallthru
        _
    $region48: #{multi_scale_downsampling.4} parent=5 // pred_fallthru
      _
    %p2662 = scmp.le.s32.totalorder 2, %s13
    // Predicated region
    $region53: #{multi_scale_downsampling.4} parent=5 // pred_check
      %p2663 = pneg %p2662
    $region54: #{multi_scale_downsampling.4} parent=5 // pred_check_branch
      %2665 = sbr.rel (%p2663) target = $region56
    $region55: #{multi_scale_downsampling.4} parent=5 // pred_region
      %s2666 = ssub.s32 %s13, 2
      // Predicated region
      $region57: #{multi_scale_downsampling.4} parent=55 // pred_check
        %p2667 = pneg %p194
      $region58: #{multi_scale_downsampling.4} parent=55 // pred_check_branch
        %2669 = sbr.rel (%p2667) target = $region60
      $region59: #{multi_scale_downsampling.4} parent=55 // pred_region
        %p2670 = scmp.lt.s32.totalorder %s19, 1
        %s2671 = scalar_select %p2670, %s19, 1
        %s2672 = smul.addr %s2671, 32
        %s2673 = smul.addr %s2672, 8
        %s2674 = scalar_lea.vmem %s7, %s2673
      $region60: #{multi_scale_downsampling.4} parent=55 // pred_fallthru
        _
    $region56: #{multi_scale_downsampling.4} parent=5 // pred_fallthru
      _
  $region6: #{multi_scale_downsampling.4} parent=0 // loop_footer
    %s17 = sadd.s32 1, %s13
  $region7: #{multi_scale_downsampling.4} parent=0 // loop_footer_branch
    %12 = sbr.rel target = $region3
  $region8: #{multi_scale_downsampling.4} parent=0 // loop_exit
    _

</llo_original>
